<compile_context>
chip_gen: v6e
topology: v6e:2x2x1
jax: 0.10.0
libtpu: 0.0.40
codegen_flags: <defaults>
</compile_context>

<pallas_src>
import functools

import jax
import jax.numpy as jnp
from jax.experimental import pallas as pl
from jax.experimental.pallas import tpu as pltpu

D_MODEL = 32
N_HEAD = 4
D_HEAD = D_MODEL // N_HEAD
D_FF = 64
N_LAYERS = 2
LN_EPS = 1e-5
_SCALE = 1.0 / (D_HEAD ** 0.5)


# --------------------------- in-kernel helpers ---------------------------

def _ln(x, g, b):
    """LayerNorm over last dim (f32). x: (M, D); g, b: (1, D)."""
    mu = jnp.mean(x, axis=-1, keepdims=True)
    xc = x - mu
    var = jnp.mean(xc * xc, axis=-1, keepdims=True)
    return xc * jax.lax.rsqrt(var + LN_EPS) * g + b


def _mha(q_in, k_in, v_in, wqkv, bqkv, wo, bo, BB, Lq, Lk):
    """Multi-head attention with single (batch*head)-batched einsums.

    q_in: (BB*Lq, D) f32; k_in, v_in: (BB*Lk, D) f32.
    wqkv: (D, 3D) bf16, Q columns pre-scaled by 1/sqrt(D_HEAD); bqkv: (1, 3D) f32.
    wo:   (D, D)  bf16 (pre-transposed out_proj);               bo:   (1, D) f32.
    """
    D = D_MODEL
    if q_in is k_in:
        # self-attention: q and k share the same input -> one (., 2D) projection
        qk = jnp.dot(q_in.astype(jnp.bfloat16), wqkv[:, :2 * D],
                     preferred_element_type=jnp.float32) + bqkv[:, :2 * D]
        q, k = qk[:, :D], qk[:, D:]
    else:
        q = jnp.dot(q_in.astype(jnp.bfloat16), wqkv[:, :D],
                    preferred_element_type=jnp.float32) + bqkv[:, :D]
        k = jnp.dot(k_in.astype(jnp.bfloat16), wqkv[:, D:2 * D],
                    preferred_element_type=jnp.float32) + bqkv[:, D:2 * D]
    v = jnp.dot(v_in.astype(jnp.bfloat16), wqkv[:, 2 * D:],
                preferred_element_type=jnp.float32) + bqkv[:, 2 * D:]

    def split_heads(t, L):  # (BB*L, D) f32 -> (BB*H, L, dh) bf16, heads folded into batch
        return (t.astype(jnp.bfloat16)
                 .reshape(BB, L, N_HEAD, D_HEAD)
                 .transpose(0, 2, 1, 3)
                 .reshape(BB * N_HEAD, L, D_HEAD))

    qh = split_heads(q, Lq)
    kh = split_heads(k, Lk)
    vh = split_heads(v, Lk)

    # one batched score matmul over (batch, head); softmax scale folded into wq/bq
    s = jnp.einsum('bqd,bkd->bqk', qh, kh,
                   preferred_element_type=jnp.float32)            # (BB*H, Lq, Lk)
    s = s - jnp.max(s, axis=-1, keepdims=True)
    p = jnp.exp(s)
    p = p * pl.reciprocal(jnp.sum(p, axis=-1, keepdims=True), approx=True)

    o = jnp.einsum('bqk,bkd->bqd', p.astype(jnp.bfloat16), vh,
                   preferred_element_type=jnp.float32)            # (BB*H, Lq, dh)
    # merge heads (reshape == PyTorch concat order) and apply out_proj as ONE matmul
    o2 = (o.reshape(BB, N_HEAD, Lq, D_HEAD)
           .transpose(0, 2, 1, 3)
           .reshape(BB * Lq, D))
    return jnp.dot(o2.astype(jnp.bfloat16), wo,
                   preferred_element_type=jnp.float32) + bo


# ------------------------------ fused kernel ------------------------------

def _decoder_kernel(tgt_ref, mem_ref, pos_ref, qpos_ref,
                    wqkv_s_ref, bqkv_s_ref, wo_s_ref, bo_s_ref,
                    wqkv_c_ref, bqkv_c_ref, wo_c_ref, bo_c_ref,
                    w1_ref, b1_ref, w2_ref, b2_ref,
                    ln1w_ref, ln1b_ref, ln2w_ref, ln2b_ref, ln3w_ref, ln3b_ref,
                    lnfw_ref, lnfb_ref,
                    out_ref, out_norm_ref, *, BB, Lt, Lm):
    D = D_MODEL
    x = tgt_ref[...].astype(jnp.float32).reshape(BB * Lt, D)     # (BB*Lt, D)
    mem = mem_ref[...].astype(jnp.float32).reshape(BB * Lm, D)   # (BB*Lm, D)
    pos = pos_ref[...].astype(jnp.float32).reshape(BB * Lm, D)
    qpos = qpos_ref[...].astype(jnp.float32).reshape(BB * Lt, D)

    mem_k = mem + pos            # cross-attn key input, shared by all layers

    for l in range(N_LAYERS):    # static unroll over layers
        # ---- self-attention (q = k = x + query_pos, v = x), post-norm ----
        qk_in = x + qpos
        sa = _mha(qk_in, qk_in, x,
                  wqkv_s_ref[l], bqkv_s_ref[l], wo_s_ref[l], bo_s_ref[l],
                  BB, Lt, Lt)
        x = _ln(x + sa, ln1w_ref[l], ln1b_ref[l])

        # ---- cross-attention (q = x + query_pos, k = mem + pos, v = mem) ----
        ca = _mha(x + qpos, mem_k, mem,
                  wqkv_c_ref[l], bqkv_c_ref[l], wo_c_ref[l], bo_c_ref[l],
                  BB, Lt, Lm)
        x = _ln(x + ca, ln2w_ref[l], ln2b_ref[l])

        # ---- FFN: linear1 + ReLU + linear2 + residual + norm3 ----
        h = jnp.maximum(
            jnp.dot(x.astype(jnp.bfloat16), w1_ref[l],
                    preferred_element_type=jnp.float32) + b1_ref[l], 0.0)
        ff = jnp.dot(h.astype(jnp.bfloat16), w2_ref[l],
                     preferred_element_type=jnp.float32) + b2_ref[l]
        x = _ln(x + ff, ln3w_ref[l], ln3b_ref[l])

    out_ref[...] = x.reshape(BB, Lt, D).astype(out_ref.dtype)
    xn = _ln(x, lnfw_ref[...], lnfb_ref[...])
    out_norm_ref[...] = xn.reshape(BB, Lt, D).astype(out_norm_ref.dtype)


# --------------------------------- wrapper ---------------------------------

def _num_tensorcores():
    """TensorCores per JAX device (v5e/v6e: 1, v7x/megacore: 2). Defensive: defaults to 1."""
    try:
        n = getattr(jax.devices()[0], "num_cores", None)
        if not n:
            info = pltpu.get_tpu_info()
            for attr in ("num_cores", "core_count", "num_tensorcores", "tensorcore_count"):
                n = getattr(info, attr, None)
                if n:
                    break
        return max(1, int(n)) if n else 1
    except Exception:
        return 1


def transformer_decoder_forward(tgt, memory, packed, pos=None, query_pos=None,
                                num_cores=1):
    """TransformerDecoder.forward (norm != None, return_intermediate=False).

    tgt: (L_tgt, B, D); memory/pos: (L_mem, B, D); query_pos: (L_tgt, B, D).
    Returns (norm_output, output), each (L_tgt, B, D).
    """
    Lt, B, D = tgt.shape
    Lm = memory.shape[0]
    if pos is None:
        pos = jnp.zeros_like(memory)
    if query_pos is None:
        query_pos = jnp.zeros_like(tgt)

    # (L, B, D) -> batch-major (B, L, D): each grid step (TensorCore) must own a
    # disjoint, BlockSpec-addressable batch block.  Tiny copies at these sizes.
    to_bm = lambda a: jnp.transpose(a, (1, 0, 2))
    tgt_b, mem_b, pos_b, qpos_b = (to_bm(tgt), to_bm(memory),
                                   to_bm(pos), to_bm(query_pos))

    # One batch-block per TensorCore; single block (== whole batch) on 1-TC chips
    # so they pay no extra grid steps / matmul splits.
    n_blocks = num_cores if (num_cores > 1 and B % num_cores == 0) else 1
    bb = B // n_blocks

    def act_spec(L):
        return pl.BlockSpec((bb, L, D), lambda i: (i, 0, 0))

    def full_spec(a):
        return pl.BlockSpec(a.shape, lambda i, _r=a.ndim: (0,) * _r)

    kernel = functools.partial(_decoder_kernel, BB=bb, Lt=Lt, Lm=Lm)
    out_b, out_norm_b = pl.pallas_call(
        kernel,
        grid=(n_blocks,),
        in_specs=[act_spec(Lt), act_spec(Lm), act_spec(Lm), act_spec(Lt)]
                 + [full_spec(w) for w in packed],
        out_specs=(act_spec(Lt), act_spec(Lt)),
        out_shape=(jax.ShapeDtypeStruct((B, Lt, D), tgt.dtype),
                   jax.ShapeDtypeStruct((B, Lt, D), tgt.dtype)),
        compiler_params=pltpu.CompilerParams(
            dimension_semantics=("parallel",)),
    )(tgt_b, mem_b, pos_b, qpos_b, *packed)

    back = lambda a: jnp.transpose(a, (1, 0, 2))
    return back(out_norm_b), back(out_b)


# ------------------------------ param handling ------------------------------

def _init_mha_params(key):
    k1, k2 = jax.random.split(key)
    return {
        "in_proj_weight": 0.02 * jax.random.normal(k1, (3 * D_MODEL, D_MODEL), jnp.float32),
        "in_proj_bias": jnp.zeros((3 * D_MODEL,), jnp.float32),
        "out_proj_weight": 0.02 * jax.random.normal(k2, (D_MODEL, D_MODEL), jnp.float32),
        "out_proj_bias": jnp.zeros((D_MODEL,), jnp.float32),
    }


def _init_layer_params(key):
    ks = jax.random.split(key, 4)
    return {
        "self_attn": _init_mha_params(ks[0]),
        "cross_attn": _init_mha_params(ks[1]),
        "linear1_w": 0.02 * jax.random.normal(ks[2], (D_FF, D_MODEL), jnp.float32),
        "linear1_b": jnp.zeros((D_FF,), jnp.float32),
        "linear2_w": 0.02 * jax.random.normal(ks[3], (D_MODEL, D_FF), jnp.float32),
        "linear2_b": jnp.zeros((D_MODEL,), jnp.float32),
        "norm1_w": jnp.ones((D_MODEL,), jnp.float32),
        "norm1_b": jnp.zeros((D_MODEL,), jnp.float32),
        "norm2_w": jnp.ones((D_MODEL,), jnp.float32),
        "norm2_b": jnp.zeros((D_MODEL,), jnp.float32),
        "norm3_w": jnp.ones((D_MODEL,), jnp.float32),
        "norm3_b": jnp.zeros((D_MODEL,), jnp.float32),
    }


def init_decoder_params(key):
    ks = jax.random.split(key, N_LAYERS)
    return {
        "layers": [_init_layer_params(ks[i]) for i in range(N_LAYERS)],
        "norm_w": jnp.ones((D_MODEL,), jnp.float32),
        "norm_b": jnp.zeros((D_MODEL,), jnp.float32),
    }


def pack_params(params):
    """PyTorch layout -> kernel layout: pre-transposed, scale-folded, bf16, layer-stacked."""
    qscale = jnp.concatenate([jnp.full((D_MODEL,), _SCALE, jnp.float32),
                              jnp.ones((2 * D_MODEL,), jnp.float32)])

    def mha_w(p):   # (3D, D) -> (D, 3D) bf16; 1/sqrt(dh) folded into the Q block
        return (p["in_proj_weight"] * qscale[:, None]).T.astype(jnp.bfloat16)

    def mha_b(p):
        return (p["in_proj_bias"] * qscale).reshape(1, -1).astype(jnp.float32)

    def stack(fn):
        return jnp.stack([fn(lp) for lp in params["layers"]], axis=0)

    return (
        stack(lambda lp: mha_w(lp["self_attn"])),                                   # (NL, D, 3D) bf16
        stack(lambda lp: mha_b(lp["self_attn"])),                                   # (NL, 1, 3D) f32
        stack(lambda lp: lp["self_attn"]["out_proj_weight"].T.astype(jnp.bfloat16)),
        stack(lambda lp: lp["self_attn"]["out_proj_bias"].reshape(1, -1)),
        stack(lambda lp: mha_w(lp["cross_attn"])),
        stack(lambda lp: mha_b(lp["cross_attn"])),
        stack(lambda lp: lp["cross_attn"]["out_proj_weight"].T.astype(jnp.bfloat16)),
        stack(lambda lp: lp["cross_attn"]["out_proj_bias"].reshape(1, -1)),
        stack(lambda lp: lp["linear1_w"].T.astype(jnp.bfloat16)),                    # (NL, D, DFF)
        stack(lambda lp: lp["linear1_b"].reshape(1, -1)),
        stack(lambda lp: lp["linear2_w"].T.astype(jnp.bfloat16)),                    # (NL, DFF, D)
        stack(lambda lp: lp["linear2_b"].reshape(1, -1)),
        stack(lambda lp: lp["norm1_w"].reshape(1, -1)),
        stack(lambda lp: lp["norm1_b"].reshape(1, -1)),
        stack(lambda lp: lp["norm2_w"].reshape(1, -1)),
        stack(lambda lp: lp["norm2_b"].reshape(1, -1)),
        stack(lambda lp: lp["norm3_w"].reshape(1, -1)),
        stack(lambda lp: lp["norm3_b"].reshape(1, -1)),
        params["norm_w"].reshape(1, -1),                                             # (1, D)
        params["norm_b"].reshape(1, -1),
    )


# ------------------------- pure-JAX reference (check) -------------------------

def _ref_ln(x, g, b):
    mu = x.mean(-1, keepdims=True)
    var = ((x - mu) ** 2).mean(-1, keepdims=True)
    return (x - mu) * jax.lax.rsqrt(var + LN_EPS) * g + b


def _ref_mha(q, k, v, p):
    Lq, B, D = q.shape
    Lk = k.shape[0]
    wq, wk, wv = jnp.split(p["in_proj_weight"], 3, axis=0)
    bq, bk, bv = jnp.split(p["in_proj_bias"], 3, axis=0)
    qp = q.reshape(Lq * B, D) @ wq.T + bq
    kp = k.reshape(Lk * B, D) @ wk.T + bk
    vp = v.reshape(Lk * B, D) @ wv.T + bv

    def split(x, L):
        return x.reshape(L, B, N_HEAD, D_HEAD).transpose(1, 2, 0, 3)

    qh, kh, vh = split(qp, Lq), split(kp, Lk), split(vp, Lk)
    s = jnp.einsum('bhqd,bhkd->bhqk', qh, kh) / (D_HEAD ** 0.5)
    a = jax.nn.softmax(s, axis=-1)
    o = jnp.einsum('bhqk,bhkd->bhqd', a, vh)
    o = o.transpose(2, 0, 1, 3).reshape(Lq * B, D)
    o = o @ p["out_proj_weight"].T + p["out_proj_bias"]
    return o.reshape(Lq, B, D)


def reference_forward(tgt, memory, params, pos, query_pos):
    out = tgt
    for lp in params["layers"]:
        qk = out + query_pos
        out = _ref_ln(out + _ref_mha(qk, qk, out, lp["self_attn"]),
                      lp["norm1_w"], lp["norm1_b"])
        out = _ref_ln(out + _ref_mha(out + query_pos, memory + pos, memory,
                                     lp["cross_attn"]),
                      lp["norm2_w"], lp["norm2_b"])
        h = jnp.maximum(out.reshape(-1, D_MODEL) @ lp["linear1_w"].T + lp["linear1_b"], 0.0)
        ff = (h @ lp["linear2_w"].T + lp["linear2_b"]).reshape(out.shape)
        out = _ref_ln(out + ff, lp["norm3_w"], lp["norm3_b"])
    norm_out = _ref_ln(out, params["norm_w"], params["norm_b"])
    return norm_out, out


# --------------------------------- main ---------------------------------

if __name__ == "__main__":
    key = jax.random.PRNGKey(0)
    k_tgt, k_mem, k_pos, k_qpos, k_par = jax.random.split(key, 5)

    L_TGT, L_MEM, B = 8, 16, 2
    tgt = jax.random.normal(k_tgt, (L_TGT, B, D_MODEL), jnp.float32)
    memory = jax.random.normal(k_mem, (L_MEM, B, D_MODEL), jnp.float32)
    pos = 0.1 * jax.random.normal(k_pos, (L_MEM, B, D_MODEL), jnp.float32)
    query_pos = 0.1 * jax.random.normal(k_qpos, (L_TGT, B, D_MODEL), jnp.float32)

    params = init_decoder_params(k_par)
    packed = pack_params(params)          # pre-transposed / scale-folded / bf16 (host, once)
    n_cores = _num_tensorcores()          # 1 on v5e/v6e, 2 on v7x-style megacore devices

    fwd = jax.jit(functools.partial(transformer_decoder_forward, num_cores=n_cores))
    norm_output, output = fwd(tgt, memory, packed, pos, query_pos)
    jax.block_until_ready((norm_output, output))

    assert norm_output.shape == (L_TGT, B, D_MODEL)
    assert output.shape == (L_TGT, B, D_MODEL)

    # numerical check vs. pure-JAX reference (kernel uses bf16 matmul operands)
    with jax.default_matmul_precision("highest"):
        ref_norm, ref_out = reference_forward(tgt, memory, params, pos, query_pos)
    assert jnp.allclose(norm_output, ref_norm, atol=1e-2, rtol=1e-2)
    assert jnp.allclose(output, ref_out, atol=1e-2, rtol=1e-2)

    print("KERNEL_OK")
</pallas_src>

<mosaic_0001>
module attributes {stable_mosaic.version = 11 : i64} {
  func.func @_decoder_kernel(%arg0: i32, %arg1: memref<2x8x32xf32, #tpu.memory_space<vmem>>, %arg2: memref<2x16x32xf32, #tpu.memory_space<vmem>>, %arg3: memref<2x16x32xf32, #tpu.memory_space<vmem>>, %arg4: memref<2x8x32xf32, #tpu.memory_space<vmem>>, %arg5: memref<2x32x96xbf16, #tpu.memory_space<vmem>>, %arg6: memref<2x1x96xf32, #tpu.memory_space<vmem>>, %arg7: memref<2x32x32xbf16, #tpu.memory_space<vmem>>, %arg8: memref<2x1x32xf32, #tpu.memory_space<vmem>>, %arg9: memref<2x32x96xbf16, #tpu.memory_space<vmem>>, %arg10: memref<2x1x96xf32, #tpu.memory_space<vmem>>, %arg11: memref<2x32x32xbf16, #tpu.memory_space<vmem>>, %arg12: memref<2x1x32xf32, #tpu.memory_space<vmem>>, %arg13: memref<2x32x64xbf16, #tpu.memory_space<vmem>>, %arg14: memref<2x1x64xf32, #tpu.memory_space<vmem>>, %arg15: memref<2x64x32xbf16, #tpu.memory_space<vmem>>, %arg16: memref<2x1x32xf32, #tpu.memory_space<vmem>>, %arg17: memref<2x1x32xf32, #tpu.memory_space<vmem>>, %arg18: memref<2x1x32xf32, #tpu.memory_space<vmem>>, %arg19: memref<2x1x32xf32, #tpu.memory_space<vmem>>, %arg20: memref<2x1x32xf32, #tpu.memory_space<vmem>>, %arg21: memref<2x1x32xf32, #tpu.memory_space<vmem>>, %arg22: memref<2x1x32xf32, #tpu.memory_space<vmem>>, %arg23: memref<1x32xf32, #tpu.memory_space<vmem>>, %arg24: memref<1x32xf32, #tpu.memory_space<vmem>>, %arg25: memref<2x8x32xf32, #tpu.memory_space<vmem>>, %arg26: memref<2x8x32xf32, #tpu.memory_space<vmem>>) attributes {dimension_semantics = [#tpu.dimension_semantics<parallel>], iteration_bounds = array<i64: 1>, scalar_prefetch = 0 : i64, scratch_operands = 0 : i64, tpu.core_type = #tpu.core_type<tc>, window_params = [{transform_indices = @transform_0, window_bounds = array<i64: 2, 8, 32>}, {transform_indices = @transform_1, window_bounds = array<i64: 2, 16, 32>}, {transform_indices = @transform_2, window_bounds = array<i64: 2, 16, 32>}, {transform_indices = @transform_3, window_bounds = array<i64: 2, 8, 32>}, {pipeline_mode = #tpu.pipeline_mode<synchronous>, transform_indices = @transform_4, window_bounds = array<i64: 2, 32, 96>}, {pipeline_mode = #tpu.pipeline_mode<synchronous>, transform_indices = @transform_5, window_bounds = array<i64: 2, 1, 96>}, {pipeline_mode = #tpu.pipeline_mode<synchronous>, transform_indices = @transform_6, window_bounds = array<i64: 2, 32, 32>}, {pipeline_mode = #tpu.pipeline_mode<synchronous>, transform_indices = @transform_7, window_bounds = array<i64: 2, 1, 32>}, {pipeline_mode = #tpu.pipeline_mode<synchronous>, transform_indices = @transform_8, window_bounds = array<i64: 2, 32, 96>}, {pipeline_mode = #tpu.pipeline_mode<synchronous>, transform_indices = @transform_9, window_bounds = array<i64: 2, 1, 96>}, {pipeline_mode = #tpu.pipeline_mode<synchronous>, transform_indices = @transform_10, window_bounds = array<i64: 2, 32, 32>}, {pipeline_mode = #tpu.pipeline_mode<synchronous>, transform_indices = @transform_11, window_bounds = array<i64: 2, 1, 32>}, {pipeline_mode = #tpu.pipeline_mode<synchronous>, transform_indices = @transform_12, window_bounds = array<i64: 2, 32, 64>}, {pipeline_mode = #tpu.pipeline_mode<synchronous>, transform_indices = @transform_13, window_bounds = array<i64: 2, 1, 64>}, {pipeline_mode = #tpu.pipeline_mode<synchronous>, transform_indices = @transform_14, window_bounds = array<i64: 2, 64, 32>}, {pipeline_mode = #tpu.pipeline_mode<synchronous>, transform_indices = @transform_15, window_bounds = array<i64: 2, 1, 32>}, {pipeline_mode = #tpu.pipeline_mode<synchronous>, transform_indices = @transform_16, window_bounds = array<i64: 2, 1, 32>}, {pipeline_mode = #tpu.pipeline_mode<synchronous>, transform_indices = @transform_17, window_bounds = array<i64: 2, 1, 32>}, {pipeline_mode = #tpu.pipeline_mode<synchronous>, transform_indices = @transform_18, window_bounds = array<i64: 2, 1, 32>}, {pipeline_mode = #tpu.pipeline_mode<synchronous>, transform_indices = @transform_19, window_bounds = array<i64: 2, 1, 32>}, {pipeline_mode = #tpu.pipeline_mode<synchronous>, transform_indices = @transform_20, window_bounds = array<i64: 2, 1, 32>}, {pipeline_mode = #tpu.pipeline_mode<synchronous>, transform_indices = @transform_21, window_bounds = array<i64: 2, 1, 32>}, {pipeline_mode = #tpu.pipeline_mode<synchronous>, transform_indices = @transform_22, window_bounds = array<i64: 1, 32>}, {pipeline_mode = #tpu.pipeline_mode<synchronous>, transform_indices = @transform_23, window_bounds = array<i64: 1, 32>}, {transform_indices = @transform_24, window_bounds = array<i64: 2, 8, 32>}, {transform_indices = @transform_25, window_bounds = array<i64: 2, 8, 32>}]} {
    %c0 = arith.constant 0 : index
    %c0_0 = arith.constant 0 : index
    %c0_1 = arith.constant 0 : index
    %0 = vector.load %arg1[%c0, %c0_0, %c0_1] : memref<2x8x32xf32, #tpu.memory_space<vmem>>, vector<2x8x32xf32>
    %1 = vector.shape_cast %0 : vector<2x8x32xf32> to vector<16x32xf32>
    %c0_2 = arith.constant 0 : index
    %c0_3 = arith.constant 0 : index
    %c0_4 = arith.constant 0 : index
    %2 = vector.load %arg2[%c0_2, %c0_3, %c0_4] : memref<2x16x32xf32, #tpu.memory_space<vmem>>, vector<2x16x32xf32>
    %3 = vector.shape_cast %2 : vector<2x16x32xf32> to vector<32x32xf32>
    %c0_5 = arith.constant 0 : index
    %c0_6 = arith.constant 0 : index
    %c0_7 = arith.constant 0 : index
    %4 = vector.load %arg3[%c0_5, %c0_6, %c0_7] : memref<2x16x32xf32, #tpu.memory_space<vmem>>, vector<2x16x32xf32>
    %5 = vector.shape_cast %4 : vector<2x16x32xf32> to vector<32x32xf32>
    %c0_8 = arith.constant 0 : index
    %c0_9 = arith.constant 0 : index
    %c0_10 = arith.constant 0 : index
    %6 = vector.load %arg4[%c0_8, %c0_9, %c0_10] : memref<2x8x32xf32, #tpu.memory_space<vmem>>, vector<2x8x32xf32>
    %7 = vector.shape_cast %6 : vector<2x8x32xf32> to vector<16x32xf32>
    %8 = arith.addf %3, %5 : vector<32x32xf32>
    %9 = arith.addf %1, %7 : vector<16x32xf32>
    %c0_11 = arith.constant 0 : index
    %c0_12 = arith.constant 0 : index
    %c0_13 = arith.constant 0 : index
    %10 = vector.load %arg5[%c0_11, %c0_12, %c0_13] : memref<2x32x96xbf16, #tpu.memory_space<vmem>>, vector<1x32x96xbf16>
    %11 = vector.shape_cast %10 : vector<1x32x96xbf16> to vector<32x96xbf16>
    %c0_14 = arith.constant 0 : index
    %c0_15 = arith.constant 0 : index
    %c0_16 = arith.constant 0 : index
    %12 = vector.load %arg6[%c0_14, %c0_15, %c0_16] : memref<2x1x96xf32, #tpu.memory_space<vmem>>, vector<1x1x96xf32>
    %13 = vector.shape_cast %12 : vector<1x1x96xf32> to vector<1x96xf32>
    %c0_17 = arith.constant 0 : index
    %c0_18 = arith.constant 0 : index
    %c0_19 = arith.constant 0 : index
    %14 = vector.load %arg7[%c0_17, %c0_18, %c0_19] : memref<2x32x32xbf16, #tpu.memory_space<vmem>>, vector<1x32x32xbf16>
    %15 = vector.shape_cast %14 : vector<1x32x32xbf16> to vector<32x32xbf16>
    %c0_20 = arith.constant 0 : index
    %c0_21 = arith.constant 0 : index
    %c0_22 = arith.constant 0 : index
    %16 = vector.load %arg8[%c0_20, %c0_21, %c0_22] : memref<2x1x32xf32, #tpu.memory_space<vmem>>, vector<1x1x32xf32>
    %17 = vector.shape_cast %16 : vector<1x1x32xf32> to vector<1x32xf32>
    %18 = arith.truncf %9 : vector<16x32xf32> to vector<16x32xbf16>
    %19 = vector.extract_strided_slice %11 {offsets = [0, 0], sizes = [32, 64], strides = [1, 1]} : vector<32x96xbf16> to vector<32x64xbf16>
    %cst = arith.constant dense<0.000000e+00> : vector<16x64xf32>
    %20 = tpu.matmul %18, %19, %cst {dimension_numbers = #tpu.dot_dimension_numbers<[1], [0], [0], [1], [0, 0, 1, 1], [], []>} : vector<16x32xbf16>, vector<32x64xbf16>, vector<16x64xf32> -> vector<16x64xf32>
    %21 = vector.extract_strided_slice %13 {offsets = [0, 0], sizes = [1, 64], strides = [1, 1]} : vector<1x96xf32> to vector<1x64xf32>
    %22 = vector.broadcast %21 : vector<1x64xf32> to vector<16x64xf32>
    %23 = arith.addf %20, %22 : vector<16x64xf32>
    %24 = vector.extract_strided_slice %23 {offsets = [0, 0], sizes = [16, 32], strides = [1, 1]} : vector<16x64xf32> to vector<16x32xf32>
    %25 = vector.extract_strided_slice %23 {offsets = [0, 32], sizes = [16, 32], strides = [1, 1]} : vector<16x64xf32> to vector<16x32xf32>
    %26 = arith.truncf %1 : vector<16x32xf32> to vector<16x32xbf16>
    %27 = vector.extract_strided_slice %11 {offsets = [0, 64], sizes = [32, 32], strides = [1, 1]} : vector<32x96xbf16> to vector<32x32xbf16>
    %cst_23 = arith.constant dense<0.000000e+00> : vector<16x32xf32>
    %28 = tpu.matmul %26, %27, %cst_23 {dimension_numbers = #tpu.dot_dimension_numbers<[1], [0], [0], [1], [0, 0, 1, 1], [], []>} : vector<16x32xbf16>, vector<32x32xbf16>, vector<16x32xf32> -> vector<16x32xf32>
    %29 = vector.extract_strided_slice %13 {offsets = [0, 64], sizes = [1, 32], strides = [1, 1]} : vector<1x96xf32> to vector<1x32xf32>
    %30 = vector.broadcast %29 : vector<1x32xf32> to vector<16x32xf32>
    %31 = arith.addf %28, %30 : vector<16x32xf32>
    %32 = arith.truncf %24 : vector<16x32xf32> to vector<16x32xbf16>
    %33 = vector.shape_cast %32 : vector<16x32xbf16> to vector<2x8x4x8xbf16>
    %34 = tpu.transpose %33, [0, 2, 1, 3] : vector<2x8x4x8xbf16> -> vector<2x4x8x8xbf16>
    %35 = vector.shape_cast %34 : vector<2x4x8x8xbf16> to vector<8x8x8xbf16>
    %36 = arith.truncf %25 : vector<16x32xf32> to vector<16x32xbf16>
    %37 = vector.shape_cast %36 : vector<16x32xbf16> to vector<2x8x4x8xbf16>
    %38 = tpu.transpose %37, [0, 2, 1, 3] : vector<2x8x4x8xbf16> -> vector<2x4x8x8xbf16>
    %39 = vector.shape_cast %38 : vector<2x4x8x8xbf16> to vector<8x8x8xbf16>
    %40 = arith.truncf %31 : vector<16x32xf32> to vector<16x32xbf16>
    %41 = vector.shape_cast %40 : vector<16x32xbf16> to vector<2x8x4x8xbf16>
    %42 = tpu.transpose %41, [0, 2, 1, 3] : vector<2x8x4x8xbf16> -> vector<2x4x8x8xbf16>
    %43 = vector.shape_cast %42 : vector<2x4x8x8xbf16> to vector<8x8x8xbf16>
    "tpu.trace_start"() <{level = 10 : i32, message = "bqd,bkd->bqk"}> : () -> ()
    %cst_24 = arith.constant dense<0.000000e+00> : vector<8x8x8xf32>
    %44 = tpu.matmul %35, %39, %cst_24 {dimension_numbers = #tpu.dot_dimension_numbers<[2], [2], [1], [1], [0, 0, 0, 1, 1, 1], [0], [0]>} : vector<8x8x8xbf16>, vector<8x8x8xbf16>, vector<8x8x8xf32> -> vector<8x8x8xf32>
    "tpu.trace_stop"() : () -> ()
    %cst_25 = arith.constant dense<0xFF800000> : vector<8x8xf32>
    %45 = vector.multi_reduction <maximumf>, %44, %cst_25 [2] : vector<8x8x8xf32> to vector<8x8xf32>
    %46 = vector.shape_cast %45 : vector<8x8xf32> to vector<8x8x1xf32>
    %47 = vector.broadcast %46 : vector<8x8x1xf32> to vector<8x8x8xf32>
    %48 = arith.subf %44, %47 : vector<8x8x8xf32>
    %49 = math.exp %48 : vector<8x8x8xf32>
    %cst_26 = arith.constant dense<0.000000e+00> : vector<8x8xf32>
    %50 = vector.multi_reduction <add>, %49, %cst_26 [2] : vector<8x8x8xf32> to vector<8x8xf32>
    %51 = vector.shape_cast %50 : vector<8x8xf32> to vector<8x8x1xf32>
    %52 = tpu.reciprocal %51 {approx = true} : vector<8x8x1xf32> -> vector<8x8x1xf32>
    %53 = vector.broadcast %52 : vector<8x8x1xf32> to vector<8x8x8xf32>
    %54 = arith.mulf %49, %53 : vector<8x8x8xf32>
    %55 = arith.truncf %54 : vector<8x8x8xf32> to vector<8x8x8xbf16>
    "tpu.trace_start"() <{level = 10 : i32, message = "bqk,bkd->bqd"}> : () -> ()
    %cst_27 = arith.constant dense<0.000000e+00> : vector<8x8x8xf32>
    %56 = tpu.matmul %55, %43, %cst_27 {dimension_numbers = #tpu.dot_dimension_numbers<[2], [1], [1], [2], [0, 0, 0, 1, 1, 2], [0], [0]>} : vector<8x8x8xbf16>, vector<8x8x8xbf16>, vector<8x8x8xf32> -> vector<8x8x8xf32>
    "tpu.trace_stop"() : () -> ()
    %57 = vector.shape_cast %56 : vector<8x8x8xf32> to vector<2x4x8x8xf32>
    %58 = tpu.transpose %57, [0, 2, 1, 3] : vector<2x4x8x8xf32> -> vector<2x8x4x8xf32>
    %59 = vector.shape_cast %58 : vector<2x8x4x8xf32> to vector<16x32xf32>
    %60 = arith.truncf %59 : vector<16x32xf32> to vector<16x32xbf16>
    %cst_28 = arith.constant dense<0.000000e+00> : vector<16x32xf32>
    %61 = tpu.matmul %60, %15, %cst_28 {dimension_numbers = #tpu.dot_dimension_numbers<[1], [0], [0], [1], [0, 0, 1, 1], [], []>} : vector<16x32xbf16>, vector<32x32xbf16>, vector<16x32xf32> -> vector<16x32xf32>
    %62 = vector.broadcast %17 : vector<1x32xf32> to vector<16x32xf32>
    %63 = arith.addf %61, %62 : vector<16x32xf32>
    %64 = arith.addf %1, %63 : vector<16x32xf32>
    %c0_29 = arith.constant 0 : index
    %c0_30 = arith.constant 0 : index
    %c0_31 = arith.constant 0 : index
    %65 = vector.load %arg17[%c0_29, %c0_30, %c0_31] : memref<2x1x32xf32, #tpu.memory_space<vmem>>, vector<1x1x32xf32>
    %66 = vector.shape_cast %65 : vector<1x1x32xf32> to vector<1x32xf32>
    %c0_32 = arith.constant 0 : index
    %c0_33 = arith.constant 0 : index
    %c0_34 = arith.constant 0 : index
    %67 = vector.load %arg18[%c0_32, %c0_33, %c0_34] : memref<2x1x32xf32, #tpu.memory_space<vmem>>, vector<1x1x32xf32>
    %68 = vector.shape_cast %67 : vector<1x1x32xf32> to vector<1x32xf32>
    %cst_35 = arith.constant dense<0.000000e+00> : vector<16xf32>
    %69 = vector.multi_reduction <add>, %64, %cst_35 [1] : vector<16x32xf32> to vector<16xf32>
    %70 = vector.shape_cast %69 : vector<16xf32> to vector<16x1xf32>
    %cst_36 = arith.constant 3.200000e+01 : f32
    %71 = vector.broadcast %cst_36 : f32 to vector<16x1xf32>
    %72 = arith.divf %70, %71 : vector<16x1xf32>
    %73 = vector.broadcast %72 : vector<16x1xf32> to vector<16x32xf32>
    %74 = arith.subf %64, %73 : vector<16x32xf32>
    %75 = arith.mulf %74, %74 : vector<16x32xf32>
    %cst_37 = arith.constant dense<0.000000e+00> : vector<16xf32>
    %76 = vector.multi_reduction <add>, %75, %cst_37 [1] : vector<16x32xf32> to vector<16xf32>
    %77 = vector.shape_cast %76 : vector<16xf32> to vector<16x1xf32>
    %cst_38 = arith.constant 3.200000e+01 : f32
    %78 = vector.broadcast %cst_38 : f32 to vector<16x1xf32>
    %79 = arith.divf %77, %78 : vector<16x1xf32>
    %cst_39 = arith.constant 9.99999974E-6 : f32
    %80 = vector.broadcast %cst_39 : f32 to vector<16x1xf32>
    %81 = arith.addf %79, %80 : vector<16x1xf32>
    %82 = math.rsqrt %81 : vector<16x1xf32>
    %83 = vector.broadcast %82 : vector<16x1xf32> to vector<16x32xf32>
    %84 = arith.mulf %74, %83 : vector<16x32xf32>
    %85 = vector.broadcast %66 : vector<1x32xf32> to vector<16x32xf32>
    %86 = arith.mulf %84, %85 : vector<16x32xf32>
    %87 = vector.broadcast %68 : vector<1x32xf32> to vector<16x32xf32>
    %88 = arith.addf %86, %87 : vector<16x32xf32>
    %89 = arith.addf %88, %7 : vector<16x32xf32>
    %c0_40 = arith.constant 0 : index
    %c0_41 = arith.constant 0 : index
    %c0_42 = arith.constant 0 : index
    %90 = vector.load %arg9[%c0_40, %c0_41, %c0_42] : memref<2x32x96xbf16, #tpu.memory_space<vmem>>, vector<1x32x96xbf16>
    %91 = vector.shape_cast %90 : vector<1x32x96xbf16> to vector<32x96xbf16>
    %c0_43 = arith.constant 0 : index
    %c0_44 = arith.constant 0 : index
    %c0_45 = arith.constant 0 : index
    %92 = vector.load %arg10[%c0_43, %c0_44, %c0_45] : memref<2x1x96xf32, #tpu.memory_space<vmem>>, vector<1x1x96xf32>
    %93 = vector.shape_cast %92 : vector<1x1x96xf32> to vector<1x96xf32>
    %c0_46 = arith.constant 0 : index
    %c0_47 = arith.constant 0 : index
    %c0_48 = arith.constant 0 : index
    %94 = vector.load %arg11[%c0_46, %c0_47, %c0_48] : memref<2x32x32xbf16, #tpu.memory_space<vmem>>, vector<1x32x32xbf16>
    %95 = vector.shape_cast %94 : vector<1x32x32xbf16> to vector<32x32xbf16>
    %c0_49 = arith.constant 0 : index
    %c0_50 = arith.constant 0 : index
    %c0_51 = arith.constant 0 : index
    %96 = vector.load %arg12[%c0_49, %c0_50, %c0_51] : memref<2x1x32xf32, #tpu.memory_space<vmem>>, vector<1x1x32xf32>
    %97 = vector.shape_cast %96 : vector<1x1x32xf32> to vector<1x32xf32>
    %98 = arith.truncf %89 : vector<16x32xf32> to vector<16x32xbf16>
    %99 = vector.extract_strided_slice %91 {offsets = [0, 0], sizes = [32, 32], strides = [1, 1]} : vector<32x96xbf16> to vector<32x32xbf16>
    %cst_52 = arith.constant dense<0.000000e+00> : vector<16x32xf32>
    %100 = tpu.matmul %98, %99, %cst_52 {dimension_numbers = #tpu.dot_dimension_numbers<[1], [0], [0], [1], [0, 0, 1, 1], [], []>} : vector<16x32xbf16>, vector<32x32xbf16>, vector<16x32xf32> -> vector<16x32xf32>
    %101 = vector.extract_strided_slice %93 {offsets = [0, 0], sizes = [1, 32], strides = [1, 1]} : vector<1x96xf32> to vector<1x32xf32>
    %102 = vector.broadcast %101 : vector<1x32xf32> to vector<16x32xf32>
    %103 = arith.addf %100, %102 : vector<16x32xf32>
    %104 = arith.truncf %8 : vector<32x32xf32> to vector<32x32xbf16>
    %105 = vector.extract_strided_slice %91 {offsets = [0, 32], sizes = [32, 32], strides = [1, 1]} : vector<32x96xbf16> to vector<32x32xbf16>
    %cst_53 = arith.constant dense<0.000000e+00> : vector<32x32xf32>
    %106 = tpu.matmul %104, %105, %cst_53 {dimension_numbers = #tpu.dot_dimension_numbers<[1], [0], [0], [1], [0, 0, 1, 1], [], []>} : vector<32x32xbf16>, vector<32x32xbf16>, vector<32x32xf32> -> vector<32x32xf32>
    %107 = vector.extract_strided_slice %93 {offsets = [0, 32], sizes = [1, 32], strides = [1, 1]} : vector<1x96xf32> to vector<1x32xf32>
    %108 = vector.broadcast %107 : vector<1x32xf32> to vector<32x32xf32>
    %109 = arith.addf %106, %108 : vector<32x32xf32>
    %110 = arith.truncf %3 : vector<32x32xf32> to vector<32x32xbf16>
    %111 = vector.extract_strided_slice %91 {offsets = [0, 64], sizes = [32, 32], strides = [1, 1]} : vector<32x96xbf16> to vector<32x32xbf16>
    %cst_54 = arith.constant dense<0.000000e+00> : vector<32x32xf32>
    %112 = tpu.matmul %110, %111, %cst_54 {dimension_numbers = #tpu.dot_dimension_numbers<[1], [0], [0], [1], [0, 0, 1, 1], [], []>} : vector<32x32xbf16>, vector<32x32xbf16>, vector<32x32xf32> -> vector<32x32xf32>
    %113 = vector.extract_strided_slice %93 {offsets = [0, 64], sizes = [1, 32], strides = [1, 1]} : vector<1x96xf32> to vector<1x32xf32>
    %114 = vector.broadcast %113 : vector<1x32xf32> to vector<32x32xf32>
    %115 = arith.addf %112, %114 : vector<32x32xf32>
    %116 = arith.truncf %103 : vector<16x32xf32> to vector<16x32xbf16>
    %117 = vector.shape_cast %116 : vector<16x32xbf16> to vector<2x8x4x8xbf16>
    %118 = tpu.transpose %117, [0, 2, 1, 3] : vector<2x8x4x8xbf16> -> vector<2x4x8x8xbf16>
    %119 = vector.shape_cast %118 : vector<2x4x8x8xbf16> to vector<8x8x8xbf16>
    %120 = arith.truncf %109 : vector<32x32xf32> to vector<32x32xbf16>
    %121 = vector.shape_cast %120 : vector<32x32xbf16> to vector<2x16x4x8xbf16>
    %122 = tpu.transpose %121, [0, 2, 1, 3] : vector<2x16x4x8xbf16> -> vector<2x4x16x8xbf16>
    %123 = vector.shape_cast %122 : vector<2x4x16x8xbf16> to vector<8x16x8xbf16>
    %124 = arith.truncf %115 : vector<32x32xf32> to vector<32x32xbf16>
    %125 = vector.shape_cast %124 : vector<32x32xbf16> to vector<2x16x4x8xbf16>
    %126 = tpu.transpose %125, [0, 2, 1, 3] : vector<2x16x4x8xbf16> -> vector<2x4x16x8xbf16>
    %127 = vector.shape_cast %126 : vector<2x4x16x8xbf16> to vector<8x16x8xbf16>
    "tpu.trace_start"() <{level = 10 : i32, message = "bqd,bkd->bqk"}> : () -> ()
    %cst_55 = arith.constant dense<0.000000e+00> : vector<8x8x16xf32>
    %128 = tpu.matmul %119, %123, %cst_55 {dimension_numbers = #tpu.dot_dimension_numbers<[2], [2], [1], [1], [0, 0, 0, 1, 1, 1], [0], [0]>} : vector<8x8x8xbf16>, vector<8x16x8xbf16>, vector<8x8x16xf32> -> vector<8x8x16xf32>
    "tpu.trace_stop"() : () -> ()
    %cst_56 = arith.constant dense<0xFF800000> : vector<8x8xf32>
    %129 = vector.multi_reduction <maximumf>, %128, %cst_56 [2] : vector<8x8x16xf32> to vector<8x8xf32>
    %130 = vector.shape_cast %129 : vector<8x8xf32> to vector<8x8x1xf32>
    %131 = vector.broadcast %130 : vector<8x8x1xf32> to vector<8x8x16xf32>
    %132 = arith.subf %128, %131 : vector<8x8x16xf32>
    %133 = math.exp %132 : vector<8x8x16xf32>
    %cst_57 = arith.constant dense<0.000000e+00> : vector<8x8xf32>
    %134 = vector.multi_reduction <add>, %133, %cst_57 [2] : vector<8x8x16xf32> to vector<8x8xf32>
    %135 = vector.shape_cast %134 : vector<8x8xf32> to vector<8x8x1xf32>
    %136 = tpu.reciprocal %135 {approx = true} : vector<8x8x1xf32> -> vector<8x8x1xf32>
    %137 = vector.broadcast %136 : vector<8x8x1xf32> to vector<8x8x16xf32>
    %138 = arith.mulf %133, %137 : vector<8x8x16xf32>
    %139 = arith.truncf %138 : vector<8x8x16xf32> to vector<8x8x16xbf16>
    "tpu.trace_start"() <{level = 10 : i32, message = "bqk,bkd->bqd"}> : () -> ()
    %cst_58 = arith.constant dense<0.000000e+00> : vector<8x8x8xf32>
    %140 = tpu.matmul %139, %127, %cst_58 {dimension_numbers = #tpu.dot_dimension_numbers<[2], [1], [1], [2], [0, 0, 0, 1, 1, 2], [0], [0]>} : vector<8x8x16xbf16>, vector<8x16x8xbf16>, vector<8x8x8xf32> -> vector<8x8x8xf32>
    "tpu.trace_stop"() : () -> ()
    %141 = vector.shape_cast %140 : vector<8x8x8xf32> to vector<2x4x8x8xf32>
    %142 = tpu.transpose %141, [0, 2, 1, 3] : vector<2x4x8x8xf32> -> vector<2x8x4x8xf32>
    %143 = vector.shape_cast %142 : vector<2x8x4x8xf32> to vector<16x32xf32>
    %144 = arith.truncf %143 : vector<16x32xf32> to vector<16x32xbf16>
    %cst_59 = arith.constant dense<0.000000e+00> : vector<16x32xf32>
    %145 = tpu.matmul %144, %95, %cst_59 {dimension_numbers = #tpu.dot_dimension_numbers<[1], [0], [0], [1], [0, 0, 1, 1], [], []>} : vector<16x32xbf16>, vector<32x32xbf16>, vector<16x32xf32> -> vector<16x32xf32>
    %146 = vector.broadcast %97 : vector<1x32xf32> to vector<16x32xf32>
    %147 = arith.addf %145, %146 : vector<16x32xf32>
    %148 = arith.addf %88, %147 : vector<16x32xf32>
    %c0_60 = arith.constant 0 : index
    %c0_61 = arith.constant 0 : index
    %c0_62 = arith.constant 0 : index
    %149 = vector.load %arg19[%c0_60, %c0_61, %c0_62] : memref<2x1x32xf32, #tpu.memory_space<vmem>>, vector<1x1x32xf32>
    %150 = vector.shape_cast %149 : vector<1x1x32xf32> to vector<1x32xf32>
    %c0_63 = arith.constant 0 : index
    %c0_64 = arith.constant 0 : index
    %c0_65 = arith.constant 0 : index
    %151 = vector.load %arg20[%c0_63, %c0_64, %c0_65] : memref<2x1x32xf32, #tpu.memory_space<vmem>>, vector<1x1x32xf32>
    %152 = vector.shape_cast %151 : vector<1x1x32xf32> to vector<1x32xf32>
    %cst_66 = arith.constant dense<0.000000e+00> : vector<16xf32>
    %153 = vector.multi_reduction <add>, %148, %cst_66 [1] : vector<16x32xf32> to vector<16xf32>
    %154 = vector.shape_cast %153 : vector<16xf32> to vector<16x1xf32>
    %cst_67 = arith.constant 3.200000e+01 : f32
    %155 = vector.broadcast %cst_67 : f32 to vector<16x1xf32>
    %156 = arith.divf %154, %155 : vector<16x1xf32>
    %157 = vector.broadcast %156 : vector<16x1xf32> to vector<16x32xf32>
    %158 = arith.subf %148, %157 : vector<16x32xf32>
    %159 = arith.mulf %158, %158 : vector<16x32xf32>
    %cst_68 = arith.constant dense<0.000000e+00> : vector<16xf32>
    %160 = vector.multi_reduction <add>, %159, %cst_68 [1] : vector<16x32xf32> to vector<16xf32>
    %161 = vector.shape_cast %160 : vector<16xf32> to vector<16x1xf32>
    %cst_69 = arith.constant 3.200000e+01 : f32
    %162 = vector.broadcast %cst_69 : f32 to vector<16x1xf32>
    %163 = arith.divf %161, %162 : vector<16x1xf32>
    %cst_70 = arith.constant 9.99999974E-6 : f32
    %164 = vector.broadcast %cst_70 : f32 to vector<16x1xf32>
    %165 = arith.addf %163, %164 : vector<16x1xf32>
    %166 = math.rsqrt %165 : vector<16x1xf32>
    %167 = vector.broadcast %166 : vector<16x1xf32> to vector<16x32xf32>
    %168 = arith.mulf %158, %167 : vector<16x32xf32>
    %169 = vector.broadcast %150 : vector<1x32xf32> to vector<16x32xf32>
    %170 = arith.mulf %168, %169 : vector<16x32xf32>
    %171 = vector.broadcast %152 : vector<1x32xf32> to vector<16x32xf32>
    %172 = arith.addf %170, %171 : vector<16x32xf32>
    %173 = arith.truncf %172 : vector<16x32xf32> to vector<16x32xbf16>
    %c0_71 = arith.constant 0 : index
    %c0_72 = arith.constant 0 : index
    %c0_73 = arith.constant 0 : index
    %174 = vector.load %arg13[%c0_71, %c0_72, %c0_73] : memref<2x32x64xbf16, #tpu.memory_space<vmem>>, vector<1x32x64xbf16>
    %175 = vector.shape_cast %174 : vector<1x32x64xbf16> to vector<32x64xbf16>
    %cst_74 = arith.constant dense<0.000000e+00> : vector<16x64xf32>
    %176 = tpu.matmul %173, %175, %cst_74 {dimension_numbers = #tpu.dot_dimension_numbers<[1], [0], [0], [1], [0, 0, 1, 1], [], []>} : vector<16x32xbf16>, vector<32x64xbf16>, vector<16x64xf32> -> vector<16x64xf32>
    %c0_75 = arith.constant 0 : index
    %c0_76 = arith.constant 0 : index
    %c0_77 = arith.constant 0 : index
    %177 = vector.load %arg14[%c0_75, %c0_76, %c0_77] : memref<2x1x64xf32, #tpu.memory_space<vmem>>, vector<1x1x64xf32>
    %178 = vector.shape_cast %177 : vector<1x1x64xf32> to vector<1x64xf32>
    %179 = vector.broadcast %178 : vector<1x64xf32> to vector<16x64xf32>
    %180 = arith.addf %176, %179 : vector<16x64xf32>
    %cst_78 = arith.constant 0.000000e+00 : f32
    %181 = vector.broadcast %cst_78 : f32 to vector<16x64xf32>
    %182 = arith.maximumf %180, %181 : vector<16x64xf32>
    %183 = arith.truncf %182 : vector<16x64xf32> to vector<16x64xbf16>
    %c0_79 = arith.constant 0 : index
    %c0_80 = arith.constant 0 : index
    %c0_81 = arith.constant 0 : index
    %184 = vector.load %arg15[%c0_79, %c0_80, %c0_81] : memref<2x64x32xbf16, #tpu.memory_space<vmem>>, vector<1x64x32xbf16>
    %185 = vector.shape_cast %184 : vector<1x64x32xbf16> to vector<64x32xbf16>
    %cst_82 = arith.constant dense<0.000000e+00> : vector<16x32xf32>
    %186 = tpu.matmul %183, %185, %cst_82 {dimension_numbers = #tpu.dot_dimension_numbers<[1], [0], [0], [1], [0, 0, 1, 1], [], []>} : vector<16x64xbf16>, vector<64x32xbf16>, vector<16x32xf32> -> vector<16x32xf32>
    %c0_83 = arith.constant 0 : index
    %c0_84 = arith.constant 0 : index
    %c0_85 = arith.constant 0 : index
    %187 = vector.load %arg16[%c0_83, %c0_84, %c0_85] : memref<2x1x32xf32, #tpu.memory_space<vmem>>, vector<1x1x32xf32>
    %188 = vector.shape_cast %187 : vector<1x1x32xf32> to vector<1x32xf32>
    %189 = vector.broadcast %188 : vector<1x32xf32> to vector<16x32xf32>
    %190 = arith.addf %186, %189 : vector<16x32xf32>
    %191 = arith.addf %172, %190 : vector<16x32xf32>
    %c0_86 = arith.constant 0 : index
    %c0_87 = arith.constant 0 : index
    %c0_88 = arith.constant 0 : index
    %192 = vector.load %arg21[%c0_86, %c0_87, %c0_88] : memref<2x1x32xf32, #tpu.memory_space<vmem>>, vector<1x1x32xf32>
    %193 = vector.shape_cast %192 : vector<1x1x32xf32> to vector<1x32xf32>
    %c0_89 = arith.constant 0 : index
    %c0_90 = arith.constant 0 : index
    %c0_91 = arith.constant 0 : index
    %194 = vector.load %arg22[%c0_89, %c0_90, %c0_91] : memref<2x1x32xf32, #tpu.memory_space<vmem>>, vector<1x1x32xf32>
    %195 = vector.shape_cast %194 : vector<1x1x32xf32> to vector<1x32xf32>
    %cst_92 = arith.constant dense<0.000000e+00> : vector<16xf32>
    %196 = vector.multi_reduction <add>, %191, %cst_92 [1] : vector<16x32xf32> to vector<16xf32>
    %197 = vector.shape_cast %196 : vector<16xf32> to vector<16x1xf32>
    %cst_93 = arith.constant 3.200000e+01 : f32
    %198 = vector.broadcast %cst_93 : f32 to vector<16x1xf32>
    %199 = arith.divf %197, %198 : vector<16x1xf32>
    %200 = vector.broadcast %199 : vector<16x1xf32> to vector<16x32xf32>
    %201 = arith.subf %191, %200 : vector<16x32xf32>
    %202 = arith.mulf %201, %201 : vector<16x32xf32>
    %cst_94 = arith.constant dense<0.000000e+00> : vector<16xf32>
    %203 = vector.multi_reduction <add>, %202, %cst_94 [1] : vector<16x32xf32> to vector<16xf32>
    %204 = vector.shape_cast %203 : vector<16xf32> to vector<16x1xf32>
    %cst_95 = arith.constant 3.200000e+01 : f32
    %205 = vector.broadcast %cst_95 : f32 to vector<16x1xf32>
    %206 = arith.divf %204, %205 : vector<16x1xf32>
    %cst_96 = arith.constant 9.99999974E-6 : f32
    %207 = vector.broadcast %cst_96 : f32 to vector<16x1xf32>
    %208 = arith.addf %206, %207 : vector<16x1xf32>
    %209 = math.rsqrt %208 : vector<16x1xf32>
    %210 = vector.broadcast %209 : vector<16x1xf32> to vector<16x32xf32>
    %211 = arith.mulf %201, %210 : vector<16x32xf32>
    %212 = vector.broadcast %193 : vector<1x32xf32> to vector<16x32xf32>
    %213 = arith.mulf %211, %212 : vector<16x32xf32>
    %214 = vector.broadcast %195 : vector<1x32xf32> to vector<16x32xf32>
    %215 = arith.addf %213, %214 : vector<16x32xf32>
    %216 = arith.addf %215, %7 : vector<16x32xf32>
    %c1 = arith.constant 1 : index
    %c0_97 = arith.constant 0 : index
    %c0_98 = arith.constant 0 : index
    %217 = vector.load %arg5[%c1, %c0_97, %c0_98] : memref<2x32x96xbf16, #tpu.memory_space<vmem>>, vector<1x32x96xbf16>
    %218 = vector.shape_cast %217 : vector<1x32x96xbf16> to vector<32x96xbf16>
    %c1_99 = arith.constant 1 : index
    %c0_100 = arith.constant 0 : index
    %c0_101 = arith.constant 0 : index
    %219 = vector.load %arg6[%c1_99, %c0_100, %c0_101] : memref<2x1x96xf32, #tpu.memory_space<vmem>>, vector<1x1x96xf32>
    %220 = vector.shape_cast %219 : vector<1x1x96xf32> to vector<1x96xf32>
    %c1_102 = arith.constant 1 : index
    %c0_103 = arith.constant 0 : index
    %c0_104 = arith.constant 0 : index
    %221 = vector.load %arg7[%c1_102, %c0_103, %c0_104] : memref<2x32x32xbf16, #tpu.memory_space<vmem>>, vector<1x32x32xbf16>
    %222 = vector.shape_cast %221 : vector<1x32x32xbf16> to vector<32x32xbf16>
    %c1_105 = arith.constant 1 : index
    %c0_106 = arith.constant 0 : index
    %c0_107 = arith.constant 0 : index
    %223 = vector.load %arg8[%c1_105, %c0_106, %c0_107] : memref<2x1x32xf32, #tpu.memory_space<vmem>>, vector<1x1x32xf32>
    %224 = vector.shape_cast %223 : vector<1x1x32xf32> to vector<1x32xf32>
    %225 = arith.truncf %216 : vector<16x32xf32> to vector<16x32xbf16>
    %226 = vector.extract_strided_slice %218 {offsets = [0, 0], sizes = [32, 64], strides = [1, 1]} : vector<32x96xbf16> to vector<32x64xbf16>
    %cst_108 = arith.constant dense<0.000000e+00> : vector<16x64xf32>
    %227 = tpu.matmul %225, %226, %cst_108 {dimension_numbers = #tpu.dot_dimension_numbers<[1], [0], [0], [1], [0, 0, 1, 1], [], []>} : vector<16x32xbf16>, vector<32x64xbf16>, vector<16x64xf32> -> vector<16x64xf32>
    %228 = vector.extract_strided_slice %220 {offsets = [0, 0], sizes = [1, 64], strides = [1, 1]} : vector<1x96xf32> to vector<1x64xf32>
    %229 = vector.broadcast %228 : vector<1x64xf32> to vector<16x64xf32>
    %230 = arith.addf %227, %229 : vector<16x64xf32>
    %231 = vector.extract_strided_slice %230 {offsets = [0, 0], sizes = [16, 32], strides = [1, 1]} : vector<16x64xf32> to vector<16x32xf32>
    %232 = vector.extract_strided_slice %230 {offsets = [0, 32], sizes = [16, 32], strides = [1, 1]} : vector<16x64xf32> to vector<16x32xf32>
    %233 = arith.truncf %215 : vector<16x32xf32> to vector<16x32xbf16>
    %234 = vector.extract_strided_slice %218 {offsets = [0, 64], sizes = [32, 32], strides = [1, 1]} : vector<32x96xbf16> to vector<32x32xbf16>
    %cst_109 = arith.constant dense<0.000000e+00> : vector<16x32xf32>
    %235 = tpu.matmul %233, %234, %cst_109 {dimension_numbers = #tpu.dot_dimension_numbers<[1], [0], [0], [1], [0, 0, 1, 1], [], []>} : vector<16x32xbf16>, vector<32x32xbf16>, vector<16x32xf32> -> vector<16x32xf32>
    %236 = vector.extract_strided_slice %220 {offsets = [0, 64], sizes = [1, 32], strides = [1, 1]} : vector<1x96xf32> to vector<1x32xf32>
    %237 = vector.broadcast %236 : vector<1x32xf32> to vector<16x32xf32>
    %238 = arith.addf %235, %237 : vector<16x32xf32>
    %239 = arith.truncf %231 : vector<16x32xf32> to vector<16x32xbf16>
    %240 = vector.shape_cast %239 : vector<16x32xbf16> to vector<2x8x4x8xbf16>
    %241 = tpu.transpose %240, [0, 2, 1, 3] : vector<2x8x4x8xbf16> -> vector<2x4x8x8xbf16>
    %242 = vector.shape_cast %241 : vector<2x4x8x8xbf16> to vector<8x8x8xbf16>
    %243 = arith.truncf %232 : vector<16x32xf32> to vector<16x32xbf16>
    %244 = vector.shape_cast %243 : vector<16x32xbf16> to vector<2x8x4x8xbf16>
    %245 = tpu.transpose %244, [0, 2, 1, 3] : vector<2x8x4x8xbf16> -> vector<2x4x8x8xbf16>
    %246 = vector.shape_cast %245 : vector<2x4x8x8xbf16> to vector<8x8x8xbf16>
    %247 = arith.truncf %238 : vector<16x32xf32> to vector<16x32xbf16>
    %248 = vector.shape_cast %247 : vector<16x32xbf16> to vector<2x8x4x8xbf16>
    %249 = tpu.transpose %248, [0, 2, 1, 3] : vector<2x8x4x8xbf16> -> vector<2x4x8x8xbf16>
    %250 = vector.shape_cast %249 : vector<2x4x8x8xbf16> to vector<8x8x8xbf16>
    "tpu.trace_start"() <{level = 10 : i32, message = "bqd,bkd->bqk"}> : () -> ()
    %cst_110 = arith.constant dense<0.000000e+00> : vector<8x8x8xf32>
    %251 = tpu.matmul %242, %246, %cst_110 {dimension_numbers = #tpu.dot_dimension_numbers<[2], [2], [1], [1], [0, 0, 0, 1, 1, 1], [0], [0]>} : vector<8x8x8xbf16>, vector<8x8x8xbf16>, vector<8x8x8xf32> -> vector<8x8x8xf32>
    "tpu.trace_stop"() : () -> ()
    %cst_111 = arith.constant dense<0xFF800000> : vector<8x8xf32>
    %252 = vector.multi_reduction <maximumf>, %251, %cst_111 [2] : vector<8x8x8xf32> to vector<8x8xf32>
    %253 = vector.shape_cast %252 : vector<8x8xf32> to vector<8x8x1xf32>
    %254 = vector.broadcast %253 : vector<8x8x1xf32> to vector<8x8x8xf32>
    %255 = arith.subf %251, %254 : vector<8x8x8xf32>
    %256 = math.exp %255 : vector<8x8x8xf32>
    %cst_112 = arith.constant dense<0.000000e+00> : vector<8x8xf32>
    %257 = vector.multi_reduction <add>, %256, %cst_112 [2] : vector<8x8x8xf32> to vector<8x8xf32>
    %258 = vector.shape_cast %257 : vector<8x8xf32> to vector<8x8x1xf32>
    %259 = tpu.reciprocal %258 {approx = true} : vector<8x8x1xf32> -> vector<8x8x1xf32>
    %260 = vector.broadcast %259 : vector<8x8x1xf32> to vector<8x8x8xf32>
    %261 = arith.mulf %256, %260 : vector<8x8x8xf32>
    %262 = arith.truncf %261 : vector<8x8x8xf32> to vector<8x8x8xbf16>
    "tpu.trace_start"() <{level = 10 : i32, message = "bqk,bkd->bqd"}> : () -> ()
    %cst_113 = arith.constant dense<0.000000e+00> : vector<8x8x8xf32>
    %263 = tpu.matmul %262, %250, %cst_113 {dimension_numbers = #tpu.dot_dimension_numbers<[2], [1], [1], [2], [0, 0, 0, 1, 1, 2], [0], [0]>} : vector<8x8x8xbf16>, vector<8x8x8xbf16>, vector<8x8x8xf32> -> vector<8x8x8xf32>
    "tpu.trace_stop"() : () -> ()
    %264 = vector.shape_cast %263 : vector<8x8x8xf32> to vector<2x4x8x8xf32>
    %265 = tpu.transpose %264, [0, 2, 1, 3] : vector<2x4x8x8xf32> -> vector<2x8x4x8xf32>
    %266 = vector.shape_cast %265 : vector<2x8x4x8xf32> to vector<16x32xf32>
    %267 = arith.truncf %266 : vector<16x32xf32> to vector<16x32xbf16>
    %cst_114 = arith.constant dense<0.000000e+00> : vector<16x32xf32>
    %268 = tpu.matmul %267, %222, %cst_114 {dimension_numbers = #tpu.dot_dimension_numbers<[1], [0], [0], [1], [0, 0, 1, 1], [], []>} : vector<16x32xbf16>, vector<32x32xbf16>, vector<16x32xf32> -> vector<16x32xf32>
    %269 = vector.broadcast %224 : vector<1x32xf32> to vector<16x32xf32>
    %270 = arith.addf %268, %269 : vector<16x32xf32>
    %271 = arith.addf %215, %270 : vector<16x32xf32>
    %c1_115 = arith.constant 1 : index
    %c0_116 = arith.constant 0 : index
    %c0_117 = arith.constant 0 : index
    %272 = vector.load %arg17[%c1_115, %c0_116, %c0_117] : memref<2x1x32xf32, #tpu.memory_space<vmem>>, vector<1x1x32xf32>
    %273 = vector.shape_cast %272 : vector<1x1x32xf32> to vector<1x32xf32>
    %c1_118 = arith.constant 1 : index
    %c0_119 = arith.constant 0 : index
    %c0_120 = arith.constant 0 : index
    %274 = vector.load %arg18[%c1_118, %c0_119, %c0_120] : memref<2x1x32xf32, #tpu.memory_space<vmem>>, vector<1x1x32xf32>
    %275 = vector.shape_cast %274 : vector<1x1x32xf32> to vector<1x32xf32>
    %cst_121 = arith.constant dense<0.000000e+00> : vector<16xf32>
    %276 = vector.multi_reduction <add>, %271, %cst_121 [1] : vector<16x32xf32> to vector<16xf32>
    %277 = vector.shape_cast %276 : vector<16xf32> to vector<16x1xf32>
    %cst_122 = arith.constant 3.200000e+01 : f32
    %278 = vector.broadcast %cst_122 : f32 to vector<16x1xf32>
    %279 = arith.divf %277, %278 : vector<16x1xf32>
    %280 = vector.broadcast %279 : vector<16x1xf32> to vector<16x32xf32>
    %281 = arith.subf %271, %280 : vector<16x32xf32>
    %282 = arith.mulf %281, %281 : vector<16x32xf32>
    %cst_123 = arith.constant dense<0.000000e+00> : vector<16xf32>
    %283 = vector.multi_reduction <add>, %282, %cst_123 [1] : vector<16x32xf32> to vector<16xf32>
    %284 = vector.shape_cast %283 : vector<16xf32> to vector<16x1xf32>
    %cst_124 = arith.constant 3.200000e+01 : f32
    %285 = vector.broadcast %cst_124 : f32 to vector<16x1xf32>
    %286 = arith.divf %284, %285 : vector<16x1xf32>
    %cst_125 = arith.constant 9.99999974E-6 : f32
    %287 = vector.broadcast %cst_125 : f32 to vector<16x1xf32>
    %288 = arith.addf %286, %287 : vector<16x1xf32>
    %289 = math.rsqrt %288 : vector<16x1xf32>
    %290 = vector.broadcast %289 : vector<16x1xf32> to vector<16x32xf32>
    %291 = arith.mulf %281, %290 : vector<16x32xf32>
    %292 = vector.broadcast %273 : vector<1x32xf32> to vector<16x32xf32>
    %293 = arith.mulf %291, %292 : vector<16x32xf32>
    %294 = vector.broadcast %275 : vector<1x32xf32> to vector<16x32xf32>
    %295 = arith.addf %293, %294 : vector<16x32xf32>
    %296 = arith.addf %295, %7 : vector<16x32xf32>
    %c1_126 = arith.constant 1 : index
    %c0_127 = arith.constant 0 : index
    %c0_128 = arith.constant 0 : index
    %297 = vector.load %arg9[%c1_126, %c0_127, %c0_128] : memref<2x32x96xbf16, #tpu.memory_space<vmem>>, vector<1x32x96xbf16>
    %298 = vector.shape_cast %297 : vector<1x32x96xbf16> to vector<32x96xbf16>
    %c1_129 = arith.constant 1 : index
    %c0_130 = arith.constant 0 : index
    %c0_131 = arith.constant 0 : index
    %299 = vector.load %arg10[%c1_129, %c0_130, %c0_131] : memref<2x1x96xf32, #tpu.memory_space<vmem>>, vector<1x1x96xf32>
    %300 = vector.shape_cast %299 : vector<1x1x96xf32> to vector<1x96xf32>
    %c1_132 = arith.constant 1 : index
    %c0_133 = arith.constant 0 : index
    %c0_134 = arith.constant 0 : index
    %301 = vector.load %arg11[%c1_132, %c0_133, %c0_134] : memref<2x32x32xbf16, #tpu.memory_space<vmem>>, vector<1x32x32xbf16>
    %302 = vector.shape_cast %301 : vector<1x32x32xbf16> to vector<32x32xbf16>
    %c1_135 = arith.constant 1 : index
    %c0_136 = arith.constant 0 : index
    %c0_137 = arith.constant 0 : index
    %303 = vector.load %arg12[%c1_135, %c0_136, %c0_137] : memref<2x1x32xf32, #tpu.memory_space<vmem>>, vector<1x1x32xf32>
    %304 = vector.shape_cast %303 : vector<1x1x32xf32> to vector<1x32xf32>
    %305 = arith.truncf %296 : vector<16x32xf32> to vector<16x32xbf16>
    %306 = vector.extract_strided_slice %298 {offsets = [0, 0], sizes = [32, 32], strides = [1, 1]} : vector<32x96xbf16> to vector<32x32xbf16>
    %cst_138 = arith.constant dense<0.000000e+00> : vector<16x32xf32>
    %307 = tpu.matmul %305, %306, %cst_138 {dimension_numbers = #tpu.dot_dimension_numbers<[1], [0], [0], [1], [0, 0, 1, 1], [], []>} : vector<16x32xbf16>, vector<32x32xbf16>, vector<16x32xf32> -> vector<16x32xf32>
    %308 = vector.extract_strided_slice %300 {offsets = [0, 0], sizes = [1, 32], strides = [1, 1]} : vector<1x96xf32> to vector<1x32xf32>
    %309 = vector.broadcast %308 : vector<1x32xf32> to vector<16x32xf32>
    %310 = arith.addf %307, %309 : vector<16x32xf32>
    %311 = arith.truncf %8 : vector<32x32xf32> to vector<32x32xbf16>
    %312 = vector.extract_strided_slice %298 {offsets = [0, 32], sizes = [32, 32], strides = [1, 1]} : vector<32x96xbf16> to vector<32x32xbf16>
    %cst_139 = arith.constant dense<0.000000e+00> : vector<32x32xf32>
    %313 = tpu.matmul %311, %312, %cst_139 {dimension_numbers = #tpu.dot_dimension_numbers<[1], [0], [0], [1], [0, 0, 1, 1], [], []>} : vector<32x32xbf16>, vector<32x32xbf16>, vector<32x32xf32> -> vector<32x32xf32>
    %314 = vector.extract_strided_slice %300 {offsets = [0, 32], sizes = [1, 32], strides = [1, 1]} : vector<1x96xf32> to vector<1x32xf32>
    %315 = vector.broadcast %314 : vector<1x32xf32> to vector<32x32xf32>
    %316 = arith.addf %313, %315 : vector<32x32xf32>
    %317 = arith.truncf %3 : vector<32x32xf32> to vector<32x32xbf16>
    %318 = vector.extract_strided_slice %298 {offsets = [0, 64], sizes = [32, 32], strides = [1, 1]} : vector<32x96xbf16> to vector<32x32xbf16>
    %cst_140 = arith.constant dense<0.000000e+00> : vector<32x32xf32>
    %319 = tpu.matmul %317, %318, %cst_140 {dimension_numbers = #tpu.dot_dimension_numbers<[1], [0], [0], [1], [0, 0, 1, 1], [], []>} : vector<32x32xbf16>, vector<32x32xbf16>, vector<32x32xf32> -> vector<32x32xf32>
    %320 = vector.extract_strided_slice %300 {offsets = [0, 64], sizes = [1, 32], strides = [1, 1]} : vector<1x96xf32> to vector<1x32xf32>
    %321 = vector.broadcast %320 : vector<1x32xf32> to vector<32x32xf32>
    %322 = arith.addf %319, %321 : vector<32x32xf32>
    %323 = arith.truncf %310 : vector<16x32xf32> to vector<16x32xbf16>
    %324 = vector.shape_cast %323 : vector<16x32xbf16> to vector<2x8x4x8xbf16>
    %325 = tpu.transpose %324, [0, 2, 1, 3] : vector<2x8x4x8xbf16> -> vector<2x4x8x8xbf16>
    %326 = vector.shape_cast %325 : vector<2x4x8x8xbf16> to vector<8x8x8xbf16>
    %327 = arith.truncf %316 : vector<32x32xf32> to vector<32x32xbf16>
    %328 = vector.shape_cast %327 : vector<32x32xbf16> to vector<2x16x4x8xbf16>
    %329 = tpu.transpose %328, [0, 2, 1, 3] : vector<2x16x4x8xbf16> -> vector<2x4x16x8xbf16>
    %330 = vector.shape_cast %329 : vector<2x4x16x8xbf16> to vector<8x16x8xbf16>
    %331 = arith.truncf %322 : vector<32x32xf32> to vector<32x32xbf16>
    %332 = vector.shape_cast %331 : vector<32x32xbf16> to vector<2x16x4x8xbf16>
    %333 = tpu.transpose %332, [0, 2, 1, 3] : vector<2x16x4x8xbf16> -> vector<2x4x16x8xbf16>
    %334 = vector.shape_cast %333 : vector<2x4x16x8xbf16> to vector<8x16x8xbf16>
    "tpu.trace_start"() <{level = 10 : i32, message = "bqd,bkd->bqk"}> : () -> ()
    %cst_141 = arith.constant dense<0.000000e+00> : vector<8x8x16xf32>
    %335 = tpu.matmul %326, %330, %cst_141 {dimension_numbers = #tpu.dot_dimension_numbers<[2], [2], [1], [1], [0, 0, 0, 1, 1, 1], [0], [0]>} : vector<8x8x8xbf16>, vector<8x16x8xbf16>, vector<8x8x16xf32> -> vector<8x8x16xf32>
    "tpu.trace_stop"() : () -> ()
    %cst_142 = arith.constant dense<0xFF800000> : vector<8x8xf32>
    %336 = vector.multi_reduction <maximumf>, %335, %cst_142 [2] : vector<8x8x16xf32> to vector<8x8xf32>
    %337 = vector.shape_cast %336 : vector<8x8xf32> to vector<8x8x1xf32>
    %338 = vector.broadcast %337 : vector<8x8x1xf32> to vector<8x8x16xf32>
    %339 = arith.subf %335, %338 : vector<8x8x16xf32>
    %340 = math.exp %339 : vector<8x8x16xf32>
    %cst_143 = arith.constant dense<0.000000e+00> : vector<8x8xf32>
    %341 = vector.multi_reduction <add>, %340, %cst_143 [2] : vector<8x8x16xf32> to vector<8x8xf32>
    %342 = vector.shape_cast %341 : vector<8x8xf32> to vector<8x8x1xf32>
    %343 = tpu.reciprocal %342 {approx = true} : vector<8x8x1xf32> -> vector<8x8x1xf32>
    %344 = vector.broadcast %343 : vector<8x8x1xf32> to vector<8x8x16xf32>
    %345 = arith.mulf %340, %344 : vector<8x8x16xf32>
    %346 = arith.truncf %345 : vector<8x8x16xf32> to vector<8x8x16xbf16>
    "tpu.trace_start"() <{level = 10 : i32, message = "bqk,bkd->bqd"}> : () -> ()
    %cst_144 = arith.constant dense<0.000000e+00> : vector<8x8x8xf32>
    %347 = tpu.matmul %346, %334, %cst_144 {dimension_numbers = #tpu.dot_dimension_numbers<[2], [1], [1], [2], [0, 0, 0, 1, 1, 2], [0], [0]>} : vector<8x8x16xbf16>, vector<8x16x8xbf16>, vector<8x8x8xf32> -> vector<8x8x8xf32>
    "tpu.trace_stop"() : () -> ()
    %348 = vector.shape_cast %347 : vector<8x8x8xf32> to vector<2x4x8x8xf32>
    %349 = tpu.transpose %348, [0, 2, 1, 3] : vector<2x4x8x8xf32> -> vector<2x8x4x8xf32>
    %350 = vector.shape_cast %349 : vector<2x8x4x8xf32> to vector<16x32xf32>
    %351 = arith.truncf %350 : vector<16x32xf32> to vector<16x32xbf16>
    %cst_145 = arith.constant dense<0.000000e+00> : vector<16x32xf32>
    %352 = tpu.matmul %351, %302, %cst_145 {dimension_numbers = #tpu.dot_dimension_numbers<[1], [0], [0], [1], [0, 0, 1, 1], [], []>} : vector<16x32xbf16>, vector<32x32xbf16>, vector<16x32xf32> -> vector<16x32xf32>
    %353 = vector.broadcast %304 : vector<1x32xf32> to vector<16x32xf32>
    %354 = arith.addf %352, %353 : vector<16x32xf32>
    %355 = arith.addf %295, %354 : vector<16x32xf32>
    %c1_146 = arith.constant 1 : index
    %c0_147 = arith.constant 0 : index
    %c0_148 = arith.constant 0 : index
    %356 = vector.load %arg19[%c1_146, %c0_147, %c0_148] : memref<2x1x32xf32, #tpu.memory_space<vmem>>, vector<1x1x32xf32>
    %357 = vector.shape_cast %356 : vector<1x1x32xf32> to vector<1x32xf32>
    %c1_149 = arith.constant 1 : index
    %c0_150 = arith.constant 0 : index
    %c0_151 = arith.constant 0 : index
    %358 = vector.load %arg20[%c1_149, %c0_150, %c0_151] : memref<2x1x32xf32, #tpu.memory_space<vmem>>, vector<1x1x32xf32>
    %359 = vector.shape_cast %358 : vector<1x1x32xf32> to vector<1x32xf32>
    %cst_152 = arith.constant dense<0.000000e+00> : vector<16xf32>
    %360 = vector.multi_reduction <add>, %355, %cst_152 [1] : vector<16x32xf32> to vector<16xf32>
    %361 = vector.shape_cast %360 : vector<16xf32> to vector<16x1xf32>
    %cst_153 = arith.constant 3.200000e+01 : f32
    %362 = vector.broadcast %cst_153 : f32 to vector<16x1xf32>
    %363 = arith.divf %361, %362 : vector<16x1xf32>
    %364 = vector.broadcast %363 : vector<16x1xf32> to vector<16x32xf32>
    %365 = arith.subf %355, %364 : vector<16x32xf32>
    %366 = arith.mulf %365, %365 : vector<16x32xf32>
    %cst_154 = arith.constant dense<0.000000e+00> : vector<16xf32>
    %367 = vector.multi_reduction <add>, %366, %cst_154 [1] : vector<16x32xf32> to vector<16xf32>
    %368 = vector.shape_cast %367 : vector<16xf32> to vector<16x1xf32>
    %cst_155 = arith.constant 3.200000e+01 : f32
    %369 = vector.broadcast %cst_155 : f32 to vector<16x1xf32>
    %370 = arith.divf %368, %369 : vector<16x1xf32>
    %cst_156 = arith.constant 9.99999974E-6 : f32
    %371 = vector.broadcast %cst_156 : f32 to vector<16x1xf32>
    %372 = arith.addf %370, %371 : vector<16x1xf32>
    %373 = math.rsqrt %372 : vector<16x1xf32>
    %374 = vector.broadcast %373 : vector<16x1xf32> to vector<16x32xf32>
    %375 = arith.mulf %365, %374 : vector<16x32xf32>
    %376 = vector.broadcast %357 : vector<1x32xf32> to vector<16x32xf32>
    %377 = arith.mulf %375, %376 : vector<16x32xf32>
    %378 = vector.broadcast %359 : vector<1x32xf32> to vector<16x32xf32>
    %379 = arith.addf %377, %378 : vector<16x32xf32>
    %380 = arith.truncf %379 : vector<16x32xf32> to vector<16x32xbf16>
    %c1_157 = arith.constant 1 : index
    %c0_158 = arith.constant 0 : index
    %c0_159 = arith.constant 0 : index
    %381 = vector.load %arg13[%c1_157, %c0_158, %c0_159] : memref<2x32x64xbf16, #tpu.memory_space<vmem>>, vector<1x32x64xbf16>
    %382 = vector.shape_cast %381 : vector<1x32x64xbf16> to vector<32x64xbf16>
    %cst_160 = arith.constant dense<0.000000e+00> : vector<16x64xf32>
    %383 = tpu.matmul %380, %382, %cst_160 {dimension_numbers = #tpu.dot_dimension_numbers<[1], [0], [0], [1], [0, 0, 1, 1], [], []>} : vector<16x32xbf16>, vector<32x64xbf16>, vector<16x64xf32> -> vector<16x64xf32>
    %c1_161 = arith.constant 1 : index
    %c0_162 = arith.constant 0 : index
    %c0_163 = arith.constant 0 : index
    %384 = vector.load %arg14[%c1_161, %c0_162, %c0_163] : memref<2x1x64xf32, #tpu.memory_space<vmem>>, vector<1x1x64xf32>
    %385 = vector.shape_cast %384 : vector<1x1x64xf32> to vector<1x64xf32>
    %386 = vector.broadcast %385 : vector<1x64xf32> to vector<16x64xf32>
    %387 = arith.addf %383, %386 : vector<16x64xf32>
    %cst_164 = arith.constant 0.000000e+00 : f32
    %388 = vector.broadcast %cst_164 : f32 to vector<16x64xf32>
    %389 = arith.maximumf %387, %388 : vector<16x64xf32>
    %390 = arith.truncf %389 : vector<16x64xf32> to vector<16x64xbf16>
    %c1_165 = arith.constant 1 : index
    %c0_166 = arith.constant 0 : index
    %c0_167 = arith.constant 0 : index
    %391 = vector.load %arg15[%c1_165, %c0_166, %c0_167] : memref<2x64x32xbf16, #tpu.memory_space<vmem>>, vector<1x64x32xbf16>
    %392 = vector.shape_cast %391 : vector<1x64x32xbf16> to vector<64x32xbf16>
    %cst_168 = arith.constant dense<0.000000e+00> : vector<16x32xf32>
    %393 = tpu.matmul %390, %392, %cst_168 {dimension_numbers = #tpu.dot_dimension_numbers<[1], [0], [0], [1], [0, 0, 1, 1], [], []>} : vector<16x64xbf16>, vector<64x32xbf16>, vector<16x32xf32> -> vector<16x32xf32>
    %c1_169 = arith.constant 1 : index
    %c0_170 = arith.constant 0 : index
    %c0_171 = arith.constant 0 : index
    %394 = vector.load %arg16[%c1_169, %c0_170, %c0_171] : memref<2x1x32xf32, #tpu.memory_space<vmem>>, vector<1x1x32xf32>
    %395 = vector.shape_cast %394 : vector<1x1x32xf32> to vector<1x32xf32>
    %396 = vector.broadcast %395 : vector<1x32xf32> to vector<16x32xf32>
    %397 = arith.addf %393, %396 : vector<16x32xf32>
    %398 = arith.addf %379, %397 : vector<16x32xf32>
    %c1_172 = arith.constant 1 : index
    %c0_173 = arith.constant 0 : index
    %c0_174 = arith.constant 0 : index
    %399 = vector.load %arg21[%c1_172, %c0_173, %c0_174] : memref<2x1x32xf32, #tpu.memory_space<vmem>>, vector<1x1x32xf32>
    %400 = vector.shape_cast %399 : vector<1x1x32xf32> to vector<1x32xf32>
    %c1_175 = arith.constant 1 : index
    %c0_176 = arith.constant 0 : index
    %c0_177 = arith.constant 0 : index
    %401 = vector.load %arg22[%c1_175, %c0_176, %c0_177] : memref<2x1x32xf32, #tpu.memory_space<vmem>>, vector<1x1x32xf32>
    %402 = vector.shape_cast %401 : vector<1x1x32xf32> to vector<1x32xf32>
    %cst_178 = arith.constant dense<0.000000e+00> : vector<16xf32>
    %403 = vector.multi_reduction <add>, %398, %cst_178 [1] : vector<16x32xf32> to vector<16xf32>
    %404 = vector.shape_cast %403 : vector<16xf32> to vector<16x1xf32>
    %cst_179 = arith.constant 3.200000e+01 : f32
    %405 = vector.broadcast %cst_179 : f32 to vector<16x1xf32>
    %406 = arith.divf %404, %405 : vector<16x1xf32>
    %407 = vector.broadcast %406 : vector<16x1xf32> to vector<16x32xf32>
    %408 = arith.subf %398, %407 : vector<16x32xf32>
    %409 = arith.mulf %408, %408 : vector<16x32xf32>
    %cst_180 = arith.constant dense<0.000000e+00> : vector<16xf32>
    %410 = vector.multi_reduction <add>, %409, %cst_180 [1] : vector<16x32xf32> to vector<16xf32>
    %411 = vector.shape_cast %410 : vector<16xf32> to vector<16x1xf32>
    %cst_181 = arith.constant 3.200000e+01 : f32
    %412 = vector.broadcast %cst_181 : f32 to vector<16x1xf32>
    %413 = arith.divf %411, %412 : vector<16x1xf32>
    %cst_182 = arith.constant 9.99999974E-6 : f32
    %414 = vector.broadcast %cst_182 : f32 to vector<16x1xf32>
    %415 = arith.addf %413, %414 : vector<16x1xf32>
    %416 = math.rsqrt %415 : vector<16x1xf32>
    %417 = vector.broadcast %416 : vector<16x1xf32> to vector<16x32xf32>
    %418 = arith.mulf %408, %417 : vector<16x32xf32>
    %419 = vector.broadcast %400 : vector<1x32xf32> to vector<16x32xf32>
    %420 = arith.mulf %418, %419 : vector<16x32xf32>
    %421 = vector.broadcast %402 : vector<1x32xf32> to vector<16x32xf32>
    %422 = arith.addf %420, %421 : vector<16x32xf32>
    %423 = vector.shape_cast %422 : vector<16x32xf32> to vector<2x8x32xf32>
    %c0_183 = arith.constant 0 : index
    %c0_184 = arith.constant 0 : index
    %c0_185 = arith.constant 0 : index
    %424 = vector.load %arg25[%c0_183, %c0_184, %c0_185] : memref<2x8x32xf32, #tpu.memory_space<vmem>>, vector<2x8x32xf32>
    tpu.vector_store %arg25[%c0_183, %c0_184, %c0_185], %423 {strides = array<i32>} : memref<2x8x32xf32, #tpu.memory_space<vmem>>, vector<2x8x32xf32>,
    %c0_186 = arith.constant 0 : index
    %c0_187 = arith.constant 0 : index
    %425 = vector.load %arg23[%c0_186, %c0_187] : memref<1x32xf32, #tpu.memory_space<vmem>>, vector<1x32xf32>
    %c0_188 = arith.constant 0 : index
    %c0_189 = arith.constant 0 : index
    %426 = vector.load %arg24[%c0_188, %c0_189] : memref<1x32xf32, #tpu.memory_space<vmem>>, vector<1x32xf32>
    %cst_190 = arith.constant dense<0.000000e+00> : vector<16xf32>
    %427 = vector.multi_reduction <add>, %422, %cst_190 [1] : vector<16x32xf32> to vector<16xf32>
    %428 = vector.shape_cast %427 : vector<16xf32> to vector<16x1xf32>
    %cst_191 = arith.constant 3.200000e+01 : f32
    %429 = vector.broadcast %cst_191 : f32 to vector<16x1xf32>
    %430 = arith.divf %428, %429 : vector<16x1xf32>
    %431 = vector.broadcast %430 : vector<16x1xf32> to vector<16x32xf32>
    %432 = arith.subf %422, %431 : vector<16x32xf32>
    %433 = arith.mulf %432, %432 : vector<16x32xf32>
    %cst_192 = arith.constant dense<0.000000e+00> : vector<16xf32>
    %434 = vector.multi_reduction <add>, %433, %cst_192 [1] : vector<16x32xf32> to vector<16xf32>
    %435 = vector.shape_cast %434 : vector<16xf32> to vector<16x1xf32>
    %cst_193 = arith.constant 3.200000e+01 : f32
    %436 = vector.broadcast %cst_193 : f32 to vector<16x1xf32>
    %437 = arith.divf %435, %436 : vector<16x1xf32>
    %cst_194 = arith.constant 9.99999974E-6 : f32
    %438 = vector.broadcast %cst_194 : f32 to vector<16x1xf32>
    %439 = arith.addf %437, %438 : vector<16x1xf32>
    %440 = math.rsqrt %439 : vector<16x1xf32>
    %441 = vector.broadcast %440 : vector<16x1xf32> to vector<16x32xf32>
    %442 = arith.mulf %432, %441 : vector<16x32xf32>
    %443 = vector.broadcast %425 : vector<1x32xf32> to vector<16x32xf32>
    %444 = arith.mulf %442, %443 : vector<16x32xf32>
    %445 = vector.broadcast %426 : vector<1x32xf32> to vector<16x32xf32>
    %446 = arith.addf %444, %445 : vector<16x32xf32>
    %447 = vector.shape_cast %446 : vector<16x32xf32> to vector<2x8x32xf32>
    %c0_195 = arith.constant 0 : index
    %c0_196 = arith.constant 0 : index
    %c0_197 = arith.constant 0 : index
    %448 = vector.load %arg26[%c0_195, %c0_196, %c0_197] : memref<2x8x32xf32, #tpu.memory_space<vmem>>, vector<2x8x32xf32>
    tpu.vector_store %arg26[%c0_195, %c0_196, %c0_197], %447 {strides = array<i32>} : memref<2x8x32xf32, #tpu.memory_space<vmem>>, vector<2x8x32xf32>,
    return
  }
  func.func @transform_0(%arg0: i32) -> (i32, i32, i32) {
    %c0_i32 = arith.constant 0 : i32
    %c0_i32_0 = arith.constant 0 : i32
    %c0_i32_1 = arith.constant 0 : i32
    return %arg0, %c0_i32, %c0_i32_0 : i32, i32, i32
  }
  func.func @transform_1(%arg0: i32) -> (i32, i32, i32) {
    %c0_i32 = arith.constant 0 : i32
    %c0_i32_0 = arith.constant 0 : i32
    %c0_i32_1 = arith.constant 0 : i32
    return %arg0, %c0_i32, %c0_i32_0 : i32, i32, i32
  }
  func.func @transform_2(%arg0: i32) -> (i32, i32, i32) {
    %c0_i32 = arith.constant 0 : i32
    %c0_i32_0 = arith.constant 0 : i32
    %c0_i32_1 = arith.constant 0 : i32
    return %arg0, %c0_i32, %c0_i32_0 : i32, i32, i32
  }
  func.func @transform_3(%arg0: i32) -> (i32, i32, i32) {
    %c0_i32 = arith.constant 0 : i32
    %c0_i32_0 = arith.constant 0 : i32
    %c0_i32_1 = arith.constant 0 : i32
    return %arg0, %c0_i32, %c0_i32_0 : i32, i32, i32
  }
  func.func @transform_4(%arg0: i32) -> (i32, i32, i32) {
    %c0_i32 = arith.constant 0 : i32
    %c0_i32_0 = arith.constant 0 : i32
    %c0_i32_1 = arith.constant 0 : i32
    %c0_i32_2 = arith.constant 0 : i32
    return %c0_i32, %c0_i32_0, %c0_i32_1 : i32, i32, i32
  }
  func.func @transform_5(%arg0: i32) -> (i32, i32, i32) {
    %c0_i32 = arith.constant 0 : i32
    %c0_i32_0 = arith.constant 0 : i32
    %c0_i32_1 = arith.constant 0 : i32
    %c0_i32_2 = arith.constant 0 : i32
    return %c0_i32, %c0_i32_0, %c0_i32_1 : i32, i32, i32
  }
  func.func @transform_6(%arg0: i32) -> (i32, i32, i32) {
    %c0_i32 = arith.constant 0 : i32
    %c0_i32_0 = arith.constant 0 : i32
    %c0_i32_1 = arith.constant 0 : i32
    %c0_i32_2 = arith.constant 0 : i32
    return %c0_i32, %c0_i32_0, %c0_i32_1 : i32, i32, i32
  }
  func.func @transform_7(%arg0: i32) -> (i32, i32, i32) {
    %c0_i32 = arith.constant 0 : i32
    %c0_i32_0 = arith.constant 0 : i32
    %c0_i32_1 = arith.constant 0 : i32
    %c0_i32_2 = arith.constant 0 : i32
    return %c0_i32, %c0_i32_0, %c0_i32_1 : i32, i32, i32
  }
  func.func @transform_8(%arg0: i32) -> (i32, i32, i32) {
    %c0_i32 = arith.constant 0 : i32
    %c0_i32_0 = arith.constant 0 : i32
    %c0_i32_1 = arith.constant 0 : i32
    %c0_i32_2 = arith.constant 0 : i32
    return %c0_i32, %c0_i32_0, %c0_i32_1 : i32, i32, i32
  }
  func.func @transform_9(%arg0: i32) -> (i32, i32, i32) {
    %c0_i32 = arith.constant 0 : i32
    %c0_i32_0 = arith.constant 0 : i32
    %c0_i32_1 = arith.constant 0 : i32
    %c0_i32_2 = arith.constant 0 : i32
    return %c0_i32, %c0_i32_0, %c0_i32_1 : i32, i32, i32
  }
  func.func @transform_10(%arg0: i32) -> (i32, i32, i32) {
    %c0_i32 = arith.constant 0 : i32
    %c0_i32_0 = arith.constant 0 : i32
    %c0_i32_1 = arith.constant 0 : i32
    %c0_i32_2 = arith.constant 0 : i32
    return %c0_i32, %c0_i32_0, %c0_i32_1 : i32, i32, i32
  }
  func.func @transform_11(%arg0: i32) -> (i32, i32, i32) {
    %c0_i32 = arith.constant 0 : i32
    %c0_i32_0 = arith.constant 0 : i32
    %c0_i32_1 = arith.constant 0 : i32
    %c0_i32_2 = arith.constant 0 : i32
    return %c0_i32, %c0_i32_0, %c0_i32_1 : i32, i32, i32
  }
  func.func @transform_12(%arg0: i32) -> (i32, i32, i32) {
    %c0_i32 = arith.constant 0 : i32
    %c0_i32_0 = arith.constant 0 : i32
    %c0_i32_1 = arith.constant 0 : i32
    %c0_i32_2 = arith.constant 0 : i32
    return %c0_i32, %c0_i32_0, %c0_i32_1 : i32, i32, i32
  }
  func.func @transform_13(%arg0: i32) -> (i32, i32, i32) {
    %c0_i32 = arith.constant 0 : i32
    %c0_i32_0 = arith.constant 0 : i32
    %c0_i32_1 = arith.constant 0 : i32
    %c0_i32_2 = arith.constant 0 : i32
    return %c0_i32, %c0_i32_0, %c0_i32_1 : i32, i32, i32
  }
  func.func @transform_14(%arg0: i32) -> (i32, i32, i32) {
    %c0_i32 = arith.constant 0 : i32
    %c0_i32_0 = arith.constant 0 : i32
    %c0_i32_1 = arith.constant 0 : i32
    %c0_i32_2 = arith.constant 0 : i32
    return %c0_i32, %c0_i32_0, %c0_i32_1 : i32, i32, i32
  }
  func.func @transform_15(%arg0: i32) -> (i32, i32, i32) {
    %c0_i32 = arith.constant 0 : i32
    %c0_i32_0 = arith.constant 0 : i32
    %c0_i32_1 = arith.constant 0 : i32
    %c0_i32_2 = arith.constant 0 : i32
    return %c0_i32, %c0_i32_0, %c0_i32_1 : i32, i32, i32
  }
  func.func @transform_16(%arg0: i32) -> (i32, i32, i32) {
    %c0_i32 = arith.constant 0 : i32
    %c0_i32_0 = arith.constant 0 : i32
    %c0_i32_1 = arith.constant 0 : i32
    %c0_i32_2 = arith.constant 0 : i32
    return %c0_i32, %c0_i32_0, %c0_i32_1 : i32, i32, i32
  }
  func.func @transform_17(%arg0: i32) -> (i32, i32, i32) {
    %c0_i32 = arith.constant 0 : i32
    %c0_i32_0 = arith.constant 0 : i32
    %c0_i32_1 = arith.constant 0 : i32
    %c0_i32_2 = arith.constant 0 : i32
    return %c0_i32, %c0_i32_0, %c0_i32_1 : i32, i32, i32
  }
  func.func @transform_18(%arg0: i32) -> (i32, i32, i32) {
    %c0_i32 = arith.constant 0 : i32
    %c0_i32_0 = arith.constant 0 : i32
    %c0_i32_1 = arith.constant 0 : i32
    %c0_i32_2 = arith.constant 0 : i32
    return %c0_i32, %c0_i32_0, %c0_i32_1 : i32, i32, i32
  }
  func.func @transform_19(%arg0: i32) -> (i32, i32, i32) {
    %c0_i32 = arith.constant 0 : i32
    %c0_i32_0 = arith.constant 0 : i32
    %c0_i32_1 = arith.constant 0 : i32
    %c0_i32_2 = arith.constant 0 : i32
    return %c0_i32, %c0_i32_0, %c0_i32_1 : i32, i32, i32
  }
  func.func @transform_20(%arg0: i32) -> (i32, i32, i32) {
    %c0_i32 = arith.constant 0 : i32
    %c0_i32_0 = arith.constant 0 : i32
    %c0_i32_1 = arith.constant 0 : i32
    %c0_i32_2 = arith.constant 0 : i32
    return %c0_i32, %c0_i32_0, %c0_i32_1 : i32, i32, i32
  }
  func.func @transform_21(%arg0: i32) -> (i32, i32, i32) {
    %c0_i32 = arith.constant 0 : i32
    %c0_i32_0 = arith.constant 0 : i32
    %c0_i32_1 = arith.constant 0 : i32
    %c0_i32_2 = arith.constant 0 : i32
    return %c0_i32, %c0_i32_0, %c0_i32_1 : i32, i32, i32
  }
  func.func @transform_22(%arg0: i32) -> (i32, i32) {
    %c0_i32 = arith.constant 0 : i32
    %c0_i32_0 = arith.constant 0 : i32
    %c0_i32_1 = arith.constant 0 : i32
    return %c0_i32, %c0_i32_0 : i32, i32
  }
  func.func @transform_23(%arg0: i32) -> (i32, i32) {
    %c0_i32 = arith.constant 0 : i32
    %c0_i32_0 = arith.constant 0 : i32
    %c0_i32_1 = arith.constant 0 : i32
    return %c0_i32, %c0_i32_0 : i32, i32
  }
  func.func @transform_24(%arg0: i32) -> (i32, i32, i32) {
    %c0_i32 = arith.constant 0 : i32
    %c0_i32_0 = arith.constant 0 : i32
    %c0_i32_1 = arith.constant 0 : i32
    return %arg0, %c0_i32, %c0_i32_0 : i32, i32, i32
  }
  func.func @transform_25(%arg0: i32) -> (i32, i32, i32) {
    %c0_i32 = arith.constant 0 : i32
    %c0_i32_0 = arith.constant 0 : i32
    %c0_i32_1 = arith.constant 0 : i32
    return %arg0, %c0_i32, %c0_i32_0 : i32, i32, i32
  }
}

</mosaic_0001>

<llo_original>
// kernel: transformer_decoder_forward.1
$region0: #{transformer_decoder_forward.1}
  #allocation0 [shape = 'u32[]', space=smem, size = 0x4, offset = 0x4, fixed_abs, tag = 'smem constant byte address 0x4 - core index']
  #allocation1 [shape = 'u32[144,128]{1,0:T(1,128)}', space=vmem, size = 0x12000, scoped, tag = 'internal scratch']
  %s0 = inlined_call_operand.vmem [shape: f32[2,8,32], index: 0, kind: input, shape index: {}]
  %s1 = inlined_call_operand.vmem [shape: f32[2,16,32], index: 1, kind: input, shape index: {}]
  %s2 = inlined_call_operand.vmem [shape: f32[2,16,32], index: 2, kind: input, shape index: {}]
  %s3 = inlined_call_operand.vmem [shape: f32[2,8,32], index: 3, kind: input, shape index: {}]
  %s4 = inlined_call_operand.vmem [shape: bf16[2,32,96], index: 4, kind: input, shape index: {}]
  %s5 = inlined_call_operand.vmem [shape: f32[2,1,96], index: 5, kind: input, shape index: {}]
  %s6 = inlined_call_operand.vmem [shape: bf16[2,32,32], index: 6, kind: input, shape index: {}]
  %s7 = inlined_call_operand.vmem [shape: f32[2,1,32], index: 7, kind: input, shape index: {}]
  %s8 = inlined_call_operand.vmem [shape: bf16[2,32,96], index: 8, kind: input, shape index: {}]
  %s9 = inlined_call_operand.vmem [shape: f32[2,1,96], index: 9, kind: input, shape index: {}]
  %s10 = inlined_call_operand.vmem [shape: bf16[2,32,32], index: 10, kind: input, shape index: {}]
  %s11 = inlined_call_operand.vmem [shape: f32[2,1,32], index: 11, kind: input, shape index: {}]
  %s12 = inlined_call_operand.vmem [shape: bf16[2,32,64], index: 12, kind: input, shape index: {}]
  %s13 = inlined_call_operand.vmem [shape: f32[2,1,64], index: 13, kind: input, shape index: {}]
  %s14 = inlined_call_operand.vmem [shape: bf16[2,64,32], index: 14, kind: input, shape index: {}]
  %s15 = inlined_call_operand.vmem [shape: f32[2,1,32], index: 15, kind: input, shape index: {}]
  %s16 = inlined_call_operand.vmem [shape: f32[2,1,32], index: 16, kind: input, shape index: {}]
  %s17 = inlined_call_operand.vmem [shape: f32[2,1,32], index: 17, kind: input, shape index: {}]
  %s18 = inlined_call_operand.vmem [shape: f32[2,1,32], index: 18, kind: input, shape index: {}]
  %s19 = inlined_call_operand.vmem [shape: f32[2,1,32], index: 19, kind: input, shape index: {}]
  %s20 = inlined_call_operand.vmem [shape: f32[2,1,32], index: 20, kind: input, shape index: {}]
  %s21 = inlined_call_operand.vmem [shape: f32[2,1,32], index: 21, kind: input, shape index: {}]
  %s22 = inlined_call_operand.vmem [shape: f32[1,32], index: 22, kind: input, shape index: {}]
  %s23 = inlined_call_operand.vmem [shape: f32[1,32], index: 23, kind: input, shape index: {}]
  %s24 = inlined_call_operand.vmem [shape: f32[2,8,32], index: 24, kind: output, shape index: {0}]
  %s25 = inlined_call_operand.vmem [shape: f32[2,8,32], index: 25, kind: output, shape index: {1}]
  %26 = xla_tuple %s24, %s25
  %s27 = sld [smem:[#allocation0]]
  $region114: #{transformer_decoder_forward.1} parent=0
    _
  %s29 = ssub.s32 1, %s27
  %s30 = scalar_select 0, %s29, %s27
  // Predicated region
  $region2: #{transformer_decoder_forward.1} parent=0 // pred_check
    _
  $region3: #{transformer_decoder_forward.1} parent=0 // pred_check_branch
    %32 = sbr.rel (0) target = $region5
  $region4: #{transformer_decoder_forward.1} parent=0 // pred_region
    _
  $region5: #{transformer_decoder_forward.1} parent=0 // pred_fallthru
    _
  // Predicated region
  $region6: #{transformer_decoder_forward.1} parent=0 // pred_check
    _
  $region7: #{transformer_decoder_forward.1} parent=0 // pred_check_branch
    %34 = sbr.rel (0) target = $region9
  $region8: #{transformer_decoder_forward.1} parent=0 // pred_region
    _
  $region9: #{transformer_decoder_forward.1} parent=0 // pred_fallthru
    _
  // Predicated region
  $region10: #{transformer_decoder_forward.1} parent=0 // pred_check
    _
  $region11: #{transformer_decoder_forward.1} parent=0 // pred_check_branch
    %36 = sbr.rel (0) target = $region13
  $region12: #{transformer_decoder_forward.1} parent=0 // pred_region
    _
  $region13: #{transformer_decoder_forward.1} parent=0 // pred_fallthru
    _
  // Predicated region
  $region14: #{transformer_decoder_forward.1} parent=0 // pred_check
    _
  $region15: #{transformer_decoder_forward.1} parent=0 // pred_check_branch
    %38 = sbr.rel (0) target = $region17
  $region16: #{transformer_decoder_forward.1} parent=0 // pred_region
    _
  $region17: #{transformer_decoder_forward.1} parent=0 // pred_fallthru
    _
  // Predicated region
  $region18: #{transformer_decoder_forward.1} parent=0 // pred_check
    _
  $region19: #{transformer_decoder_forward.1} parent=0 // pred_check_branch
    %40 = sbr.rel (0) target = $region21
  $region20: #{transformer_decoder_forward.1} parent=0 // pred_region
    _
  $region21: #{transformer_decoder_forward.1} parent=0 // pred_fallthru
    _
  // Predicated region
  $region22: #{transformer_decoder_forward.1} parent=0 // pred_check
    _
  $region23: #{transformer_decoder_forward.1} parent=0 // pred_check_branch
    %42 = sbr.rel (0) target = $region25
  $region24: #{transformer_decoder_forward.1} parent=0 // pred_region
    _
  $region25: #{transformer_decoder_forward.1} parent=0 // pred_fallthru
    _
  // Predicated region
  $region26: #{transformer_decoder_forward.1} parent=0 // pred_check
    _
  $region27: #{transformer_decoder_forward.1} parent=0 // pred_check_branch
    %44 = sbr.rel (0) target = $region29
  $region28: #{transformer_decoder_forward.1} parent=0 // pred_region
    _
  $region29: #{transformer_decoder_forward.1} parent=0 // pred_fallthru
    _
  // Predicated region
  $region30: #{transformer_decoder_forward.1} parent=0 // pred_check
    _
  $region31: #{transformer_decoder_forward.1} parent=0 // pred_check_branch
    %46 = sbr.rel (0) target = $region33
  $region32: #{transformer_decoder_forward.1} parent=0 // pred_region
    _
  $region33: #{transformer_decoder_forward.1} parent=0 // pred_fallthru
    _
  // Predicated region
  $region34: #{transformer_decoder_forward.1} parent=0 // pred_check
    _
  $region35: #{transformer_decoder_forward.1} parent=0 // pred_check_branch
    %48 = sbr.rel (0) target = $region37
  $region36: #{transformer_decoder_forward.1} parent=0 // pred_region
    _
  $region37: #{transformer_decoder_forward.1} parent=0 // pred_fallthru
    _
  // Predicated region
  $region38: #{transformer_decoder_forward.1} parent=0 // pred_check
    _
  $region39: #{transformer_decoder_forward.1} parent=0 // pred_check_branch
    %50 = sbr.rel (0) target = $region41
  $region40: #{transformer_decoder_forward.1} parent=0 // pred_region
    _
  $region41: #{transformer_decoder_forward.1} parent=0 // pred_fallthru
    _
  // Predicated region
  $region42: #{transformer_decoder_forward.1} parent=0 // pred_check
    _
  $region43: #{transformer_decoder_forward.1} parent=0 // pred_check_branch
    %52 = sbr.rel (0) target = $region45
  $region44: #{transformer_decoder_forward.1} parent=0 // pred_region
    _
  $region45: #{transformer_decoder_forward.1} parent=0 // pred_fallthru
    _
  // Predicated region
  $region46: #{transformer_decoder_forward.1} parent=0 // pred_check
    _
  $region47: #{transformer_decoder_forward.1} parent=0 // pred_check_branch
    %54 = sbr.rel (0) target = $region49
  $region48: #{transformer_decoder_forward.1} parent=0 // pred_region
    _
  $region49: #{transformer_decoder_forward.1} parent=0 // pred_fallthru
    _
  // Predicated region
  $region50: #{transformer_decoder_forward.1} parent=0 // pred_check
    _
  $region51: #{transformer_decoder_forward.1} parent=0 // pred_check_branch
    %56 = sbr.rel (0) target = $region53
  $region52: #{transformer_decoder_forward.1} parent=0 // pred_region
    _
  $region53: #{transformer_decoder_forward.1} parent=0 // pred_fallthru
    _
  // Predicated region
  $region54: #{transformer_decoder_forward.1} parent=0 // pred_check
    _
  $region55: #{transformer_decoder_forward.1} parent=0 // pred_check_branch
    %58 = sbr.rel (0) target = $region57
  $region56: #{transformer_decoder_forward.1} parent=0 // pred_region
    _
  $region57: #{transformer_decoder_forward.1} parent=0 // pred_fallthru
    _
  // Predicated region
  $region58: #{transformer_decoder_forward.1} parent=0 // pred_check
    _
  $region59: #{transformer_decoder_forward.1} parent=0 // pred_check_branch
    %60 = sbr.rel (0) target = $region61
  $region60: #{transformer_decoder_forward.1} parent=0 // pred_region
    _
  $region61: #{transformer_decoder_forward.1} parent=0 // pred_fallthru
    _
  // Predicated region
  $region62: #{transformer_decoder_forward.1} parent=0 // pred_check
    _
  $region63: #{transformer_decoder_forward.1} parent=0 // pred_check_branch
    %62 = sbr.rel (0) target = $region65
  $region64: #{transformer_decoder_forward.1} parent=0 // pred_region
    _
  $region65: #{transformer_decoder_forward.1} parent=0 // pred_fallthru
    _
  // Predicated region
  $region66: #{transformer_decoder_forward.1} parent=0 // pred_check
    _
  $region67: #{transformer_decoder_forward.1} parent=0 // pred_check_branch
    %64 = sbr.rel (0) target = $region69
  $region68: #{transformer_decoder_forward.1} parent=0 // pred_region
    _
  $region69: #{transformer_decoder_forward.1} parent=0 // pred_fallthru
    _
  // Predicated region
  $region70: #{transformer_decoder_forward.1} parent=0 // pred_check
    _
  $region71: #{transformer_decoder_forward.1} parent=0 // pred_check_branch
    %66 = sbr.rel (0) target = $region73
  $region72: #{transformer_decoder_forward.1} parent=0 // pred_region
    _
  $region73: #{transformer_decoder_forward.1} parent=0 // pred_fallthru
    _
  // Predicated region
  $region74: #{transformer_decoder_forward.1} parent=0 // pred_check
    _
  $region75: #{transformer_decoder_forward.1} parent=0 // pred_check_branch
    %68 = sbr.rel (0) target = $region77
  $region76: #{transformer_decoder_forward.1} parent=0 // pred_region
    _
  $region77: #{transformer_decoder_forward.1} parent=0 // pred_fallthru
    _
  // Predicated region
  $region78: #{transformer_decoder_forward.1} parent=0 // pred_check
    _
  $region79: #{transformer_decoder_forward.1} parent=0 // pred_check_branch
    %70 = sbr.rel (0) target = $region81
  $region80: #{transformer_decoder_forward.1} parent=0 // pred_region
    _
  $region81: #{transformer_decoder_forward.1} parent=0 // pred_fallthru
    _
  // Predicated region
  $region82: #{transformer_decoder_forward.1} parent=0 // pred_check
    _
  $region83: #{transformer_decoder_forward.1} parent=0 // pred_check_branch
    %72 = sbr.rel (0) target = $region85
  $region84: #{transformer_decoder_forward.1} parent=0 // pred_region
    _
  $region85: #{transformer_decoder_forward.1} parent=0 // pred_fallthru
    _
  // Predicated region
  $region86: #{transformer_decoder_forward.1} parent=0 // pred_check
    _
  $region87: #{transformer_decoder_forward.1} parent=0 // pred_check_branch
    %74 = sbr.rel (0) target = $region89
  $region88: #{transformer_decoder_forward.1} parent=0 // pred_region
    _
  $region89: #{transformer_decoder_forward.1} parent=0 // pred_fallthru
    _
  // Predicated region
  $region90: #{transformer_decoder_forward.1} parent=0 // pred_check
    _
  $region91: #{transformer_decoder_forward.1} parent=0 // pred_check_branch
    %76 = sbr.rel (0) target = $region93
  $region92: #{transformer_decoder_forward.1} parent=0 // pred_region
    _
  $region93: #{transformer_decoder_forward.1} parent=0 // pred_fallthru
    _
  // Predicated region
  $region94: #{transformer_decoder_forward.1} parent=0 // pred_check
    _
  $region95: #{transformer_decoder_forward.1} parent=0 // pred_check_branch
    %78 = sbr.rel (0) target = $region97
  $region96: #{transformer_decoder_forward.1} parent=0 // pred_region
    _
  $region97: #{transformer_decoder_forward.1} parent=0 // pred_fallthru
    _
  %v80 = vld [vmem:[%s0] sm:$0xff]
  %v81 = vld [vmem:[%s0 + $0x8] sm:$0xff]
  %v82 = vld [vmem:[%s1] sm:$0xff]
  %v83 = vld [vmem:[%s1 + $0x8] sm:$0xff]
  %v84 = vld [vmem:[%s1 + $0x10] sm:$0xff]
  %v85 = vld [vmem:[%s1 + $0x18] sm:$0xff]
  %v86 = vld [vmem:[%s2] sm:$0xff]
  %v87 = vld [vmem:[%s2 + $0x8] sm:$0xff]
  %v88 = vld [vmem:[%s2 + $0x10] sm:$0xff]
  %v89 = vld [vmem:[%s2 + $0x18] sm:$0xff]
  %v90 = vld [vmem:[%s3] sm:$0xff]
  %v91 = vld [vmem:[%s3 + $0x8] sm:$0xff]
  %v92 = vadd.f32 %v82, %v86
  %v93 = vadd.f32 %v83, %v87
  %v94 = vadd.f32 %v84, %v88
  %v95 = vadd.f32 %v85, %v89
  %v96 = vadd.f32 %v80, %v90
  %v97 = vadd.f32 %v81, %v91
  %v98 = vld [vmem:[%s4] sm:$0xf]
  %v99 = vld [vmem:[%s4 + $0x4] sm:$0xf]
  %v100 = vld [vmem:[%s4 + $0x8] sm:$0xf]
  %v101 = vld [vmem:[%s4 + $0xc] sm:$0xf]
  %v102 = vld [vmem:[%s5] sm:$0x1]
  %v103 = vld [vmem:[%s6] sm:$0xf]
  %v104 = vld [vmem:[%s6 + $0x4] sm:$0xf]
  %v105 = vld [vmem:[%s6 + $0x8] sm:$0xf]
  %v106 = vld [vmem:[%s6 + $0xc] sm:$0xf]
  %v107 = vld [vmem:[%s7] sm:$0x1]
  %v108 = vpack.c.bf16 %v97, %v96
  %v110 = vlaneseq
  %v111 = vshrl.u32 %v110, 7
  %v112 = vsub.s32 0, %v111
  %v113 = vrot.slane %v102, %v112
  %v119 = vunpack.c.l.b16 %v98
  %v120 = vunpack.c.l.b16 %v99
  %v121 = vunpack.c.l.b16 %v100
  %v122 = vunpack.c.l.b16 %v101
  %v123 = vpack.c.b16 %v120, %v119
  %v124 = vpack.c.b16 %v122, %v121
  %vm127 = vcmask 261120
  %v129 = vsel %vm127, %v108, 0
  %131 = vmatprep.subr.bf16.mxu0 0
  %132 = vmatpush1.bf16.msra.mxu0 0
  %133 = vmatprep.subr.bf16.mxu0 0
  %134 = vmatpush1.bf16.msra.mxu0 0
  %135 = vmatprep.subr.bf16.mxu0 0
  %136 = vmatpush1.bf16.msra.mxu0 0
  %137 = vmatprep.subr.bf16.mxu0 0
  %138 = vmatpush1.bf16.msra.mxu0 0
  %139 = vmatprep.subr.bf16.mxu0 0
  %140 = vmatpush1.bf16.msra.mxu0 0
  %141 = vmatprep.subr.bf16.mxu0 0
  %142 = vmatpush1.bf16.msra.mxu0 0
  %143 = vmatprep.subr.bf16.mxu0 0
  %144 = vmatpush1.bf16.msra.mxu0 %v124
  %145 = vmatprep.subr.bf16.mxu0 0
  %146 = vmatpush1.bf16.msra.mxu0 %v123
  %147 = vmatprep.subr.bf16.mxu0 0
  %148 = vmatpush2.bf16.msra.mxu0 0
  %149 = vmatprep.subr.bf16.mxu0 0
  %150 = vmatpush2.bf16.msra.mxu0 0
  %151 = vmatprep.subr.bf16.mxu0 0
  %152 = vmatpush2.bf16.msra.mxu0 0
  %153 = vmatprep.subr.bf16.mxu0 0
  %154 = vmatpush2.bf16.msra.mxu0 0
  %155 = vmatprep.subr.bf16.mxu0 0
  %156 = vmatpush2.bf16.msra.mxu0 0
  %157 = vmatprep.subr.bf16.mxu0 0
  %158 = vmatpush2.bf16.msra.mxu0 0
  %159 = vmatprep.subr.bf16.mxu0 0
  %160 = vmatpush2.bf16.msra.mxu0 0
  %161 = vmatprep.subr.bf16.mxu0 0
  %162 = vmatpush2.bf16.msra.mxu0 0
  %163 = vmatprep.mubr.bf16.mxu0 0
  %164 = vmatmul.mubr.bf16.gmra.mxu0 %v129
  %v165 = vpop.f32.mrf.mxu0
  %v166 = vadd.f32 %v113, %v165
  %v167 = vpop.f32.mrf.mxu0
  %v168 = vpop.f32.mrf.mxu0
  %v169 = vadd.f32 %v113, %v168
  %v170 = vpop.f32.mrf.mxu0
  %171 = vdwg.mxu0
  %v172 = vpack.c.bf16 %v81, %v80
  %173 = vrot.lane.b32.xlu0 %v123, 64
  %v174 = vpop.permute.xlu0 %173
  %175 = vrot.lane.b32.xlu0 %v124, 64
  %v176 = vpop.permute.xlu0 %175
  %179 = vrot.lane.b32.xlu0 %v113, 64
  %v180 = vpop.permute.xlu0 %179
  %v183 = vsel %vm127, %v172, 0
  %185 = vmatprep.subr.bf16.mxu0 0
  %186 = vmatpush1.bf16.msra.mxu0 0
  %187 = vmatprep.subr.bf16.mxu0 0
  %188 = vmatpush1.bf16.msra.mxu0 0
  %189 = vmatprep.subr.bf16.mxu0 0
  %190 = vmatpush1.bf16.msra.mxu0 0
  %191 = vmatprep.subr.bf16.mxu0 0
  %192 = vmatpush1.bf16.msra.mxu0 0
  %193 = vmatprep.subr.bf16.mxu0 0
  %194 = vmatpush1.bf16.msra.mxu0 0
  %195 = vmatprep.subr.bf16.mxu0 0
  %196 = vmatpush1.bf16.msra.mxu0 0
  %197 = vmatprep.subr.bf16.mxu0 0
  %198 = vmatpush1.bf16.msra.mxu0 %v176
  %199 = vmatprep.subr.bf16.mxu0 0
  %200 = vmatpush1.bf16.msra.mxu0 %v174
  %201 = vmatprep.subr.bf16.mxu0 0
  %202 = vmatpush2.bf16.msra.mxu0 0
  %203 = vmatprep.subr.bf16.mxu0 0
  %204 = vmatpush2.bf16.msra.mxu0 0
  %205 = vmatprep.subr.bf16.mxu0 0
  %206 = vmatpush2.bf16.msra.mxu0 0
  %207 = vmatprep.subr.bf16.mxu0 0
  %208 = vmatpush2.bf16.msra.mxu0 0
  %209 = vmatprep.subr.bf16.mxu0 0
  %210 = vmatpush2.bf16.msra.mxu0 0
  %211 = vmatprep.subr.bf16.mxu0 0
  %212 = vmatpush2.bf16.msra.mxu0 0
  %213 = vmatprep.subr.bf16.mxu0 0
  %214 = vmatpush2.bf16.msra.mxu0 0
  %215 = vmatprep.subr.bf16.mxu0 0
  %216 = vmatpush2.bf16.msra.mxu0 0
  %217 = vmatprep.mubr.bf16.mxu0 0
  %218 = vmatmul.mubr.bf16.gmra.mxu0 %v183
  %v219 = vpop.f32.mrf.mxu0
  %v220 = vadd.f32 %v180, %v219
  %v221 = vpop.f32.mrf.mxu0
  %v222 = vpop.f32.mrf.mxu0
  %v223 = vadd.f32 %v180, %v222
  %v224 = vpop.f32.mrf.mxu0
  %225 = vdwg.mxu0
  %v226 = vpack.c.bf16 %v169, %v166
  %228 = vrot.lane.b32.xlu0 %v226, 120
  %v229 = vpop.permute.xlu0 %228
  %230 = vrot.lane.b32.xlu0 %v226, 112
  %v231 = vpop.permute.xlu0 %230
  %232 = vrot.lane.b32.xlu0 %v226, 104
  %v233 = vpop.permute.xlu0 %232
  %v236 = vpack.i.b16 %v229, %v226
  %v238 = vshrl.u32 %v226, 16
  %v239 = vshrl.u32 %v229, 16
  %v240 = vpack.i.b16 %v239, %v238
  %v244 = vpack.i.b16 %v233, %v231
  %v246 = vshrl.u32 %v231, 16
  %v247 = vshrl.u32 %v233, 16
  %v248 = vpack.i.b16 %v247, %v246
  %v251 = vpack.i.b16 0, 0
  %v253 = vshrl.u32 0, 16
  %v254 = vpack.i.b16 %v253, %v253
  %v256 = vcombine.high %v236, %v251
  %v258 = vunpack.c.l.s4 1983009808
  %v259 = vunpack.c.0.s8 %v258
  %v260 = vlaneseq
  %v261 = vshrl.u32 %v260, 7
  %v262 = vsub.s32 %v259, %v261
  %v263 = vrot.slane %v236, %v262
  %v265 = vunpack.c.l.s4 1983009808
  %v266 = vunpack.c.0.s8 %v265
  %v267 = vlaneseq
  %v268 = vshrl.u32 %v267, 7
  %v269 = vsub.s32 %v266, %v268
  %v270 = vrot.slane %v256, %v269
  %v271 = vcombine.high %v244, %v251
  %v273 = vunpack.c.l.s4 1983009808
  %v274 = vunpack.c.0.s8 %v273
  %v275 = vlaneseq
  %v276 = vshrl.u32 %v275, 7
  %v277 = vsub.s32 %v274, %v276
  %v278 = vrot.slane %v244, %v277
  %v280 = vunpack.c.l.s4 1983009808
  %v281 = vunpack.c.0.s8 %v280
  %v282 = vlaneseq
  %v283 = vshrl.u32 %v282, 7
  %v284 = vsub.s32 %v281, %v283
  %v285 = vrot.slane %v271, %v284
  %v286 = vcombine.low %v263, %v278
  %v287 = vcombine.high %v263, %v278
  %v289 = vunpack.c.l.s4 1934713408
  %v290 = vunpack.c.0.s8 %v289
  %v291 = vlaneseq
  %v292 = vshrl.u32 %v291, 7
  %v293 = vsub.s32 %v290, %v292
  %v294 = vrot.slane %v286, %v293
  %v296 = vunpack.c.l.s4 1934713408
  %v297 = vunpack.c.0.s8 %v296
  %v298 = vlaneseq
  %v299 = vshrl.u32 %v298, 7
  %v300 = vsub.s32 %v297, %v299
  %v301 = vrot.slane %v287, %v300
  %v302 = vcombine.low %v270, %v285
  %v303 = vcombine.high %v270, %v285
  %v305 = vunpack.c.l.s4 1934713408
  %v306 = vunpack.c.0.s8 %v305
  %v307 = vlaneseq
  %v308 = vshrl.u32 %v307, 7
  %v309 = vsub.s32 %v306, %v308
  %v310 = vrot.slane %v302, %v309
  %v312 = vunpack.c.l.s4 1934713408
  %v313 = vunpack.c.0.s8 %v312
  %v314 = vlaneseq
  %v315 = vshrl.u32 %v314, 7
  %v316 = vsub.s32 %v313, %v315
  %v317 = vrot.slane %v303, %v316
  %v318 = vcombine.high %v294, 0
  %v319 = vcombine.high %v301, 0
  %v320 = vcombine.high %v310, 0
  %v321 = vcombine.high %v317, 0
  %v322 = vcombine.high %v240, %v254
  %v324 = vunpack.c.l.s4 1983009808
  %v325 = vunpack.c.0.s8 %v324
  %v326 = vlaneseq
  %v327 = vshrl.u32 %v326, 7
  %v328 = vsub.s32 %v325, %v327
  %v329 = vrot.slane %v240, %v328
  %v331 = vunpack.c.l.s4 1983009808
  %v332 = vunpack.c.0.s8 %v331
  %v333 = vlaneseq
  %v334 = vshrl.u32 %v333, 7
  %v335 = vsub.s32 %v332, %v334
  %v336 = vrot.slane %v322, %v335
  %v337 = vcombine.high %v248, %v254
  %v339 = vunpack.c.l.s4 1983009808
  %v340 = vunpack.c.0.s8 %v339
  %v341 = vlaneseq
  %v342 = vshrl.u32 %v341, 7
  %v343 = vsub.s32 %v340, %v342
  %v344 = vrot.slane %v248, %v343
  %v346 = vunpack.c.l.s4 1983009808
  %v347 = vunpack.c.0.s8 %v346
  %v348 = vlaneseq
  %v349 = vshrl.u32 %v348, 7
  %v350 = vsub.s32 %v347, %v349
  %v351 = vrot.slane %v337, %v350
  %v352 = vcombine.low %v329, %v344
  %v353 = vcombine.high %v329, %v344
  %v355 = vunpack.c.l.s4 1934713408
  %v356 = vunpack.c.0.s8 %v355
  %v357 = vlaneseq
  %v358 = vshrl.u32 %v357, 7
  %v359 = vsub.s32 %v356, %v358
  %v360 = vrot.slane %v352, %v359
  %v362 = vunpack.c.l.s4 1934713408
  %v363 = vunpack.c.0.s8 %v362
  %v364 = vlaneseq
  %v365 = vshrl.u32 %v364, 7
  %v366 = vsub.s32 %v363, %v365
  %v367 = vrot.slane %v353, %v366
  %v368 = vcombine.low %v336, %v351
  %v369 = vcombine.high %v336, %v351
  %v371 = vunpack.c.l.s4 1934713408
  %v372 = vunpack.c.0.s8 %v371
  %v373 = vlaneseq
  %v374 = vshrl.u32 %v373, 7
  %v375 = vsub.s32 %v372, %v374
  %v376 = vrot.slane %v368, %v375
  %v378 = vunpack.c.l.s4 1934713408
  %v379 = vunpack.c.0.s8 %v378
  %v380 = vlaneseq
  %v381 = vshrl.u32 %v380, 7
  %v382 = vsub.s32 %v379, %v381
  %v383 = vrot.slane %v369, %v382
  %v384 = vcombine.high %v360, 0
  %v385 = vcombine.high %v367, 0
  %v386 = vcombine.high %v376, 0
  %v387 = vcombine.high %v383, 0
  %v388 = vcombine.low %v294, %v301
  %v390 = vunpack.c.l.s4 1983009808
  %v391 = vunpack.c.0.s8 %v390
  %v392 = vlaneseq
  %v393 = vshrl.u32 %v392, 7
  %v394 = vsub.s32 %v391, %v393
  %v395 = vrot.slane %v388, %v394
  %v396 = vcombine.low %v318, %v319
  %v398 = vunpack.c.l.s4 1983009808
  %v399 = vunpack.c.0.s8 %v398
  %v400 = vlaneseq
  %v401 = vshrl.u32 %v400, 7
  %v402 = vsub.s32 %v399, %v401
  %v403 = vrot.slane %v396, %v402
  %v404 = vcombine.low %v395, %v403
  %v406 = vunpack.c.l.s4 1934713408
  %v407 = vunpack.c.0.s8 %v406
  %v408 = vlaneseq
  %v409 = vshrl.u32 %v408, 7
  %v410 = vsub.s32 %v407, %v409
  %v411 = vrot.slane %v404, %v410
  %v412 = vcombine.high %v411, 0
  %v413 = vcombine.low %v360, %v367
  %v415 = vunpack.c.l.s4 1983009808
  %v416 = vunpack.c.0.s8 %v415
  %v417 = vlaneseq
  %v418 = vshrl.u32 %v417, 7
  %v419 = vsub.s32 %v416, %v418
  %v420 = vrot.slane %v413, %v419
  %v421 = vcombine.low %v384, %v385
  %v423 = vunpack.c.l.s4 1983009808
  %v424 = vunpack.c.0.s8 %v423
  %v425 = vlaneseq
  %v426 = vshrl.u32 %v425, 7
  %v427 = vsub.s32 %v424, %v426
  %v428 = vrot.slane %v421, %v427
  %v429 = vcombine.low %v420, %v428
  %v431 = vunpack.c.l.s4 1934713408
  %v432 = vunpack.c.0.s8 %v431
  %v433 = vlaneseq
  %v434 = vshrl.u32 %v433, 7
  %v435 = vsub.s32 %v432, %v434
  %v436 = vrot.slane %v429, %v435
  %v437 = vcombine.high %v436, 0
  %v438 = vcombine.low %v310, %v317
  %v440 = vunpack.c.l.s4 1983009808
  %v441 = vunpack.c.0.s8 %v440
  %v442 = vlaneseq
  %v443 = vshrl.u32 %v442, 7
  %v444 = vsub.s32 %v441, %v443
  %v445 = vrot.slane %v438, %v444
  %v446 = vcombine.low %v320, %v321
  %v448 = vunpack.c.l.s4 1983009808
  %v449 = vunpack.c.0.s8 %v448
  %v450 = vlaneseq
  %v451 = vshrl.u32 %v450, 7
  %v452 = vsub.s32 %v449, %v451
  %v453 = vrot.slane %v446, %v452
  %v454 = vcombine.low %v445, %v453
  %v456 = vunpack.c.l.s4 1934713408
  %v457 = vunpack.c.0.s8 %v456
  %v458 = vlaneseq
  %v459 = vshrl.u32 %v458, 7
  %v460 = vsub.s32 %v457, %v459
  %v461 = vrot.slane %v454, %v460
  %v462 = vcombine.high %v461, 0
  %v463 = vcombine.low %v376, %v383
  %v465 = vunpack.c.l.s4 1983009808
  %v466 = vunpack.c.0.s8 %v465
  %v467 = vlaneseq
  %v468 = vshrl.u32 %v467, 7
  %v469 = vsub.s32 %v466, %v468
  %v470 = vrot.slane %v463, %v469
  %v471 = vcombine.low %v386, %v387
  %v473 = vunpack.c.l.s4 1983009808
  %v474 = vunpack.c.0.s8 %v473
  %v475 = vlaneseq
  %v476 = vshrl.u32 %v475, 7
  %v477 = vsub.s32 %v474, %v476
  %v478 = vrot.slane %v471, %v477
  %v479 = vcombine.low %v470, %v478
  %v481 = vunpack.c.l.s4 1934713408
  %v482 = vunpack.c.0.s8 %v481
  %v483 = vlaneseq
  %v484 = vshrl.u32 %v483, 7
  %v485 = vsub.s32 %v482, %v484
  %v486 = vrot.slane %v479, %v485
  %v487 = vcombine.high %v486, 0
  %v490 = vpack.i.b16 %v436, %v411
  %v491 = vshrl.u32 %v411, 16
  %v492 = vshrl.u32 %v436, 16
  %v493 = vpack.i.b16 %v492, %v491
  %v496 = vpack.i.b16 %v437, %v412
  %v497 = vshrl.u32 %v412, 16
  %v498 = vshrl.u32 %v437, 16
  %v499 = vpack.i.b16 %v498, %v497
  %v502 = vpack.i.b16 %v486, %v461
  %v503 = vshrl.u32 %v461, 16
  %v504 = vshrl.u32 %v486, 16
  %v505 = vpack.i.b16 %v504, %v503
  %v508 = vpack.i.b16 %v487, %v462
  %v509 = vshrl.u32 %v462, 16
  %v510 = vshrl.u32 %v487, 16
  %v511 = vpack.i.b16 %v510, %v509
  %512 = vrot.lane.b32.xlu0 %v226, 96
  %v513 = vpop.permute.xlu0 %512
  %514 = vrot.lane.b32.xlu0 %v229, 96
  %v515 = vpop.permute.xlu0 %514
  %516 = vrot.lane.b32.xlu0 %v231, 96
  %v517 = vpop.permute.xlu0 %516
  %518 = vrot.lane.b32.xlu0 %v233, 96
  %v519 = vpop.permute.xlu0 %518
  %v522 = vpack.i.b16 %v515, %v513
  %v524 = vshrl.u32 %v513, 16
  %v525 = vshrl.u32 %v515, 16
  %v526 = vpack.i.b16 %v525, %v524
  %v530 = vpack.i.b16 %v519, %v517
  %v532 = vshrl.u32 %v517, 16
  %v533 = vshrl.u32 %v519, 16
  %v534 = vpack.i.b16 %v533, %v532
  %v536 = vcombine.high %v522, %v251
  %v538 = vunpack.c.l.s4 1983009808
  %v539 = vunpack.c.0.s8 %v538
  %v540 = vlaneseq
  %v541 = vshrl.u32 %v540, 7
  %v542 = vsub.s32 %v539, %v541
  %v543 = vrot.slane %v522, %v542
  %v545 = vunpack.c.l.s4 1983009808
  %v546 = vunpack.c.0.s8 %v545
  %v547 = vlaneseq
  %v548 = vshrl.u32 %v547, 7
  %v549 = vsub.s32 %v546, %v548
  %v550 = vrot.slane %v536, %v549
  %v551 = vcombine.high %v530, %v251
  %v553 = vunpack.c.l.s4 1983009808
  %v554 = vunpack.c.0.s8 %v553
  %v555 = vlaneseq
  %v556 = vshrl.u32 %v555, 7
  %v557 = vsub.s32 %v554, %v556
  %v558 = vrot.slane %v530, %v557
  %v560 = vunpack.c.l.s4 1983009808
  %v561 = vunpack.c.0.s8 %v560
  %v562 = vlaneseq
  %v563 = vshrl.u32 %v562, 7
  %v564 = vsub.s32 %v561, %v563
  %v565 = vrot.slane %v551, %v564
  %v566 = vcombine.low %v543, %v558
  %v567 = vcombine.high %v543, %v558
  %v569 = vunpack.c.l.s4 1934713408
  %v570 = vunpack.c.0.s8 %v569
  %v571 = vlaneseq
  %v572 = vshrl.u32 %v571, 7
  %v573 = vsub.s32 %v570, %v572
  %v574 = vrot.slane %v566, %v573
  %v576 = vunpack.c.l.s4 1934713408
  %v577 = vunpack.c.0.s8 %v576
  %v578 = vlaneseq
  %v579 = vshrl.u32 %v578, 7
  %v580 = vsub.s32 %v577, %v579
  %v581 = vrot.slane %v567, %v580
  %v582 = vcombine.low %v550, %v565
  %v583 = vcombine.high %v550, %v565
  %v585 = vunpack.c.l.s4 1934713408
  %v586 = vunpack.c.0.s8 %v585
  %v587 = vlaneseq
  %v588 = vshrl.u32 %v587, 7
  %v589 = vsub.s32 %v586, %v588
  %v590 = vrot.slane %v582, %v589
  %v592 = vunpack.c.l.s4 1934713408
  %v593 = vunpack.c.0.s8 %v592
  %v594 = vlaneseq
  %v595 = vshrl.u32 %v594, 7
  %v596 = vsub.s32 %v593, %v595
  %v597 = vrot.slane %v583, %v596
  %v598 = vcombine.high %v574, 0
  %v599 = vcombine.high %v581, 0
  %v600 = vcombine.high %v590, 0
  %v601 = vcombine.high %v597, 0
  %v602 = vcombine.high %v526, %v254
  %v604 = vunpack.c.l.s4 1983009808
  %v605 = vunpack.c.0.s8 %v604
  %v606 = vlaneseq
  %v607 = vshrl.u32 %v606, 7
  %v608 = vsub.s32 %v605, %v607
  %v609 = vrot.slane %v526, %v608
  %v611 = vunpack.c.l.s4 1983009808
  %v612 = vunpack.c.0.s8 %v611
  %v613 = vlaneseq
  %v614 = vshrl.u32 %v613, 7
  %v615 = vsub.s32 %v612, %v614
  %v616 = vrot.slane %v602, %v615
  %v617 = vcombine.high %v534, %v254
  %v619 = vunpack.c.l.s4 1983009808
  %v620 = vunpack.c.0.s8 %v619
  %v621 = vlaneseq
  %v622 = vshrl.u32 %v621, 7
  %v623 = vsub.s32 %v620, %v622
  %v624 = vrot.slane %v534, %v623
  %v626 = vunpack.c.l.s4 1983009808
  %v627 = vunpack.c.0.s8 %v626
  %v628 = vlaneseq
  %v629 = vshrl.u32 %v628, 7
  %v630 = vsub.s32 %v627, %v629
  %v631 = vrot.slane %v617, %v630
  %v632 = vcombine.low %v609, %v624
  %v633 = vcombine.high %v609, %v624
  %v635 = vunpack.c.l.s4 1934713408
  %v636 = vunpack.c.0.s8 %v635
  %v637 = vlaneseq
  %v638 = vshrl.u32 %v637, 7
  %v639 = vsub.s32 %v636, %v638
  %v640 = vrot.slane %v632, %v639
  %v642 = vunpack.c.l.s4 1934713408
  %v643 = vunpack.c.0.s8 %v642
  %v644 = vlaneseq
  %v645 = vshrl.u32 %v644, 7
  %v646 = vsub.s32 %v643, %v645
  %v647 = vrot.slane %v633, %v646
  %v648 = vcombine.low %v616, %v631
  %v649 = vcombine.high %v616, %v631
  %v651 = vunpack.c.l.s4 1934713408
  %v652 = vunpack.c.0.s8 %v651
  %v653 = vlaneseq
  %v654 = vshrl.u32 %v653, 7
  %v655 = vsub.s32 %v652, %v654
  %v656 = vrot.slane %v648, %v655
  %v658 = vunpack.c.l.s4 1934713408
  %v659 = vunpack.c.0.s8 %v658
  %v660 = vlaneseq
  %v661 = vshrl.u32 %v660, 7
  %v662 = vsub.s32 %v659, %v661
  %v663 = vrot.slane %v649, %v662
  %v664 = vcombine.high %v640, 0
  %v665 = vcombine.high %v647, 0
  %v666 = vcombine.high %v656, 0
  %v667 = vcombine.high %v663, 0
  %v668 = vcombine.low %v574, %v581
  %v670 = vunpack.c.l.s4 1983009808
  %v671 = vunpack.c.0.s8 %v670
  %v672 = vlaneseq
  %v673 = vshrl.u32 %v672, 7
  %v674 = vsub.s32 %v671, %v673
  %v675 = vrot.slane %v668, %v674
  %v676 = vcombine.low %v598, %v599
  %v678 = vunpack.c.l.s4 1983009808
  %v679 = vunpack.c.0.s8 %v678
  %v680 = vlaneseq
  %v681 = vshrl.u32 %v680, 7
  %v682 = vsub.s32 %v679, %v681
  %v683 = vrot.slane %v676, %v682
  %v684 = vcombine.low %v675, %v683
  %v686 = vunpack.c.l.s4 1934713408
  %v687 = vunpack.c.0.s8 %v686
  %v688 = vlaneseq
  %v689 = vshrl.u32 %v688, 7
  %v690 = vsub.s32 %v687, %v689
  %v691 = vrot.slane %v684, %v690
  %v692 = vcombine.high %v691, 0
  %v693 = vcombine.low %v640, %v647
  %v695 = vunpack.c.l.s4 1983009808
  %v696 = vunpack.c.0.s8 %v695
  %v697 = vlaneseq
  %v698 = vshrl.u32 %v697, 7
  %v699 = vsub.s32 %v696, %v698
  %v700 = vrot.slane %v693, %v699
  %v701 = vcombine.low %v664, %v665
  %v703 = vunpack.c.l.s4 1983009808
  %v704 = vunpack.c.0.s8 %v703
  %v705 = vlaneseq
  %v706 = vshrl.u32 %v705, 7
  %v707 = vsub.s32 %v704, %v706
  %v708 = vrot.slane %v701, %v707
  %v709 = vcombine.low %v700, %v708
  %v711 = vunpack.c.l.s4 1934713408
  %v712 = vunpack.c.0.s8 %v711
  %v713 = vlaneseq
  %v714 = vshrl.u32 %v713, 7
  %v715 = vsub.s32 %v712, %v714
  %v716 = vrot.slane %v709, %v715
  %v717 = vcombine.high %v716, 0
  %v718 = vcombine.low %v590, %v597
  %v720 = vunpack.c.l.s4 1983009808
  %v721 = vunpack.c.0.s8 %v720
  %v722 = vlaneseq
  %v723 = vshrl.u32 %v722, 7
  %v724 = vsub.s32 %v721, %v723
  %v725 = vrot.slane %v718, %v724
  %v726 = vcombine.low %v600, %v601
  %v728 = vunpack.c.l.s4 1983009808
  %v729 = vunpack.c.0.s8 %v728
  %v730 = vlaneseq
  %v731 = vshrl.u32 %v730, 7
  %v732 = vsub.s32 %v729, %v731
  %v733 = vrot.slane %v726, %v732
  %v734 = vcombine.low %v725, %v733
  %v736 = vunpack.c.l.s4 1934713408
  %v737 = vunpack.c.0.s8 %v736
  %v738 = vlaneseq
  %v739 = vshrl.u32 %v738, 7
  %v740 = vsub.s32 %v737, %v739
  %v741 = vrot.slane %v734, %v740
  %v742 = vcombine.high %v741, 0
  %v743 = vcombine.low %v656, %v663
  %v745 = vunpack.c.l.s4 1983009808
  %v746 = vunpack.c.0.s8 %v745
  %v747 = vlaneseq
  %v748 = vshrl.u32 %v747, 7
  %v749 = vsub.s32 %v746, %v748
  %v750 = vrot.slane %v743, %v749
  %v751 = vcombine.low %v666, %v667
  %v753 = vunpack.c.l.s4 1983009808
  %v754 = vunpack.c.0.s8 %v753
  %v755 = vlaneseq
  %v756 = vshrl.u32 %v755, 7
  %v757 = vsub.s32 %v754, %v756
  %v758 = vrot.slane %v751, %v757
  %v759 = vcombine.low %v750, %v758
  %v761 = vunpack.c.l.s4 1934713408
  %v762 = vunpack.c.0.s8 %v761
  %v763 = vlaneseq
  %v764 = vshrl.u32 %v763, 7
  %v765 = vsub.s32 %v762, %v764
  %v766 = vrot.slane %v759, %v765
  %v767 = vcombine.high %v766, 0
  %v770 = vpack.i.b16 %v716, %v691
  %v771 = vshrl.u32 %v691, 16
  %v772 = vshrl.u32 %v716, 16
  %v773 = vpack.i.b16 %v772, %v771
  %v776 = vpack.i.b16 %v717, %v692
  %v777 = vshrl.u32 %v692, 16
  %v778 = vshrl.u32 %v717, 16
  %v779 = vpack.i.b16 %v778, %v777
  %v782 = vpack.i.b16 %v766, %v741
  %v783 = vshrl.u32 %v741, 16
  %v784 = vshrl.u32 %v766, 16
  %v785 = vpack.i.b16 %v784, %v783
  %v788 = vpack.i.b16 %v767, %v742
  %v789 = vshrl.u32 %v742, 16
  %v790 = vshrl.u32 %v767, 16
  %v791 = vpack.i.b16 %v790, %v789
  %v792 = vpack.c.bf16 %v223, %v220
  %794 = vrot.lane.b32.xlu0 %v792, 120
  %v795 = vpop.permute.xlu0 %794
  %796 = vrot.lane.b32.xlu0 %v792, 112
  %v797 = vpop.permute.xlu0 %796
  %798 = vrot.lane.b32.xlu0 %v792, 104
  %v799 = vpop.permute.xlu0 %798
  %v802 = vpack.i.b16 %v795, %v792
  %v804 = vshrl.u32 %v792, 16
  %v805 = vshrl.u32 %v795, 16
  %v806 = vpack.i.b16 %v805, %v804
  %v810 = vpack.i.b16 %v799, %v797
  %v812 = vshrl.u32 %v797, 16
  %v813 = vshrl.u32 %v799, 16
  %v814 = vpack.i.b16 %v813, %v812
  %v816 = vcombine.high %v802, %v251
  %v818 = vunpack.c.l.s4 1983009808
  %v819 = vunpack.c.0.s8 %v818
  %v820 = vlaneseq
  %v821 = vshrl.u32 %v820, 7
  %v822 = vsub.s32 %v819, %v821
  %v823 = vrot.slane %v802, %v822
  %v825 = vunpack.c.l.s4 1983009808
  %v826 = vunpack.c.0.s8 %v825
  %v827 = vlaneseq
  %v828 = vshrl.u32 %v827, 7
  %v829 = vsub.s32 %v826, %v828
  %v830 = vrot.slane %v816, %v829
  %v831 = vcombine.high %v810, %v251
  %v833 = vunpack.c.l.s4 1983009808
  %v834 = vunpack.c.0.s8 %v833
  %v835 = vlaneseq
  %v836 = vshrl.u32 %v835, 7
  %v837 = vsub.s32 %v834, %v836
  %v838 = vrot.slane %v810, %v837
  %v840 = vunpack.c.l.s4 1983009808
  %v841 = vunpack.c.0.s8 %v840
  %v842 = vlaneseq
  %v843 = vshrl.u32 %v842, 7
  %v844 = vsub.s32 %v841, %v843
  %v845 = vrot.slane %v831, %v844
  %v846 = vcombine.low %v823, %v838
  %v847 = vcombine.high %v823, %v838
  %v849 = vunpack.c.l.s4 1934713408
  %v850 = vunpack.c.0.s8 %v849
  %v851 = vlaneseq
  %v852 = vshrl.u32 %v851, 7
  %v853 = vsub.s32 %v850, %v852
  %v854 = vrot.slane %v846, %v853
  %v856 = vunpack.c.l.s4 1934713408
  %v857 = vunpack.c.0.s8 %v856
  %v858 = vlaneseq
  %v859 = vshrl.u32 %v858, 7
  %v860 = vsub.s32 %v857, %v859
  %v861 = vrot.slane %v847, %v860
  %v862 = vcombine.low %v830, %v845
  %v863 = vcombine.high %v830, %v845
  %v865 = vunpack.c.l.s4 1934713408
  %v866 = vunpack.c.0.s8 %v865
  %v867 = vlaneseq
  %v868 = vshrl.u32 %v867, 7
  %v869 = vsub.s32 %v866, %v868
  %v870 = vrot.slane %v862, %v869
  %v872 = vunpack.c.l.s4 1934713408
  %v873 = vunpack.c.0.s8 %v872
  %v874 = vlaneseq
  %v875 = vshrl.u32 %v874, 7
  %v876 = vsub.s32 %v873, %v875
  %v877 = vrot.slane %v863, %v876
  %v878 = vcombine.high %v854, 0
  %v879 = vcombine.high %v861, 0
  %v880 = vcombine.high %v870, 0
  %v881 = vcombine.high %v877, 0
  %v882 = vcombine.high %v806, %v254
  %v884 = vunpack.c.l.s4 1983009808
  %v885 = vunpack.c.0.s8 %v884
  %v886 = vlaneseq
  %v887 = vshrl.u32 %v886, 7
  %v888 = vsub.s32 %v885, %v887
  %v889 = vrot.slane %v806, %v888
  %v891 = vunpack.c.l.s4 1983009808
  %v892 = vunpack.c.0.s8 %v891
  %v893 = vlaneseq
  %v894 = vshrl.u32 %v893, 7
  %v895 = vsub.s32 %v892, %v894
  %v896 = vrot.slane %v882, %v895
  %v897 = vcombine.high %v814, %v254
  %v899 = vunpack.c.l.s4 1983009808
  %v900 = vunpack.c.0.s8 %v899
  %v901 = vlaneseq
  %v902 = vshrl.u32 %v901, 7
  %v903 = vsub.s32 %v900, %v902
  %v904 = vrot.slane %v814, %v903
  %v906 = vunpack.c.l.s4 1983009808
  %v907 = vunpack.c.0.s8 %v906
  %v908 = vlaneseq
  %v909 = vshrl.u32 %v908, 7
  %v910 = vsub.s32 %v907, %v909
  %v911 = vrot.slane %v897, %v910
  %v912 = vcombine.low %v889, %v904
  %v913 = vcombine.high %v889, %v904
  %v915 = vunpack.c.l.s4 1934713408
  %v916 = vunpack.c.0.s8 %v915
  %v917 = vlaneseq
  %v918 = vshrl.u32 %v917, 7
  %v919 = vsub.s32 %v916, %v918
  %v920 = vrot.slane %v912, %v919
  %v922 = vunpack.c.l.s4 1934713408
  %v923 = vunpack.c.0.s8 %v922
  %v924 = vlaneseq
  %v925 = vshrl.u32 %v924, 7
  %v926 = vsub.s32 %v923, %v925
  %v927 = vrot.slane %v913, %v926
  %v928 = vcombine.low %v896, %v911
  %v929 = vcombine.high %v896, %v911
  %v931 = vunpack.c.l.s4 1934713408
  %v932 = vunpack.c.0.s8 %v931
  %v933 = vlaneseq
  %v934 = vshrl.u32 %v933, 7
  %v935 = vsub.s32 %v932, %v934
  %v936 = vrot.slane %v928, %v935
  %v938 = vunpack.c.l.s4 1934713408
  %v939 = vunpack.c.0.s8 %v938
  %v940 = vlaneseq
  %v941 = vshrl.u32 %v940, 7
  %v942 = vsub.s32 %v939, %v941
  %v943 = vrot.slane %v929, %v942
  %v944 = vcombine.high %v920, 0
  %v945 = vcombine.high %v927, 0
  %v946 = vcombine.high %v936, 0
  %v947 = vcombine.high %v943, 0
  %v948 = vcombine.low %v854, %v861
  %v950 = vunpack.c.l.s4 1983009808
  %v951 = vunpack.c.0.s8 %v950
  %v952 = vlaneseq
  %v953 = vshrl.u32 %v952, 7
  %v954 = vsub.s32 %v951, %v953
  %v955 = vrot.slane %v948, %v954
  %v956 = vcombine.low %v878, %v879
  %v958 = vunpack.c.l.s4 1983009808
  %v959 = vunpack.c.0.s8 %v958
  %v960 = vlaneseq
  %v961 = vshrl.u32 %v960, 7
  %v962 = vsub.s32 %v959, %v961
  %v963 = vrot.slane %v956, %v962
  %v964 = vcombine.low %v955, %v963
  %v966 = vunpack.c.l.s4 1934713408
  %v967 = vunpack.c.0.s8 %v966
  %v968 = vlaneseq
  %v969 = vshrl.u32 %v968, 7
  %v970 = vsub.s32 %v967, %v969
  %v971 = vrot.slane %v964, %v970
  %v972 = vcombine.high %v971, 0
  %v973 = vcombine.low %v920, %v927
  %v975 = vunpack.c.l.s4 1983009808
  %v976 = vunpack.c.0.s8 %v975
  %v977 = vlaneseq
  %v978 = vshrl.u32 %v977, 7
  %v979 = vsub.s32 %v976, %v978
  %v980 = vrot.slane %v973, %v979
  %v981 = vcombine.low %v944, %v945
  %v983 = vunpack.c.l.s4 1983009808
  %v984 = vunpack.c.0.s8 %v983
  %v985 = vlaneseq
  %v986 = vshrl.u32 %v985, 7
  %v987 = vsub.s32 %v984, %v986
  %v988 = vrot.slane %v981, %v987
  %v989 = vcombine.low %v980, %v988
  %v991 = vunpack.c.l.s4 1934713408
  %v992 = vunpack.c.0.s8 %v991
  %v993 = vlaneseq
  %v994 = vshrl.u32 %v993, 7
  %v995 = vsub.s32 %v992, %v994
  %v996 = vrot.slane %v989, %v995
  %v997 = vcombine.high %v996, 0
  %v998 = vcombine.low %v870, %v877
  %v1000 = vunpack.c.l.s4 1983009808
  %v1001 = vunpack.c.0.s8 %v1000
  %v1002 = vlaneseq
  %v1003 = vshrl.u32 %v1002, 7
  %v1004 = vsub.s32 %v1001, %v1003
  %v1005 = vrot.slane %v998, %v1004
  %v1006 = vcombine.low %v880, %v881
  %v1008 = vunpack.c.l.s4 1983009808
  %v1009 = vunpack.c.0.s8 %v1008
  %v1010 = vlaneseq
  %v1011 = vshrl.u32 %v1010, 7
  %v1012 = vsub.s32 %v1009, %v1011
  %v1013 = vrot.slane %v1006, %v1012
  %v1014 = vcombine.low %v1005, %v1013
  %v1016 = vunpack.c.l.s4 1934713408
  %v1017 = vunpack.c.0.s8 %v1016
  %v1018 = vlaneseq
  %v1019 = vshrl.u32 %v1018, 7
  %v1020 = vsub.s32 %v1017, %v1019
  %v1021 = vrot.slane %v1014, %v1020
  %v1022 = vcombine.high %v1021, 0
  %v1023 = vcombine.low %v936, %v943
  %v1025 = vunpack.c.l.s4 1983009808
  %v1026 = vunpack.c.0.s8 %v1025
  %v1027 = vlaneseq
  %v1028 = vshrl.u32 %v1027, 7
  %v1029 = vsub.s32 %v1026, %v1028
  %v1030 = vrot.slane %v1023, %v1029
  %v1031 = vcombine.low %v946, %v947
  %v1033 = vunpack.c.l.s4 1983009808
  %v1034 = vunpack.c.0.s8 %v1033
  %v1035 = vlaneseq
  %v1036 = vshrl.u32 %v1035, 7
  %v1037 = vsub.s32 %v1034, %v1036
  %v1038 = vrot.slane %v1031, %v1037
  %v1039 = vcombine.low %v1030, %v1038
  %v1041 = vunpack.c.l.s4 1934713408
  %v1042 = vunpack.c.0.s8 %v1041
  %v1043 = vlaneseq
  %v1044 = vshrl.u32 %v1043, 7
  %v1045 = vsub.s32 %v1042, %v1044
  %v1046 = vrot.slane %v1039, %v1045
  %v1047 = vcombine.high %v1046, 0
  %v1050 = vpack.i.b16 %v996, %v971
  %v1051 = vshrl.u32 %v971, 16
  %v1052 = vshrl.u32 %v996, 16
  %v1053 = vpack.i.b16 %v1052, %v1051
  %v1056 = vpack.i.b16 %v997, %v972
  %v1057 = vshrl.u32 %v972, 16
  %v1058 = vshrl.u32 %v997, 16
  %v1059 = vpack.i.b16 %v1058, %v1057
  %v1062 = vpack.i.b16 %v1046, %v1021
  %v1063 = vshrl.u32 %v1021, 16
  %v1064 = vshrl.u32 %v1046, 16
  %v1065 = vpack.i.b16 %v1064, %v1063
  %v1068 = vpack.i.b16 %v1047, %v1022
  %v1069 = vshrl.u32 %v1022, 16
  %v1070 = vshrl.u32 %v1047, 16
  %v1071 = vpack.i.b16 %v1070, %v1069
  %vm1072 = vcmask 64512
  %v1074 = vsel %vm1072, %v490, 0
  %v1077 = vsel %vm1072, %v770, 0
  %1079 = vmatprep.subr.bf16.mxu0 0
  %1080 = vmatpush1.bf16.xpose.msra.mxu0 0
  %1081 = vmatprep.subr.bf16.mxu0 0
  %1082 = vmatpush1.bf16.xpose.msra.mxu0 0
  %1083 = vmatprep.subr.bf16.mxu0 0
  %1084 = vmatpush1.bf16.xpose.msra.mxu0 0
  %1085 = vmatprep.subr.bf16.mxu0 0
  %1086 = vmatpush1.bf16.xpose.msra.mxu0 0
  %1087 = vmatprep.subr.bf16.mxu0 0
  %1088 = vmatpush1.bf16.xpose.msra.mxu0 0
  %1089 = vmatprep.subr.bf16.mxu0 0
  %1090 = vmatpush1.bf16.xpose.msra.mxu0 0
  %1091 = vmatprep.subr.bf16.mxu0 0
  %1092 = vmatpush1.bf16.xpose.msra.mxu0 0
  %1093 = vmatprep.subr.bf16.mxu0 0
  %1094 = vmatpush1.bf16.xpose.msra.mxu0 %v1077
  %1095 = vmatprep.subr.bf16.mxu0 0
  %1096 = vmatpush2.bf16.xpose.msra.mxu0 0
  %1097 = vmatprep.subr.bf16.mxu0 0
  %1098 = vmatpush2.bf16.xpose.msra.mxu0 0
  %1099 = vmatprep.subr.bf16.mxu0 0
  %1100 = vmatpush2.bf16.xpose.msra.mxu0 0
  %1101 = vmatprep.subr.bf16.mxu0 0
  %1102 = vmatpush2.bf16.xpose.msra.mxu0 0
  %1103 = vmatprep.subr.bf16.mxu0 0
  %1104 = vmatpush2.bf16.xpose.msra.mxu0 0
  %1105 = vmatprep.subr.bf16.mxu0 0
  %1106 = vmatpush2.bf16.xpose.msra.mxu0 0
  %1107 = vmatprep.subr.bf16.mxu0 0
  %1108 = vmatpush2.bf16.xpose.msra.mxu0 0
  %1109 = vmatprep.subr.bf16.mxu0 0
  %1110 = vmatpush2.bf16.xpose.msra.mxu0 0
  %1111 = vmatprep.mubr.bf16.mxu0 0
  %1112 = vmatmul.mubr.bf16.gmra.mxu0 %v1074
  %v1113 = vpop.f32.mrf.mxu0
  %v1114 = vadd.f32 0.0, %v1113
  %v1115 = vpop.f32.mrf.mxu0
  %v1116 = vpop.f32.mrf.mxu0
  %v1117 = vpop.f32.mrf.mxu0
  %1118 = vdwg.mxu0
  %v1120 = vsel %vm1072, %v493, 0
  %v1123 = vsel %vm1072, %v773, 0
  %1125 = vmatprep.subr.bf16.mxu0 0
  %1126 = vmatpush1.bf16.xpose.msra.mxu0 0
  %1127 = vmatprep.subr.bf16.mxu0 0
  %1128 = vmatpush1.bf16.xpose.msra.mxu0 0
  %1129 = vmatprep.subr.bf16.mxu0 0
  %1130 = vmatpush1.bf16.xpose.msra.mxu0 0
  %1131 = vmatprep.subr.bf16.mxu0 0
  %1132 = vmatpush1.bf16.xpose.msra.mxu0 0
  %1133 = vmatprep.subr.bf16.mxu0 0
  %1134 = vmatpush1.bf16.xpose.msra.mxu0 0
  %1135 = vmatprep.subr.bf16.mxu0 0
  %1136 = vmatpush1.bf16.xpose.msra.mxu0 0
  %1137 = vmatprep.subr.bf16.mxu0 0
  %1138 = vmatpush1.bf16.xpose.msra.mxu0 0
  %1139 = vmatprep.subr.bf16.mxu0 0
  %1140 = vmatpush1.bf16.xpose.msra.mxu0 %v1123
  %1141 = vmatprep.subr.bf16.mxu0 0
  %1142 = vmatpush2.bf16.xpose.msra.mxu0 0
  %1143 = vmatprep.subr.bf16.mxu0 0
  %1144 = vmatpush2.bf16.xpose.msra.mxu0 0
  %1145 = vmatprep.subr.bf16.mxu0 0
  %1146 = vmatpush2.bf16.xpose.msra.mxu0 0
  %1147 = vmatprep.subr.bf16.mxu0 0
  %1148 = vmatpush2.bf16.xpose.msra.mxu0 0
  %1149 = vmatprep.subr.bf16.mxu0 0
  %1150 = vmatpush2.bf16.xpose.msra.mxu0 0
  %1151 = vmatprep.subr.bf16.mxu0 0
  %1152 = vmatpush2.bf16.xpose.msra.mxu0 0
  %1153 = vmatprep.subr.bf16.mxu0 0
  %1154 = vmatpush2.bf16.xpose.msra.mxu0 0
  %1155 = vmatprep.subr.bf16.mxu0 0
  %1156 = vmatpush2.bf16.xpose.msra.mxu0 0
  %1157 = vmatprep.mubr.bf16.mxu0 0
  %1158 = vmatmul.mubr.bf16.gmra.mxu0 %v1120
  %v1159 = vpop.f32.mrf.mxu0
  %v1160 = vadd.f32 0.0, %v1159
  %v1161 = vpop.f32.mrf.mxu0
  %v1162 = vpop.f32.mrf.mxu0
  %v1163 = vpop.f32.mrf.mxu0
  %1164 = vdwg.mxu0
  %v1166 = vsel %vm1072, %v496, 0
  %v1169 = vsel %vm1072, %v776, 0
  %1171 = vmatprep.subr.bf16.mxu0 0
  %1172 = vmatpush1.bf16.xpose.msra.mxu0 0
  %1173 = vmatprep.subr.bf16.mxu0 0
  %1174 = vmatpush1.bf16.xpose.msra.mxu0 0
  %1175 = vmatprep.subr.bf16.mxu0 0
  %1176 = vmatpush1.bf16.xpose.msra.mxu0 0
  %1177 = vmatprep.subr.bf16.mxu0 0
  %1178 = vmatpush1.bf16.xpose.msra.mxu0 0
  %1179 = vmatprep.subr.bf16.mxu0 0
  %1180 = vmatpush1.bf16.xpose.msra.mxu0 0
  %1181 = vmatprep.subr.bf16.mxu0 0
  %1182 = vmatpush1.bf16.xpose.msra.mxu0 0
  %1183 = vmatprep.subr.bf16.mxu0 0
  %1184 = vmatpush1.bf16.xpose.msra.mxu0 0
  %1185 = vmatprep.subr.bf16.mxu0 0
  %1186 = vmatpush1.bf16.xpose.msra.mxu0 %v1169
  %1187 = vmatprep.subr.bf16.mxu0 0
  %1188 = vmatpush2.bf16.xpose.msra.mxu0 0
  %1189 = vmatprep.subr.bf16.mxu0 0
  %1190 = vmatpush2.bf16.xpose.msra.mxu0 0
  %1191 = vmatprep.subr.bf16.mxu0 0
  %1192 = vmatpush2.bf16.xpose.msra.mxu0 0
  %1193 = vmatprep.subr.bf16.mxu0 0
  %1194 = vmatpush2.bf16.xpose.msra.mxu0 0
  %1195 = vmatprep.subr.bf16.mxu0 0
  %1196 = vmatpush2.bf16.xpose.msra.mxu0 0
  %1197 = vmatprep.subr.bf16.mxu0 0
  %1198 = vmatpush2.bf16.xpose.msra.mxu0 0
  %1199 = vmatprep.subr.bf16.mxu0 0
  %1200 = vmatpush2.bf16.xpose.msra.mxu0 0
  %1201 = vmatprep.subr.bf16.mxu0 0
  %1202 = vmatpush2.bf16.xpose.msra.mxu0 0
  %1203 = vmatprep.mubr.bf16.mxu0 0
  %1204 = vmatmul.mubr.bf16.gmra.mxu0 %v1166
  %v1205 = vpop.f32.mrf.mxu0
  %v1206 = vadd.f32 0.0, %v1205
  %v1207 = vpop.f32.mrf.mxu0
  %v1208 = vpop.f32.mrf.mxu0
  %v1209 = vpop.f32.mrf.mxu0
  %1210 = vdwg.mxu0
  %v1212 = vsel %vm1072, %v499, 0
  %v1215 = vsel %vm1072, %v779, 0
  %1217 = vmatprep.subr.bf16.mxu0 0
  %1218 = vmatpush1.bf16.xpose.msra.mxu0 0
  %1219 = vmatprep.subr.bf16.mxu0 0
  %1220 = vmatpush1.bf16.xpose.msra.mxu0 0
  %1221 = vmatprep.subr.bf16.mxu0 0
  %1222 = vmatpush1.bf16.xpose.msra.mxu0 0
  %1223 = vmatprep.subr.bf16.mxu0 0
  %1224 = vmatpush1.bf16.xpose.msra.mxu0 0
  %1225 = vmatprep.subr.bf16.mxu0 0
  %1226 = vmatpush1.bf16.xpose.msra.mxu0 0
  %1227 = vmatprep.subr.bf16.mxu0 0
  %1228 = vmatpush1.bf16.xpose.msra.mxu0 0
  %1229 = vmatprep.subr.bf16.mxu0 0
  %1230 = vmatpush1.bf16.xpose.msra.mxu0 0
  %1231 = vmatprep.subr.bf16.mxu0 0
  %1232 = vmatpush1.bf16.xpose.msra.mxu0 %v1215
  %1233 = vmatprep.subr.bf16.mxu0 0
  %1234 = vmatpush2.bf16.xpose.msra.mxu0 0
  %1235 = vmatprep.subr.bf16.mxu0 0
  %1236 = vmatpush2.bf16.xpose.msra.mxu0 0
  %1237 = vmatprep.subr.bf16.mxu0 0
  %1238 = vmatpush2.bf16.xpose.msra.mxu0 0
  %1239 = vmatprep.subr.bf16.mxu0 0
  %1240 = vmatpush2.bf16.xpose.msra.mxu0 0
  %1241 = vmatprep.subr.bf16.mxu0 0
  %1242 = vmatpush2.bf16.xpose.msra.mxu0 0
  %1243 = vmatprep.subr.bf16.mxu0 0
  %1244 = vmatpush2.bf16.xpose.msra.mxu0 0
  %1245 = vmatprep.subr.bf16.mxu0 0
  %1246 = vmatpush2.bf16.xpose.msra.mxu0 0
  %1247 = vmatprep.subr.bf16.mxu0 0
  %1248 = vmatpush2.bf16.xpose.msra.mxu0 0
  %1249 = vmatprep.mubr.bf16.mxu0 0
  %1250 = vmatmul.mubr.bf16.gmra.mxu0 %v1212
  %v1251 = vpop.f32.mrf.mxu0
  %v1252 = vadd.f32 0.0, %v1251
  %v1253 = vpop.f32.mrf.mxu0
  %v1254 = vpop.f32.mrf.mxu0
  %v1255 = vpop.f32.mrf.mxu0
  %1256 = vdwg.mxu0
  %v1258 = vsel %vm1072, %v502, 0
  %v1261 = vsel %vm1072, %v782, 0
  %1263 = vmatprep.subr.bf16.mxu0 0
  %1264 = vmatpush1.bf16.xpose.msra.mxu0 0
  %1265 = vmatprep.subr.bf16.mxu0 0
  %1266 = vmatpush1.bf16.xpose.msra.mxu0 0
  %1267 = vmatprep.subr.bf16.mxu0 0
  %1268 = vmatpush1.bf16.xpose.msra.mxu0 0
  %1269 = vmatprep.subr.bf16.mxu0 0
  %1270 = vmatpush1.bf16.xpose.msra.mxu0 0
  %1271 = vmatprep.subr.bf16.mxu0 0
  %1272 = vmatpush1.bf16.xpose.msra.mxu0 0
  %1273 = vmatprep.subr.bf16.mxu0 0
  %1274 = vmatpush1.bf16.xpose.msra.mxu0 0
  %1275 = vmatprep.subr.bf16.mxu0 0
  %1276 = vmatpush1.bf16.xpose.msra.mxu0 0
  %1277 = vmatprep.subr.bf16.mxu0 0
  %1278 = vmatpush1.bf16.xpose.msra.mxu0 %v1261
  %1279 = vmatprep.subr.bf16.mxu0 0
  %1280 = vmatpush2.bf16.xpose.msra.mxu0 0
  %1281 = vmatprep.subr.bf16.mxu0 0
  %1282 = vmatpush2.bf16.xpose.msra.mxu0 0
  %1283 = vmatprep.subr.bf16.mxu0 0
  %1284 = vmatpush2.bf16.xpose.msra.mxu0 0
  %1285 = vmatprep.subr.bf16.mxu0 0
  %1286 = vmatpush2.bf16.xpose.msra.mxu0 0
  %1287 = vmatprep.subr.bf16.mxu0 0
  %1288 = vmatpush2.bf16.xpose.msra.mxu0 0
  %1289 = vmatprep.subr.bf16.mxu0 0
  %1290 = vmatpush2.bf16.xpose.msra.mxu0 0
  %1291 = vmatprep.subr.bf16.mxu0 0
  %1292 = vmatpush2.bf16.xpose.msra.mxu0 0
  %1293 = vmatprep.subr.bf16.mxu0 0
  %1294 = vmatpush2.bf16.xpose.msra.mxu0 0
  %1295 = vmatprep.mubr.bf16.mxu0 0
  %1296 = vmatmul.mubr.bf16.gmra.mxu0 %v1258
  %v1297 = vpop.f32.mrf.mxu0
  %v1298 = vadd.f32 0.0, %v1297
  %v1299 = vpop.f32.mrf.mxu0
  %v1300 = vpop.f32.mrf.mxu0
  %v1301 = vpop.f32.mrf.mxu0
  %1302 = vdwg.mxu0
  %v1304 = vsel %vm1072, %v505, 0
  %v1307 = vsel %vm1072, %v785, 0
  %1309 = vmatprep.subr.bf16.mxu0 0
  %1310 = vmatpush1.bf16.xpose.msra.mxu0 0
  %1311 = vmatprep.subr.bf16.mxu0 0
  %1312 = vmatpush1.bf16.xpose.msra.mxu0 0
  %1313 = vmatprep.subr.bf16.mxu0 0
  %1314 = vmatpush1.bf16.xpose.msra.mxu0 0
  %1315 = vmatprep.subr.bf16.mxu0 0
  %1316 = vmatpush1.bf16.xpose.msra.mxu0 0
  %1317 = vmatprep.subr.bf16.mxu0 0
  %1318 = vmatpush1.bf16.xpose.msra.mxu0 0
  %1319 = vmatprep.subr.bf16.mxu0 0
  %1320 = vmatpush1.bf16.xpose.msra.mxu0 0
  %1321 = vmatprep.subr.bf16.mxu0 0
  %1322 = vmatpush1.bf16.xpose.msra.mxu0 0
  %1323 = vmatprep.subr.bf16.mxu0 0
  %1324 = vmatpush1.bf16.xpose.msra.mxu0 %v1307
  %1325 = vmatprep.subr.bf16.mxu0 0
  %1326 = vmatpush2.bf16.xpose.msra.mxu0 0
  %1327 = vmatprep.subr.bf16.mxu0 0
  %1328 = vmatpush2.bf16.xpose.msra.mxu0 0
  %1329 = vmatprep.subr.bf16.mxu0 0
  %1330 = vmatpush2.bf16.xpose.msra.mxu0 0
  %1331 = vmatprep.subr.bf16.mxu0 0
  %1332 = vmatpush2.bf16.xpose.msra.mxu0 0
  %1333 = vmatprep.subr.bf16.mxu0 0
  %1334 = vmatpush2.bf16.xpose.msra.mxu0 0
  %1335 = vmatprep.subr.bf16.mxu0 0
  %1336 = vmatpush2.bf16.xpose.msra.mxu0 0
  %1337 = vmatprep.subr.bf16.mxu0 0
  %1338 = vmatpush2.bf16.xpose.msra.mxu0 0
  %1339 = vmatprep.subr.bf16.mxu0 0
  %1340 = vmatpush2.bf16.xpose.msra.mxu0 0
  %1341 = vmatprep.mubr.bf16.mxu0 0
  %1342 = vmatmul.mubr.bf16.gmra.mxu0 %v1304
  %v1343 = vpop.f32.mrf.mxu0
  %v1344 = vadd.f32 0.0, %v1343
  %v1345 = vpop.f32.mrf.mxu0
  %v1346 = vpop.f32.mrf.mxu0
  %v1347 = vpop.f32.mrf.mxu0
  %1348 = vdwg.mxu0
  %v1350 = vsel %vm1072, %v508, 0
  %v1353 = vsel %vm1072, %v788, 0
  %1355 = vmatprep.subr.bf16.mxu0 0
  %1356 = vmatpush1.bf16.xpose.msra.mxu0 0
  %1357 = vmatprep.subr.bf16.mxu0 0
  %1358 = vmatpush1.bf16.xpose.msra.mxu0 0
  %1359 = vmatprep.subr.bf16.mxu0 0
  %1360 = vmatpush1.bf16.xpose.msra.mxu0 0
  %1361 = vmatprep.subr.bf16.mxu0 0
  %1362 = vmatpush1.bf16.xpose.msra.mxu0 0
  %1363 = vmatprep.subr.bf16.mxu0 0
  %1364 = vmatpush1.bf16.xpose.msra.mxu0 0
  %1365 = vmatprep.subr.bf16.mxu0 0
  %1366 = vmatpush1.bf16.xpose.msra.mxu0 0
  %1367 = vmatprep.subr.bf16.mxu0 0
  %1368 = vmatpush1.bf16.xpose.msra.mxu0 0
  %1369 = vmatprep.subr.bf16.mxu0 0
  %1370 = vmatpush1.bf16.xpose.msra.mxu0 %v1353
  %1371 = vmatprep.subr.bf16.mxu0 0
  %1372 = vmatpush2.bf16.xpose.msra.mxu0 0
  %1373 = vmatprep.subr.bf16.mxu0 0
  %1374 = vmatpush2.bf16.xpose.msra.mxu0 0
  %1375 = vmatprep.subr.bf16.mxu0 0
  %1376 = vmatpush2.bf16.xpose.msra.mxu0 0
  %1377 = vmatprep.subr.bf16.mxu0 0
  %1378 = vmatpush2.bf16.xpose.msra.mxu0 0
  %1379 = vmatprep.subr.bf16.mxu0 0
  %1380 = vmatpush2.bf16.xpose.msra.mxu0 0
  %1381 = vmatprep.subr.bf16.mxu0 0
  %1382 = vmatpush2.bf16.xpose.msra.mxu0 0
  %1383 = vmatprep.subr.bf16.mxu0 0
  %1384 = vmatpush2.bf16.xpose.msra.mxu0 0
  %1385 = vmatprep.subr.bf16.mxu0 0
  %1386 = vmatpush2.bf16.xpose.msra.mxu0 0
  %1387 = vmatprep.mubr.bf16.mxu0 0
  %1388 = vmatmul.mubr.bf16.gmra.mxu0 %v1350
  %v1389 = vpop.f32.mrf.mxu0
  %v1390 = vadd.f32 0.0, %v1389
  %v1391 = vpop.f32.mrf.mxu0
  %v1392 = vpop.f32.mrf.mxu0
  %v1393 = vpop.f32.mrf.mxu0
  %1394 = vdwg.mxu0
  %v1396 = vsel %vm1072, %v511, 0
  %v1399 = vsel %vm1072, %v791, 0
  %1401 = vmatprep.subr.bf16.mxu0 0
  %1402 = vmatpush1.bf16.xpose.msra.mxu0 0
  %1403 = vmatprep.subr.bf16.mxu0 0
  %1404 = vmatpush1.bf16.xpose.msra.mxu0 0
  %1405 = vmatprep.subr.bf16.mxu0 0
  %1406 = vmatpush1.bf16.xpose.msra.mxu0 0
  %1407 = vmatprep.subr.bf16.mxu0 0
  %1408 = vmatpush1.bf16.xpose.msra.mxu0 0
  %1409 = vmatprep.subr.bf16.mxu0 0
  %1410 = vmatpush1.bf16.xpose.msra.mxu0 0
  %1411 = vmatprep.subr.bf16.mxu0 0
  %1412 = vmatpush1.bf16.xpose.msra.mxu0 0
  %1413 = vmatprep.subr.bf16.mxu0 0
  %1414 = vmatpush1.bf16.xpose.msra.mxu0 0
  %1415 = vmatprep.subr.bf16.mxu0 0
  %1416 = vmatpush1.bf16.xpose.msra.mxu0 %v1399
  %1417 = vmatprep.subr.bf16.mxu0 0
  %1418 = vmatpush2.bf16.xpose.msra.mxu0 0
  %1419 = vmatprep.subr.bf16.mxu0 0
  %1420 = vmatpush2.bf16.xpose.msra.mxu0 0
  %1421 = vmatprep.subr.bf16.mxu0 0
  %1422 = vmatpush2.bf16.xpose.msra.mxu0 0
  %1423 = vmatprep.subr.bf16.mxu0 0
  %1424 = vmatpush2.bf16.xpose.msra.mxu0 0
  %1425 = vmatprep.subr.bf16.mxu0 0
  %1426 = vmatpush2.bf16.xpose.msra.mxu0 0
  %1427 = vmatprep.subr.bf16.mxu0 0
  %1428 = vmatpush2.bf16.xpose.msra.mxu0 0
  %1429 = vmatprep.subr.bf16.mxu0 0
  %1430 = vmatpush2.bf16.xpose.msra.mxu0 0
  %1431 = vmatprep.subr.bf16.mxu0 0
  %1432 = vmatpush2.bf16.xpose.msra.mxu0 0
  %1433 = vmatprep.mubr.bf16.mxu0 0
  %1434 = vmatmul.mubr.bf16.gmra.mxu0 %v1396
  %v1435 = vpop.f32.mrf.mxu0
  %v1436 = vadd.f32 0.0, %v1435
  %v1437 = vpop.f32.mrf.mxu0
  %v1438 = vpop.f32.mrf.mxu0
  %v1439 = vpop.f32.mrf.mxu0
  %1440 = vdwg.mxu0
  %v1441 = vsel %vm1072, %v1114, -inf
  %1442 = vmax.xlane.f32.xlu0 %v1441
  %v1443 = vpop.xlane.xlu0 %1442
  %v1444 = vsel %vm1072, %v1160, -inf
  %1445 = vmax.xlane.f32.xlu0 %v1444
  %v1446 = vpop.xlane.xlu0 %1445
  %v1447 = vsel %vm1072, %v1206, -inf
  %1448 = vmax.xlane.f32.xlu0 %v1447
  %v1449 = vpop.xlane.xlu0 %1448
  %v1450 = vsel %vm1072, %v1252, -inf
  %1451 = vmax.xlane.f32.xlu0 %v1450
  %v1452 = vpop.xlane.xlu0 %1451
  %v1453 = vsel %vm1072, %v1298, -inf
  %1454 = vmax.xlane.f32.xlu0 %v1453
  %v1455 = vpop.xlane.xlu0 %1454
  %v1456 = vsel %vm1072, %v1344, -inf
  %1457 = vmax.xlane.f32.xlu0 %v1456
  %v1458 = vpop.xlane.xlu0 %1457
  %v1459 = vsel %vm1072, %v1390, -inf
  %1460 = vmax.xlane.f32.xlu0 %v1459
  %v1461 = vpop.xlane.xlu0 %1460
  %v1462 = vsel %vm1072, %v1436, -inf
  %1463 = vmax.xlane.f32.xlu0 %v1462
  %v1464 = vpop.xlane.xlu0 %1463
  %v1465 = vsub.f32 %v1114, %v1443
  %v1466 = vsub.f32 %v1160, %v1446
  %v1467 = vsub.f32 %v1206, %v1449
  %v1468 = vsub.f32 %v1252, %v1452
  %v1469 = vsub.f32 %v1298, %v1455
  %v1470 = vsub.f32 %v1344, %v1458
  %v1471 = vsub.f32 %v1390, %v1461
  %v1472 = vsub.f32 %v1436, %v1464
  %v1473 = vmul.f32 %v1465, 1.442695
  %v1474 = vpow.pop %v1473
  %v1475 = vmul.f32 %v1466, 1.442695
  %v1476 = vpow.pop %v1475
  %v1477 = vmul.f32 %v1467, 1.442695
  %v1478 = vpow.pop %v1477
  %v1479 = vmul.f32 %v1468, 1.442695
  %v1480 = vpow.pop %v1479
  %v1481 = vmul.f32 %v1469, 1.442695
  %v1482 = vpow.pop %v1481
  %v1483 = vmul.f32 %v1470, 1.442695
  %v1484 = vpow.pop %v1483
  %v1485 = vmul.f32 %v1471, 1.442695
  %v1486 = vpow.pop %v1485
  %v1487 = vmul.f32 %v1472, 1.442695
  %v1488 = vpow.pop %v1487
  %v1489 = vsel %vm1072, %v1474, 0.0
  %1490 = vadd.xlane.f32.xlu0 %v1489
  %v1491 = vpop.xlane.xlu0 %1490
  %v1492 = vsel %vm1072, %v1476, 0.0
  %1493 = vadd.xlane.f32.xlu0 %v1492
  %v1494 = vpop.xlane.xlu0 %1493
  %v1495 = vsel %vm1072, %v1478, 0.0
  %1496 = vadd.xlane.f32.xlu0 %v1495
  %v1497 = vpop.xlane.xlu0 %1496
  %v1498 = vsel %vm1072, %v1480, 0.0
  %1499 = vadd.xlane.f32.xlu0 %v1498
  %v1500 = vpop.xlane.xlu0 %1499
  %v1501 = vsel %vm1072, %v1482, 0.0
  %1502 = vadd.xlane.f32.xlu0 %v1501
  %v1503 = vpop.xlane.xlu0 %1502
  %v1504 = vsel %vm1072, %v1484, 0.0
  %1505 = vadd.xlane.f32.xlu0 %v1504
  %v1506 = vpop.xlane.xlu0 %1505
  %v1507 = vsel %vm1072, %v1486, 0.0
  %1508 = vadd.xlane.f32.xlu0 %v1507
  %v1509 = vpop.xlane.xlu0 %1508
  %v1510 = vsel %vm1072, %v1488, 0.0
  %1511 = vadd.xlane.f32.xlu0 %v1510
  %v1512 = vpop.xlane.xlu0 %1511
  %v1513 = vrcp.pop %v1491
  %v1514 = vrcp.pop %v1494
  %v1515 = vrcp.pop %v1497
  %v1516 = vrcp.pop %v1500
  %v1517 = vrcp.pop %v1503
  %v1518 = vrcp.pop %v1506
  %v1519 = vrcp.pop %v1509
  %v1520 = vrcp.pop %v1512
  %v1521 = vmul.f32 %v1474, %v1513
  %v1522 = vmul.f32 %v1476, %v1514
  %v1523 = vmul.f32 %v1478, %v1515
  %v1524 = vmul.f32 %v1480, %v1516
  %v1525 = vmul.f32 %v1482, %v1517
  %v1526 = vmul.f32 %v1484, %v1518
  %v1527 = vmul.f32 %v1486, %v1519
  %v1528 = vmul.f32 %v1488, %v1520
  %v1529 = vpack.c.bf16 %v1521, %v1521
  %v1530 = vpack.c.bf16 %v1522, %v1522
  %v1531 = vpack.c.bf16 %v1523, %v1523
  %v1532 = vpack.c.bf16 %v1524, %v1524
  %v1533 = vpack.c.bf16 %v1525, %v1525
  %v1534 = vpack.c.bf16 %v1526, %v1526
  %v1535 = vpack.c.bf16 %v1527, %v1527
  %v1536 = vpack.c.bf16 %v1528, %v1528
  %v1538 = vsel %vm1072, %v1529, 0
  %vm1540 = vcmask 1043456
  %v1542 = vsel %vm1540, %v1050, 0
  %1544 = vmatprep.subr.bf16.mxu0 0
  %1545 = vmatpush1.bf16.msra.mxu0 0
  %1546 = vmatprep.subr.bf16.mxu0 0
  %1547 = vmatpush1.bf16.msra.mxu0 0
  %1548 = vmatprep.subr.bf16.mxu0 0
  %1549 = vmatpush1.bf16.msra.mxu0 0
  %1550 = vmatprep.subr.bf16.mxu0 0
  %1551 = vmatpush1.bf16.msra.mxu0 0
  %1552 = vmatprep.subr.bf16.mxu0 0
  %1553 = vmatpush1.bf16.msra.mxu0 0
  %1554 = vmatprep.subr.bf16.mxu0 0
  %1555 = vmatpush1.bf16.msra.mxu0 0
  %1556 = vmatprep.subr.bf16.mxu0 0
  %1557 = vmatpush1.bf16.msra.mxu0 0
  %1558 = vmatprep.subr.bf16.mxu0 0
  %1559 = vmatpush1.bf16.msra.mxu0 %v1542
  %1560 = vmatprep.subr.bf16.mxu0 0
  %1561 = vmatpush2.bf16.msra.mxu0 0
  %1562 = vmatprep.subr.bf16.mxu0 0
  %1563 = vmatpush2.bf16.msra.mxu0 0
  %1564 = vmatprep.subr.bf16.mxu0 0
  %1565 = vmatpush2.bf16.msra.mxu0 0
  %1566 = vmatprep.subr.bf16.mxu0 0
  %1567 = vmatpush2.bf16.msra.mxu0 0
  %1568 = vmatprep.subr.bf16.mxu0 0
  %1569 = vmatpush2.bf16.msra.mxu0 0
  %1570 = vmatprep.subr.bf16.mxu0 0
  %1571 = vmatpush2.bf16.msra.mxu0 0
  %1572 = vmatprep.subr.bf16.mxu0 0
  %1573 = vmatpush2.bf16.msra.mxu0 0
  %1574 = vmatprep.subr.bf16.mxu0 0
  %1575 = vmatpush2.bf16.msra.mxu0 0
  %1576 = vmatprep.mubr.bf16.mxu0 0
  %1577 = vmatmul.mubr.bf16.gmra.mxu0 %v1538
  %v1578 = vpop.f32.mrf.mxu0
  %v1579 = vadd.f32 0.0, %v1578
  %v1580 = vpop.f32.mrf.mxu0
  %v1581 = vpop.f32.mrf.mxu0
  %v1582 = vpop.f32.mrf.mxu0
  %1583 = vdwg.mxu0
  %v1585 = vsel %vm1072, %v1530, 0
  %v1588 = vsel %vm1540, %v1053, 0
  %1590 = vmatprep.subr.bf16.mxu0 0
  %1591 = vmatpush1.bf16.msra.mxu0 0
  %1592 = vmatprep.subr.bf16.mxu0 0
  %1593 = vmatpush1.bf16.msra.mxu0 0
  %1594 = vmatprep.subr.bf16.mxu0 0
  %1595 = vmatpush1.bf16.msra.mxu0 0
  %1596 = vmatprep.subr.bf16.mxu0 0
  %1597 = vmatpush1.bf16.msra.mxu0 0
  %1598 = vmatprep.subr.bf16.mxu0 0
  %1599 = vmatpush1.bf16.msra.mxu0 0
  %1600 = vmatprep.subr.bf16.mxu0 0
  %1601 = vmatpush1.bf16.msra.mxu0 0
  %1602 = vmatprep.subr.bf16.mxu0 0
  %1603 = vmatpush1.bf16.msra.mxu0 0
  %1604 = vmatprep.subr.bf16.mxu0 0
  %1605 = vmatpush1.bf16.msra.mxu0 %v1588
  %1606 = vmatprep.subr.bf16.mxu0 0
  %1607 = vmatpush2.bf16.msra.mxu0 0
  %1608 = vmatprep.subr.bf16.mxu0 0
  %1609 = vmatpush2.bf16.msra.mxu0 0
  %1610 = vmatprep.subr.bf16.mxu0 0
  %1611 = vmatpush2.bf16.msra.mxu0 0
  %1612 = vmatprep.subr.bf16.mxu0 0
  %1613 = vmatpush2.bf16.msra.mxu0 0
  %1614 = vmatprep.subr.bf16.mxu0 0
  %1615 = vmatpush2.bf16.msra.mxu0 0
  %1616 = vmatprep.subr.bf16.mxu0 0
  %1617 = vmatpush2.bf16.msra.mxu0 0
  %1618 = vmatprep.subr.bf16.mxu0 0
  %1619 = vmatpush2.bf16.msra.mxu0 0
  %1620 = vmatprep.subr.bf16.mxu0 0
  %1621 = vmatpush2.bf16.msra.mxu0 0
  %1622 = vmatprep.mubr.bf16.mxu0 0
  %1623 = vmatmul.mubr.bf16.gmra.mxu0 %v1585
  %v1624 = vpop.f32.mrf.mxu0
  %v1625 = vadd.f32 0.0, %v1624
  %v1626 = vpop.f32.mrf.mxu0
  %v1627 = vpop.f32.mrf.mxu0
  %v1628 = vpop.f32.mrf.mxu0
  %1629 = vdwg.mxu0
  %v1631 = vsel %vm1072, %v1531, 0
  %v1634 = vsel %vm1540, %v1056, 0
  %1636 = vmatprep.subr.bf16.mxu0 0
  %1637 = vmatpush1.bf16.msra.mxu0 0
  %1638 = vmatprep.subr.bf16.mxu0 0
  %1639 = vmatpush1.bf16.msra.mxu0 0
  %1640 = vmatprep.subr.bf16.mxu0 0
  %1641 = vmatpush1.bf16.msra.mxu0 0
  %1642 = vmatprep.subr.bf16.mxu0 0
  %1643 = vmatpush1.bf16.msra.mxu0 0
  %1644 = vmatprep.subr.bf16.mxu0 0
  %1645 = vmatpush1.bf16.msra.mxu0 0
  %1646 = vmatprep.subr.bf16.mxu0 0
  %1647 = vmatpush1.bf16.msra.mxu0 0
  %1648 = vmatprep.subr.bf16.mxu0 0
  %1649 = vmatpush1.bf16.msra.mxu0 0
  %1650 = vmatprep.subr.bf16.mxu0 0
  %1651 = vmatpush1.bf16.msra.mxu0 %v1634
  %1652 = vmatprep.subr.bf16.mxu0 0
  %1653 = vmatpush2.bf16.msra.mxu0 0
  %1654 = vmatprep.subr.bf16.mxu0 0
  %1655 = vmatpush2.bf16.msra.mxu0 0
  %1656 = vmatprep.subr.bf16.mxu0 0
  %1657 = vmatpush2.bf16.msra.mxu0 0
  %1658 = vmatprep.subr.bf16.mxu0 0
  %1659 = vmatpush2.bf16.msra.mxu0 0
  %1660 = vmatprep.subr.bf16.mxu0 0
  %1661 = vmatpush2.bf16.msra.mxu0 0
  %1662 = vmatprep.subr.bf16.mxu0 0
  %1663 = vmatpush2.bf16.msra.mxu0 0
  %1664 = vmatprep.subr.bf16.mxu0 0
  %1665 = vmatpush2.bf16.msra.mxu0 0
  %1666 = vmatprep.subr.bf16.mxu0 0
  %1667 = vmatpush2.bf16.msra.mxu0 0
  %1668 = vmatprep.mubr.bf16.mxu0 0
  %1669 = vmatmul.mubr.bf16.gmra.mxu0 %v1631
  %v1670 = vpop.f32.mrf.mxu0
  %v1671 = vadd.f32 0.0, %v1670
  %v1672 = vpop.f32.mrf.mxu0
  %v1673 = vpop.f32.mrf.mxu0
  %v1674 = vpop.f32.mrf.mxu0
  %1675 = vdwg.mxu0
  %v1677 = vsel %vm1072, %v1532, 0
  %v1680 = vsel %vm1540, %v1059, 0
  %1682 = vmatprep.subr.bf16.mxu0 0
  %1683 = vmatpush1.bf16.msra.mxu0 0
  %1684 = vmatprep.subr.bf16.mxu0 0
  %1685 = vmatpush1.bf16.msra.mxu0 0
  %1686 = vmatprep.subr.bf16.mxu0 0
  %1687 = vmatpush1.bf16.msra.mxu0 0
  %1688 = vmatprep.subr.bf16.mxu0 0
  %1689 = vmatpush1.bf16.msra.mxu0 0
  %1690 = vmatprep.subr.bf16.mxu0 0
  %1691 = vmatpush1.bf16.msra.mxu0 0
  %1692 = vmatprep.subr.bf16.mxu0 0
  %1693 = vmatpush1.bf16.msra.mxu0 0
  %1694 = vmatprep.subr.bf16.mxu0 0
  %1695 = vmatpush1.bf16.msra.mxu0 0
  %1696 = vmatprep.subr.bf16.mxu0 0
  %1697 = vmatpush1.bf16.msra.mxu0 %v1680
  %1698 = vmatprep.subr.bf16.mxu0 0
  %1699 = vmatpush2.bf16.msra.mxu0 0
  %1700 = vmatprep.subr.bf16.mxu0 0
  %1701 = vmatpush2.bf16.msra.mxu0 0
  %1702 = vmatprep.subr.bf16.mxu0 0
  %1703 = vmatpush2.bf16.msra.mxu0 0
  %1704 = vmatprep.subr.bf16.mxu0 0
  %1705 = vmatpush2.bf16.msra.mxu0 0
  %1706 = vmatprep.subr.bf16.mxu0 0
  %1707 = vmatpush2.bf16.msra.mxu0 0
  %1708 = vmatprep.subr.bf16.mxu0 0
  %1709 = vmatpush2.bf16.msra.mxu0 0
  %1710 = vmatprep.subr.bf16.mxu0 0
  %1711 = vmatpush2.bf16.msra.mxu0 0
  %1712 = vmatprep.subr.bf16.mxu0 0
  %1713 = vmatpush2.bf16.msra.mxu0 0
  %1714 = vmatprep.mubr.bf16.mxu0 0
  %1715 = vmatmul.mubr.bf16.gmra.mxu0 %v1677
  %v1716 = vpop.f32.mrf.mxu0
  %v1717 = vadd.f32 0.0, %v1716
  %v1718 = vpop.f32.mrf.mxu0
  %v1719 = vpop.f32.mrf.mxu0
  %v1720 = vpop.f32.mrf.mxu0
  %1721 = vdwg.mxu0
  %v1723 = vsel %vm1072, %v1533, 0
  %v1726 = vsel %vm1540, %v1062, 0
  %1728 = vmatprep.subr.bf16.mxu0 0
  %1729 = vmatpush1.bf16.msra.mxu0 0
  %1730 = vmatprep.subr.bf16.mxu0 0
  %1731 = vmatpush1.bf16.msra.mxu0 0
  %1732 = vmatprep.subr.bf16.mxu0 0
  %1733 = vmatpush1.bf16.msra.mxu0 0
  %1734 = vmatprep.subr.bf16.mxu0 0
  %1735 = vmatpush1.bf16.msra.mxu0 0
  %1736 = vmatprep.subr.bf16.mxu0 0
  %1737 = vmatpush1.bf16.msra.mxu0 0
  %1738 = vmatprep.subr.bf16.mxu0 0
  %1739 = vmatpush1.bf16.msra.mxu0 0
  %1740 = vmatprep.subr.bf16.mxu0 0
  %1741 = vmatpush1.bf16.msra.mxu0 0
  %1742 = vmatprep.subr.bf16.mxu0 0
  %1743 = vmatpush1.bf16.msra.mxu0 %v1726
  %1744 = vmatprep.subr.bf16.mxu0 0
  %1745 = vmatpush2.bf16.msra.mxu0 0
  %1746 = vmatprep.subr.bf16.mxu0 0
  %1747 = vmatpush2.bf16.msra.mxu0 0
  %1748 = vmatprep.subr.bf16.mxu0 0
  %1749 = vmatpush2.bf16.msra.mxu0 0
  %1750 = vmatprep.subr.bf16.mxu0 0
  %1751 = vmatpush2.bf16.msra.mxu0 0
  %1752 = vmatprep.subr.bf16.mxu0 0
  %1753 = vmatpush2.bf16.msra.mxu0 0
  %1754 = vmatprep.subr.bf16.mxu0 0
  %1755 = vmatpush2.bf16.msra.mxu0 0
  %1756 = vmatprep.subr.bf16.mxu0 0
  %1757 = vmatpush2.bf16.msra.mxu0 0
  %1758 = vmatprep.subr.bf16.mxu0 0
  %1759 = vmatpush2.bf16.msra.mxu0 0
  %1760 = vmatprep.mubr.bf16.mxu0 0
  %1761 = vmatmul.mubr.bf16.gmra.mxu0 %v1723
  %v1762 = vpop.f32.mrf.mxu0
  %v1763 = vadd.f32 0.0, %v1762
  %v1764 = vpop.f32.mrf.mxu0
  %v1765 = vpop.f32.mrf.mxu0
  %v1766 = vpop.f32.mrf.mxu0
  %1767 = vdwg.mxu0
  %v1769 = vsel %vm1072, %v1534, 0
  %v1772 = vsel %vm1540, %v1065, 0
  %1774 = vmatprep.subr.bf16.mxu0 0
  %1775 = vmatpush1.bf16.msra.mxu0 0
  %1776 = vmatprep.subr.bf16.mxu0 0
  %1777 = vmatpush1.bf16.msra.mxu0 0
  %1778 = vmatprep.subr.bf16.mxu0 0
  %1779 = vmatpush1.bf16.msra.mxu0 0
  %1780 = vmatprep.subr.bf16.mxu0 0
  %1781 = vmatpush1.bf16.msra.mxu0 0
  %1782 = vmatprep.subr.bf16.mxu0 0
  %1783 = vmatpush1.bf16.msra.mxu0 0
  %1784 = vmatprep.subr.bf16.mxu0 0
  %1785 = vmatpush1.bf16.msra.mxu0 0
  %1786 = vmatprep.subr.bf16.mxu0 0
  %1787 = vmatpush1.bf16.msra.mxu0 0
  %1788 = vmatprep.subr.bf16.mxu0 0
  %1789 = vmatpush1.bf16.msra.mxu0 %v1772
  %1790 = vmatprep.subr.bf16.mxu0 0
  %1791 = vmatpush2.bf16.msra.mxu0 0
  %1792 = vmatprep.subr.bf16.mxu0 0
  %1793 = vmatpush2.bf16.msra.mxu0 0
  %1794 = vmatprep.subr.bf16.mxu0 0
  %1795 = vmatpush2.bf16.msra.mxu0 0
  %1796 = vmatprep.subr.bf16.mxu0 0
  %1797 = vmatpush2.bf16.msra.mxu0 0
  %1798 = vmatprep.subr.bf16.mxu0 0
  %1799 = vmatpush2.bf16.msra.mxu0 0
  %1800 = vmatprep.subr.bf16.mxu0 0
  %1801 = vmatpush2.bf16.msra.mxu0 0
  %1802 = vmatprep.subr.bf16.mxu0 0
  %1803 = vmatpush2.bf16.msra.mxu0 0
  %1804 = vmatprep.subr.bf16.mxu0 0
  %1805 = vmatpush2.bf16.msra.mxu0 0
  %1806 = vmatprep.mubr.bf16.mxu0 0
  %1807 = vmatmul.mubr.bf16.gmra.mxu0 %v1769
  %v1808 = vpop.f32.mrf.mxu0
  %v1809 = vadd.f32 0.0, %v1808
  %v1810 = vpop.f32.mrf.mxu0
  %v1811 = vpop.f32.mrf.mxu0
  %v1812 = vpop.f32.mrf.mxu0
  %1813 = vdwg.mxu0
  %v1815 = vsel %vm1072, %v1535, 0
  %v1818 = vsel %vm1540, %v1068, 0
  %1820 = vmatprep.subr.bf16.mxu0 0
  %1821 = vmatpush1.bf16.msra.mxu0 0
  %1822 = vmatprep.subr.bf16.mxu0 0
  %1823 = vmatpush1.bf16.msra.mxu0 0
  %1824 = vmatprep.subr.bf16.mxu0 0
  %1825 = vmatpush1.bf16.msra.mxu0 0
  %1826 = vmatprep.subr.bf16.mxu0 0
  %1827 = vmatpush1.bf16.msra.mxu0 0
  %1828 = vmatprep.subr.bf16.mxu0 0
  %1829 = vmatpush1.bf16.msra.mxu0 0
  %1830 = vmatprep.subr.bf16.mxu0 0
  %1831 = vmatpush1.bf16.msra.mxu0 0
  %1832 = vmatprep.subr.bf16.mxu0 0
  %1833 = vmatpush1.bf16.msra.mxu0 0
  %1834 = vmatprep.subr.bf16.mxu0 0
  %1835 = vmatpush1.bf16.msra.mxu0 %v1818
  %1836 = vmatprep.subr.bf16.mxu0 0
  %1837 = vmatpush2.bf16.msra.mxu0 0
  %1838 = vmatprep.subr.bf16.mxu0 0
  %1839 = vmatpush2.bf16.msra.mxu0 0
  %1840 = vmatprep.subr.bf16.mxu0 0
  %1841 = vmatpush2.bf16.msra.mxu0 0
  %1842 = vmatprep.subr.bf16.mxu0 0
  %1843 = vmatpush2.bf16.msra.mxu0 0
  %1844 = vmatprep.subr.bf16.mxu0 0
  %1845 = vmatpush2.bf16.msra.mxu0 0
  %1846 = vmatprep.subr.bf16.mxu0 0
  %1847 = vmatpush2.bf16.msra.mxu0 0
  %1848 = vmatprep.subr.bf16.mxu0 0
  %1849 = vmatpush2.bf16.msra.mxu0 0
  %1850 = vmatprep.subr.bf16.mxu0 0
  %1851 = vmatpush2.bf16.msra.mxu0 0
  %1852 = vmatprep.mubr.bf16.mxu0 0
  %1853 = vmatmul.mubr.bf16.gmra.mxu0 %v1815
  %v1854 = vpop.f32.mrf.mxu0
  %v1855 = vadd.f32 0.0, %v1854
  %v1856 = vpop.f32.mrf.mxu0
  %v1857 = vpop.f32.mrf.mxu0
  %v1858 = vpop.f32.mrf.mxu0
  %1859 = vdwg.mxu0
  %v1861 = vsel %vm1072, %v1536, 0
  %v1864 = vsel %vm1540, %v1071, 0
  %1866 = vmatprep.subr.bf16.mxu0 0
  %1867 = vmatpush1.bf16.msra.mxu0 0
  %1868 = vmatprep.subr.bf16.mxu0 0
  %1869 = vmatpush1.bf16.msra.mxu0 0
  %1870 = vmatprep.subr.bf16.mxu0 0
  %1871 = vmatpush1.bf16.msra.mxu0 0
  %1872 = vmatprep.subr.bf16.mxu0 0
  %1873 = vmatpush1.bf16.msra.mxu0 0
  %1874 = vmatprep.subr.bf16.mxu0 0
  %1875 = vmatpush1.bf16.msra.mxu0 0
  %1876 = vmatprep.subr.bf16.mxu0 0
  %1877 = vmatpush1.bf16.msra.mxu0 0
  %1878 = vmatprep.subr.bf16.mxu0 0
  %1879 = vmatpush1.bf16.msra.mxu0 0
  %1880 = vmatprep.subr.bf16.mxu0 0
  %1881 = vmatpush1.bf16.msra.mxu0 %v1864
  %1882 = vmatprep.subr.bf16.mxu0 0
  %1883 = vmatpush2.bf16.msra.mxu0 0
  %1884 = vmatprep.subr.bf16.mxu0 0
  %1885 = vmatpush2.bf16.msra.mxu0 0
  %1886 = vmatprep.subr.bf16.mxu0 0
  %1887 = vmatpush2.bf16.msra.mxu0 0
  %1888 = vmatprep.subr.bf16.mxu0 0
  %1889 = vmatpush2.bf16.msra.mxu0 0
  %1890 = vmatprep.subr.bf16.mxu0 0
  %1891 = vmatpush2.bf16.msra.mxu0 0
  %1892 = vmatprep.subr.bf16.mxu0 0
  %1893 = vmatpush2.bf16.msra.mxu0 0
  %1894 = vmatprep.subr.bf16.mxu0 0
  %1895 = vmatpush2.bf16.msra.mxu0 0
  %1896 = vmatprep.subr.bf16.mxu0 0
  %1897 = vmatpush2.bf16.msra.mxu0 0
  %1898 = vmatprep.mubr.bf16.mxu0 0
  %1899 = vmatmul.mubr.bf16.gmra.mxu0 %v1861
  %v1900 = vpop.f32.mrf.mxu0
  %v1901 = vadd.f32 0.0, %v1900
  %v1902 = vpop.f32.mrf.mxu0
  %v1903 = vpop.f32.mrf.mxu0
  %v1904 = vpop.f32.mrf.mxu0
  %1905 = vdwg.mxu0
  %v1906 = vcombine.low %v1579, %v1671
  %v1907 = vcombine.high %v1579, %v1671
  %v1909 = vunpack.c.l.s4 1983009808
  %v1910 = vunpack.c.0.s8 %v1909
  %v1911 = vlaneseq
  %v1912 = vshrl.u32 %v1911, 7
  %v1913 = vsub.s32 %v1910, %v1912
  %v1914 = vrot.slane %v1906, %v1913
  %v1916 = vunpack.c.l.s4 1983009808
  %v1917 = vunpack.c.0.s8 %v1916
  %v1918 = vlaneseq
  %v1919 = vshrl.u32 %v1918, 7
  %v1920 = vsub.s32 %v1917, %v1919
  %v1921 = vrot.slane %v1907, %v1920
  %v1922 = vcombine.low %v1625, %v1717
  %v1923 = vcombine.high %v1625, %v1717
  %v1925 = vunpack.c.l.s4 1983009808
  %v1926 = vunpack.c.0.s8 %v1925
  %v1927 = vlaneseq
  %v1928 = vshrl.u32 %v1927, 7
  %v1929 = vsub.s32 %v1926, %v1928
  %v1930 = vrot.slane %v1922, %v1929
  %v1932 = vunpack.c.l.s4 1983009808
  %v1933 = vunpack.c.0.s8 %v1932
  %v1934 = vlaneseq
  %v1935 = vshrl.u32 %v1934, 7
  %v1936 = vsub.s32 %v1933, %v1935
  %v1937 = vrot.slane %v1923, %v1936
  %v1938 = vcombine.low %v1914, %v1930
  %v1939 = vcombine.high %v1914, %v1930
  %v1941 = vunpack.c.l.s4 1934713408
  %v1942 = vunpack.c.0.s8 %v1941
  %v1943 = vlaneseq
  %v1944 = vshrl.u32 %v1943, 7
  %v1945 = vsub.s32 %v1942, %v1944
  %v1946 = vrot.slane %v1938, %v1945
  %v1948 = vunpack.c.l.s4 1934713408
  %v1949 = vunpack.c.0.s8 %v1948
  %v1950 = vlaneseq
  %v1951 = vshrl.u32 %v1950, 7
  %v1952 = vsub.s32 %v1949, %v1951
  %v1953 = vrot.slane %v1939, %v1952
  %v1954 = vcombine.low %v1921, %v1937
  %v1955 = vcombine.high %v1921, %v1937
  %v1957 = vunpack.c.l.s4 1934713408
  %v1958 = vunpack.c.0.s8 %v1957
  %v1959 = vlaneseq
  %v1960 = vshrl.u32 %v1959, 7
  %v1961 = vsub.s32 %v1958, %v1960
  %v1962 = vrot.slane %v1954, %v1961
  %v1964 = vunpack.c.l.s4 1934713408
  %v1965 = vunpack.c.0.s8 %v1964
  %v1966 = vlaneseq
  %v1967 = vshrl.u32 %v1966, 7
  %v1968 = vsub.s32 %v1965, %v1967
  %v1969 = vrot.slane %v1955, %v1968
  %v1970 = vcombine.high %v1946, 0.0
  %v1971 = vcombine.high %v1953, 0.0
  %v1972 = vcombine.high %v1962, 0.0
  %v1973 = vcombine.high %v1969, 0.0
  %v1974 = vcombine.low %v1763, %v1855
  %v1975 = vcombine.high %v1763, %v1855
  %v1977 = vunpack.c.l.s4 1983009808
  %v1978 = vunpack.c.0.s8 %v1977
  %v1979 = vlaneseq
  %v1980 = vshrl.u32 %v1979, 7
  %v1981 = vsub.s32 %v1978, %v1980
  %v1982 = vrot.slane %v1974, %v1981
  %v1984 = vunpack.c.l.s4 1983009808
  %v1985 = vunpack.c.0.s8 %v1984
  %v1986 = vlaneseq
  %v1987 = vshrl.u32 %v1986, 7
  %v1988 = vsub.s32 %v1985, %v1987
  %v1989 = vrot.slane %v1975, %v1988
  %v1990 = vcombine.low %v1809, %v1901
  %v1991 = vcombine.high %v1809, %v1901
  %v1993 = vunpack.c.l.s4 1983009808
  %v1994 = vunpack.c.0.s8 %v1993
  %v1995 = vlaneseq
  %v1996 = vshrl.u32 %v1995, 7
  %v1997 = vsub.s32 %v1994, %v1996
  %v1998 = vrot.slane %v1990, %v1997
  %v2000 = vunpack.c.l.s4 1983009808
  %v2001 = vunpack.c.0.s8 %v2000
  %v2002 = vlaneseq
  %v2003 = vshrl.u32 %v2002, 7
  %v2004 = vsub.s32 %v2001, %v2003
  %v2005 = vrot.slane %v1991, %v2004
  %v2006 = vcombine.low %v1982, %v1998
  %v2007 = vcombine.high %v1982, %v1998
  %v2009 = vunpack.c.l.s4 1934713408
  %v2010 = vunpack.c.0.s8 %v2009
  %v2011 = vlaneseq
  %v2012 = vshrl.u32 %v2011, 7
  %v2013 = vsub.s32 %v2010, %v2012
  %v2014 = vrot.slane %v2006, %v2013
  %v2016 = vunpack.c.l.s4 1934713408
  %v2017 = vunpack.c.0.s8 %v2016
  %v2018 = vlaneseq
  %v2019 = vshrl.u32 %v2018, 7
  %v2020 = vsub.s32 %v2017, %v2019
  %v2021 = vrot.slane %v2007, %v2020
  %v2022 = vcombine.low %v1989, %v2005
  %v2023 = vcombine.high %v1989, %v2005
  %v2025 = vunpack.c.l.s4 1934713408
  %v2026 = vunpack.c.0.s8 %v2025
  %v2027 = vlaneseq
  %v2028 = vshrl.u32 %v2027, 7
  %v2029 = vsub.s32 %v2026, %v2028
  %v2030 = vrot.slane %v2022, %v2029
  %v2032 = vunpack.c.l.s4 1934713408
  %v2033 = vunpack.c.0.s8 %v2032
  %v2034 = vlaneseq
  %v2035 = vshrl.u32 %v2034, 7
  %v2036 = vsub.s32 %v2033, %v2035
  %v2037 = vrot.slane %v2023, %v2036
  %v2038 = vcombine.high %v2014, 0.0
  %v2039 = vcombine.high %v2021, 0.0
  %v2040 = vcombine.high %v2030, 0.0
  %v2041 = vcombine.high %v2037, 0.0
  %v2042 = vcombine.low %v1946, %v1953
  %v2044 = vunpack.c.l.s4 1983009808
  %v2045 = vunpack.c.0.s8 %v2044
  %v2046 = vlaneseq
  %v2047 = vshrl.u32 %v2046, 7
  %v2048 = vsub.s32 %v2045, %v2047
  %v2049 = vrot.slane %v2042, %v2048
  %v2050 = vcombine.low %v1970, %v1971
  %v2052 = vunpack.c.l.s4 1983009808
  %v2053 = vunpack.c.0.s8 %v2052
  %v2054 = vlaneseq
  %v2055 = vshrl.u32 %v2054, 7
  %v2056 = vsub.s32 %v2053, %v2055
  %v2057 = vrot.slane %v2050, %v2056
  %v2058 = vcombine.low %v1962, %v1969
  %v2060 = vunpack.c.l.s4 1983009808
  %v2061 = vunpack.c.0.s8 %v2060
  %v2062 = vlaneseq
  %v2063 = vshrl.u32 %v2062, 7
  %v2064 = vsub.s32 %v2061, %v2063
  %v2065 = vrot.slane %v2058, %v2064
  %v2066 = vcombine.low %v1972, %v1973
  %v2068 = vunpack.c.l.s4 1983009808
  %v2069 = vunpack.c.0.s8 %v2068
  %v2070 = vlaneseq
  %v2071 = vshrl.u32 %v2070, 7
  %v2072 = vsub.s32 %v2069, %v2071
  %v2073 = vrot.slane %v2066, %v2072
  %v2074 = vcombine.low %v2049, %v2057
  %v2075 = vcombine.high %v2049, %v2057
  %v2077 = vunpack.c.l.s4 1934713408
  %v2078 = vunpack.c.0.s8 %v2077
  %v2079 = vlaneseq
  %v2080 = vshrl.u32 %v2079, 7
  %v2081 = vsub.s32 %v2078, %v2080
  %v2082 = vrot.slane %v2074, %v2081
  %v2084 = vunpack.c.l.s4 1934713408
  %v2085 = vunpack.c.0.s8 %v2084
  %v2086 = vlaneseq
  %v2087 = vshrl.u32 %v2086, 7
  %v2088 = vsub.s32 %v2085, %v2087
  %v2089 = vrot.slane %v2075, %v2088
  %v2090 = vcombine.low %v2065, %v2073
  %v2091 = vcombine.high %v2065, %v2073
  %v2093 = vunpack.c.l.s4 1934713408
  %v2094 = vunpack.c.0.s8 %v2093
  %v2095 = vlaneseq
  %v2096 = vshrl.u32 %v2095, 7
  %v2097 = vsub.s32 %v2094, %v2096
  %v2098 = vrot.slane %v2090, %v2097
  %v2100 = vunpack.c.l.s4 1934713408
  %v2101 = vunpack.c.0.s8 %v2100
  %v2102 = vlaneseq
  %v2103 = vshrl.u32 %v2102, 7
  %v2104 = vsub.s32 %v2101, %v2103
  %v2105 = vrot.slane %v2091, %v2104
  %v2106 = vcombine.low %v2082, %v2098
  %v2107 = vcombine.high %v2082, %v2098
  %v2108 = vcombine.low %v2089, %v2105
  %v2109 = vcombine.high %v2089, %v2105
  %v2110 = vcombine.low %v2014, %v2021
  %v2112 = vunpack.c.l.s4 1983009808
  %v2113 = vunpack.c.0.s8 %v2112
  %v2114 = vlaneseq
  %v2115 = vshrl.u32 %v2114, 7
  %v2116 = vsub.s32 %v2113, %v2115
  %v2117 = vrot.slane %v2110, %v2116
  %v2118 = vcombine.low %v2038, %v2039
  %v2120 = vunpack.c.l.s4 1983009808
  %v2121 = vunpack.c.0.s8 %v2120
  %v2122 = vlaneseq
  %v2123 = vshrl.u32 %v2122, 7
  %v2124 = vsub.s32 %v2121, %v2123
  %v2125 = vrot.slane %v2118, %v2124
  %v2126 = vcombine.low %v2030, %v2037
  %v2128 = vunpack.c.l.s4 1983009808
  %v2129 = vunpack.c.0.s8 %v2128
  %v2130 = vlaneseq
  %v2131 = vshrl.u32 %v2130, 7
  %v2132 = vsub.s32 %v2129, %v2131
  %v2133 = vrot.slane %v2126, %v2132
  %v2134 = vcombine.low %v2040, %v2041
  %v2136 = vunpack.c.l.s4 1983009808
  %v2137 = vunpack.c.0.s8 %v2136
  %v2138 = vlaneseq
  %v2139 = vshrl.u32 %v2138, 7
  %v2140 = vsub.s32 %v2137, %v2139
  %v2141 = vrot.slane %v2134, %v2140
  %v2142 = vcombine.low %v2117, %v2125
  %v2143 = vcombine.high %v2117, %v2125
  %v2145 = vunpack.c.l.s4 1934713408
  %v2146 = vunpack.c.0.s8 %v2145
  %v2147 = vlaneseq
  %v2148 = vshrl.u32 %v2147, 7
  %v2149 = vsub.s32 %v2146, %v2148
  %v2150 = vrot.slane %v2142, %v2149
  %v2152 = vunpack.c.l.s4 1934713408
  %v2153 = vunpack.c.0.s8 %v2152
  %v2154 = vlaneseq
  %v2155 = vshrl.u32 %v2154, 7
  %v2156 = vsub.s32 %v2153, %v2155
  %v2157 = vrot.slane %v2143, %v2156
  %v2158 = vcombine.low %v2133, %v2141
  %v2159 = vcombine.high %v2133, %v2141
  %v2161 = vunpack.c.l.s4 1934713408
  %v2162 = vunpack.c.0.s8 %v2161
  %v2163 = vlaneseq
  %v2164 = vshrl.u32 %v2163, 7
  %v2165 = vsub.s32 %v2162, %v2164
  %v2166 = vrot.slane %v2158, %v2165
  %v2168 = vunpack.c.l.s4 1934713408
  %v2169 = vunpack.c.0.s8 %v2168
  %v2170 = vlaneseq
  %v2171 = vshrl.u32 %v2170, 7
  %v2172 = vsub.s32 %v2169, %v2171
  %v2173 = vrot.slane %v2159, %v2172
  %v2174 = vcombine.low %v2150, %v2166
  %v2175 = vcombine.high %v2150, %v2166
  %v2176 = vcombine.low %v2157, %v2173
  %v2177 = vcombine.high %v2157, %v2173
  %2180 = vrot.lane.b32.xlu0 %v2107, 8
  %v2181 = vpop.permute.xlu0 %2180
  %2182 = vrot.lane.b32.xlu0 %v2175, 8
  %v2183 = vpop.permute.xlu0 %2182
  %2188 = vrot.lane.b32.xlu0 %v2108, 16
  %v2189 = vpop.permute.xlu0 %2188
  %2190 = vrot.lane.b32.xlu0 %v2176, 16
  %v2191 = vpop.permute.xlu0 %2190
  %2196 = vrot.lane.b32.xlu0 %v2109, 24
  %v2197 = vpop.permute.xlu0 %2196
  %2198 = vrot.lane.b32.xlu0 %v2177, 24
  %v2199 = vpop.permute.xlu0 %2198
  %v2202 = vsel %vm1072, %v2106, %v2181
  %v2203 = vsel %vm1072, %v2174, %v2183
  %vm2204 = vcmask 130048
  %v2205 = vsel %vm2204, %v2202, %v2189
  %v2206 = vsel %vm2204, %v2203, %v2191
  %vm2207 = vcmask 195584
  %v2208 = vsel %vm2207, %v2205, %v2197
  %v2209 = vsel %vm2207, %v2206, %v2199
  %v2210 = vpack.c.bf16 %v2209, %v2208
  %v2212 = vlaneseq
  %v2213 = vshrl.u32 %v2212, 7
  %v2214 = vsub.s32 0, %v2213
  %v2215 = vrot.slane %v107, %v2214
  %v2221 = vunpack.c.l.b16 %v103
  %v2222 = vunpack.c.l.b16 %v104
  %v2223 = vunpack.c.l.b16 %v105
  %v2224 = vunpack.c.l.b16 %v106
  %v2225 = vpack.c.b16 %v2222, %v2221
  %v2226 = vpack.c.b16 %v2224, %v2223
  %v2230 = vsel %vm127, %v2210, 0
  %2232 = vmatprep.subr.bf16.mxu0 0
  %2233 = vmatpush1.bf16.msra.mxu0 0
  %2234 = vmatprep.subr.bf16.mxu0 0
  %2235 = vmatpush1.bf16.msra.mxu0 0
  %2236 = vmatprep.subr.bf16.mxu0 0
  %2237 = vmatpush1.bf16.msra.mxu0 0
  %2238 = vmatprep.subr.bf16.mxu0 0
  %2239 = vmatpush1.bf16.msra.mxu0 0
  %2240 = vmatprep.subr.bf16.mxu0 0
  %2241 = vmatpush1.bf16.msra.mxu0 0
  %2242 = vmatprep.subr.bf16.mxu0 0
  %2243 = vmatpush1.bf16.msra.mxu0 0
  %2244 = vmatprep.subr.bf16.mxu0 0
  %2245 = vmatpush1.bf16.msra.mxu0 %v2226
  %2246 = vmatprep.subr.bf16.mxu0 0
  %2247 = vmatpush1.bf16.msra.mxu0 %v2225
  %2248 = vmatprep.subr.bf16.mxu0 0
  %2249 = vmatpush2.bf16.msra.mxu0 0
  %2250 = vmatprep.subr.bf16.mxu0 0
  %2251 = vmatpush2.bf16.msra.mxu0 0
  %2252 = vmatprep.subr.bf16.mxu0 0
  %2253 = vmatpush2.bf16.msra.mxu0 0
  %2254 = vmatprep.subr.bf16.mxu0 0
  %2255 = vmatpush2.bf16.msra.mxu0 0
  %2256 = vmatprep.subr.bf16.mxu0 0
  %2257 = vmatpush2.bf16.msra.mxu0 0
  %2258 = vmatprep.subr.bf16.mxu0 0
  %2259 = vmatpush2.bf16.msra.mxu0 0
  %2260 = vmatprep.subr.bf16.mxu0 0
  %2261 = vmatpush2.bf16.msra.mxu0 0
  %2262 = vmatprep.subr.bf16.mxu0 0
  %2263 = vmatpush2.bf16.msra.mxu0 0
  %2264 = vmatprep.mubr.bf16.mxu0 0
  %2265 = vmatmul.mubr.bf16.gmra.mxu0 %v2230
  %v2266 = vpop.f32.mrf.mxu0
  %v2267 = vadd.f32 %v2215, %v2266
  %v2268 = vpop.f32.mrf.mxu0
  %v2269 = vpop.f32.mrf.mxu0
  %v2270 = vadd.f32 %v2215, %v2269
  %v2271 = vpop.f32.mrf.mxu0
  %2272 = vdwg.mxu0
  %v2273 = vadd.f32 %v80, %v2267
  %v2274 = vadd.f32 %v81, %v2270
  %v2275 = vld [vmem:[%s16] sm:$0x1]
  %v2276 = vld [vmem:[%s17] sm:$0x1]
  %v2277 = vsel %vm127, %v2273, 0.0
  %2278 = vadd.xlane.f32.xlu0 %v2277
  %v2279 = vpop.xlane.xlu0 %2278
  %v2280 = vsel %vm127, %v2274, 0.0
  %2281 = vadd.xlane.f32.xlu0 %v2280
  %v2282 = vpop.xlane.xlu0 %2281
  %v2283 = vrcp.pop 32.0
  %v2284 = vmul.f32 %v2279, %v2283
  %v2285 = vmul.f32 %v2282, %v2283
  %v2286 = vsub.f32 %v2273, %v2284
  %v2287 = vsub.f32 %v2274, %v2285
  %v2288 = vmul.f32 %v2286, %v2286
  %v2289 = vmul.f32 %v2287, %v2287
  %v2290 = vsel %vm127, %v2288, 0.0
  %2291 = vadd.xlane.f32.xlu0 %v2290
  %v2292 = vpop.xlane.xlu0 %2291
  %v2293 = vsel %vm127, %v2289, 0.0
  %2294 = vadd.xlane.f32.xlu0 %v2293
  %v2295 = vpop.xlane.xlu0 %2294
  %v2296 = vmul.f32 %v2292, %v2283
  %v2297 = vmul.f32 %v2295, %v2283
  %v2298 = vadd.f32 %v2296, 1e-05
  %v2299 = vadd.f32 %v2297, 1e-05
  %v2300 = vrsqrt.pop %v2298
  %v2301 = vrsqrt.pop %v2299
  %v2302 = vmul.f32 %v2286, %v2300
  %v2303 = vmul.f32 %v2287, %v2301
  %v2305 = vlaneseq
  %v2306 = vshrl.u32 %v2305, 7
  %v2307 = vsub.s32 0, %v2306
  %v2308 = vrot.slane %v2275, %v2307
  %v2310 = vmul.f32 %v2302, %v2308
  %v2311 = vmul.f32 %v2303, %v2308
  %v2313 = vlaneseq
  %v2314 = vshrl.u32 %v2313, 7
  %v2315 = vsub.s32 0, %v2314
  %v2316 = vrot.slane %v2276, %v2315
  %v2318 = vadd.f32 %v2310, %v2316
  %v2319 = vadd.f32 %v2311, %v2316
  %v2320 = vadd.f32 %v2318, %v90
  %v2321 = vadd.f32 %v2319, %v91
  %v2322 = vld [vmem:[%s8] sm:$0xf]
  %v2323 = vld [vmem:[%s8 + $0x4] sm:$0xf]
  %v2324 = vld [vmem:[%s8 + $0x8] sm:$0xf]
  %v2325 = vld [vmem:[%s8 + $0xc] sm:$0xf]
  %v2326 = vld [vmem:[%s9] sm:$0x1]
  %v2327 = vld [vmem:[%s10] sm:$0xf]
  %v2328 = vld [vmem:[%s10 + $0x4] sm:$0xf]
  %v2329 = vld [vmem:[%s10 + $0x8] sm:$0xf]
  %v2330 = vld [vmem:[%s10 + $0xc] sm:$0xf]
  %v2331 = vld [vmem:[%s11] sm:$0x1]
  %v2332 = vpack.c.bf16 %v2321, %v2320
  %v2334 = vlaneseq
  %v2335 = vshrl.u32 %v2334, 7
  %v2336 = vsub.s32 0, %v2335
  %v2337 = vrot.slane %v2326, %v2336
  %v2343 = vunpack.c.l.b16 %v2322
  %v2344 = vunpack.c.l.b16 %v2323
  %v2345 = vunpack.c.l.b16 %v2324
  %v2346 = vunpack.c.l.b16 %v2325
  %v2347 = vpack.c.b16 %v2344, %v2343
  %v2348 = vpack.c.b16 %v2346, %v2345
  %v2352 = vsel %vm127, %v2332, 0
  %2354 = vmatprep.subr.bf16.mxu0 0
  %2355 = vmatpush1.bf16.msra.mxu0 0
  %2356 = vmatprep.subr.bf16.mxu0 0
  %2357 = vmatpush1.bf16.msra.mxu0 0
  %2358 = vmatprep.subr.bf16.mxu0 0
  %2359 = vmatpush1.bf16.msra.mxu0 0
  %2360 = vmatprep.subr.bf16.mxu0 0
  %2361 = vmatpush1.bf16.msra.mxu0 0
  %2362 = vmatprep.subr.bf16.mxu0 0
  %2363 = vmatpush1.bf16.msra.mxu0 0
  %2364 = vmatprep.subr.bf16.mxu0 0
  %2365 = vmatpush1.bf16.msra.mxu0 0
  %2366 = vmatprep.subr.bf16.mxu0 0
  %2367 = vmatpush1.bf16.msra.mxu0 %v2348
  %2368 = vmatprep.subr.bf16.mxu0 0
  %2369 = vmatpush1.bf16.msra.mxu0 %v2347
  %2370 = vmatprep.subr.bf16.mxu0 0
  %2371 = vmatpush2.bf16.msra.mxu0 0
  %2372 = vmatprep.subr.bf16.mxu0 0
  %2373 = vmatpush2.bf16.msra.mxu0 0
  %2374 = vmatprep.subr.bf16.mxu0 0
  %2375 = vmatpush2.bf16.msra.mxu0 0
  %2376 = vmatprep.subr.bf16.mxu0 0
  %2377 = vmatpush2.bf16.msra.mxu0 0
  %2378 = vmatprep.subr.bf16.mxu0 0
  %2379 = vmatpush2.bf16.msra.mxu0 0
  %2380 = vmatprep.subr.bf16.mxu0 0
  %2381 = vmatpush2.bf16.msra.mxu0 0
  %2382 = vmatprep.subr.bf16.mxu0 0
  %2383 = vmatpush2.bf16.msra.mxu0 0
  %2384 = vmatprep.subr.bf16.mxu0 0
  %2385 = vmatpush2.bf16.msra.mxu0 0
  %2386 = vmatprep.mubr.bf16.mxu0 0
  %2387 = vmatmul.mubr.bf16.gmra.mxu0 %v2352
  %v2388 = vpop.f32.mrf.mxu0
  %v2389 = vadd.f32 %v2337, %v2388
  %v2390 = vpop.f32.mrf.mxu0
  %v2391 = vpop.f32.mrf.mxu0
  %v2392 = vadd.f32 %v2337, %v2391
  %v2393 = vpop.f32.mrf.mxu0
  %2394 = vdwg.mxu0
  %v2395 = vpack.c.bf16 %v93, %v92
  %v2396 = vpack.c.bf16 %v95, %v94
  %2397 = vrot.lane.b32.xlu0 %v2347, 96
  %v2398 = vpop.permute.xlu0 %2397
  %2399 = vrot.lane.b32.xlu0 %v2348, 96
  %v2400 = vpop.permute.xlu0 %2399
  %2403 = vrot.lane.b32.xlu0 %v2337, 96
  %v2404 = vpop.permute.xlu0 %2403
  %v2407 = vsel %vm127, %v2395, 0
  %v2410 = vsel %vm127, %v2396, 0
  %2412 = vmatprep.subr.bf16.mxu0 0
  %2413 = vmatpush1.bf16.msra.mxu0 0
  %2414 = vmatprep.subr.bf16.mxu0 0
  %2415 = vmatpush1.bf16.msra.mxu0 0
  %2416 = vmatprep.subr.bf16.mxu0 0
  %2417 = vmatpush1.bf16.msra.mxu0 0
  %2418 = vmatprep.subr.bf16.mxu0 0
  %2419 = vmatpush1.bf16.msra.mxu0 0
  %2420 = vmatprep.subr.bf16.mxu0 0
  %2421 = vmatpush1.bf16.msra.mxu0 0
  %2422 = vmatprep.subr.bf16.mxu0 0
  %2423 = vmatpush1.bf16.msra.mxu0 0
  %2424 = vmatprep.subr.bf16.mxu0 0
  %2425 = vmatpush1.bf16.msra.mxu0 %v2400
  %2426 = vmatprep.subr.bf16.mxu0 0
  %2427 = vmatpush1.bf16.msra.mxu0 %v2398
  %2428 = vmatprep.subr.bf16.mxu0 0
  %2429 = vmatpush2.bf16.msra.mxu0 0
  %2430 = vmatprep.subr.bf16.mxu0 0
  %2431 = vmatpush2.bf16.msra.mxu0 0
  %2432 = vmatprep.subr.bf16.mxu0 0
  %2433 = vmatpush2.bf16.msra.mxu0 0
  %2434 = vmatprep.subr.bf16.mxu0 0
  %2435 = vmatpush2.bf16.msra.mxu0 0
  %2436 = vmatprep.subr.bf16.mxu0 0
  %2437 = vmatpush2.bf16.msra.mxu0 0
  %2438 = vmatprep.subr.bf16.mxu0 0
  %2439 = vmatpush2.bf16.msra.mxu0 0
  %2440 = vmatprep.subr.bf16.mxu0 0
  %2441 = vmatpush2.bf16.msra.mxu0 0
  %2442 = vmatprep.subr.bf16.mxu0 0
  %2443 = vmatpush2.bf16.msra.mxu0 0
  %2444 = vmatprep.mubr.bf16.mxu0 0
  %2445 = vmatmul.mubr.bf16.gmra.mxu0 %v2407
  %v2446 = vpop.f32.mrf.mxu0
  %v2447 = vadd.f32 %v2404, %v2446
  %v2448 = vpop.f32.mrf.mxu0
  %v2449 = vpop.f32.mrf.mxu0
  %v2450 = vadd.f32 %v2404, %v2449
  %v2451 = vpop.f32.mrf.mxu0
  %2452 = vmatprep.mubr.bf16.mxu0 0
  %2453 = vmatmul.mubr.bf16.gmra.mxu0 %v2410
  %v2454 = vpop.f32.mrf.mxu0
  %v2455 = vadd.f32 %v2404, %v2454
  %v2456 = vpop.f32.mrf.mxu0
  %v2457 = vpop.f32.mrf.mxu0
  %v2458 = vadd.f32 %v2404, %v2457
  %v2459 = vpop.f32.mrf.mxu0
  %2460 = vdwg.mxu0
  %v2461 = vpack.c.bf16 %v83, %v82
  %v2462 = vpack.c.bf16 %v85, %v84
  %2463 = vrot.lane.b32.xlu0 %v2347, 64
  %v2464 = vpop.permute.xlu0 %2463
  %2465 = vrot.lane.b32.xlu0 %v2348, 64
  %v2466 = vpop.permute.xlu0 %2465
  %2469 = vrot.lane.b32.xlu0 %v2337, 64
  %v2470 = vpop.permute.xlu0 %2469
  %v2473 = vsel %vm127, %v2461, 0
  %v2476 = vsel %vm127, %v2462, 0
  %2478 = vmatprep.subr.bf16.mxu0 0
  %2479 = vmatpush1.bf16.msra.mxu0 0
  %2480 = vmatprep.subr.bf16.mxu0 0
  %2481 = vmatpush1.bf16.msra.mxu0 0
  %2482 = vmatprep.subr.bf16.mxu0 0
  %2483 = vmatpush1.bf16.msra.mxu0 0
  %2484 = vmatprep.subr.bf16.mxu0 0
  %2485 = vmatpush1.bf16.msra.mxu0 0
  %2486 = vmatprep.subr.bf16.mxu0 0
  %2487 = vmatpush1.bf16.msra.mxu0 0
  %2488 = vmatprep.subr.bf16.mxu0 0
  %2489 = vmatpush1.bf16.msra.mxu0 0
  %2490 = vmatprep.subr.bf16.mxu0 0
  %2491 = vmatpush1.bf16.msra.mxu0 %v2466
  %2492 = vmatprep.subr.bf16.mxu0 0
  %2493 = vmatpush1.bf16.msra.mxu0 %v2464
  %2494 = vmatprep.subr.bf16.mxu0 0
  %2495 = vmatpush2.bf16.msra.mxu0 0
  %2496 = vmatprep.subr.bf16.mxu0 0
  %2497 = vmatpush2.bf16.msra.mxu0 0
  %2498 = vmatprep.subr.bf16.mxu0 0
  %2499 = vmatpush2.bf16.msra.mxu0 0
  %2500 = vmatprep.subr.bf16.mxu0 0
  %2501 = vmatpush2.bf16.msra.mxu0 0
  %2502 = vmatprep.subr.bf16.mxu0 0
  %2503 = vmatpush2.bf16.msra.mxu0 0
  %2504 = vmatprep.subr.bf16.mxu0 0
  %2505 = vmatpush2.bf16.msra.mxu0 0
  %2506 = vmatprep.subr.bf16.mxu0 0
  %2507 = vmatpush2.bf16.msra.mxu0 0
  %2508 = vmatprep.subr.bf16.mxu0 0
  %2509 = vmatpush2.bf16.msra.mxu0 0
  %2510 = vmatprep.mubr.bf16.mxu0 0
  %2511 = vmatmul.mubr.bf16.gmra.mxu0 %v2473
  %v2512 = vpop.f32.mrf.mxu0
  %v2513 = vadd.f32 %v2470, %v2512
  %v2514 = vpop.f32.mrf.mxu0
  %v2515 = vpop.f32.mrf.mxu0
  %v2516 = vadd.f32 %v2470, %v2515
  %v2517 = vpop.f32.mrf.mxu0
  %2518 = vmatprep.mubr.bf16.mxu0 0
  %2519 = vmatmul.mubr.bf16.gmra.mxu0 %v2476
  %v2520 = vpop.f32.mrf.mxu0
  %v2521 = vadd.f32 %v2470, %v2520
  %v2522 = vpop.f32.mrf.mxu0
  %v2523 = vpop.f32.mrf.mxu0
  %v2524 = vadd.f32 %v2470, %v2523
  %v2525 = vpop.f32.mrf.mxu0
  %2526 = vdwg.mxu0
  %v2527 = vpack.c.bf16 %v2392, %v2389
  %2529 = vrot.lane.b32.xlu0 %v2527, 120
  %v2530 = vpop.permute.xlu0 %2529
  %2531 = vrot.lane.b32.xlu0 %v2527, 112
  %v2532 = vpop.permute.xlu0 %2531
  %2533 = vrot.lane.b32.xlu0 %v2527, 104
  %v2534 = vpop.permute.xlu0 %2533
  %v2537 = vpack.i.b16 %v2530, %v2527
  %v2539 = vshrl.u32 %v2527, 16
  %v2540 = vshrl.u32 %v2530, 16
  %v2541 = vpack.i.b16 %v2540, %v2539
  %v2545 = vpack.i.b16 %v2534, %v2532
  %v2547 = vshrl.u32 %v2532, 16
  %v2548 = vshrl.u32 %v2534, 16
  %v2549 = vpack.i.b16 %v2548, %v2547
  %v2551 = vcombine.high %v2537, %v251
  %v2553 = vunpack.c.l.s4 1983009808
  %v2554 = vunpack.c.0.s8 %v2553
  %v2555 = vlaneseq
  %v2556 = vshrl.u32 %v2555, 7
  %v2557 = vsub.s32 %v2554, %v2556
  %v2558 = vrot.slane %v2537, %v2557
  %v2560 = vunpack.c.l.s4 1983009808
  %v2561 = vunpack.c.0.s8 %v2560
  %v2562 = vlaneseq
  %v2563 = vshrl.u32 %v2562, 7
  %v2564 = vsub.s32 %v2561, %v2563
  %v2565 = vrot.slane %v2551, %v2564
  %v2566 = vcombine.high %v2545, %v251
  %v2568 = vunpack.c.l.s4 1983009808
  %v2569 = vunpack.c.0.s8 %v2568
  %v2570 = vlaneseq
  %v2571 = vshrl.u32 %v2570, 7
  %v2572 = vsub.s32 %v2569, %v2571
  %v2573 = vrot.slane %v2545, %v2572
  %v2575 = vunpack.c.l.s4 1983009808
  %v2576 = vunpack.c.0.s8 %v2575
  %v2577 = vlaneseq
  %v2578 = vshrl.u32 %v2577, 7
  %v2579 = vsub.s32 %v2576, %v2578
  %v2580 = vrot.slane %v2566, %v2579
  %v2581 = vcombine.low %v2558, %v2573
  %v2582 = vcombine.high %v2558, %v2573
  %v2584 = vunpack.c.l.s4 1934713408
  %v2585 = vunpack.c.0.s8 %v2584
  %v2586 = vlaneseq
  %v2587 = vshrl.u32 %v2586, 7
  %v2588 = vsub.s32 %v2585, %v2587
  %v2589 = vrot.slane %v2581, %v2588
  %v2591 = vunpack.c.l.s4 1934713408
  %v2592 = vunpack.c.0.s8 %v2591
  %v2593 = vlaneseq
  %v2594 = vshrl.u32 %v2593, 7
  %v2595 = vsub.s32 %v2592, %v2594
  %v2596 = vrot.slane %v2582, %v2595
  %v2597 = vcombine.low %v2565, %v2580
  %v2598 = vcombine.high %v2565, %v2580
  %v2600 = vunpack.c.l.s4 1934713408
  %v2601 = vunpack.c.0.s8 %v2600
  %v2602 = vlaneseq
  %v2603 = vshrl.u32 %v2602, 7
  %v2604 = vsub.s32 %v2601, %v2603
  %v2605 = vrot.slane %v2597, %v2604
  %v2607 = vunpack.c.l.s4 1934713408
  %v2608 = vunpack.c.0.s8 %v2607
  %v2609 = vlaneseq
  %v2610 = vshrl.u32 %v2609, 7
  %v2611 = vsub.s32 %v2608, %v2610
  %v2612 = vrot.slane %v2598, %v2611
  %v2613 = vcombine.high %v2589, 0
  %v2614 = vcombine.high %v2596, 0
  %v2615 = vcombine.high %v2605, 0
  %v2616 = vcombine.high %v2612, 0
  %v2617 = vcombine.high %v2541, %v254
  %v2619 = vunpack.c.l.s4 1983009808
  %v2620 = vunpack.c.0.s8 %v2619
  %v2621 = vlaneseq
  %v2622 = vshrl.u32 %v2621, 7
  %v2623 = vsub.s32 %v2620, %v2622
  %v2624 = vrot.slane %v2541, %v2623
  %v2626 = vunpack.c.l.s4 1983009808
  %v2627 = vunpack.c.0.s8 %v2626
  %v2628 = vlaneseq
  %v2629 = vshrl.u32 %v2628, 7
  %v2630 = vsub.s32 %v2627, %v2629
  %v2631 = vrot.slane %v2617, %v2630
  %v2632 = vcombine.high %v2549, %v254
  %v2634 = vunpack.c.l.s4 1983009808
  %v2635 = vunpack.c.0.s8 %v2634
  %v2636 = vlaneseq
  %v2637 = vshrl.u32 %v2636, 7
  %v2638 = vsub.s32 %v2635, %v2637
  %v2639 = vrot.slane %v2549, %v2638
  %v2641 = vunpack.c.l.s4 1983009808
  %v2642 = vunpack.c.0.s8 %v2641
  %v2643 = vlaneseq
  %v2644 = vshrl.u32 %v2643, 7
  %v2645 = vsub.s32 %v2642, %v2644
  %v2646 = vrot.slane %v2632, %v2645
  %v2647 = vcombine.low %v2624, %v2639
  %v2648 = vcombine.high %v2624, %v2639
  %v2650 = vunpack.c.l.s4 1934713408
  %v2651 = vunpack.c.0.s8 %v2650
  %v2652 = vlaneseq
  %v2653 = vshrl.u32 %v2652, 7
  %v2654 = vsub.s32 %v2651, %v2653
  %v2655 = vrot.slane %v2647, %v2654
  %v2657 = vunpack.c.l.s4 1934713408
  %v2658 = vunpack.c.0.s8 %v2657
  %v2659 = vlaneseq
  %v2660 = vshrl.u32 %v2659, 7
  %v2661 = vsub.s32 %v2658, %v2660
  %v2662 = vrot.slane %v2648, %v2661
  %v2663 = vcombine.low %v2631, %v2646
  %v2664 = vcombine.high %v2631, %v2646
  %v2666 = vunpack.c.l.s4 1934713408
  %v2667 = vunpack.c.0.s8 %v2666
  %v2668 = vlaneseq
  %v2669 = vshrl.u32 %v2668, 7
  %v2670 = vsub.s32 %v2667, %v2669
  %v2671 = vrot.slane %v2663, %v2670
  %v2673 = vunpack.c.l.s4 1934713408
  %v2674 = vunpack.c.0.s8 %v2673
  %v2675 = vlaneseq
  %v2676 = vshrl.u32 %v2675, 7
  %v2677 = vsub.s32 %v2674, %v2676
  %v2678 = vrot.slane %v2664, %v2677
  %v2679 = vcombine.high %v2655, 0
  %v2680 = vcombine.high %v2662, 0
  %v2681 = vcombine.high %v2671, 0
  %v2682 = vcombine.high %v2678, 0
  %v2683 = vcombine.low %v2589, %v2596
  %v2685 = vunpack.c.l.s4 1983009808
  %v2686 = vunpack.c.0.s8 %v2685
  %v2687 = vlaneseq
  %v2688 = vshrl.u32 %v2687, 7
  %v2689 = vsub.s32 %v2686, %v2688
  %v2690 = vrot.slane %v2683, %v2689
  %v2691 = vcombine.low %v2613, %v2614
  %v2693 = vunpack.c.l.s4 1983009808
  %v2694 = vunpack.c.0.s8 %v2693
  %v2695 = vlaneseq
  %v2696 = vshrl.u32 %v2695, 7
  %v2697 = vsub.s32 %v2694, %v2696
  %v2698 = vrot.slane %v2691, %v2697
  %v2699 = vcombine.low %v2690, %v2698
  %v2701 = vunpack.c.l.s4 1934713408
  %v2702 = vunpack.c.0.s8 %v2701
  %v2703 = vlaneseq
  %v2704 = vshrl.u32 %v2703, 7
  %v2705 = vsub.s32 %v2702, %v2704
  %v2706 = vrot.slane %v2699, %v2705
  %v2707 = vcombine.high %v2706, 0
  %v2708 = vcombine.low %v2655, %v2662
  %v2710 = vunpack.c.l.s4 1983009808
  %v2711 = vunpack.c.0.s8 %v2710
  %v2712 = vlaneseq
  %v2713 = vshrl.u32 %v2712, 7
  %v2714 = vsub.s32 %v2711, %v2713
  %v2715 = vrot.slane %v2708, %v2714
  %v2716 = vcombine.low %v2679, %v2680
  %v2718 = vunpack.c.l.s4 1983009808
  %v2719 = vunpack.c.0.s8 %v2718
  %v2720 = vlaneseq
  %v2721 = vshrl.u32 %v2720, 7
  %v2722 = vsub.s32 %v2719, %v2721
  %v2723 = vrot.slane %v2716, %v2722
  %v2724 = vcombine.low %v2715, %v2723
  %v2726 = vunpack.c.l.s4 1934713408
  %v2727 = vunpack.c.0.s8 %v2726
  %v2728 = vlaneseq
  %v2729 = vshrl.u32 %v2728, 7
  %v2730 = vsub.s32 %v2727, %v2729
  %v2731 = vrot.slane %v2724, %v2730
  %v2732 = vcombine.high %v2731, 0
  %v2733 = vcombine.low %v2605, %v2612
  %v2735 = vunpack.c.l.s4 1983009808
  %v2736 = vunpack.c.0.s8 %v2735
  %v2737 = vlaneseq
  %v2738 = vshrl.u32 %v2737, 7
  %v2739 = vsub.s32 %v2736, %v2738
  %v2740 = vrot.slane %v2733, %v2739
  %v2741 = vcombine.low %v2615, %v2616
  %v2743 = vunpack.c.l.s4 1983009808
  %v2744 = vunpack.c.0.s8 %v2743
  %v2745 = vlaneseq
  %v2746 = vshrl.u32 %v2745, 7
  %v2747 = vsub.s32 %v2744, %v2746
  %v2748 = vrot.slane %v2741, %v2747
  %v2749 = vcombine.low %v2740, %v2748
  %v2751 = vunpack.c.l.s4 1934713408
  %v2752 = vunpack.c.0.s8 %v2751
  %v2753 = vlaneseq
  %v2754 = vshrl.u32 %v2753, 7
  %v2755 = vsub.s32 %v2752, %v2754
  %v2756 = vrot.slane %v2749, %v2755
  %v2757 = vcombine.high %v2756, 0
  %v2758 = vcombine.low %v2671, %v2678
  %v2760 = vunpack.c.l.s4 1983009808
  %v2761 = vunpack.c.0.s8 %v2760
  %v2762 = vlaneseq
  %v2763 = vshrl.u32 %v2762, 7
  %v2764 = vsub.s32 %v2761, %v2763
  %v2765 = vrot.slane %v2758, %v2764
  %v2766 = vcombine.low %v2681, %v2682
  %v2768 = vunpack.c.l.s4 1983009808
  %v2769 = vunpack.c.0.s8 %v2768
  %v2770 = vlaneseq
  %v2771 = vshrl.u32 %v2770, 7
  %v2772 = vsub.s32 %v2769, %v2771
  %v2773 = vrot.slane %v2766, %v2772
  %v2774 = vcombine.low %v2765, %v2773
  %v2776 = vunpack.c.l.s4 1934713408
  %v2777 = vunpack.c.0.s8 %v2776
  %v2778 = vlaneseq
  %v2779 = vshrl.u32 %v2778, 7
  %v2780 = vsub.s32 %v2777, %v2779
  %v2781 = vrot.slane %v2774, %v2780
  %v2782 = vcombine.high %v2781, 0
  %v2785 = vpack.i.b16 %v2731, %v2706
  %v2786 = vshrl.u32 %v2706, 16
  %v2787 = vshrl.u32 %v2731, 16
  %v2788 = vpack.i.b16 %v2787, %v2786
  %v2791 = vpack.i.b16 %v2732, %v2707
  %v2792 = vshrl.u32 %v2707, 16
  %v2793 = vshrl.u32 %v2732, 16
  %v2794 = vpack.i.b16 %v2793, %v2792
  %v2797 = vpack.i.b16 %v2781, %v2756
  %v2798 = vshrl.u32 %v2756, 16
  %v2799 = vshrl.u32 %v2781, 16
  %v2800 = vpack.i.b16 %v2799, %v2798
  %v2803 = vpack.i.b16 %v2782, %v2757
  %v2804 = vshrl.u32 %v2757, 16
  %v2805 = vshrl.u32 %v2782, 16
  %v2806 = vpack.i.b16 %v2805, %v2804
  %v2807 = vpack.c.bf16 %v2450, %v2447
  %v2808 = vpack.c.bf16 %v2458, %v2455
  %2811 = vrot.lane.b32.xlu0 %v2807, 120
  %v2812 = vpop.permute.xlu0 %2811
  %2813 = vrot.lane.b32.xlu0 %v2808, 120
  %v2814 = vpop.permute.xlu0 %2813
  %2815 = vrot.lane.b32.xlu0 %v2807, 112
  %v2816 = vpop.permute.xlu0 %2815
  %2817 = vrot.lane.b32.xlu0 %v2808, 112
  %v2818 = vpop.permute.xlu0 %2817
  %2819 = vrot.lane.b32.xlu0 %v2807, 104
  %v2820 = vpop.permute.xlu0 %2819
  %2821 = vrot.lane.b32.xlu0 %v2808, 104
  %v2822 = vpop.permute.xlu0 %2821
  %v2825 = vpack.i.b16 %v2812, %v2807
  %v2827 = vshrl.u32 %v2807, 16
  %v2828 = vshrl.u32 %v2812, 16
  %v2829 = vpack.i.b16 %v2828, %v2827
  %v2833 = vpack.i.b16 %v2820, %v2816
  %v2835 = vshrl.u32 %v2816, 16
  %v2836 = vshrl.u32 %v2820, 16
  %v2837 = vpack.i.b16 %v2836, %v2835
  %v2841 = vpack.i.b16 %v2814, %v2808
  %v2843 = vshrl.u32 %v2808, 16
  %v2844 = vshrl.u32 %v2814, 16
  %v2845 = vpack.i.b16 %v2844, %v2843
  %v2849 = vpack.i.b16 %v2822, %v2818
  %v2851 = vshrl.u32 %v2818, 16
  %v2852 = vshrl.u32 %v2822, 16
  %v2853 = vpack.i.b16 %v2852, %v2851
  %v2855 = vcombine.high %v2825, %v251
  %v2857 = vunpack.c.l.s4 1983009808
  %v2858 = vunpack.c.0.s8 %v2857
  %v2859 = vlaneseq
  %v2860 = vshrl.u32 %v2859, 7
  %v2861 = vsub.s32 %v2858, %v2860
  %v2862 = vrot.slane %v2825, %v2861
  %v2864 = vunpack.c.l.s4 1983009808
  %v2865 = vunpack.c.0.s8 %v2864
  %v2866 = vlaneseq
  %v2867 = vshrl.u32 %v2866, 7
  %v2868 = vsub.s32 %v2865, %v2867
  %v2869 = vrot.slane %v2855, %v2868
  %v2870 = vcombine.high %v2833, %v251
  %v2872 = vunpack.c.l.s4 1983009808
  %v2873 = vunpack.c.0.s8 %v2872
  %v2874 = vlaneseq
  %v2875 = vshrl.u32 %v2874, 7
  %v2876 = vsub.s32 %v2873, %v2875
  %v2877 = vrot.slane %v2833, %v2876
  %v2879 = vunpack.c.l.s4 1983009808
  %v2880 = vunpack.c.0.s8 %v2879
  %v2881 = vlaneseq
  %v2882 = vshrl.u32 %v2881, 7
  %v2883 = vsub.s32 %v2880, %v2882
  %v2884 = vrot.slane %v2870, %v2883
  %v2885 = vcombine.low %v2862, %v2877
  %v2886 = vcombine.high %v2862, %v2877
  %v2888 = vunpack.c.l.s4 1934713408
  %v2889 = vunpack.c.0.s8 %v2888
  %v2890 = vlaneseq
  %v2891 = vshrl.u32 %v2890, 7
  %v2892 = vsub.s32 %v2889, %v2891
  %v2893 = vrot.slane %v2885, %v2892
  %v2895 = vunpack.c.l.s4 1934713408
  %v2896 = vunpack.c.0.s8 %v2895
  %v2897 = vlaneseq
  %v2898 = vshrl.u32 %v2897, 7
  %v2899 = vsub.s32 %v2896, %v2898
  %v2900 = vrot.slane %v2886, %v2899
  %v2901 = vcombine.low %v2869, %v2884
  %v2902 = vcombine.high %v2869, %v2884
  %v2904 = vunpack.c.l.s4 1934713408
  %v2905 = vunpack.c.0.s8 %v2904
  %v2906 = vlaneseq
  %v2907 = vshrl.u32 %v2906, 7
  %v2908 = vsub.s32 %v2905, %v2907
  %v2909 = vrot.slane %v2901, %v2908
  %v2911 = vunpack.c.l.s4 1934713408
  %v2912 = vunpack.c.0.s8 %v2911
  %v2913 = vlaneseq
  %v2914 = vshrl.u32 %v2913, 7
  %v2915 = vsub.s32 %v2912, %v2914
  %v2916 = vrot.slane %v2902, %v2915
  %v2917 = vcombine.high %v2893, 0
  %v2918 = vcombine.high %v2900, 0
  %v2919 = vcombine.high %v2909, 0
  %v2920 = vcombine.high %v2916, 0
  %v2921 = vcombine.high %v2829, %v254
  %v2923 = vunpack.c.l.s4 1983009808
  %v2924 = vunpack.c.0.s8 %v2923
  %v2925 = vlaneseq
  %v2926 = vshrl.u32 %v2925, 7
  %v2927 = vsub.s32 %v2924, %v2926
  %v2928 = vrot.slane %v2829, %v2927
  %v2930 = vunpack.c.l.s4 1983009808
  %v2931 = vunpack.c.0.s8 %v2930
  %v2932 = vlaneseq
  %v2933 = vshrl.u32 %v2932, 7
  %v2934 = vsub.s32 %v2931, %v2933
  %v2935 = vrot.slane %v2921, %v2934
  %v2936 = vcombine.high %v2837, %v254
  %v2938 = vunpack.c.l.s4 1983009808
  %v2939 = vunpack.c.0.s8 %v2938
  %v2940 = vlaneseq
  %v2941 = vshrl.u32 %v2940, 7
  %v2942 = vsub.s32 %v2939, %v2941
  %v2943 = vrot.slane %v2837, %v2942
  %v2945 = vunpack.c.l.s4 1983009808
  %v2946 = vunpack.c.0.s8 %v2945
  %v2947 = vlaneseq
  %v2948 = vshrl.u32 %v2947, 7
  %v2949 = vsub.s32 %v2946, %v2948
  %v2950 = vrot.slane %v2936, %v2949
  %v2951 = vcombine.low %v2928, %v2943
  %v2952 = vcombine.high %v2928, %v2943
  %v2954 = vunpack.c.l.s4 1934713408
  %v2955 = vunpack.c.0.s8 %v2954
  %v2956 = vlaneseq
  %v2957 = vshrl.u32 %v2956, 7
  %v2958 = vsub.s32 %v2955, %v2957
  %v2959 = vrot.slane %v2951, %v2958
  %v2961 = vunpack.c.l.s4 1934713408
  %v2962 = vunpack.c.0.s8 %v2961
  %v2963 = vlaneseq
  %v2964 = vshrl.u32 %v2963, 7
  %v2965 = vsub.s32 %v2962, %v2964
  %v2966 = vrot.slane %v2952, %v2965
  %v2967 = vcombine.low %v2935, %v2950
  %v2968 = vcombine.high %v2935, %v2950
  %v2970 = vunpack.c.l.s4 1934713408
  %v2971 = vunpack.c.0.s8 %v2970
  %v2972 = vlaneseq
  %v2973 = vshrl.u32 %v2972, 7
  %v2974 = vsub.s32 %v2971, %v2973
  %v2975 = vrot.slane %v2967, %v2974
  %v2977 = vunpack.c.l.s4 1934713408
  %v2978 = vunpack.c.0.s8 %v2977
  %v2979 = vlaneseq
  %v2980 = vshrl.u32 %v2979, 7
  %v2981 = vsub.s32 %v2978, %v2980
  %v2982 = vrot.slane %v2968, %v2981
  %v2983 = vcombine.high %v2959, 0
  %v2984 = vcombine.high %v2966, 0
  %v2985 = vcombine.high %v2975, 0
  %v2986 = vcombine.high %v2982, 0
  %v2987 = vcombine.high %v2841, %v251
  %v2989 = vunpack.c.l.s4 1983009808
  %v2990 = vunpack.c.0.s8 %v2989
  %v2991 = vlaneseq
  %v2992 = vshrl.u32 %v2991, 7
  %v2993 = vsub.s32 %v2990, %v2992
  %v2994 = vrot.slane %v2841, %v2993
  %v2996 = vunpack.c.l.s4 1983009808
  %v2997 = vunpack.c.0.s8 %v2996
  %v2998 = vlaneseq
  %v2999 = vshrl.u32 %v2998, 7
  %v3000 = vsub.s32 %v2997, %v2999
  %v3001 = vrot.slane %v2987, %v3000
  %v3002 = vcombine.high %v2849, %v251
  %v3004 = vunpack.c.l.s4 1983009808
  %v3005 = vunpack.c.0.s8 %v3004
  %v3006 = vlaneseq
  %v3007 = vshrl.u32 %v3006, 7
  %v3008 = vsub.s32 %v3005, %v3007
  %v3009 = vrot.slane %v2849, %v3008
  %v3011 = vunpack.c.l.s4 1983009808
  %v3012 = vunpack.c.0.s8 %v3011
  %v3013 = vlaneseq
  %v3014 = vshrl.u32 %v3013, 7
  %v3015 = vsub.s32 %v3012, %v3014
  %v3016 = vrot.slane %v3002, %v3015
  %v3017 = vcombine.low %v2994, %v3009
  %v3018 = vcombine.high %v2994, %v3009
  %v3020 = vunpack.c.l.s4 1934713408
  %v3021 = vunpack.c.0.s8 %v3020
  %v3022 = vlaneseq
  %v3023 = vshrl.u32 %v3022, 7
  %v3024 = vsub.s32 %v3021, %v3023
  %v3025 = vrot.slane %v3017, %v3024
  %v3027 = vunpack.c.l.s4 1934713408
  %v3028 = vunpack.c.0.s8 %v3027
  %v3029 = vlaneseq
  %v3030 = vshrl.u32 %v3029, 7
  %v3031 = vsub.s32 %v3028, %v3030
  %v3032 = vrot.slane %v3018, %v3031
  %v3033 = vcombine.low %v3001, %v3016
  %v3034 = vcombine.high %v3001, %v3016
  %v3036 = vunpack.c.l.s4 1934713408
  %v3037 = vunpack.c.0.s8 %v3036
  %v3038 = vlaneseq
  %v3039 = vshrl.u32 %v3038, 7
  %v3040 = vsub.s32 %v3037, %v3039
  %v3041 = vrot.slane %v3033, %v3040
  %v3043 = vunpack.c.l.s4 1934713408
  %v3044 = vunpack.c.0.s8 %v3043
  %v3045 = vlaneseq
  %v3046 = vshrl.u32 %v3045, 7
  %v3047 = vsub.s32 %v3044, %v3046
  %v3048 = vrot.slane %v3034, %v3047
  %v3049 = vcombine.high %v3025, 0
  %v3050 = vcombine.high %v3032, 0
  %v3051 = vcombine.high %v3041, 0
  %v3052 = vcombine.high %v3048, 0
  %v3053 = vcombine.high %v2845, %v254
  %v3055 = vunpack.c.l.s4 1983009808
  %v3056 = vunpack.c.0.s8 %v3055
  %v3057 = vlaneseq
  %v3058 = vshrl.u32 %v3057, 7
  %v3059 = vsub.s32 %v3056, %v3058
  %v3060 = vrot.slane %v2845, %v3059
  %v3062 = vunpack.c.l.s4 1983009808
  %v3063 = vunpack.c.0.s8 %v3062
  %v3064 = vlaneseq
  %v3065 = vshrl.u32 %v3064, 7
  %v3066 = vsub.s32 %v3063, %v3065
  %v3067 = vrot.slane %v3053, %v3066
  %v3068 = vcombine.high %v2853, %v254
  %v3070 = vunpack.c.l.s4 1983009808
  %v3071 = vunpack.c.0.s8 %v3070
  %v3072 = vlaneseq
  %v3073 = vshrl.u32 %v3072, 7
  %v3074 = vsub.s32 %v3071, %v3073
  %v3075 = vrot.slane %v2853, %v3074
  %v3077 = vunpack.c.l.s4 1983009808
  %v3078 = vunpack.c.0.s8 %v3077
  %v3079 = vlaneseq
  %v3080 = vshrl.u32 %v3079, 7
  %v3081 = vsub.s32 %v3078, %v3080
  %v3082 = vrot.slane %v3068, %v3081
  %v3083 = vcombine.low %v3060, %v3075
  %v3084 = vcombine.high %v3060, %v3075
  %v3086 = vunpack.c.l.s4 1934713408
  %v3087 = vunpack.c.0.s8 %v3086
  %v3088 = vlaneseq
  %v3089 = vshrl.u32 %v3088, 7
  %v3090 = vsub.s32 %v3087, %v3089
  %v3091 = vrot.slane %v3083, %v3090
  %v3093 = vunpack.c.l.s4 1934713408
  %v3094 = vunpack.c.0.s8 %v3093
  %v3095 = vlaneseq
  %v3096 = vshrl.u32 %v3095, 7
  %v3097 = vsub.s32 %v3094, %v3096
  %v3098 = vrot.slane %v3084, %v3097
  %v3099 = vcombine.low %v3067, %v3082
  %v3100 = vcombine.high %v3067, %v3082
  %v3102 = vunpack.c.l.s4 1934713408
  %v3103 = vunpack.c.0.s8 %v3102
  %v3104 = vlaneseq
  %v3105 = vshrl.u32 %v3104, 7
  %v3106 = vsub.s32 %v3103, %v3105
  %v3107 = vrot.slane %v3099, %v3106
  %v3109 = vunpack.c.l.s4 1934713408
  %v3110 = vunpack.c.0.s8 %v3109
  %v3111 = vlaneseq
  %v3112 = vshrl.u32 %v3111, 7
  %v3113 = vsub.s32 %v3110, %v3112
  %v3114 = vrot.slane %v3100, %v3113
  %v3115 = vcombine.high %v3091, 0
  %v3116 = vcombine.high %v3098, 0
  %v3117 = vcombine.high %v3107, 0
  %v3118 = vcombine.high %v3114, 0
  %v3119 = vcombine.low %v2893, %v2900
  %v3121 = vunpack.c.l.s4 1983009808
  %v3122 = vunpack.c.0.s8 %v3121
  %v3123 = vlaneseq
  %v3124 = vshrl.u32 %v3123, 7
  %v3125 = vsub.s32 %v3122, %v3124
  %v3126 = vrot.slane %v3119, %v3125
  %v3127 = vcombine.low %v2917, %v2918
  %v3129 = vunpack.c.l.s4 1983009808
  %v3130 = vunpack.c.0.s8 %v3129
  %v3131 = vlaneseq
  %v3132 = vshrl.u32 %v3131, 7
  %v3133 = vsub.s32 %v3130, %v3132
  %v3134 = vrot.slane %v3127, %v3133
  %v3135 = vcombine.low %v2909, %v2916
  %v3137 = vunpack.c.l.s4 1983009808
  %v3138 = vunpack.c.0.s8 %v3137
  %v3139 = vlaneseq
  %v3140 = vshrl.u32 %v3139, 7
  %v3141 = vsub.s32 %v3138, %v3140
  %v3142 = vrot.slane %v3135, %v3141
  %v3143 = vcombine.low %v2919, %v2920
  %v3145 = vunpack.c.l.s4 1983009808
  %v3146 = vunpack.c.0.s8 %v3145
  %v3147 = vlaneseq
  %v3148 = vshrl.u32 %v3147, 7
  %v3149 = vsub.s32 %v3146, %v3148
  %v3150 = vrot.slane %v3143, %v3149
  %v3151 = vcombine.low %v3126, %v3134
  %v3153 = vunpack.c.l.s4 1934713408
  %v3154 = vunpack.c.0.s8 %v3153
  %v3155 = vlaneseq
  %v3156 = vshrl.u32 %v3155, 7
  %v3157 = vsub.s32 %v3154, %v3156
  %v3158 = vrot.slane %v3151, %v3157
  %v3159 = vcombine.low %v3142, %v3150
  %v3161 = vunpack.c.l.s4 1934713408
  %v3162 = vunpack.c.0.s8 %v3161
  %v3163 = vlaneseq
  %v3164 = vshrl.u32 %v3163, 7
  %v3165 = vsub.s32 %v3162, %v3164
  %v3166 = vrot.slane %v3159, %v3165
  %v3167 = vcombine.low %v3158, %v3166
  %v3168 = vcombine.high %v3158, %v3166
  %v3169 = vcombine.low %v2959, %v2966
  %v3171 = vunpack.c.l.s4 1983009808
  %v3172 = vunpack.c.0.s8 %v3171
  %v3173 = vlaneseq
  %v3174 = vshrl.u32 %v3173, 7
  %v3175 = vsub.s32 %v3172, %v3174
  %v3176 = vrot.slane %v3169, %v3175
  %v3177 = vcombine.low %v2983, %v2984
  %v3179 = vunpack.c.l.s4 1983009808
  %v3180 = vunpack.c.0.s8 %v3179
  %v3181 = vlaneseq
  %v3182 = vshrl.u32 %v3181, 7
  %v3183 = vsub.s32 %v3180, %v3182
  %v3184 = vrot.slane %v3177, %v3183
  %v3185 = vcombine.low %v2975, %v2982
  %v3187 = vunpack.c.l.s4 1983009808
  %v3188 = vunpack.c.0.s8 %v3187
  %v3189 = vlaneseq
  %v3190 = vshrl.u32 %v3189, 7
  %v3191 = vsub.s32 %v3188, %v3190
  %v3192 = vrot.slane %v3185, %v3191
  %v3193 = vcombine.low %v2985, %v2986
  %v3195 = vunpack.c.l.s4 1983009808
  %v3196 = vunpack.c.0.s8 %v3195
  %v3197 = vlaneseq
  %v3198 = vshrl.u32 %v3197, 7
  %v3199 = vsub.s32 %v3196, %v3198
  %v3200 = vrot.slane %v3193, %v3199
  %v3201 = vcombine.low %v3176, %v3184
  %v3203 = vunpack.c.l.s4 1934713408
  %v3204 = vunpack.c.0.s8 %v3203
  %v3205 = vlaneseq
  %v3206 = vshrl.u32 %v3205, 7
  %v3207 = vsub.s32 %v3204, %v3206
  %v3208 = vrot.slane %v3201, %v3207
  %v3209 = vcombine.low %v3192, %v3200
  %v3211 = vunpack.c.l.s4 1934713408
  %v3212 = vunpack.c.0.s8 %v3211
  %v3213 = vlaneseq
  %v3214 = vshrl.u32 %v3213, 7
  %v3215 = vsub.s32 %v3212, %v3214
  %v3216 = vrot.slane %v3209, %v3215
  %v3217 = vcombine.low %v3208, %v3216
  %v3218 = vcombine.high %v3208, %v3216
  %v3219 = vcombine.low %v3025, %v3032
  %v3221 = vunpack.c.l.s4 1983009808
  %v3222 = vunpack.c.0.s8 %v3221
  %v3223 = vlaneseq
  %v3224 = vshrl.u32 %v3223, 7
  %v3225 = vsub.s32 %v3222, %v3224
  %v3226 = vrot.slane %v3219, %v3225
  %v3227 = vcombine.low %v3049, %v3050
  %v3229 = vunpack.c.l.s4 1983009808
  %v3230 = vunpack.c.0.s8 %v3229
  %v3231 = vlaneseq
  %v3232 = vshrl.u32 %v3231, 7
  %v3233 = vsub.s32 %v3230, %v3232
  %v3234 = vrot.slane %v3227, %v3233
  %v3235 = vcombine.low %v3041, %v3048
  %v3237 = vunpack.c.l.s4 1983009808
  %v3238 = vunpack.c.0.s8 %v3237
  %v3239 = vlaneseq
  %v3240 = vshrl.u32 %v3239, 7
  %v3241 = vsub.s32 %v3238, %v3240
  %v3242 = vrot.slane %v3235, %v3241
  %v3243 = vcombine.low %v3051, %v3052
  %v3245 = vunpack.c.l.s4 1983009808
  %v3246 = vunpack.c.0.s8 %v3245
  %v3247 = vlaneseq
  %v3248 = vshrl.u32 %v3247, 7
  %v3249 = vsub.s32 %v3246, %v3248
  %v3250 = vrot.slane %v3243, %v3249
  %v3251 = vcombine.low %v3226, %v3234
  %v3253 = vunpack.c.l.s4 1934713408
  %v3254 = vunpack.c.0.s8 %v3253
  %v3255 = vlaneseq
  %v3256 = vshrl.u32 %v3255, 7
  %v3257 = vsub.s32 %v3254, %v3256
  %v3258 = vrot.slane %v3251, %v3257
  %v3259 = vcombine.low %v3242, %v3250
  %v3261 = vunpack.c.l.s4 1934713408
  %v3262 = vunpack.c.0.s8 %v3261
  %v3263 = vlaneseq
  %v3264 = vshrl.u32 %v3263, 7
  %v3265 = vsub.s32 %v3262, %v3264
  %v3266 = vrot.slane %v3259, %v3265
  %v3267 = vcombine.low %v3258, %v3266
  %v3268 = vcombine.high %v3258, %v3266
  %v3269 = vcombine.low %v3091, %v3098
  %v3271 = vunpack.c.l.s4 1983009808
  %v3272 = vunpack.c.0.s8 %v3271
  %v3273 = vlaneseq
  %v3274 = vshrl.u32 %v3273, 7
  %v3275 = vsub.s32 %v3272, %v3274
  %v3276 = vrot.slane %v3269, %v3275
  %v3277 = vcombine.low %v3115, %v3116
  %v3279 = vunpack.c.l.s4 1983009808
  %v3280 = vunpack.c.0.s8 %v3279
  %v3281 = vlaneseq
  %v3282 = vshrl.u32 %v3281, 7
  %v3283 = vsub.s32 %v3280, %v3282
  %v3284 = vrot.slane %v3277, %v3283
  %v3285 = vcombine.low %v3107, %v3114
  %v3287 = vunpack.c.l.s4 1983009808
  %v3288 = vunpack.c.0.s8 %v3287
  %v3289 = vlaneseq
  %v3290 = vshrl.u32 %v3289, 7
  %v3291 = vsub.s32 %v3288, %v3290
  %v3292 = vrot.slane %v3285, %v3291
  %v3293 = vcombine.low %v3117, %v3118
  %v3295 = vunpack.c.l.s4 1983009808
  %v3296 = vunpack.c.0.s8 %v3295
  %v3297 = vlaneseq
  %v3298 = vshrl.u32 %v3297, 7
  %v3299 = vsub.s32 %v3296, %v3298
  %v3300 = vrot.slane %v3293, %v3299
  %v3301 = vcombine.low %v3276, %v3284
  %v3303 = vunpack.c.l.s4 1934713408
  %v3304 = vunpack.c.0.s8 %v3303
  %v3305 = vlaneseq
  %v3306 = vshrl.u32 %v3305, 7
  %v3307 = vsub.s32 %v3304, %v3306
  %v3308 = vrot.slane %v3301, %v3307
  %v3309 = vcombine.low %v3292, %v3300
  %v3311 = vunpack.c.l.s4 1934713408
  %v3312 = vunpack.c.0.s8 %v3311
  %v3313 = vlaneseq
  %v3314 = vshrl.u32 %v3313, 7
  %v3315 = vsub.s32 %v3312, %v3314
  %v3316 = vrot.slane %v3309, %v3315
  %v3317 = vcombine.low %v3308, %v3316
  %v3318 = vcombine.high %v3308, %v3316
  %v3321 = vpack.i.b16 %v3217, %v3167
  %v3322 = vshrl.u32 %v3167, 16
  %v3323 = vshrl.u32 %v3217, 16
  %v3324 = vpack.i.b16 %v3323, %v3322
  %v3327 = vpack.i.b16 %v3218, %v3168
  %v3328 = vshrl.u32 %v3168, 16
  %v3329 = vshrl.u32 %v3218, 16
  %v3330 = vpack.i.b16 %v3329, %v3328
  %v3333 = vpack.i.b16 %v3317, %v3267
  %v3334 = vshrl.u32 %v3267, 16
  %v3335 = vshrl.u32 %v3317, 16
  %v3336 = vpack.i.b16 %v3335, %v3334
  %v3339 = vpack.i.b16 %v3318, %v3268
  %v3340 = vshrl.u32 %v3268, 16
  %v3341 = vshrl.u32 %v3318, 16
  %v3342 = vpack.i.b16 %v3341, %v3340
  %v3343 = vpack.c.bf16 %v2516, %v2513
  %v3344 = vpack.c.bf16 %v2524, %v2521
  %3347 = vrot.lane.b32.xlu0 %v3343, 120
  %v3348 = vpop.permute.xlu0 %3347
  %3349 = vrot.lane.b32.xlu0 %v3344, 120
  %v3350 = vpop.permute.xlu0 %3349
  %3351 = vrot.lane.b32.xlu0 %v3343, 112
  %v3352 = vpop.permute.xlu0 %3351
  %3353 = vrot.lane.b32.xlu0 %v3344, 112
  %v3354 = vpop.permute.xlu0 %3353
  %3355 = vrot.lane.b32.xlu0 %v3343, 104
  %v3356 = vpop.permute.xlu0 %3355
  %3357 = vrot.lane.b32.xlu0 %v3344, 104
  %v3358 = vpop.permute.xlu0 %3357
  %v3361 = vpack.i.b16 %v3348, %v3343
  %v3363 = vshrl.u32 %v3343, 16
  %v3364 = vshrl.u32 %v3348, 16
  %v3365 = vpack.i.b16 %v3364, %v3363
  %v3369 = vpack.i.b16 %v3356, %v3352
  %v3371 = vshrl.u32 %v3352, 16
  %v3372 = vshrl.u32 %v3356, 16
  %v3373 = vpack.i.b16 %v3372, %v3371
  %v3377 = vpack.i.b16 %v3350, %v3344
  %v3379 = vshrl.u32 %v3344, 16
  %v3380 = vshrl.u32 %v3350, 16
  %v3381 = vpack.i.b16 %v3380, %v3379
  %v3385 = vpack.i.b16 %v3358, %v3354
  %v3387 = vshrl.u32 %v3354, 16
  %v3388 = vshrl.u32 %v3358, 16
  %v3389 = vpack.i.b16 %v3388, %v3387
  %v3391 = vcombine.high %v3361, %v251
  %v3393 = vunpack.c.l.s4 1983009808
  %v3394 = vunpack.c.0.s8 %v3393
  %v3395 = vlaneseq
  %v3396 = vshrl.u32 %v3395, 7
  %v3397 = vsub.s32 %v3394, %v3396
  %v3398 = vrot.slane %v3361, %v3397
  %v3400 = vunpack.c.l.s4 1983009808
  %v3401 = vunpack.c.0.s8 %v3400
  %v3402 = vlaneseq
  %v3403 = vshrl.u32 %v3402, 7
  %v3404 = vsub.s32 %v3401, %v3403
  %v3405 = vrot.slane %v3391, %v3404
  %v3406 = vcombine.high %v3369, %v251
  %v3408 = vunpack.c.l.s4 1983009808
  %v3409 = vunpack.c.0.s8 %v3408
  %v3410 = vlaneseq
  %v3411 = vshrl.u32 %v3410, 7
  %v3412 = vsub.s32 %v3409, %v3411
  %v3413 = vrot.slane %v3369, %v3412
  %v3415 = vunpack.c.l.s4 1983009808
  %v3416 = vunpack.c.0.s8 %v3415
  %v3417 = vlaneseq
  %v3418 = vshrl.u32 %v3417, 7
  %v3419 = vsub.s32 %v3416, %v3418
  %v3420 = vrot.slane %v3406, %v3419
  %v3421 = vcombine.low %v3398, %v3413
  %v3422 = vcombine.high %v3398, %v3413
  %v3424 = vunpack.c.l.s4 1934713408
  %v3425 = vunpack.c.0.s8 %v3424
  %v3426 = vlaneseq
  %v3427 = vshrl.u32 %v3426, 7
  %v3428 = vsub.s32 %v3425, %v3427
  %v3429 = vrot.slane %v3421, %v3428
  %v3431 = vunpack.c.l.s4 1934713408
  %v3432 = vunpack.c.0.s8 %v3431
  %v3433 = vlaneseq
  %v3434 = vshrl.u32 %v3433, 7
  %v3435 = vsub.s32 %v3432, %v3434
  %v3436 = vrot.slane %v3422, %v3435
  %v3437 = vcombine.low %v3405, %v3420
  %v3438 = vcombine.high %v3405, %v3420
  %v3440 = vunpack.c.l.s4 1934713408
  %v3441 = vunpack.c.0.s8 %v3440
  %v3442 = vlaneseq
  %v3443 = vshrl.u32 %v3442, 7
  %v3444 = vsub.s32 %v3441, %v3443
  %v3445 = vrot.slane %v3437, %v3444
  %v3447 = vunpack.c.l.s4 1934713408
  %v3448 = vunpack.c.0.s8 %v3447
  %v3449 = vlaneseq
  %v3450 = vshrl.u32 %v3449, 7
  %v3451 = vsub.s32 %v3448, %v3450
  %v3452 = vrot.slane %v3438, %v3451
  %v3453 = vcombine.high %v3429, 0
  %v3454 = vcombine.high %v3436, 0
  %v3455 = vcombine.high %v3445, 0
  %v3456 = vcombine.high %v3452, 0
  %v3457 = vcombine.high %v3365, %v254
  %v3459 = vunpack.c.l.s4 1983009808
  %v3460 = vunpack.c.0.s8 %v3459
  %v3461 = vlaneseq
  %v3462 = vshrl.u32 %v3461, 7
  %v3463 = vsub.s32 %v3460, %v3462
  %v3464 = vrot.slane %v3365, %v3463
  %v3466 = vunpack.c.l.s4 1983009808
  %v3467 = vunpack.c.0.s8 %v3466
  %v3468 = vlaneseq
  %v3469 = vshrl.u32 %v3468, 7
  %v3470 = vsub.s32 %v3467, %v3469
  %v3471 = vrot.slane %v3457, %v3470
  %v3472 = vcombine.high %v3373, %v254
  %v3474 = vunpack.c.l.s4 1983009808
  %v3475 = vunpack.c.0.s8 %v3474
  %v3476 = vlaneseq
  %v3477 = vshrl.u32 %v3476, 7
  %v3478 = vsub.s32 %v3475, %v3477
  %v3479 = vrot.slane %v3373, %v3478
  %v3481 = vunpack.c.l.s4 1983009808
  %v3482 = vunpack.c.0.s8 %v3481
  %v3483 = vlaneseq
  %v3484 = vshrl.u32 %v3483, 7
  %v3485 = vsub.s32 %v3482, %v3484
  %v3486 = vrot.slane %v3472, %v3485
  %v3487 = vcombine.low %v3464, %v3479
  %v3488 = vcombine.high %v3464, %v3479
  %v3490 = vunpack.c.l.s4 1934713408
  %v3491 = vunpack.c.0.s8 %v3490
  %v3492 = vlaneseq
  %v3493 = vshrl.u32 %v3492, 7
  %v3494 = vsub.s32 %v3491, %v3493
  %v3495 = vrot.slane %v3487, %v3494
  %v3497 = vunpack.c.l.s4 1934713408
  %v3498 = vunpack.c.0.s8 %v3497
  %v3499 = vlaneseq
  %v3500 = vshrl.u32 %v3499, 7
  %v3501 = vsub.s32 %v3498, %v3500
  %v3502 = vrot.slane %v3488, %v3501
  %v3503 = vcombine.low %v3471, %v3486
  %v3504 = vcombine.high %v3471, %v3486
  %v3506 = vunpack.c.l.s4 1934713408
  %v3507 = vunpack.c.0.s8 %v3506
  %v3508 = vlaneseq
  %v3509 = vshrl.u32 %v3508, 7
  %v3510 = vsub.s32 %v3507, %v3509
  %v3511 = vrot.slane %v3503, %v3510
  %v3513 = vunpack.c.l.s4 1934713408
  %v3514 = vunpack.c.0.s8 %v3513
  %v3515 = vlaneseq
  %v3516 = vshrl.u32 %v3515, 7
  %v3517 = vsub.s32 %v3514, %v3516
  %v3518 = vrot.slane %v3504, %v3517
  %v3519 = vcombine.high %v3495, 0
  %v3520 = vcombine.high %v3502, 0
  %v3521 = vcombine.high %v3511, 0
  %v3522 = vcombine.high %v3518, 0
  %v3523 = vcombine.high %v3377, %v251
  %v3525 = vunpack.c.l.s4 1983009808
  %v3526 = vunpack.c.0.s8 %v3525
  %v3527 = vlaneseq
  %v3528 = vshrl.u32 %v3527, 7
  %v3529 = vsub.s32 %v3526, %v3528
  %v3530 = vrot.slane %v3377, %v3529
  %v3532 = vunpack.c.l.s4 1983009808
  %v3533 = vunpack.c.0.s8 %v3532
  %v3534 = vlaneseq
  %v3535 = vshrl.u32 %v3534, 7
  %v3536 = vsub.s32 %v3533, %v3535
  %v3537 = vrot.slane %v3523, %v3536
  %v3538 = vcombine.high %v3385, %v251
  %v3540 = vunpack.c.l.s4 1983009808
  %v3541 = vunpack.c.0.s8 %v3540
  %v3542 = vlaneseq
  %v3543 = vshrl.u32 %v3542, 7
  %v3544 = vsub.s32 %v3541, %v3543
  %v3545 = vrot.slane %v3385, %v3544
  %v3547 = vunpack.c.l.s4 1983009808
  %v3548 = vunpack.c.0.s8 %v3547
  %v3549 = vlaneseq
  %v3550 = vshrl.u32 %v3549, 7
  %v3551 = vsub.s32 %v3548, %v3550
  %v3552 = vrot.slane %v3538, %v3551
  %v3553 = vcombine.low %v3530, %v3545
  %v3554 = vcombine.high %v3530, %v3545
  %v3556 = vunpack.c.l.s4 1934713408
  %v3557 = vunpack.c.0.s8 %v3556
  %v3558 = vlaneseq
  %v3559 = vshrl.u32 %v3558, 7
  %v3560 = vsub.s32 %v3557, %v3559
  %v3561 = vrot.slane %v3553, %v3560
  %v3563 = vunpack.c.l.s4 1934713408
  %v3564 = vunpack.c.0.s8 %v3563
  %v3565 = vlaneseq
  %v3566 = vshrl.u32 %v3565, 7
  %v3567 = vsub.s32 %v3564, %v3566
  %v3568 = vrot.slane %v3554, %v3567
  %v3569 = vcombine.low %v3537, %v3552
  %v3570 = vcombine.high %v3537, %v3552
  %v3572 = vunpack.c.l.s4 1934713408
  %v3573 = vunpack.c.0.s8 %v3572
  %v3574 = vlaneseq
  %v3575 = vshrl.u32 %v3574, 7
  %v3576 = vsub.s32 %v3573, %v3575
  %v3577 = vrot.slane %v3569, %v3576
  %v3579 = vunpack.c.l.s4 1934713408
  %v3580 = vunpack.c.0.s8 %v3579
  %v3581 = vlaneseq
  %v3582 = vshrl.u32 %v3581, 7
  %v3583 = vsub.s32 %v3580, %v3582
  %v3584 = vrot.slane %v3570, %v3583
  %v3585 = vcombine.high %v3561, 0
  %v3586 = vcombine.high %v3568, 0
  %v3587 = vcombine.high %v3577, 0
  %v3588 = vcombine.high %v3584, 0
  %v3589 = vcombine.high %v3381, %v254
  %v3591 = vunpack.c.l.s4 1983009808
  %v3592 = vunpack.c.0.s8 %v3591
  %v3593 = vlaneseq
  %v3594 = vshrl.u32 %v3593, 7
  %v3595 = vsub.s32 %v3592, %v3594
  %v3596 = vrot.slane %v3381, %v3595
  %v3598 = vunpack.c.l.s4 1983009808
  %v3599 = vunpack.c.0.s8 %v3598
  %v3600 = vlaneseq
  %v3601 = vshrl.u32 %v3600, 7
  %v3602 = vsub.s32 %v3599, %v3601
  %v3603 = vrot.slane %v3589, %v3602
  %v3604 = vcombine.high %v3389, %v254
  %v3606 = vunpack.c.l.s4 1983009808
  %v3607 = vunpack.c.0.s8 %v3606
  %v3608 = vlaneseq
  %v3609 = vshrl.u32 %v3608, 7
  %v3610 = vsub.s32 %v3607, %v3609
  %v3611 = vrot.slane %v3389, %v3610
  %v3613 = vunpack.c.l.s4 1983009808
  %v3614 = vunpack.c.0.s8 %v3613
  %v3615 = vlaneseq
  %v3616 = vshrl.u32 %v3615, 7
  %v3617 = vsub.s32 %v3614, %v3616
  %v3618 = vrot.slane %v3604, %v3617
  %v3619 = vcombine.low %v3596, %v3611
  %v3620 = vcombine.high %v3596, %v3611
  %v3622 = vunpack.c.l.s4 1934713408
  %v3623 = vunpack.c.0.s8 %v3622
  %v3624 = vlaneseq
  %v3625 = vshrl.u32 %v3624, 7
  %v3626 = vsub.s32 %v3623, %v3625
  %v3627 = vrot.slane %v3619, %v3626
  %v3629 = vunpack.c.l.s4 1934713408
  %v3630 = vunpack.c.0.s8 %v3629
  %v3631 = vlaneseq
  %v3632 = vshrl.u32 %v3631, 7
  %v3633 = vsub.s32 %v3630, %v3632
  %v3634 = vrot.slane %v3620, %v3633
  %v3635 = vcombine.low %v3603, %v3618
  %v3636 = vcombine.high %v3603, %v3618
  %v3638 = vunpack.c.l.s4 1934713408
  %v3639 = vunpack.c.0.s8 %v3638
  %v3640 = vlaneseq
  %v3641 = vshrl.u32 %v3640, 7
  %v3642 = vsub.s32 %v3639, %v3641
  %v3643 = vrot.slane %v3635, %v3642
  %v3645 = vunpack.c.l.s4 1934713408
  %v3646 = vunpack.c.0.s8 %v3645
  %v3647 = vlaneseq
  %v3648 = vshrl.u32 %v3647, 7
  %v3649 = vsub.s32 %v3646, %v3648
  %v3650 = vrot.slane %v3636, %v3649
  %v3651 = vcombine.high %v3627, 0
  %v3652 = vcombine.high %v3634, 0
  %v3653 = vcombine.high %v3643, 0
  %v3654 = vcombine.high %v3650, 0
  %v3655 = vcombine.low %v3429, %v3436
  %v3657 = vunpack.c.l.s4 1983009808
  %v3658 = vunpack.c.0.s8 %v3657
  %v3659 = vlaneseq
  %v3660 = vshrl.u32 %v3659, 7
  %v3661 = vsub.s32 %v3658, %v3660
  %v3662 = vrot.slane %v3655, %v3661
  %v3663 = vcombine.low %v3453, %v3454
  %v3665 = vunpack.c.l.s4 1983009808
  %v3666 = vunpack.c.0.s8 %v3665
  %v3667 = vlaneseq
  %v3668 = vshrl.u32 %v3667, 7
  %v3669 = vsub.s32 %v3666, %v3668
  %v3670 = vrot.slane %v3663, %v3669
  %v3671 = vcombine.low %v3445, %v3452
  %v3673 = vunpack.c.l.s4 1983009808
  %v3674 = vunpack.c.0.s8 %v3673
  %v3675 = vlaneseq
  %v3676 = vshrl.u32 %v3675, 7
  %v3677 = vsub.s32 %v3674, %v3676
  %v3678 = vrot.slane %v3671, %v3677
  %v3679 = vcombine.low %v3455, %v3456
  %v3681 = vunpack.c.l.s4 1983009808
  %v3682 = vunpack.c.0.s8 %v3681
  %v3683 = vlaneseq
  %v3684 = vshrl.u32 %v3683, 7
  %v3685 = vsub.s32 %v3682, %v3684
  %v3686 = vrot.slane %v3679, %v3685
  %v3687 = vcombine.low %v3662, %v3670
  %v3689 = vunpack.c.l.s4 1934713408
  %v3690 = vunpack.c.0.s8 %v3689
  %v3691 = vlaneseq
  %v3692 = vshrl.u32 %v3691, 7
  %v3693 = vsub.s32 %v3690, %v3692
  %v3694 = vrot.slane %v3687, %v3693
  %v3695 = vcombine.low %v3678, %v3686
  %v3697 = vunpack.c.l.s4 1934713408
  %v3698 = vunpack.c.0.s8 %v3697
  %v3699 = vlaneseq
  %v3700 = vshrl.u32 %v3699, 7
  %v3701 = vsub.s32 %v3698, %v3700
  %v3702 = vrot.slane %v3695, %v3701
  %v3703 = vcombine.low %v3694, %v3702
  %v3704 = vcombine.high %v3694, %v3702
  %v3705 = vcombine.low %v3495, %v3502
  %v3707 = vunpack.c.l.s4 1983009808
  %v3708 = vunpack.c.0.s8 %v3707
  %v3709 = vlaneseq
  %v3710 = vshrl.u32 %v3709, 7
  %v3711 = vsub.s32 %v3708, %v3710
  %v3712 = vrot.slane %v3705, %v3711
  %v3713 = vcombine.low %v3519, %v3520
  %v3715 = vunpack.c.l.s4 1983009808
  %v3716 = vunpack.c.0.s8 %v3715
  %v3717 = vlaneseq
  %v3718 = vshrl.u32 %v3717, 7
  %v3719 = vsub.s32 %v3716, %v3718
  %v3720 = vrot.slane %v3713, %v3719
  %v3721 = vcombine.low %v3511, %v3518
  %v3723 = vunpack.c.l.s4 1983009808
  %v3724 = vunpack.c.0.s8 %v3723
  %v3725 = vlaneseq
  %v3726 = vshrl.u32 %v3725, 7
  %v3727 = vsub.s32 %v3724, %v3726
  %v3728 = vrot.slane %v3721, %v3727
  %v3729 = vcombine.low %v3521, %v3522
  %v3731 = vunpack.c.l.s4 1983009808
  %v3732 = vunpack.c.0.s8 %v3731
  %v3733 = vlaneseq
  %v3734 = vshrl.u32 %v3733, 7
  %v3735 = vsub.s32 %v3732, %v3734
  %v3736 = vrot.slane %v3729, %v3735
  %v3737 = vcombine.low %v3712, %v3720
  %v3739 = vunpack.c.l.s4 1934713408
  %v3740 = vunpack.c.0.s8 %v3739
  %v3741 = vlaneseq
  %v3742 = vshrl.u32 %v3741, 7
  %v3743 = vsub.s32 %v3740, %v3742
  %v3744 = vrot.slane %v3737, %v3743
  %v3745 = vcombine.low %v3728, %v3736
  %v3747 = vunpack.c.l.s4 1934713408
  %v3748 = vunpack.c.0.s8 %v3747
  %v3749 = vlaneseq
  %v3750 = vshrl.u32 %v3749, 7
  %v3751 = vsub.s32 %v3748, %v3750
  %v3752 = vrot.slane %v3745, %v3751
  %v3753 = vcombine.low %v3744, %v3752
  %v3754 = vcombine.high %v3744, %v3752
  %v3755 = vcombine.low %v3561, %v3568
  %v3757 = vunpack.c.l.s4 1983009808
  %v3758 = vunpack.c.0.s8 %v3757
  %v3759 = vlaneseq
  %v3760 = vshrl.u32 %v3759, 7
  %v3761 = vsub.s32 %v3758, %v3760
  %v3762 = vrot.slane %v3755, %v3761
  %v3763 = vcombine.low %v3585, %v3586
  %v3765 = vunpack.c.l.s4 1983009808
  %v3766 = vunpack.c.0.s8 %v3765
  %v3767 = vlaneseq
  %v3768 = vshrl.u32 %v3767, 7
  %v3769 = vsub.s32 %v3766, %v3768
  %v3770 = vrot.slane %v3763, %v3769
  %v3771 = vcombine.low %v3577, %v3584
  %v3773 = vunpack.c.l.s4 1983009808
  %v3774 = vunpack.c.0.s8 %v3773
  %v3775 = vlaneseq
  %v3776 = vshrl.u32 %v3775, 7
  %v3777 = vsub.s32 %v3774, %v3776
  %v3778 = vrot.slane %v3771, %v3777
  %v3779 = vcombine.low %v3587, %v3588
  %v3781 = vunpack.c.l.s4 1983009808
  %v3782 = vunpack.c.0.s8 %v3781
  %v3783 = vlaneseq
  %v3784 = vshrl.u32 %v3783, 7
  %v3785 = vsub.s32 %v3782, %v3784
  %v3786 = vrot.slane %v3779, %v3785
  %v3787 = vcombine.low %v3762, %v3770
  %v3789 = vunpack.c.l.s4 1934713408
  %v3790 = vunpack.c.0.s8 %v3789
  %v3791 = vlaneseq
  %v3792 = vshrl.u32 %v3791, 7
  %v3793 = vsub.s32 %v3790, %v3792
  %v3794 = vrot.slane %v3787, %v3793
  %v3795 = vcombine.low %v3778, %v3786
  %v3797 = vunpack.c.l.s4 1934713408
  %v3798 = vunpack.c.0.s8 %v3797
  %v3799 = vlaneseq
  %v3800 = vshrl.u32 %v3799, 7
  %v3801 = vsub.s32 %v3798, %v3800
  %v3802 = vrot.slane %v3795, %v3801
  %v3803 = vcombine.low %v3794, %v3802
  %v3804 = vcombine.high %v3794, %v3802
  %v3805 = vcombine.low %v3627, %v3634
  %v3807 = vunpack.c.l.s4 1983009808
  %v3808 = vunpack.c.0.s8 %v3807
  %v3809 = vlaneseq
  %v3810 = vshrl.u32 %v3809, 7
  %v3811 = vsub.s32 %v3808, %v3810
  %v3812 = vrot.slane %v3805, %v3811
  %v3813 = vcombine.low %v3651, %v3652
  %v3815 = vunpack.c.l.s4 1983009808
  %v3816 = vunpack.c.0.s8 %v3815
  %v3817 = vlaneseq
  %v3818 = vshrl.u32 %v3817, 7
  %v3819 = vsub.s32 %v3816, %v3818
  %v3820 = vrot.slane %v3813, %v3819
  %v3821 = vcombine.low %v3643, %v3650
  %v3823 = vunpack.c.l.s4 1983009808
  %v3824 = vunpack.c.0.s8 %v3823
  %v3825 = vlaneseq
  %v3826 = vshrl.u32 %v3825, 7
  %v3827 = vsub.s32 %v3824, %v3826
  %v3828 = vrot.slane %v3821, %v3827
  %v3829 = vcombine.low %v3653, %v3654
  %v3831 = vunpack.c.l.s4 1983009808
  %v3832 = vunpack.c.0.s8 %v3831
  %v3833 = vlaneseq
  %v3834 = vshrl.u32 %v3833, 7
  %v3835 = vsub.s32 %v3832, %v3834
  %v3836 = vrot.slane %v3829, %v3835
  %v3837 = vcombine.low %v3812, %v3820
  %v3839 = vunpack.c.l.s4 1934713408
  %v3840 = vunpack.c.0.s8 %v3839
  %v3841 = vlaneseq
  %v3842 = vshrl.u32 %v3841, 7
  %v3843 = vsub.s32 %v3840, %v3842
  %v3844 = vrot.slane %v3837, %v3843
  %v3845 = vcombine.low %v3828, %v3836
  %v3847 = vunpack.c.l.s4 1934713408
  %v3848 = vunpack.c.0.s8 %v3847
  %v3849 = vlaneseq
  %v3850 = vshrl.u32 %v3849, 7
  %v3851 = vsub.s32 %v3848, %v3850
  %v3852 = vrot.slane %v3845, %v3851
  %v3853 = vcombine.low %v3844, %v3852
  %v3854 = vcombine.high %v3844, %v3852
  %v3857 = vpack.i.b16 %v3753, %v3703
  %v3859 = vshrl.u32 %v3703, 16
  %v3860 = vshrl.u32 %v3753, 16
  %v3861 = vpack.i.b16 %v3860, %v3859
  %v3865 = vpack.i.b16 %v3754, %v3704
  %v3867 = vshrl.u32 %v3704, 16
  %v3868 = vshrl.u32 %v3754, 16
  %v3869 = vpack.i.b16 %v3868, %v3867
  %v3873 = vpack.i.b16 %v3853, %v3803
  %v3875 = vshrl.u32 %v3803, 16
  %v3876 = vshrl.u32 %v3853, 16
  %v3877 = vpack.i.b16 %v3876, %v3875
  %v3881 = vpack.i.b16 %v3854, %v3804
  %v3883 = vshrl.u32 %v3804, 16
  %v3884 = vshrl.u32 %v3854, 16
  %v3885 = vpack.i.b16 %v3884, %v3883
  %v3888 = vsel %vm1072, %v2785, 0
  %v3891 = vsel %vm1072, %v3321, 0
  %3893 = vmatprep.subr.bf16.mxu0 0
  %3894 = vmatpush1.bf16.xpose.msra.mxu0 0
  %3895 = vmatprep.subr.bf16.mxu0 0
  %3896 = vmatpush1.bf16.xpose.msra.mxu0 0
  %3897 = vmatprep.subr.bf16.mxu0 0
  %3898 = vmatpush1.bf16.xpose.msra.mxu0 0
  %3899 = vmatprep.subr.bf16.mxu0 0
  %3900 = vmatpush1.bf16.xpose.msra.mxu0 0
  %3901 = vmatprep.subr.bf16.mxu0 0
  %3902 = vmatpush1.bf16.xpose.msra.mxu0 0
  %3903 = vmatprep.subr.bf16.mxu0 0
  %3904 = vmatpush1.bf16.xpose.msra.mxu0 0
  %3905 = vmatprep.subr.bf16.mxu0 0
  %3906 = vmatpush1.bf16.xpose.msra.mxu0 0
  %3907 = vmatprep.subr.bf16.mxu0 0
  %3908 = vmatpush1.bf16.xpose.msra.mxu0 %v3891
  %3909 = vmatprep.subr.bf16.mxu0 0
  %3910 = vmatpush2.bf16.xpose.msra.mxu0 0
  %3911 = vmatprep.subr.bf16.mxu0 0
  %3912 = vmatpush2.bf16.xpose.msra.mxu0 0
  %3913 = vmatprep.subr.bf16.mxu0 0
  %3914 = vmatpush2.bf16.xpose.msra.mxu0 0
  %3915 = vmatprep.subr.bf16.mxu0 0
  %3916 = vmatpush2.bf16.xpose.msra.mxu0 0
  %3917 = vmatprep.subr.bf16.mxu0 0
  %3918 = vmatpush2.bf16.xpose.msra.mxu0 0
  %3919 = vmatprep.subr.bf16.mxu0 0
  %3920 = vmatpush2.bf16.xpose.msra.mxu0 0
  %3921 = vmatprep.subr.bf16.mxu0 0
  %3922 = vmatpush2.bf16.xpose.msra.mxu0 0
  %3923 = vmatprep.subr.bf16.mxu0 0
  %3924 = vmatpush2.bf16.xpose.msra.mxu0 0
  %3925 = vmatprep.mubr.bf16.mxu0 0
  %3926 = vmatmul.mubr.bf16.gmra.mxu0 %v3888
  %v3927 = vpop.f32.mrf.mxu0
  %v3928 = vadd.f32 0.0, %v3927
  %v3929 = vpop.f32.mrf.mxu0
  %v3930 = vpop.f32.mrf.mxu0
  %v3931 = vpop.f32.mrf.mxu0
  %3932 = vdwg.mxu0
  %v3934 = vsel %vm1072, %v2788, 0
  %v3937 = vsel %vm1072, %v3324, 0
  %3939 = vmatprep.subr.bf16.mxu0 0
  %3940 = vmatpush1.bf16.xpose.msra.mxu0 0
  %3941 = vmatprep.subr.bf16.mxu0 0
  %3942 = vmatpush1.bf16.xpose.msra.mxu0 0
  %3943 = vmatprep.subr.bf16.mxu0 0
  %3944 = vmatpush1.bf16.xpose.msra.mxu0 0
  %3945 = vmatprep.subr.bf16.mxu0 0
  %3946 = vmatpush1.bf16.xpose.msra.mxu0 0
  %3947 = vmatprep.subr.bf16.mxu0 0
  %3948 = vmatpush1.bf16.xpose.msra.mxu0 0
  %3949 = vmatprep.subr.bf16.mxu0 0
  %3950 = vmatpush1.bf16.xpose.msra.mxu0 0
  %3951 = vmatprep.subr.bf16.mxu0 0
  %3952 = vmatpush1.bf16.xpose.msra.mxu0 0
  %3953 = vmatprep.subr.bf16.mxu0 0
  %3954 = vmatpush1.bf16.xpose.msra.mxu0 %v3937
  %3955 = vmatprep.subr.bf16.mxu0 0
  %3956 = vmatpush2.bf16.xpose.msra.mxu0 0
  %3957 = vmatprep.subr.bf16.mxu0 0
  %3958 = vmatpush2.bf16.xpose.msra.mxu0 0
  %3959 = vmatprep.subr.bf16.mxu0 0
  %3960 = vmatpush2.bf16.xpose.msra.mxu0 0
  %3961 = vmatprep.subr.bf16.mxu0 0
  %3962 = vmatpush2.bf16.xpose.msra.mxu0 0
  %3963 = vmatprep.subr.bf16.mxu0 0
  %3964 = vmatpush2.bf16.xpose.msra.mxu0 0
  %3965 = vmatprep.subr.bf16.mxu0 0
  %3966 = vmatpush2.bf16.xpose.msra.mxu0 0
  %3967 = vmatprep.subr.bf16.mxu0 0
  %3968 = vmatpush2.bf16.xpose.msra.mxu0 0
  %3969 = vmatprep.subr.bf16.mxu0 0
  %3970 = vmatpush2.bf16.xpose.msra.mxu0 0
  %3971 = vmatprep.mubr.bf16.mxu0 0
  %3972 = vmatmul.mubr.bf16.gmra.mxu0 %v3934
  %v3973 = vpop.f32.mrf.mxu0
  %v3974 = vadd.f32 0.0, %v3973
  %v3975 = vpop.f32.mrf.mxu0
  %v3976 = vpop.f32.mrf.mxu0
  %v3977 = vpop.f32.mrf.mxu0
  %3978 = vdwg.mxu0
  %v3980 = vsel %vm1072, %v2791, 0
  %v3983 = vsel %vm1072, %v3327, 0
  %3985 = vmatprep.subr.bf16.mxu0 0
  %3986 = vmatpush1.bf16.xpose.msra.mxu0 0
  %3987 = vmatprep.subr.bf16.mxu0 0
  %3988 = vmatpush1.bf16.xpose.msra.mxu0 0
  %3989 = vmatprep.subr.bf16.mxu0 0
  %3990 = vmatpush1.bf16.xpose.msra.mxu0 0
  %3991 = vmatprep.subr.bf16.mxu0 0
  %3992 = vmatpush1.bf16.xpose.msra.mxu0 0
  %3993 = vmatprep.subr.bf16.mxu0 0
  %3994 = vmatpush1.bf16.xpose.msra.mxu0 0
  %3995 = vmatprep.subr.bf16.mxu0 0
  %3996 = vmatpush1.bf16.xpose.msra.mxu0 0
  %3997 = vmatprep.subr.bf16.mxu0 0
  %3998 = vmatpush1.bf16.xpose.msra.mxu0 0
  %3999 = vmatprep.subr.bf16.mxu0 0
  %4000 = vmatpush1.bf16.xpose.msra.mxu0 %v3983
  %4001 = vmatprep.subr.bf16.mxu0 0
  %4002 = vmatpush2.bf16.xpose.msra.mxu0 0
  %4003 = vmatprep.subr.bf16.mxu0 0
  %4004 = vmatpush2.bf16.xpose.msra.mxu0 0
  %4005 = vmatprep.subr.bf16.mxu0 0
  %4006 = vmatpush2.bf16.xpose.msra.mxu0 0
  %4007 = vmatprep.subr.bf16.mxu0 0
  %4008 = vmatpush2.bf16.xpose.msra.mxu0 0
  %4009 = vmatprep.subr.bf16.mxu0 0
  %4010 = vmatpush2.bf16.xpose.msra.mxu0 0
  %4011 = vmatprep.subr.bf16.mxu0 0
  %4012 = vmatpush2.bf16.xpose.msra.mxu0 0
  %4013 = vmatprep.subr.bf16.mxu0 0
  %4014 = vmatpush2.bf16.xpose.msra.mxu0 0
  %4015 = vmatprep.subr.bf16.mxu0 0
  %4016 = vmatpush2.bf16.xpose.msra.mxu0 0
  %4017 = vmatprep.mubr.bf16.mxu0 0
  %4018 = vmatmul.mubr.bf16.gmra.mxu0 %v3980
  %v4019 = vpop.f32.mrf.mxu0
  %v4020 = vadd.f32 0.0, %v4019
  %v4021 = vpop.f32.mrf.mxu0
  %v4022 = vpop.f32.mrf.mxu0
  %v4023 = vpop.f32.mrf.mxu0
  %4024 = vdwg.mxu0
  %v4026 = vsel %vm1072, %v2794, 0
  %v4029 = vsel %vm1072, %v3330, 0
  %4031 = vmatprep.subr.bf16.mxu0 0
  %4032 = vmatpush1.bf16.xpose.msra.mxu0 0
  %4033 = vmatprep.subr.bf16.mxu0 0
  %4034 = vmatpush1.bf16.xpose.msra.mxu0 0
  %4035 = vmatprep.subr.bf16.mxu0 0
  %4036 = vmatpush1.bf16.xpose.msra.mxu0 0
  %4037 = vmatprep.subr.bf16.mxu0 0
  %4038 = vmatpush1.bf16.xpose.msra.mxu0 0
  %4039 = vmatprep.subr.bf16.mxu0 0
  %4040 = vmatpush1.bf16.xpose.msra.mxu0 0
  %4041 = vmatprep.subr.bf16.mxu0 0
  %4042 = vmatpush1.bf16.xpose.msra.mxu0 0
  %4043 = vmatprep.subr.bf16.mxu0 0
  %4044 = vmatpush1.bf16.xpose.msra.mxu0 0
  %4045 = vmatprep.subr.bf16.mxu0 0
  %4046 = vmatpush1.bf16.xpose.msra.mxu0 %v4029
  %4047 = vmatprep.subr.bf16.mxu0 0
  %4048 = vmatpush2.bf16.xpose.msra.mxu0 0
  %4049 = vmatprep.subr.bf16.mxu0 0
  %4050 = vmatpush2.bf16.xpose.msra.mxu0 0
  %4051 = vmatprep.subr.bf16.mxu0 0
  %4052 = vmatpush2.bf16.xpose.msra.mxu0 0
  %4053 = vmatprep.subr.bf16.mxu0 0
  %4054 = vmatpush2.bf16.xpose.msra.mxu0 0
  %4055 = vmatprep.subr.bf16.mxu0 0
  %4056 = vmatpush2.bf16.xpose.msra.mxu0 0
  %4057 = vmatprep.subr.bf16.mxu0 0
  %4058 = vmatpush2.bf16.xpose.msra.mxu0 0
  %4059 = vmatprep.subr.bf16.mxu0 0
  %4060 = vmatpush2.bf16.xpose.msra.mxu0 0
  %4061 = vmatprep.subr.bf16.mxu0 0
  %4062 = vmatpush2.bf16.xpose.msra.mxu0 0
  %4063 = vmatprep.mubr.bf16.mxu0 0
  %4064 = vmatmul.mubr.bf16.gmra.mxu0 %v4026
  %v4065 = vpop.f32.mrf.mxu0
  %v4066 = vadd.f32 0.0, %v4065
  %v4067 = vpop.f32.mrf.mxu0
  %v4068 = vpop.f32.mrf.mxu0
  %v4069 = vpop.f32.mrf.mxu0
  %4070 = vdwg.mxu0
  %v4072 = vsel %vm1072, %v2797, 0
  %v4075 = vsel %vm1072, %v3333, 0
  %4077 = vmatprep.subr.bf16.mxu0 0
  %4078 = vmatpush1.bf16.xpose.msra.mxu0 0
  %4079 = vmatprep.subr.bf16.mxu0 0
  %4080 = vmatpush1.bf16.xpose.msra.mxu0 0
  %4081 = vmatprep.subr.bf16.mxu0 0
  %4082 = vmatpush1.bf16.xpose.msra.mxu0 0
  %4083 = vmatprep.subr.bf16.mxu0 0
  %4084 = vmatpush1.bf16.xpose.msra.mxu0 0
  %4085 = vmatprep.subr.bf16.mxu0 0
  %4086 = vmatpush1.bf16.xpose.msra.mxu0 0
  %4087 = vmatprep.subr.bf16.mxu0 0
  %4088 = vmatpush1.bf16.xpose.msra.mxu0 0
  %4089 = vmatprep.subr.bf16.mxu0 0
  %4090 = vmatpush1.bf16.xpose.msra.mxu0 0
  %4091 = vmatprep.subr.bf16.mxu0 0
  %4092 = vmatpush1.bf16.xpose.msra.mxu0 %v4075
  %4093 = vmatprep.subr.bf16.mxu0 0
  %4094 = vmatpush2.bf16.xpose.msra.mxu0 0
  %4095 = vmatprep.subr.bf16.mxu0 0
  %4096 = vmatpush2.bf16.xpose.msra.mxu0 0
  %4097 = vmatprep.subr.bf16.mxu0 0
  %4098 = vmatpush2.bf16.xpose.msra.mxu0 0
  %4099 = vmatprep.subr.bf16.mxu0 0
  %4100 = vmatpush2.bf16.xpose.msra.mxu0 0
  %4101 = vmatprep.subr.bf16.mxu0 0
  %4102 = vmatpush2.bf16.xpose.msra.mxu0 0
  %4103 = vmatprep.subr.bf16.mxu0 0
  %4104 = vmatpush2.bf16.xpose.msra.mxu0 0
  %4105 = vmatprep.subr.bf16.mxu0 0
  %4106 = vmatpush2.bf16.xpose.msra.mxu0 0
  %4107 = vmatprep.subr.bf16.mxu0 0
  %4108 = vmatpush2.bf16.xpose.msra.mxu0 0
  %4109 = vmatprep.mubr.bf16.mxu0 0
  %4110 = vmatmul.mubr.bf16.gmra.mxu0 %v4072
  %v4111 = vpop.f32.mrf.mxu0
  %v4112 = vadd.f32 0.0, %v4111
  %v4113 = vpop.f32.mrf.mxu0
  %v4114 = vpop.f32.mrf.mxu0
  %v4115 = vpop.f32.mrf.mxu0
  %4116 = vdwg.mxu0
  %v4118 = vsel %vm1072, %v2800, 0
  %v4121 = vsel %vm1072, %v3336, 0
  %4123 = vmatprep.subr.bf16.mxu0 0
  %4124 = vmatpush1.bf16.xpose.msra.mxu0 0
  %4125 = vmatprep.subr.bf16.mxu0 0
  %4126 = vmatpush1.bf16.xpose.msra.mxu0 0
  %4127 = vmatprep.subr.bf16.mxu0 0
  %4128 = vmatpush1.bf16.xpose.msra.mxu0 0
  %4129 = vmatprep.subr.bf16.mxu0 0
  %4130 = vmatpush1.bf16.xpose.msra.mxu0 0
  %4131 = vmatprep.subr.bf16.mxu0 0
  %4132 = vmatpush1.bf16.xpose.msra.mxu0 0
  %4133 = vmatprep.subr.bf16.mxu0 0
  %4134 = vmatpush1.bf16.xpose.msra.mxu0 0
  %4135 = vmatprep.subr.bf16.mxu0 0
  %4136 = vmatpush1.bf16.xpose.msra.mxu0 0
  %4137 = vmatprep.subr.bf16.mxu0 0
  %4138 = vmatpush1.bf16.xpose.msra.mxu0 %v4121
  %4139 = vmatprep.subr.bf16.mxu0 0
  %4140 = vmatpush2.bf16.xpose.msra.mxu0 0
  %4141 = vmatprep.subr.bf16.mxu0 0
  %4142 = vmatpush2.bf16.xpose.msra.mxu0 0
  %4143 = vmatprep.subr.bf16.mxu0 0
  %4144 = vmatpush2.bf16.xpose.msra.mxu0 0
  %4145 = vmatprep.subr.bf16.mxu0 0
  %4146 = vmatpush2.bf16.xpose.msra.mxu0 0
  %4147 = vmatprep.subr.bf16.mxu0 0
  %4148 = vmatpush2.bf16.xpose.msra.mxu0 0
  %4149 = vmatprep.subr.bf16.mxu0 0
  %4150 = vmatpush2.bf16.xpose.msra.mxu0 0
  %4151 = vmatprep.subr.bf16.mxu0 0
  %4152 = vmatpush2.bf16.xpose.msra.mxu0 0
  %4153 = vmatprep.subr.bf16.mxu0 0
  %4154 = vmatpush2.bf16.xpose.msra.mxu0 0
  %4155 = vmatprep.mubr.bf16.mxu0 0
  %4156 = vmatmul.mubr.bf16.gmra.mxu0 %v4118
  %v4157 = vpop.f32.mrf.mxu0
  %v4158 = vadd.f32 0.0, %v4157
  %v4159 = vpop.f32.mrf.mxu0
  %v4160 = vpop.f32.mrf.mxu0
  %v4161 = vpop.f32.mrf.mxu0
  %4162 = vdwg.mxu0
  %v4164 = vsel %vm1072, %v2803, 0
  %v4167 = vsel %vm1072, %v3339, 0
  %4169 = vmatprep.subr.bf16.mxu0 0
  %4170 = vmatpush1.bf16.xpose.msra.mxu0 0
  %4171 = vmatprep.subr.bf16.mxu0 0
  %4172 = vmatpush1.bf16.xpose.msra.mxu0 0
  %4173 = vmatprep.subr.bf16.mxu0 0
  %4174 = vmatpush1.bf16.xpose.msra.mxu0 0
  %4175 = vmatprep.subr.bf16.mxu0 0
  %4176 = vmatpush1.bf16.xpose.msra.mxu0 0
  %4177 = vmatprep.subr.bf16.mxu0 0
  %4178 = vmatpush1.bf16.xpose.msra.mxu0 0
  %4179 = vmatprep.subr.bf16.mxu0 0
  %4180 = vmatpush1.bf16.xpose.msra.mxu0 0
  %4181 = vmatprep.subr.bf16.mxu0 0
  %4182 = vmatpush1.bf16.xpose.msra.mxu0 0
  %4183 = vmatprep.subr.bf16.mxu0 0
  %4184 = vmatpush1.bf16.xpose.msra.mxu0 %v4167
  %4185 = vmatprep.subr.bf16.mxu0 0
  %4186 = vmatpush2.bf16.xpose.msra.mxu0 0
  %4187 = vmatprep.subr.bf16.mxu0 0
  %4188 = vmatpush2.bf16.xpose.msra.mxu0 0
  %4189 = vmatprep.subr.bf16.mxu0 0
  %4190 = vmatpush2.bf16.xpose.msra.mxu0 0
  %4191 = vmatprep.subr.bf16.mxu0 0
  %4192 = vmatpush2.bf16.xpose.msra.mxu0 0
  %4193 = vmatprep.subr.bf16.mxu0 0
  %4194 = vmatpush2.bf16.xpose.msra.mxu0 0
  %4195 = vmatprep.subr.bf16.mxu0 0
  %4196 = vmatpush2.bf16.xpose.msra.mxu0 0
  %4197 = vmatprep.subr.bf16.mxu0 0
  %4198 = vmatpush2.bf16.xpose.msra.mxu0 0
  %4199 = vmatprep.subr.bf16.mxu0 0
  %4200 = vmatpush2.bf16.xpose.msra.mxu0 0
  %4201 = vmatprep.mubr.bf16.mxu0 0
  %4202 = vmatmul.mubr.bf16.gmra.mxu0 %v4164
  %v4203 = vpop.f32.mrf.mxu0
  %v4204 = vadd.f32 0.0, %v4203
  %v4205 = vpop.f32.mrf.mxu0
  %v4206 = vpop.f32.mrf.mxu0
  %v4207 = vpop.f32.mrf.mxu0
  %4208 = vdwg.mxu0
  %v4210 = vsel %vm1072, %v2806, 0
  %v4213 = vsel %vm1072, %v3342, 0
  %4215 = vmatprep.subr.bf16.mxu0 0
  %4216 = vmatpush1.bf16.xpose.msra.mxu0 0
  %4217 = vmatprep.subr.bf16.mxu0 0
  %4218 = vmatpush1.bf16.xpose.msra.mxu0 0
  %4219 = vmatprep.subr.bf16.mxu0 0
  %4220 = vmatpush1.bf16.xpose.msra.mxu0 0
  %4221 = vmatprep.subr.bf16.mxu0 0
  %4222 = vmatpush1.bf16.xpose.msra.mxu0 0
  %4223 = vmatprep.subr.bf16.mxu0 0
  %4224 = vmatpush1.bf16.xpose.msra.mxu0 0
  %4225 = vmatprep.subr.bf16.mxu0 0
  %4226 = vmatpush1.bf16.xpose.msra.mxu0 0
  %4227 = vmatprep.subr.bf16.mxu0 0
  %4228 = vmatpush1.bf16.xpose.msra.mxu0 0
  %4229 = vmatprep.subr.bf16.mxu0 0
  %4230 = vmatpush1.bf16.xpose.msra.mxu0 %v4213
  %4231 = vmatprep.subr.bf16.mxu0 0
  %4232 = vmatpush2.bf16.xpose.msra.mxu0 0
  %4233 = vmatprep.subr.bf16.mxu0 0
  %4234 = vmatpush2.bf16.xpose.msra.mxu0 0
  %4235 = vmatprep.subr.bf16.mxu0 0
  %4236 = vmatpush2.bf16.xpose.msra.mxu0 0
  %4237 = vmatprep.subr.bf16.mxu0 0
  %4238 = vmatpush2.bf16.xpose.msra.mxu0 0
  %4239 = vmatprep.subr.bf16.mxu0 0
  %4240 = vmatpush2.bf16.xpose.msra.mxu0 0
  %4241 = vmatprep.subr.bf16.mxu0 0
  %4242 = vmatpush2.bf16.xpose.msra.mxu0 0
  %4243 = vmatprep.subr.bf16.mxu0 0
  %4244 = vmatpush2.bf16.xpose.msra.mxu0 0
  %4245 = vmatprep.subr.bf16.mxu0 0
  %4246 = vmatpush2.bf16.xpose.msra.mxu0 0
  %4247 = vmatprep.mubr.bf16.mxu0 0
  %4248 = vmatmul.mubr.bf16.gmra.mxu0 %v4210
  %v4249 = vpop.f32.mrf.mxu0
  %v4250 = vadd.f32 0.0, %v4249
  %v4251 = vpop.f32.mrf.mxu0
  %v4252 = vpop.f32.mrf.mxu0
  %v4253 = vpop.f32.mrf.mxu0
  %4254 = vdwg.mxu0
  %v4255 = vsel %vm2204, %v3928, -inf
  %4256 = vmax.xlane.f32.xlu0 %v4255
  %v4257 = vpop.xlane.xlu0 %4256
  %v4258 = vsel %vm2204, %v3974, -inf
  %4259 = vmax.xlane.f32.xlu0 %v4258
  %v4260 = vpop.xlane.xlu0 %4259
  %v4261 = vsel %vm2204, %v4020, -inf
  %4262 = vmax.xlane.f32.xlu0 %v4261
  %v4263 = vpop.xlane.xlu0 %4262
  %v4264 = vsel %vm2204, %v4066, -inf
  %4265 = vmax.xlane.f32.xlu0 %v4264
  %v4266 = vpop.xlane.xlu0 %4265
  %v4267 = vsel %vm2204, %v4112, -inf
  %4268 = vmax.xlane.f32.xlu0 %v4267
  %v4269 = vpop.xlane.xlu0 %4268
  %v4270 = vsel %vm2204, %v4158, -inf
  %4271 = vmax.xlane.f32.xlu0 %v4270
  %v4272 = vpop.xlane.xlu0 %4271
  %v4273 = vsel %vm2204, %v4204, -inf
  %4274 = vmax.xlane.f32.xlu0 %v4273
  %v4275 = vpop.xlane.xlu0 %4274
  %v4276 = vsel %vm2204, %v4250, -inf
  %4277 = vmax.xlane.f32.xlu0 %v4276
  %v4278 = vpop.xlane.xlu0 %4277
  %v4279 = vsub.f32 %v3928, %v4257
  %v4280 = vsub.f32 %v3974, %v4260
  %v4281 = vsub.f32 %v4020, %v4263
  %v4282 = vsub.f32 %v4066, %v4266
  %v4283 = vsub.f32 %v4112, %v4269
  %v4284 = vsub.f32 %v4158, %v4272
  %v4285 = vsub.f32 %v4204, %v4275
  %v4286 = vsub.f32 %v4250, %v4278
  %v4287 = vmul.f32 %v4279, 1.442695
  %v4288 = vpow.pop %v4287
  %v4289 = vmul.f32 %v4280, 1.442695
  %v4290 = vpow.pop %v4289
  %v4291 = vmul.f32 %v4281, 1.442695
  %v4292 = vpow.pop %v4291
  %v4293 = vmul.f32 %v4282, 1.442695
  %v4294 = vpow.pop %v4293
  %v4295 = vmul.f32 %v4283, 1.442695
  %v4296 = vpow.pop %v4295
  %v4297 = vmul.f32 %v4284, 1.442695
  %v4298 = vpow.pop %v4297
  %v4299 = vmul.f32 %v4285, 1.442695
  %v4300 = vpow.pop %v4299
  %v4301 = vmul.f32 %v4286, 1.442695
  %v4302 = vpow.pop %v4301
  %v4303 = vsel %vm2204, %v4288, 0.0
  %4304 = vadd.xlane.f32.xlu0 %v4303
  %v4305 = vpop.xlane.xlu0 %4304
  %v4306 = vsel %vm2204, %v4290, 0.0
  %4307 = vadd.xlane.f32.xlu0 %v4306
  %v4308 = vpop.xlane.xlu0 %4307
  %v4309 = vsel %vm2204, %v4292, 0.0
  %4310 = vadd.xlane.f32.xlu0 %v4309
  %v4311 = vpop.xlane.xlu0 %4310
  %v4312 = vsel %vm2204, %v4294, 0.0
  %4313 = vadd.xlane.f32.xlu0 %v4312
  %v4314 = vpop.xlane.xlu0 %4313
  %v4315 = vsel %vm2204, %v4296, 0.0
  %4316 = vadd.xlane.f32.xlu0 %v4315
  %v4317 = vpop.xlane.xlu0 %4316
  %v4318 = vsel %vm2204, %v4298, 0.0
  %4319 = vadd.xlane.f32.xlu0 %v4318
  %v4320 = vpop.xlane.xlu0 %4319
  %v4321 = vsel %vm2204, %v4300, 0.0
  %4322 = vadd.xlane.f32.xlu0 %v4321
  %v4323 = vpop.xlane.xlu0 %4322
  %v4324 = vsel %vm2204, %v4302, 0.0
  %4325 = vadd.xlane.f32.xlu0 %v4324
  %v4326 = vpop.xlane.xlu0 %4325
  %v4327 = vrcp.pop %v4305
  %v4328 = vrcp.pop %v4308
  %v4329 = vrcp.pop %v4311
  %v4330 = vrcp.pop %v4314
  %v4331 = vrcp.pop %v4317
  %v4332 = vrcp.pop %v4320
  %v4333 = vrcp.pop %v4323
  %v4334 = vrcp.pop %v4326
  %v4335 = vmul.f32 %v4288, %v4327
  %v4336 = vmul.f32 %v4290, %v4328
  %v4337 = vmul.f32 %v4292, %v4329
  %v4338 = vmul.f32 %v4294, %v4330
  %v4339 = vmul.f32 %v4296, %v4331
  %v4340 = vmul.f32 %v4298, %v4332
  %v4341 = vmul.f32 %v4300, %v4333
  %v4342 = vmul.f32 %v4302, %v4334
  %v4343 = vpack.c.bf16 %v4335, %v4335
  %v4344 = vpack.c.bf16 %v4336, %v4336
  %v4345 = vpack.c.bf16 %v4337, %v4337
  %v4346 = vpack.c.bf16 %v4338, %v4338
  %v4347 = vpack.c.bf16 %v4339, %v4339
  %v4348 = vpack.c.bf16 %v4340, %v4340
  %v4349 = vpack.c.bf16 %v4341, %v4341
  %v4350 = vpack.c.bf16 %v4342, %v4342
  %v4352 = vsel %vm2204, %v4343, 0
  %4354 = vmatprep.subr.bf16.mxu0 0
  %4355 = vmatpush1.bf16.msra.mxu0 0
  %4356 = vmatprep.subr.bf16.mxu0 0
  %4357 = vmatpush1.bf16.msra.mxu0 0
  %4358 = vmatprep.subr.bf16.mxu0 0
  %4359 = vmatpush1.bf16.msra.mxu0 0
  %4360 = vmatprep.subr.bf16.mxu0 0
  %4361 = vmatpush1.bf16.msra.mxu0 0
  %4362 = vmatprep.subr.bf16.mxu0 0
  %4363 = vmatpush1.bf16.msra.mxu0 0
  %4364 = vmatprep.subr.bf16.mxu0 0
  %4365 = vmatpush1.bf16.msra.mxu0 0
  %4366 = vmatprep.subr.bf16.mxu0 0
  %4367 = vmatpush1.bf16.msra.mxu0 0
  %4368 = vmatprep.subr.bf16.mxu0 0
  %4369 = vmatpush1.bf16.msra.mxu0 %v3857
  %4370 = vmatprep.subr.bf16.mxu0 0
  %4371 = vmatpush2.bf16.msra.mxu0 0
  %4372 = vmatprep.subr.bf16.mxu0 0
  %4373 = vmatpush2.bf16.msra.mxu0 0
  %4374 = vmatprep.subr.bf16.mxu0 0
  %4375 = vmatpush2.bf16.msra.mxu0 0
  %4376 = vmatprep.subr.bf16.mxu0 0
  %4377 = vmatpush2.bf16.msra.mxu0 0
  %4378 = vmatprep.subr.bf16.mxu0 0
  %4379 = vmatpush2.bf16.msra.mxu0 0
  %4380 = vmatprep.subr.bf16.mxu0 0
  %4381 = vmatpush2.bf16.msra.mxu0 0
  %4382 = vmatprep.subr.bf16.mxu0 0
  %4383 = vmatpush2.bf16.msra.mxu0 0
  %4384 = vmatprep.subr.bf16.mxu0 0
  %4385 = vmatpush2.bf16.msra.mxu0 0
  %4386 = vmatprep.mubr.bf16.mxu0 0
  %4387 = vmatmul.mubr.bf16.gmra.mxu0 %v4352
  %v4388 = vpop.f32.mrf.mxu0
  %v4389 = vadd.f32 0.0, %v4388
  %v4390 = vpop.f32.mrf.mxu0
  %v4391 = vpop.f32.mrf.mxu0
  %v4392 = vpop.f32.mrf.mxu0
  %4393 = vdwg.mxu0
  %v4395 = vsel %vm2204, %v4344, 0
  %4397 = vmatprep.subr.bf16.mxu0 0
  %4398 = vmatpush1.bf16.msra.mxu0 0
  %4399 = vmatprep.subr.bf16.mxu0 0
  %4400 = vmatpush1.bf16.msra.mxu0 0
  %4401 = vmatprep.subr.bf16.mxu0 0
  %4402 = vmatpush1.bf16.msra.mxu0 0
  %4403 = vmatprep.subr.bf16.mxu0 0
  %4404 = vmatpush1.bf16.msra.mxu0 0
  %4405 = vmatprep.subr.bf16.mxu0 0
  %4406 = vmatpush1.bf16.msra.mxu0 0
  %4407 = vmatprep.subr.bf16.mxu0 0
  %4408 = vmatpush1.bf16.msra.mxu0 0
  %4409 = vmatprep.subr.bf16.mxu0 0
  %4410 = vmatpush1.bf16.msra.mxu0 0
  %4411 = vmatprep.subr.bf16.mxu0 0
  %4412 = vmatpush1.bf16.msra.mxu0 %v3861
  %4413 = vmatprep.subr.bf16.mxu0 0
  %4414 = vmatpush2.bf16.msra.mxu0 0
  %4415 = vmatprep.subr.bf16.mxu0 0
  %4416 = vmatpush2.bf16.msra.mxu0 0
  %4417 = vmatprep.subr.bf16.mxu0 0
  %4418 = vmatpush2.bf16.msra.mxu0 0
  %4419 = vmatprep.subr.bf16.mxu0 0
  %4420 = vmatpush2.bf16.msra.mxu0 0
  %4421 = vmatprep.subr.bf16.mxu0 0
  %4422 = vmatpush2.bf16.msra.mxu0 0
  %4423 = vmatprep.subr.bf16.mxu0 0
  %4424 = vmatpush2.bf16.msra.mxu0 0
  %4425 = vmatprep.subr.bf16.mxu0 0
  %4426 = vmatpush2.bf16.msra.mxu0 0
  %4427 = vmatprep.subr.bf16.mxu0 0
  %4428 = vmatpush2.bf16.msra.mxu0 0
  %4429 = vmatprep.mubr.bf16.mxu0 0
  %4430 = vmatmul.mubr.bf16.gmra.mxu0 %v4395
  %v4431 = vpop.f32.mrf.mxu0
  %v4432 = vadd.f32 0.0, %v4431
  %v4433 = vpop.f32.mrf.mxu0
  %v4434 = vpop.f32.mrf.mxu0
  %v4435 = vpop.f32.mrf.mxu0
  %4436 = vdwg.mxu0
  %v4438 = vsel %vm2204, %v4345, 0
  %4440 = vmatprep.subr.bf16.mxu0 0
  %4441 = vmatpush1.bf16.msra.mxu0 0
  %4442 = vmatprep.subr.bf16.mxu0 0
  %4443 = vmatpush1.bf16.msra.mxu0 0
  %4444 = vmatprep.subr.bf16.mxu0 0
  %4445 = vmatpush1.bf16.msra.mxu0 0
  %4446 = vmatprep.subr.bf16.mxu0 0
  %4447 = vmatpush1.bf16.msra.mxu0 0
  %4448 = vmatprep.subr.bf16.mxu0 0
  %4449 = vmatpush1.bf16.msra.mxu0 0
  %4450 = vmatprep.subr.bf16.mxu0 0
  %4451 = vmatpush1.bf16.msra.mxu0 0
  %4452 = vmatprep.subr.bf16.mxu0 0
  %4453 = vmatpush1.bf16.msra.mxu0 0
  %4454 = vmatprep.subr.bf16.mxu0 0
  %4455 = vmatpush1.bf16.msra.mxu0 %v3865
  %4456 = vmatprep.subr.bf16.mxu0 0
  %4457 = vmatpush2.bf16.msra.mxu0 0
  %4458 = vmatprep.subr.bf16.mxu0 0
  %4459 = vmatpush2.bf16.msra.mxu0 0
  %4460 = vmatprep.subr.bf16.mxu0 0
  %4461 = vmatpush2.bf16.msra.mxu0 0
  %4462 = vmatprep.subr.bf16.mxu0 0
  %4463 = vmatpush2.bf16.msra.mxu0 0
  %4464 = vmatprep.subr.bf16.mxu0 0
  %4465 = vmatpush2.bf16.msra.mxu0 0
  %4466 = vmatprep.subr.bf16.mxu0 0
  %4467 = vmatpush2.bf16.msra.mxu0 0
  %4468 = vmatprep.subr.bf16.mxu0 0
  %4469 = vmatpush2.bf16.msra.mxu0 0
  %4470 = vmatprep.subr.bf16.mxu0 0
  %4471 = vmatpush2.bf16.msra.mxu0 0
  %4472 = vmatprep.mubr.bf16.mxu0 0
  %4473 = vmatmul.mubr.bf16.gmra.mxu0 %v4438
  %v4474 = vpop.f32.mrf.mxu0
  %v4475 = vadd.f32 0.0, %v4474
  %v4476 = vpop.f32.mrf.mxu0
  %v4477 = vpop.f32.mrf.mxu0
  %v4478 = vpop.f32.mrf.mxu0
  %4479 = vdwg.mxu0
  %v4481 = vsel %vm2204, %v4346, 0
  %4483 = vmatprep.subr.bf16.mxu0 0
  %4484 = vmatpush1.bf16.msra.mxu0 0
  %4485 = vmatprep.subr.bf16.mxu0 0
  %4486 = vmatpush1.bf16.msra.mxu0 0
  %4487 = vmatprep.subr.bf16.mxu0 0
  %4488 = vmatpush1.bf16.msra.mxu0 0
  %4489 = vmatprep.subr.bf16.mxu0 0
  %4490 = vmatpush1.bf16.msra.mxu0 0
  %4491 = vmatprep.subr.bf16.mxu0 0
  %4492 = vmatpush1.bf16.msra.mxu0 0
  %4493 = vmatprep.subr.bf16.mxu0 0
  %4494 = vmatpush1.bf16.msra.mxu0 0
  %4495 = vmatprep.subr.bf16.mxu0 0
  %4496 = vmatpush1.bf16.msra.mxu0 0
  %4497 = vmatprep.subr.bf16.mxu0 0
  %4498 = vmatpush1.bf16.msra.mxu0 %v3869
  %4499 = vmatprep.subr.bf16.mxu0 0
  %4500 = vmatpush2.bf16.msra.mxu0 0
  %4501 = vmatprep.subr.bf16.mxu0 0
  %4502 = vmatpush2.bf16.msra.mxu0 0
  %4503 = vmatprep.subr.bf16.mxu0 0
  %4504 = vmatpush2.bf16.msra.mxu0 0
  %4505 = vmatprep.subr.bf16.mxu0 0
  %4506 = vmatpush2.bf16.msra.mxu0 0
  %4507 = vmatprep.subr.bf16.mxu0 0
  %4508 = vmatpush2.bf16.msra.mxu0 0
  %4509 = vmatprep.subr.bf16.mxu0 0
  %4510 = vmatpush2.bf16.msra.mxu0 0
  %4511 = vmatprep.subr.bf16.mxu0 0
  %4512 = vmatpush2.bf16.msra.mxu0 0
  %4513 = vmatprep.subr.bf16.mxu0 0
  %4514 = vmatpush2.bf16.msra.mxu0 0
  %4515 = vmatprep.mubr.bf16.mxu0 0
  %4516 = vmatmul.mubr.bf16.gmra.mxu0 %v4481
  %v4517 = vpop.f32.mrf.mxu0
  %v4518 = vadd.f32 0.0, %v4517
  %v4519 = vpop.f32.mrf.mxu0
  %v4520 = vpop.f32.mrf.mxu0
  %v4521 = vpop.f32.mrf.mxu0
  %4522 = vdwg.mxu0
  %v4524 = vsel %vm2204, %v4347, 0
  %4526 = vmatprep.subr.bf16.mxu0 0
  %4527 = vmatpush1.bf16.msra.mxu0 0
  %4528 = vmatprep.subr.bf16.mxu0 0
  %4529 = vmatpush1.bf16.msra.mxu0 0
  %4530 = vmatprep.subr.bf16.mxu0 0
  %4531 = vmatpush1.bf16.msra.mxu0 0
  %4532 = vmatprep.subr.bf16.mxu0 0
  %4533 = vmatpush1.bf16.msra.mxu0 0
  %4534 = vmatprep.subr.bf16.mxu0 0
  %4535 = vmatpush1.bf16.msra.mxu0 0
  %4536 = vmatprep.subr.bf16.mxu0 0
  %4537 = vmatpush1.bf16.msra.mxu0 0
  %4538 = vmatprep.subr.bf16.mxu0 0
  %4539 = vmatpush1.bf16.msra.mxu0 0
  %4540 = vmatprep.subr.bf16.mxu0 0
  %4541 = vmatpush1.bf16.msra.mxu0 %v3873
  %4542 = vmatprep.subr.bf16.mxu0 0
  %4543 = vmatpush2.bf16.msra.mxu0 0
  %4544 = vmatprep.subr.bf16.mxu0 0
  %4545 = vmatpush2.bf16.msra.mxu0 0
  %4546 = vmatprep.subr.bf16.mxu0 0
  %4547 = vmatpush2.bf16.msra.mxu0 0
  %4548 = vmatprep.subr.bf16.mxu0 0
  %4549 = vmatpush2.bf16.msra.mxu0 0
  %4550 = vmatprep.subr.bf16.mxu0 0
  %4551 = vmatpush2.bf16.msra.mxu0 0
  %4552 = vmatprep.subr.bf16.mxu0 0
  %4553 = vmatpush2.bf16.msra.mxu0 0
  %4554 = vmatprep.subr.bf16.mxu0 0
  %4555 = vmatpush2.bf16.msra.mxu0 0
  %4556 = vmatprep.subr.bf16.mxu0 0
  %4557 = vmatpush2.bf16.msra.mxu0 0
  %4558 = vmatprep.mubr.bf16.mxu0 0
  %4559 = vmatmul.mubr.bf16.gmra.mxu0 %v4524
  %v4560 = vpop.f32.mrf.mxu0
  %v4561 = vadd.f32 0.0, %v4560
  %v4562 = vpop.f32.mrf.mxu0
  %v4563 = vpop.f32.mrf.mxu0
  %v4564 = vpop.f32.mrf.mxu0
  %4565 = vdwg.mxu0
  %v4567 = vsel %vm2204, %v4348, 0
  %4569 = vmatprep.subr.bf16.mxu0 0
  %4570 = vmatpush1.bf16.msra.mxu0 0
  %4571 = vmatprep.subr.bf16.mxu0 0
  %4572 = vmatpush1.bf16.msra.mxu0 0
  %4573 = vmatprep.subr.bf16.mxu0 0
  %4574 = vmatpush1.bf16.msra.mxu0 0
  %4575 = vmatprep.subr.bf16.mxu0 0
  %4576 = vmatpush1.bf16.msra.mxu0 0
  %4577 = vmatprep.subr.bf16.mxu0 0
  %4578 = vmatpush1.bf16.msra.mxu0 0
  %4579 = vmatprep.subr.bf16.mxu0 0
  %4580 = vmatpush1.bf16.msra.mxu0 0
  %4581 = vmatprep.subr.bf16.mxu0 0
  %4582 = vmatpush1.bf16.msra.mxu0 0
  %4583 = vmatprep.subr.bf16.mxu0 0
  %4584 = vmatpush1.bf16.msra.mxu0 %v3877
  %4585 = vmatprep.subr.bf16.mxu0 0
  %4586 = vmatpush2.bf16.msra.mxu0 0
  %4587 = vmatprep.subr.bf16.mxu0 0
  %4588 = vmatpush2.bf16.msra.mxu0 0
  %4589 = vmatprep.subr.bf16.mxu0 0
  %4590 = vmatpush2.bf16.msra.mxu0 0
  %4591 = vmatprep.subr.bf16.mxu0 0
  %4592 = vmatpush2.bf16.msra.mxu0 0
  %4593 = vmatprep.subr.bf16.mxu0 0
  %4594 = vmatpush2.bf16.msra.mxu0 0
  %4595 = vmatprep.subr.bf16.mxu0 0
  %4596 = vmatpush2.bf16.msra.mxu0 0
  %4597 = vmatprep.subr.bf16.mxu0 0
  %4598 = vmatpush2.bf16.msra.mxu0 0
  %4599 = vmatprep.subr.bf16.mxu0 0
  %4600 = vmatpush2.bf16.msra.mxu0 0
  %4601 = vmatprep.mubr.bf16.mxu0 0
  %4602 = vmatmul.mubr.bf16.gmra.mxu0 %v4567
  %v4603 = vpop.f32.mrf.mxu0
  %v4604 = vadd.f32 0.0, %v4603
  %v4605 = vpop.f32.mrf.mxu0
  %v4606 = vpop.f32.mrf.mxu0
  %v4607 = vpop.f32.mrf.mxu0
  %4608 = vdwg.mxu0
  %v4610 = vsel %vm2204, %v4349, 0
  %4612 = vmatprep.subr.bf16.mxu0 0
  %4613 = vmatpush1.bf16.msra.mxu0 0
  %4614 = vmatprep.subr.bf16.mxu0 0
  %4615 = vmatpush1.bf16.msra.mxu0 0
  %4616 = vmatprep.subr.bf16.mxu0 0
  %4617 = vmatpush1.bf16.msra.mxu0 0
  %4618 = vmatprep.subr.bf16.mxu0 0
  %4619 = vmatpush1.bf16.msra.mxu0 0
  %4620 = vmatprep.subr.bf16.mxu0 0
  %4621 = vmatpush1.bf16.msra.mxu0 0
  %4622 = vmatprep.subr.bf16.mxu0 0
  %4623 = vmatpush1.bf16.msra.mxu0 0
  %4624 = vmatprep.subr.bf16.mxu0 0
  %4625 = vmatpush1.bf16.msra.mxu0 0
  %4626 = vmatprep.subr.bf16.mxu0 0
  %4627 = vmatpush1.bf16.msra.mxu0 %v3881
  %4628 = vmatprep.subr.bf16.mxu0 0
  %4629 = vmatpush2.bf16.msra.mxu0 0
  %4630 = vmatprep.subr.bf16.mxu0 0
  %4631 = vmatpush2.bf16.msra.mxu0 0
  %4632 = vmatprep.subr.bf16.mxu0 0
  %4633 = vmatpush2.bf16.msra.mxu0 0
  %4634 = vmatprep.subr.bf16.mxu0 0
  %4635 = vmatpush2.bf16.msra.mxu0 0
  %4636 = vmatprep.subr.bf16.mxu0 0
  %4637 = vmatpush2.bf16.msra.mxu0 0
  %4638 = vmatprep.subr.bf16.mxu0 0
  %4639 = vmatpush2.bf16.msra.mxu0 0
  %4640 = vmatprep.subr.bf16.mxu0 0
  %4641 = vmatpush2.bf16.msra.mxu0 0
  %4642 = vmatprep.subr.bf16.mxu0 0
  %4643 = vmatpush2.bf16.msra.mxu0 0
  %4644 = vmatprep.mubr.bf16.mxu0 0
  %4645 = vmatmul.mubr.bf16.gmra.mxu0 %v4610
  %v4646 = vpop.f32.mrf.mxu0
  %v4647 = vadd.f32 0.0, %v4646
  %v4648 = vpop.f32.mrf.mxu0
  %v4649 = vpop.f32.mrf.mxu0
  %v4650 = vpop.f32.mrf.mxu0
  %4651 = vdwg.mxu0
  %v4653 = vsel %vm2204, %v4350, 0
  %4655 = vmatprep.subr.bf16.mxu0 0
  %4656 = vmatpush1.bf16.msra.mxu0 0
  %4657 = vmatprep.subr.bf16.mxu0 0
  %4658 = vmatpush1.bf16.msra.mxu0 0
  %4659 = vmatprep.subr.bf16.mxu0 0
  %4660 = vmatpush1.bf16.msra.mxu0 0
  %4661 = vmatprep.subr.bf16.mxu0 0
  %4662 = vmatpush1.bf16.msra.mxu0 0
  %4663 = vmatprep.subr.bf16.mxu0 0
  %4664 = vmatpush1.bf16.msra.mxu0 0
  %4665 = vmatprep.subr.bf16.mxu0 0
  %4666 = vmatpush1.bf16.msra.mxu0 0
  %4667 = vmatprep.subr.bf16.mxu0 0
  %4668 = vmatpush1.bf16.msra.mxu0 0
  %4669 = vmatprep.subr.bf16.mxu0 0
  %4670 = vmatpush1.bf16.msra.mxu0 %v3885
  %4671 = vmatprep.subr.bf16.mxu0 0
  %4672 = vmatpush2.bf16.msra.mxu0 0
  %4673 = vmatprep.subr.bf16.mxu0 0
  %4674 = vmatpush2.bf16.msra.mxu0 0
  %4675 = vmatprep.subr.bf16.mxu0 0
  %4676 = vmatpush2.bf16.msra.mxu0 0
  %4677 = vmatprep.subr.bf16.mxu0 0
  %4678 = vmatpush2.bf16.msra.mxu0 0
  %4679 = vmatprep.subr.bf16.mxu0 0
  %4680 = vmatpush2.bf16.msra.mxu0 0
  %4681 = vmatprep.subr.bf16.mxu0 0
  %4682 = vmatpush2.bf16.msra.mxu0 0
  %4683 = vmatprep.subr.bf16.mxu0 0
  %4684 = vmatpush2.bf16.msra.mxu0 0
  %4685 = vmatprep.subr.bf16.mxu0 0
  %4686 = vmatpush2.bf16.msra.mxu0 0
  %4687 = vmatprep.mubr.bf16.mxu0 0
  %4688 = vmatmul.mubr.bf16.gmra.mxu0 %v4653
  %v4689 = vpop.f32.mrf.mxu0
  %v4690 = vadd.f32 0.0, %v4689
  %v4691 = vpop.f32.mrf.mxu0
  %v4692 = vpop.f32.mrf.mxu0
  %v4693 = vpop.f32.mrf.mxu0
  %4694 = vdwg.mxu0
  %v4695 = vcombine.low %v4389, %v4475
  %v4696 = vcombine.high %v4389, %v4475
  %v4698 = vunpack.c.l.s4 1983009808
  %v4699 = vunpack.c.0.s8 %v4698
  %v4700 = vlaneseq
  %v4701 = vshrl.u32 %v4700, 7
  %v4702 = vsub.s32 %v4699, %v4701
  %v4703 = vrot.slane %v4695, %v4702
  %v4705 = vunpack.c.l.s4 1983009808
  %v4706 = vunpack.c.0.s8 %v4705
  %v4707 = vlaneseq
  %v4708 = vshrl.u32 %v4707, 7
  %v4709 = vsub.s32 %v4706, %v4708
  %v4710 = vrot.slane %v4696, %v4709
  %v4711 = vcombine.low %v4432, %v4518
  %v4712 = vcombine.high %v4432, %v4518
  %v4714 = vunpack.c.l.s4 1983009808
  %v4715 = vunpack.c.0.s8 %v4714
  %v4716 = vlaneseq
  %v4717 = vshrl.u32 %v4716, 7
  %v4718 = vsub.s32 %v4715, %v4717
  %v4719 = vrot.slane %v4711, %v4718
  %v4721 = vunpack.c.l.s4 1983009808
  %v4722 = vunpack.c.0.s8 %v4721
  %v4723 = vlaneseq
  %v4724 = vshrl.u32 %v4723, 7
  %v4725 = vsub.s32 %v4722, %v4724
  %v4726 = vrot.slane %v4712, %v4725
  %v4727 = vcombine.low %v4703, %v4719
  %v4728 = vcombine.high %v4703, %v4719
  %v4730 = vunpack.c.l.s4 1934713408
  %v4731 = vunpack.c.0.s8 %v4730
  %v4732 = vlaneseq
  %v4733 = vshrl.u32 %v4732, 7
  %v4734 = vsub.s32 %v4731, %v4733
  %v4735 = vrot.slane %v4727, %v4734
  %v4737 = vunpack.c.l.s4 1934713408
  %v4738 = vunpack.c.0.s8 %v4737
  %v4739 = vlaneseq
  %v4740 = vshrl.u32 %v4739, 7
  %v4741 = vsub.s32 %v4738, %v4740
  %v4742 = vrot.slane %v4728, %v4741
  %v4743 = vcombine.low %v4710, %v4726
  %v4744 = vcombine.high %v4710, %v4726
  %v4746 = vunpack.c.l.s4 1934713408
  %v4747 = vunpack.c.0.s8 %v4746
  %v4748 = vlaneseq
  %v4749 = vshrl.u32 %v4748, 7
  %v4750 = vsub.s32 %v4747, %v4749
  %v4751 = vrot.slane %v4743, %v4750
  %v4753 = vunpack.c.l.s4 1934713408
  %v4754 = vunpack.c.0.s8 %v4753
  %v4755 = vlaneseq
  %v4756 = vshrl.u32 %v4755, 7
  %v4757 = vsub.s32 %v4754, %v4756
  %v4758 = vrot.slane %v4744, %v4757
  %v4759 = vcombine.high %v4735, 0.0
  %v4760 = vcombine.high %v4742, 0.0
  %v4761 = vcombine.high %v4751, 0.0
  %v4762 = vcombine.high %v4758, 0.0
  %v4763 = vcombine.low %v4561, %v4647
  %v4764 = vcombine.high %v4561, %v4647
  %v4766 = vunpack.c.l.s4 1983009808
  %v4767 = vunpack.c.0.s8 %v4766
  %v4768 = vlaneseq
  %v4769 = vshrl.u32 %v4768, 7
  %v4770 = vsub.s32 %v4767, %v4769
  %v4771 = vrot.slane %v4763, %v4770
  %v4773 = vunpack.c.l.s4 1983009808
  %v4774 = vunpack.c.0.s8 %v4773
  %v4775 = vlaneseq
  %v4776 = vshrl.u32 %v4775, 7
  %v4777 = vsub.s32 %v4774, %v4776
  %v4778 = vrot.slane %v4764, %v4777
  %v4779 = vcombine.low %v4604, %v4690
  %v4780 = vcombine.high %v4604, %v4690
  %v4782 = vunpack.c.l.s4 1983009808
  %v4783 = vunpack.c.0.s8 %v4782
  %v4784 = vlaneseq
  %v4785 = vshrl.u32 %v4784, 7
  %v4786 = vsub.s32 %v4783, %v4785
  %v4787 = vrot.slane %v4779, %v4786
  %v4789 = vunpack.c.l.s4 1983009808
  %v4790 = vunpack.c.0.s8 %v4789
  %v4791 = vlaneseq
  %v4792 = vshrl.u32 %v4791, 7
  %v4793 = vsub.s32 %v4790, %v4792
  %v4794 = vrot.slane %v4780, %v4793
  %v4795 = vcombine.low %v4771, %v4787
  %v4796 = vcombine.high %v4771, %v4787
  %v4798 = vunpack.c.l.s4 1934713408
  %v4799 = vunpack.c.0.s8 %v4798
  %v4800 = vlaneseq
  %v4801 = vshrl.u32 %v4800, 7
  %v4802 = vsub.s32 %v4799, %v4801
  %v4803 = vrot.slane %v4795, %v4802
  %v4805 = vunpack.c.l.s4 1934713408
  %v4806 = vunpack.c.0.s8 %v4805
  %v4807 = vlaneseq
  %v4808 = vshrl.u32 %v4807, 7
  %v4809 = vsub.s32 %v4806, %v4808
  %v4810 = vrot.slane %v4796, %v4809
  %v4811 = vcombine.low %v4778, %v4794
  %v4812 = vcombine.high %v4778, %v4794
  %v4814 = vunpack.c.l.s4 1934713408
  %v4815 = vunpack.c.0.s8 %v4814
  %v4816 = vlaneseq
  %v4817 = vshrl.u32 %v4816, 7
  %v4818 = vsub.s32 %v4815, %v4817
  %v4819 = vrot.slane %v4811, %v4818
  %v4821 = vunpack.c.l.s4 1934713408
  %v4822 = vunpack.c.0.s8 %v4821
  %v4823 = vlaneseq
  %v4824 = vshrl.u32 %v4823, 7
  %v4825 = vsub.s32 %v4822, %v4824
  %v4826 = vrot.slane %v4812, %v4825
  %v4827 = vcombine.high %v4803, 0.0
  %v4828 = vcombine.high %v4810, 0.0
  %v4829 = vcombine.high %v4819, 0.0
  %v4830 = vcombine.high %v4826, 0.0
  %v4831 = vcombine.low %v4735, %v4742
  %v4833 = vunpack.c.l.s4 1983009808
  %v4834 = vunpack.c.0.s8 %v4833
  %v4835 = vlaneseq
  %v4836 = vshrl.u32 %v4835, 7
  %v4837 = vsub.s32 %v4834, %v4836
  %v4838 = vrot.slane %v4831, %v4837
  %v4839 = vcombine.low %v4759, %v4760
  %v4841 = vunpack.c.l.s4 1983009808
  %v4842 = vunpack.c.0.s8 %v4841
  %v4843 = vlaneseq
  %v4844 = vshrl.u32 %v4843, 7
  %v4845 = vsub.s32 %v4842, %v4844
  %v4846 = vrot.slane %v4839, %v4845
  %v4847 = vcombine.low %v4751, %v4758
  %v4849 = vunpack.c.l.s4 1983009808
  %v4850 = vunpack.c.0.s8 %v4849
  %v4851 = vlaneseq
  %v4852 = vshrl.u32 %v4851, 7
  %v4853 = vsub.s32 %v4850, %v4852
  %v4854 = vrot.slane %v4847, %v4853
  %v4855 = vcombine.low %v4761, %v4762
  %v4857 = vunpack.c.l.s4 1983009808
  %v4858 = vunpack.c.0.s8 %v4857
  %v4859 = vlaneseq
  %v4860 = vshrl.u32 %v4859, 7
  %v4861 = vsub.s32 %v4858, %v4860
  %v4862 = vrot.slane %v4855, %v4861
  %v4863 = vcombine.low %v4838, %v4846
  %v4864 = vcombine.high %v4838, %v4846
  %v4866 = vunpack.c.l.s4 1934713408
  %v4867 = vunpack.c.0.s8 %v4866
  %v4868 = vlaneseq
  %v4869 = vshrl.u32 %v4868, 7
  %v4870 = vsub.s32 %v4867, %v4869
  %v4871 = vrot.slane %v4863, %v4870
  %v4873 = vunpack.c.l.s4 1934713408
  %v4874 = vunpack.c.0.s8 %v4873
  %v4875 = vlaneseq
  %v4876 = vshrl.u32 %v4875, 7
  %v4877 = vsub.s32 %v4874, %v4876
  %v4878 = vrot.slane %v4864, %v4877
  %v4879 = vcombine.low %v4854, %v4862
  %v4880 = vcombine.high %v4854, %v4862
  %v4882 = vunpack.c.l.s4 1934713408
  %v4883 = vunpack.c.0.s8 %v4882
  %v4884 = vlaneseq
  %v4885 = vshrl.u32 %v4884, 7
  %v4886 = vsub.s32 %v4883, %v4885
  %v4887 = vrot.slane %v4879, %v4886
  %v4889 = vunpack.c.l.s4 1934713408
  %v4890 = vunpack.c.0.s8 %v4889
  %v4891 = vlaneseq
  %v4892 = vshrl.u32 %v4891, 7
  %v4893 = vsub.s32 %v4890, %v4892
  %v4894 = vrot.slane %v4880, %v4893
  %v4895 = vcombine.low %v4871, %v4887
  %v4896 = vcombine.high %v4871, %v4887
  %v4897 = vcombine.low %v4878, %v4894
  %v4898 = vcombine.high %v4878, %v4894
  %v4899 = vcombine.low %v4803, %v4810
  %v4901 = vunpack.c.l.s4 1983009808
  %v4902 = vunpack.c.0.s8 %v4901
  %v4903 = vlaneseq
  %v4904 = vshrl.u32 %v4903, 7
  %v4905 = vsub.s32 %v4902, %v4904
  %v4906 = vrot.slane %v4899, %v4905
  %v4907 = vcombine.low %v4827, %v4828
  %v4909 = vunpack.c.l.s4 1983009808
  %v4910 = vunpack.c.0.s8 %v4909
  %v4911 = vlaneseq
  %v4912 = vshrl.u32 %v4911, 7
  %v4913 = vsub.s32 %v4910, %v4912
  %v4914 = vrot.slane %v4907, %v4913
  %v4915 = vcombine.low %v4819, %v4826
  %v4917 = vunpack.c.l.s4 1983009808
  %v4918 = vunpack.c.0.s8 %v4917
  %v4919 = vlaneseq
  %v4920 = vshrl.u32 %v4919, 7
  %v4921 = vsub.s32 %v4918, %v4920
  %v4922 = vrot.slane %v4915, %v4921
  %v4923 = vcombine.low %v4829, %v4830
  %v4925 = vunpack.c.l.s4 1983009808
  %v4926 = vunpack.c.0.s8 %v4925
  %v4927 = vlaneseq
  %v4928 = vshrl.u32 %v4927, 7
  %v4929 = vsub.s32 %v4926, %v4928
  %v4930 = vrot.slane %v4923, %v4929
  %v4931 = vcombine.low %v4906, %v4914
  %v4932 = vcombine.high %v4906, %v4914
  %v4934 = vunpack.c.l.s4 1934713408
  %v4935 = vunpack.c.0.s8 %v4934
  %v4936 = vlaneseq
  %v4937 = vshrl.u32 %v4936, 7
  %v4938 = vsub.s32 %v4935, %v4937
  %v4939 = vrot.slane %v4931, %v4938
  %v4941 = vunpack.c.l.s4 1934713408
  %v4942 = vunpack.c.0.s8 %v4941
  %v4943 = vlaneseq
  %v4944 = vshrl.u32 %v4943, 7
  %v4945 = vsub.s32 %v4942, %v4944
  %v4946 = vrot.slane %v4932, %v4945
  %v4947 = vcombine.low %v4922, %v4930
  %v4948 = vcombine.high %v4922, %v4930
  %v4950 = vunpack.c.l.s4 1934713408
  %v4951 = vunpack.c.0.s8 %v4950
  %v4952 = vlaneseq
  %v4953 = vshrl.u32 %v4952, 7
  %v4954 = vsub.s32 %v4951, %v4953
  %v4955 = vrot.slane %v4947, %v4954
  %v4957 = vunpack.c.l.s4 1934713408
  %v4958 = vunpack.c.0.s8 %v4957
  %v4959 = vlaneseq
  %v4960 = vshrl.u32 %v4959, 7
  %v4961 = vsub.s32 %v4958, %v4960
  %v4962 = vrot.slane %v4948, %v4961
  %v4963 = vcombine.low %v4939, %v4955
  %v4964 = vcombine.high %v4939, %v4955
  %v4965 = vcombine.low %v4946, %v4962
  %v4966 = vcombine.high %v4946, %v4962
  %4969 = vrot.lane.b32.xlu0 %v4896, 8
  %v4970 = vpop.permute.xlu0 %4969
  %4971 = vrot.lane.b32.xlu0 %v4964, 8
  %v4972 = vpop.permute.xlu0 %4971
  %4977 = vrot.lane.b32.xlu0 %v4897, 16
  %v4978 = vpop.permute.xlu0 %4977
  %4979 = vrot.lane.b32.xlu0 %v4965, 16
  %v4980 = vpop.permute.xlu0 %4979
  %4985 = vrot.lane.b32.xlu0 %v4898, 24
  %v4986 = vpop.permute.xlu0 %4985
  %4987 = vrot.lane.b32.xlu0 %v4966, 24
  %v4988 = vpop.permute.xlu0 %4987
  %v4991 = vsel %vm1072, %v4895, %v4970
  %v4992 = vsel %vm1072, %v4963, %v4972
  %v4993 = vsel %vm2204, %v4991, %v4978
  %v4994 = vsel %vm2204, %v4992, %v4980
  %v4995 = vsel %vm2207, %v4993, %v4986
  %v4996 = vsel %vm2207, %v4994, %v4988
  %v4997 = vpack.c.bf16 %v4996, %v4995
  %v4999 = vlaneseq
  %v5000 = vshrl.u32 %v4999, 7
  %v5001 = vsub.s32 0, %v5000
  %v5002 = vrot.slane %v2331, %v5001
  %v5008 = vunpack.c.l.b16 %v2327
  %v5009 = vunpack.c.l.b16 %v2328
  %v5010 = vunpack.c.l.b16 %v2329
  %v5011 = vunpack.c.l.b16 %v2330
  %v5012 = vpack.c.b16 %v5009, %v5008
  %v5013 = vpack.c.b16 %v5011, %v5010
  %v5017 = vsel %vm127, %v4997, 0
  %5019 = vmatprep.subr.bf16.mxu0 0
  %5020 = vmatpush1.bf16.msra.mxu0 0
  %5021 = vmatprep.subr.bf16.mxu0 0
  %5022 = vmatpush1.bf16.msra.mxu0 0
  %5023 = vmatprep.subr.bf16.mxu0 0
  %5024 = vmatpush1.bf16.msra.mxu0 0
  %5025 = vmatprep.subr.bf16.mxu0 0
  %5026 = vmatpush1.bf16.msra.mxu0 0
  %5027 = vmatprep.subr.bf16.mxu0 0
  %5028 = vmatpush1.bf16.msra.mxu0 0
  %5029 = vmatprep.subr.bf16.mxu0 0
  %5030 = vmatpush1.bf16.msra.mxu0 0
  %5031 = vmatprep.subr.bf16.mxu0 0
  %5032 = vmatpush1.bf16.msra.mxu0 %v5013
  %5033 = vmatprep.subr.bf16.mxu0 0
  %5034 = vmatpush1.bf16.msra.mxu0 %v5012
  %5035 = vmatprep.subr.bf16.mxu0 0
  %5036 = vmatpush2.bf16.msra.mxu0 0
  %5037 = vmatprep.subr.bf16.mxu0 0
  %5038 = vmatpush2.bf16.msra.mxu0 0
  %5039 = vmatprep.subr.bf16.mxu0 0
  %5040 = vmatpush2.bf16.msra.mxu0 0
  %5041 = vmatprep.subr.bf16.mxu0 0
  %5042 = vmatpush2.bf16.msra.mxu0 0
  %5043 = vmatprep.subr.bf16.mxu0 0
  %5044 = vmatpush2.bf16.msra.mxu0 0
  %5045 = vmatprep.subr.bf16.mxu0 0
  %5046 = vmatpush2.bf16.msra.mxu0 0
  %5047 = vmatprep.subr.bf16.mxu0 0
  %5048 = vmatpush2.bf16.msra.mxu0 0
  %5049 = vmatprep.subr.bf16.mxu0 0
  %5050 = vmatpush2.bf16.msra.mxu0 0
  %5051 = vmatprep.mubr.bf16.mxu0 0
  %5052 = vmatmul.mubr.bf16.gmra.mxu0 %v5017
  %v5053 = vpop.f32.mrf.mxu0
  %v5054 = vadd.f32 %v5002, %v5053
  %v5055 = vpop.f32.mrf.mxu0
  %v5056 = vpop.f32.mrf.mxu0
  %v5057 = vadd.f32 %v5002, %v5056
  %v5058 = vpop.f32.mrf.mxu0
  %5059 = vdwg.mxu0
  %v5060 = vadd.f32 %v2318, %v5054
  %v5061 = vadd.f32 %v2319, %v5057
  %v5062 = vld [vmem:[%s18] sm:$0x1]
  %v5063 = vld [vmem:[%s19] sm:$0x1]
  %v5064 = vsel %vm127, %v5060, 0.0
  %5065 = vadd.xlane.f32.xlu0 %v5064
  %v5066 = vpop.xlane.xlu0 %5065
  %v5067 = vsel %vm127, %v5061, 0.0
  %5068 = vadd.xlane.f32.xlu0 %v5067
  %v5069 = vpop.xlane.xlu0 %5068
  %v5070 = vmul.f32 %v5066, %v2283
  %v5071 = vmul.f32 %v5069, %v2283
  %v5072 = vsub.f32 %v5060, %v5070
  %v5073 = vsub.f32 %v5061, %v5071
  %v5074 = vmul.f32 %v5072, %v5072
  %v5075 = vmul.f32 %v5073, %v5073
  %v5076 = vsel %vm127, %v5074, 0.0
  %5077 = vadd.xlane.f32.xlu0 %v5076
  %v5078 = vpop.xlane.xlu0 %5077
  %v5079 = vsel %vm127, %v5075, 0.0
  %5080 = vadd.xlane.f32.xlu0 %v5079
  %v5081 = vpop.xlane.xlu0 %5080
  %v5082 = vmul.f32 %v5078, %v2283
  %v5083 = vmul.f32 %v5081, %v2283
  %v5084 = vadd.f32 %v5082, 1e-05
  %v5085 = vadd.f32 %v5083, 1e-05
  %v5086 = vrsqrt.pop %v5084
  %v5087 = vrsqrt.pop %v5085
  %v5088 = vmul.f32 %v5072, %v5086
  %v5089 = vmul.f32 %v5073, %v5087
  %v5091 = vlaneseq
  %v5092 = vshrl.u32 %v5091, 7
  %v5093 = vsub.s32 0, %v5092
  %v5094 = vrot.slane %v5062, %v5093
  %v5096 = vmul.f32 %v5088, %v5094
  %v5097 = vmul.f32 %v5089, %v5094
  %v5099 = vlaneseq
  %v5100 = vshrl.u32 %v5099, 7
  %v5101 = vsub.s32 0, %v5100
  %v5102 = vrot.slane %v5063, %v5101
  %v5104 = vadd.f32 %v5096, %v5102
  %v5105 = vadd.f32 %v5097, %v5102
  %v5106 = vpack.c.bf16 %v5105, %v5104
  %v5107 = vld [vmem:[%s12] sm:$0xf]
  %v5108 = vld [vmem:[%s12 + $0x4] sm:$0xf]
  %v5109 = vld [vmem:[%s12 + $0x8] sm:$0xf]
  %v5110 = vld [vmem:[%s12 + $0xc] sm:$0xf]
  %v5111 = vld [vmem:[%s13] sm:$0x1]
  %v5113 = vlaneseq
  %v5114 = vshrl.u32 %v5113, 7
  %v5115 = vsub.s32 0, %v5114
  %v5116 = vrot.slane %v5111, %v5115
  %v5122 = vunpack.c.l.b16 %v5107
  %v5123 = vunpack.c.l.b16 %v5108
  %v5124 = vunpack.c.l.b16 %v5109
  %v5125 = vunpack.c.l.b16 %v5110
  %v5126 = vpack.c.b16 %v5123, %v5122
  %v5127 = vpack.c.b16 %v5125, %v5124
  %v5131 = vsel %vm127, %v5106, 0
  %5133 = vmatprep.subr.bf16.mxu0 0
  %5134 = vmatpush1.bf16.msra.mxu0 0
  %5135 = vmatprep.subr.bf16.mxu0 0
  %5136 = vmatpush1.bf16.msra.mxu0 0
  %5137 = vmatprep.subr.bf16.mxu0 0
  %5138 = vmatpush1.bf16.msra.mxu0 0
  %5139 = vmatprep.subr.bf16.mxu0 0
  %5140 = vmatpush1.bf16.msra.mxu0 0
  %5141 = vmatprep.subr.bf16.mxu0 0
  %5142 = vmatpush1.bf16.msra.mxu0 0
  %5143 = vmatprep.subr.bf16.mxu0 0
  %5144 = vmatpush1.bf16.msra.mxu0 0
  %5145 = vmatprep.subr.bf16.mxu0 0
  %5146 = vmatpush1.bf16.msra.mxu0 %v5127
  %5147 = vmatprep.subr.bf16.mxu0 0
  %5148 = vmatpush1.bf16.msra.mxu0 %v5126
  %5149 = vmatprep.subr.bf16.mxu0 0
  %5150 = vmatpush2.bf16.msra.mxu0 0
  %5151 = vmatprep.subr.bf16.mxu0 0
  %5152 = vmatpush2.bf16.msra.mxu0 0
  %5153 = vmatprep.subr.bf16.mxu0 0
  %5154 = vmatpush2.bf16.msra.mxu0 0
  %5155 = vmatprep.subr.bf16.mxu0 0
  %5156 = vmatpush2.bf16.msra.mxu0 0
  %5157 = vmatprep.subr.bf16.mxu0 0
  %5158 = vmatpush2.bf16.msra.mxu0 0
  %5159 = vmatprep.subr.bf16.mxu0 0
  %5160 = vmatpush2.bf16.msra.mxu0 0
  %5161 = vmatprep.subr.bf16.mxu0 0
  %5162 = vmatpush2.bf16.msra.mxu0 0
  %5163 = vmatprep.subr.bf16.mxu0 0
  %5164 = vmatpush2.bf16.msra.mxu0 0
  %5165 = vmatprep.mubr.bf16.mxu0 0
  %5166 = vmatmul.mubr.bf16.gmra.mxu0 %v5131
  %v5167 = vpop.f32.mrf.mxu0
  %v5168 = vadd.f32 %v5116, %v5167
  %v5169 = vpop.f32.mrf.mxu0
  %v5170 = vpop.f32.mrf.mxu0
  %v5171 = vadd.f32 %v5116, %v5170
  %v5172 = vpop.f32.mrf.mxu0
  %5173 = vdwg.mxu0
  %v5174 = vmax.f32 %v5168, 0.0
  %v5175 = vmax.f32 %v5171, 0.0
  %v5176 = vpack.c.bf16 %v5175, %v5174
  %v5177 = vld [vmem:[%s14] sm:$0xf]
  %v5178 = vld [vmem:[%s14 + $0x4] sm:$0xf]
  %v5179 = vld [vmem:[%s14 + $0x8] sm:$0xf]
  %v5180 = vld [vmem:[%s14 + $0xc] sm:$0xf]
  %v5181 = vld [vmem:[%s14 + $0x10] sm:$0xf]
  %v5182 = vld [vmem:[%s14 + $0x14] sm:$0xf]
  %v5183 = vld [vmem:[%s14 + $0x18] sm:$0xf]
  %v5184 = vld [vmem:[%s14 + $0x1c] sm:$0xf]
  %v5185 = vld [vmem:[%s15] sm:$0x1]
  %v5187 = vlaneseq
  %v5188 = vshrl.u32 %v5187, 7
  %v5189 = vsub.s32 0, %v5188
  %v5190 = vrot.slane %v5185, %v5189
  %v5200 = vunpack.c.l.b16 %v5177
  %v5201 = vunpack.c.l.b16 %v5178
  %v5202 = vunpack.c.l.b16 %v5179
  %v5203 = vunpack.c.l.b16 %v5180
  %v5204 = vunpack.c.l.b16 %v5181
  %v5205 = vunpack.c.l.b16 %v5182
  %v5206 = vunpack.c.l.b16 %v5183
  %v5207 = vunpack.c.l.b16 %v5184
  %v5208 = vpack.c.b16 %v5201, %v5200
  %v5209 = vpack.c.b16 %v5203, %v5202
  %v5210 = vpack.c.b16 %v5205, %v5204
  %v5211 = vpack.c.b16 %v5207, %v5206
  %vm5216 = vcmask 523264
  %v5218 = vsel %vm5216, %v5176, 0
  %5220 = vmatprep.subr.bf16.mxu0 0
  %5221 = vmatpush1.bf16.msra.mxu0 0
  %5222 = vmatprep.subr.bf16.mxu0 0
  %5223 = vmatpush1.bf16.msra.mxu0 0
  %5224 = vmatprep.subr.bf16.mxu0 0
  %5225 = vmatpush1.bf16.msra.mxu0 0
  %5226 = vmatprep.subr.bf16.mxu0 0
  %5227 = vmatpush1.bf16.msra.mxu0 0
  %5228 = vmatprep.subr.bf16.mxu0 0
  %5229 = vmatpush1.bf16.msra.mxu0 %v5211
  %5230 = vmatprep.subr.bf16.mxu0 0
  %5231 = vmatpush1.bf16.msra.mxu0 %v5210
  %5232 = vmatprep.subr.bf16.mxu0 0
  %5233 = vmatpush1.bf16.msra.mxu0 %v5209
  %5234 = vmatprep.subr.bf16.mxu0 0
  %5235 = vmatpush1.bf16.msra.mxu0 %v5208
  %5236 = vmatprep.subr.bf16.mxu0 0
  %5237 = vmatpush2.bf16.msra.mxu0 0
  %5238 = vmatprep.subr.bf16.mxu0 0
  %5239 = vmatpush2.bf16.msra.mxu0 0
  %5240 = vmatprep.subr.bf16.mxu0 0
  %5241 = vmatpush2.bf16.msra.mxu0 0
  %5242 = vmatprep.subr.bf16.mxu0 0
  %5243 = vmatpush2.bf16.msra.mxu0 0
  %5244 = vmatprep.subr.bf16.mxu0 0
  %5245 = vmatpush2.bf16.msra.mxu0 0
  %5246 = vmatprep.subr.bf16.mxu0 0
  %5247 = vmatpush2.bf16.msra.mxu0 0
  %5248 = vmatprep.subr.bf16.mxu0 0
  %5249 = vmatpush2.bf16.msra.mxu0 0
  %5250 = vmatprep.subr.bf16.mxu0 0
  %5251 = vmatpush2.bf16.msra.mxu0 0
  %5252 = vmatprep.mubr.bf16.mxu0 0
  %5253 = vmatmul.mubr.bf16.gmra.mxu0 %v5218
  %v5254 = vpop.f32.mrf.mxu0
  %v5255 = vadd.f32 %v5190, %v5254
  %v5256 = vpop.f32.mrf.mxu0
  %v5257 = vpop.f32.mrf.mxu0
  %v5258 = vadd.f32 %v5190, %v5257
  %v5259 = vpop.f32.mrf.mxu0
  %5260 = vdwg.mxu0
  %v5261 = vadd.f32 %v5104, %v5255
  %v5262 = vadd.f32 %v5105, %v5258
  %v5263 = vld [vmem:[%s20] sm:$0x1]
  %v5264 = vld [vmem:[%s21] sm:$0x1]
  %v5265 = vsel %vm127, %v5261, 0.0
  %5266 = vadd.xlane.f32.xlu0 %v5265
  %v5267 = vpop.xlane.xlu0 %5266
  %v5268 = vsel %vm127, %v5262, 0.0
  %5269 = vadd.xlane.f32.xlu0 %v5268
  %v5270 = vpop.xlane.xlu0 %5269
  %v5271 = vmul.f32 %v5267, %v2283
  %v5272 = vmul.f32 %v5270, %v2283
  %v5273 = vsub.f32 %v5261, %v5271
  %v5274 = vsub.f32 %v5262, %v5272
  %v5275 = vmul.f32 %v5273, %v5273
  %v5276 = vmul.f32 %v5274, %v5274
  %v5277 = vsel %vm127, %v5275, 0.0
  %5278 = vadd.xlane.f32.xlu0 %v5277
  %v5279 = vpop.xlane.xlu0 %5278
  %v5280 = vsel %vm127, %v5276, 0.0
  %5281 = vadd.xlane.f32.xlu0 %v5280
  %v5282 = vpop.xlane.xlu0 %5281
  %v5283 = vmul.f32 %v5279, %v2283
  %v5284 = vmul.f32 %v5282, %v2283
  %v5285 = vadd.f32 %v5283, 1e-05
  %v5286 = vadd.f32 %v5284, 1e-05
  %v5287 = vrsqrt.pop %v5285
  %v5288 = vrsqrt.pop %v5286
  %v5289 = vmul.f32 %v5273, %v5287
  %v5290 = vmul.f32 %v5274, %v5288
  %v5292 = vlaneseq
  %v5293 = vshrl.u32 %v5292, 7
  %v5294 = vsub.s32 0, %v5293
  %v5295 = vrot.slane %v5263, %v5294
  %v5297 = vmul.f32 %v5289, %v5295
  %v5298 = vmul.f32 %v5290, %v5295
  %v5300 = vlaneseq
  %v5301 = vshrl.u32 %v5300, 7
  %v5302 = vsub.s32 0, %v5301
  %v5303 = vrot.slane %v5264, %v5302
  %v5305 = vadd.f32 %v5297, %v5303
  %v5306 = vadd.f32 %v5298, %v5303
  %v5307 = vadd.f32 %v5305, %v90
  %v5308 = vadd.f32 %v5306, %v91
  %s5309 = scalar_lea.vmem %s4, 16
  %v5310 = vld [vmem:[%s5309] sm:$0xf]
  %v5311 = vld [vmem:[%s5309 + $0x4] sm:$0xf]
  %v5312 = vld [vmem:[%s5309 + $0x8] sm:$0xf]
  %v5313 = vld [vmem:[%s5309 + $0xc] sm:$0xf]
  %s5314 = scalar_lea.vmem %s5, 1
  %v5315 = vld [vmem:[%s5314] sm:$0x1]
  %s5316 = scalar_lea.vmem %s6, 16
  %v5317 = vld [vmem:[%s5316] sm:$0xf]
  %v5318 = vld [vmem:[%s5316 + $0x4] sm:$0xf]
  %v5319 = vld [vmem:[%s5316 + $0x8] sm:$0xf]
  %v5320 = vld [vmem:[%s5316 + $0xc] sm:$0xf]
  %s5321 = scalar_lea.vmem %s7, 1
  %v5322 = vld [vmem:[%s5321] sm:$0x1]
  %v5323 = vpack.c.bf16 %v5308, %v5307
  %v5325 = vlaneseq
  %v5326 = vshrl.u32 %v5325, 7
  %v5327 = vsub.s32 0, %v5326
  %v5328 = vrot.slane %v5315, %v5327
  %v5334 = vunpack.c.l.b16 %v5310
  %v5335 = vunpack.c.l.b16 %v5311
  %v5336 = vunpack.c.l.b16 %v5312
  %v5337 = vunpack.c.l.b16 %v5313
  %v5338 = vpack.c.b16 %v5335, %v5334
  %v5339 = vpack.c.b16 %v5337, %v5336
  %v5343 = vsel %vm127, %v5323, 0
  %5345 = vmatprep.subr.bf16.mxu0 0
  %5346 = vmatpush1.bf16.msra.mxu0 0
  %5347 = vmatprep.subr.bf16.mxu0 0
  %5348 = vmatpush1.bf16.msra.mxu0 0
  %5349 = vmatprep.subr.bf16.mxu0 0
  %5350 = vmatpush1.bf16.msra.mxu0 0
  %5351 = vmatprep.subr.bf16.mxu0 0
  %5352 = vmatpush1.bf16.msra.mxu0 0
  %5353 = vmatprep.subr.bf16.mxu0 0
  %5354 = vmatpush1.bf16.msra.mxu0 0
  %5355 = vmatprep.subr.bf16.mxu0 0
  %5356 = vmatpush1.bf16.msra.mxu0 0
  %5357 = vmatprep.subr.bf16.mxu0 0
  %5358 = vmatpush1.bf16.msra.mxu0 %v5339
  %5359 = vmatprep.subr.bf16.mxu0 0
  %5360 = vmatpush1.bf16.msra.mxu0 %v5338
  %5361 = vmatprep.subr.bf16.mxu0 0
  %5362 = vmatpush2.bf16.msra.mxu0 0
  %5363 = vmatprep.subr.bf16.mxu0 0
  %5364 = vmatpush2.bf16.msra.mxu0 0
  %5365 = vmatprep.subr.bf16.mxu0 0
  %5366 = vmatpush2.bf16.msra.mxu0 0
  %5367 = vmatprep.subr.bf16.mxu0 0
  %5368 = vmatpush2.bf16.msra.mxu0 0
  %5369 = vmatprep.subr.bf16.mxu0 0
  %5370 = vmatpush2.bf16.msra.mxu0 0
  %5371 = vmatprep.subr.bf16.mxu0 0
  %5372 = vmatpush2.bf16.msra.mxu0 0
  %5373 = vmatprep.subr.bf16.mxu0 0
  %5374 = vmatpush2.bf16.msra.mxu0 0
  %5375 = vmatprep.subr.bf16.mxu0 0
  %5376 = vmatpush2.bf16.msra.mxu0 0
  %5377 = vmatprep.mubr.bf16.mxu0 0
  %5378 = vmatmul.mubr.bf16.gmra.mxu0 %v5343
  %v5379 = vpop.f32.mrf.mxu0
  %v5380 = vadd.f32 %v5328, %v5379
  %v5381 = vpop.f32.mrf.mxu0
  %v5382 = vpop.f32.mrf.mxu0
  %v5383 = vadd.f32 %v5328, %v5382
  %v5384 = vpop.f32.mrf.mxu0
  %5385 = vdwg.mxu0
  %v5386 = vpack.c.bf16 %v5306, %v5305
  %5387 = vrot.lane.b32.xlu0 %v5338, 64
  %v5388 = vpop.permute.xlu0 %5387
  %5389 = vrot.lane.b32.xlu0 %v5339, 64
  %v5390 = vpop.permute.xlu0 %5389
  %5393 = vrot.lane.b32.xlu0 %v5328, 64
  %v5394 = vpop.permute.xlu0 %5393
  %v5397 = vsel %vm127, %v5386, 0
  %5399 = vmatprep.subr.bf16.mxu0 0
  %5400 = vmatpush1.bf16.msra.mxu0 0
  %5401 = vmatprep.subr.bf16.mxu0 0
  %5402 = vmatpush1.bf16.msra.mxu0 0
  %5403 = vmatprep.subr.bf16.mxu0 0
  %5404 = vmatpush1.bf16.msra.mxu0 0
  %5405 = vmatprep.subr.bf16.mxu0 0
  %5406 = vmatpush1.bf16.msra.mxu0 0
  %5407 = vmatprep.subr.bf16.mxu0 0
  %5408 = vmatpush1.bf16.msra.mxu0 0
  %5409 = vmatprep.subr.bf16.mxu0 0
  %5410 = vmatpush1.bf16.msra.mxu0 0
  %5411 = vmatprep.subr.bf16.mxu0 0
  %5412 = vmatpush1.bf16.msra.mxu0 %v5390
  %5413 = vmatprep.subr.bf16.mxu0 0
  %5414 = vmatpush1.bf16.msra.mxu0 %v5388
  %5415 = vmatprep.subr.bf16.mxu0 0
  %5416 = vmatpush2.bf16.msra.mxu0 0
  %5417 = vmatprep.subr.bf16.mxu0 0
  %5418 = vmatpush2.bf16.msra.mxu0 0
  %5419 = vmatprep.subr.bf16.mxu0 0
  %5420 = vmatpush2.bf16.msra.mxu0 0
  %5421 = vmatprep.subr.bf16.mxu0 0
  %5422 = vmatpush2.bf16.msra.mxu0 0
  %5423 = vmatprep.subr.bf16.mxu0 0
  %5424 = vmatpush2.bf16.msra.mxu0 0
  %5425 = vmatprep.subr.bf16.mxu0 0
  %5426 = vmatpush2.bf16.msra.mxu0 0
  %5427 = vmatprep.subr.bf16.mxu0 0
  %5428 = vmatpush2.bf16.msra.mxu0 0
  %5429 = vmatprep.subr.bf16.mxu0 0
  %5430 = vmatpush2.bf16.msra.mxu0 0
  %5431 = vmatprep.mubr.bf16.mxu0 0
  %5432 = vmatmul.mubr.bf16.gmra.mxu0 %v5397
  %v5433 = vpop.f32.mrf.mxu0
  %v5434 = vadd.f32 %v5394, %v5433
  %v5435 = vpop.f32.mrf.mxu0
  %v5436 = vpop.f32.mrf.mxu0
  %v5437 = vadd.f32 %v5394, %v5436
  %v5438 = vpop.f32.mrf.mxu0
  %5439 = vdwg.mxu0
  %v5440 = vpack.c.bf16 %v5383, %v5380
  %5442 = vrot.lane.b32.xlu0 %v5440, 120
  %v5443 = vpop.permute.xlu0 %5442
  %5444 = vrot.lane.b32.xlu0 %v5440, 112
  %v5445 = vpop.permute.xlu0 %5444
  %5446 = vrot.lane.b32.xlu0 %v5440, 104
  %v5447 = vpop.permute.xlu0 %5446
  %v5450 = vpack.i.b16 %v5443, %v5440
  %v5452 = vshrl.u32 %v5440, 16
  %v5453 = vshrl.u32 %v5443, 16
  %v5454 = vpack.i.b16 %v5453, %v5452
  %v5458 = vpack.i.b16 %v5447, %v5445
  %v5460 = vshrl.u32 %v5445, 16
  %v5461 = vshrl.u32 %v5447, 16
  %v5462 = vpack.i.b16 %v5461, %v5460
  %v5464 = vcombine.high %v5450, %v251
  %v5466 = vunpack.c.l.s4 1983009808
  %v5467 = vunpack.c.0.s8 %v5466
  %v5468 = vlaneseq
  %v5469 = vshrl.u32 %v5468, 7
  %v5470 = vsub.s32 %v5467, %v5469
  %v5471 = vrot.slane %v5450, %v5470
  %v5473 = vunpack.c.l.s4 1983009808
  %v5474 = vunpack.c.0.s8 %v5473
  %v5475 = vlaneseq
  %v5476 = vshrl.u32 %v5475, 7
  %v5477 = vsub.s32 %v5474, %v5476
  %v5478 = vrot.slane %v5464, %v5477
  %v5479 = vcombine.high %v5458, %v251
  %v5481 = vunpack.c.l.s4 1983009808
  %v5482 = vunpack.c.0.s8 %v5481
  %v5483 = vlaneseq
  %v5484 = vshrl.u32 %v5483, 7
  %v5485 = vsub.s32 %v5482, %v5484
  %v5486 = vrot.slane %v5458, %v5485
  %v5488 = vunpack.c.l.s4 1983009808
  %v5489 = vunpack.c.0.s8 %v5488
  %v5490 = vlaneseq
  %v5491 = vshrl.u32 %v5490, 7
  %v5492 = vsub.s32 %v5489, %v5491
  %v5493 = vrot.slane %v5479, %v5492
  %v5494 = vcombine.low %v5471, %v5486
  %v5495 = vcombine.high %v5471, %v5486
  %v5497 = vunpack.c.l.s4 1934713408
  %v5498 = vunpack.c.0.s8 %v5497
  %v5499 = vlaneseq
  %v5500 = vshrl.u32 %v5499, 7
  %v5501 = vsub.s32 %v5498, %v5500
  %v5502 = vrot.slane %v5494, %v5501
  %v5504 = vunpack.c.l.s4 1934713408
  %v5505 = vunpack.c.0.s8 %v5504
  %v5506 = vlaneseq
  %v5507 = vshrl.u32 %v5506, 7
  %v5508 = vsub.s32 %v5505, %v5507
  %v5509 = vrot.slane %v5495, %v5508
  %v5510 = vcombine.low %v5478, %v5493
  %v5511 = vcombine.high %v5478, %v5493
  %v5513 = vunpack.c.l.s4 1934713408
  %v5514 = vunpack.c.0.s8 %v5513
  %v5515 = vlaneseq
  %v5516 = vshrl.u32 %v5515, 7
  %v5517 = vsub.s32 %v5514, %v5516
  %v5518 = vrot.slane %v5510, %v5517
  %v5520 = vunpack.c.l.s4 1934713408
  %v5521 = vunpack.c.0.s8 %v5520
  %v5522 = vlaneseq
  %v5523 = vshrl.u32 %v5522, 7
  %v5524 = vsub.s32 %v5521, %v5523
  %v5525 = vrot.slane %v5511, %v5524
  %v5526 = vcombine.high %v5502, 0
  %v5527 = vcombine.high %v5509, 0
  %v5528 = vcombine.high %v5518, 0
  %v5529 = vcombine.high %v5525, 0
  %v5530 = vcombine.high %v5454, %v254
  %v5532 = vunpack.c.l.s4 1983009808
  %v5533 = vunpack.c.0.s8 %v5532
  %v5534 = vlaneseq
  %v5535 = vshrl.u32 %v5534, 7
  %v5536 = vsub.s32 %v5533, %v5535
  %v5537 = vrot.slane %v5454, %v5536
  %v5539 = vunpack.c.l.s4 1983009808
  %v5540 = vunpack.c.0.s8 %v5539
  %v5541 = vlaneseq
  %v5542 = vshrl.u32 %v5541, 7
  %v5543 = vsub.s32 %v5540, %v5542
  %v5544 = vrot.slane %v5530, %v5543
  %v5545 = vcombine.high %v5462, %v254
  %v5547 = vunpack.c.l.s4 1983009808
  %v5548 = vunpack.c.0.s8 %v5547
  %v5549 = vlaneseq
  %v5550 = vshrl.u32 %v5549, 7
  %v5551 = vsub.s32 %v5548, %v5550
  %v5552 = vrot.slane %v5462, %v5551
  %v5554 = vunpack.c.l.s4 1983009808
  %v5555 = vunpack.c.0.s8 %v5554
  %v5556 = vlaneseq
  %v5557 = vshrl.u32 %v5556, 7
  %v5558 = vsub.s32 %v5555, %v5557
  %v5559 = vrot.slane %v5545, %v5558
  %v5560 = vcombine.low %v5537, %v5552
  %v5561 = vcombine.high %v5537, %v5552
  %v5563 = vunpack.c.l.s4 1934713408
  %v5564 = vunpack.c.0.s8 %v5563
  %v5565 = vlaneseq
  %v5566 = vshrl.u32 %v5565, 7
  %v5567 = vsub.s32 %v5564, %v5566
  %v5568 = vrot.slane %v5560, %v5567
  %v5570 = vunpack.c.l.s4 1934713408
  %v5571 = vunpack.c.0.s8 %v5570
  %v5572 = vlaneseq
  %v5573 = vshrl.u32 %v5572, 7
  %v5574 = vsub.s32 %v5571, %v5573
  %v5575 = vrot.slane %v5561, %v5574
  %v5576 = vcombine.low %v5544, %v5559
  %v5577 = vcombine.high %v5544, %v5559
  %v5579 = vunpack.c.l.s4 1934713408
  %v5580 = vunpack.c.0.s8 %v5579
  %v5581 = vlaneseq
  %v5582 = vshrl.u32 %v5581, 7
  %v5583 = vsub.s32 %v5580, %v5582
  %v5584 = vrot.slane %v5576, %v5583
  %v5586 = vunpack.c.l.s4 1934713408
  %v5587 = vunpack.c.0.s8 %v5586
  %v5588 = vlaneseq
  %v5589 = vshrl.u32 %v5588, 7
  %v5590 = vsub.s32 %v5587, %v5589
  %v5591 = vrot.slane %v5577, %v5590
  %v5592 = vcombine.high %v5568, 0
  %v5593 = vcombine.high %v5575, 0
  %v5594 = vcombine.high %v5584, 0
  %v5595 = vcombine.high %v5591, 0
  %v5596 = vcombine.low %v5502, %v5509
  %v5598 = vunpack.c.l.s4 1983009808
  %v5599 = vunpack.c.0.s8 %v5598
  %v5600 = vlaneseq
  %v5601 = vshrl.u32 %v5600, 7
  %v5602 = vsub.s32 %v5599, %v5601
  %v5603 = vrot.slane %v5596, %v5602
  %v5604 = vcombine.low %v5526, %v5527
  %v5606 = vunpack.c.l.s4 1983009808
  %v5607 = vunpack.c.0.s8 %v5606
  %v5608 = vlaneseq
  %v5609 = vshrl.u32 %v5608, 7
  %v5610 = vsub.s32 %v5607, %v5609
  %v5611 = vrot.slane %v5604, %v5610
  %v5612 = vcombine.low %v5603, %v5611
  %v5614 = vunpack.c.l.s4 1934713408
  %v5615 = vunpack.c.0.s8 %v5614
  %v5616 = vlaneseq
  %v5617 = vshrl.u32 %v5616, 7
  %v5618 = vsub.s32 %v5615, %v5617
  %v5619 = vrot.slane %v5612, %v5618
  %v5620 = vcombine.high %v5619, 0
  %v5621 = vcombine.low %v5568, %v5575
  %v5623 = vunpack.c.l.s4 1983009808
  %v5624 = vunpack.c.0.s8 %v5623
  %v5625 = vlaneseq
  %v5626 = vshrl.u32 %v5625, 7
  %v5627 = vsub.s32 %v5624, %v5626
  %v5628 = vrot.slane %v5621, %v5627
  %v5629 = vcombine.low %v5592, %v5593
  %v5631 = vunpack.c.l.s4 1983009808
  %v5632 = vunpack.c.0.s8 %v5631
  %v5633 = vlaneseq
  %v5634 = vshrl.u32 %v5633, 7
  %v5635 = vsub.s32 %v5632, %v5634
  %v5636 = vrot.slane %v5629, %v5635
  %v5637 = vcombine.low %v5628, %v5636
  %v5639 = vunpack.c.l.s4 1934713408
  %v5640 = vunpack.c.0.s8 %v5639
  %v5641 = vlaneseq
  %v5642 = vshrl.u32 %v5641, 7
  %v5643 = vsub.s32 %v5640, %v5642
  %v5644 = vrot.slane %v5637, %v5643
  %v5645 = vcombine.high %v5644, 0
  %v5646 = vcombine.low %v5518, %v5525
  %v5648 = vunpack.c.l.s4 1983009808
  %v5649 = vunpack.c.0.s8 %v5648
  %v5650 = vlaneseq
  %v5651 = vshrl.u32 %v5650, 7
  %v5652 = vsub.s32 %v5649, %v5651
  %v5653 = vrot.slane %v5646, %v5652
  %v5654 = vcombine.low %v5528, %v5529
  %v5656 = vunpack.c.l.s4 1983009808
  %v5657 = vunpack.c.0.s8 %v5656
  %v5658 = vlaneseq
  %v5659 = vshrl.u32 %v5658, 7
  %v5660 = vsub.s32 %v5657, %v5659
  %v5661 = vrot.slane %v5654, %v5660
  %v5662 = vcombine.low %v5653, %v5661
  %v5664 = vunpack.c.l.s4 1934713408
  %v5665 = vunpack.c.0.s8 %v5664
  %v5666 = vlaneseq
  %v5667 = vshrl.u32 %v5666, 7
  %v5668 = vsub.s32 %v5665, %v5667
  %v5669 = vrot.slane %v5662, %v5668
  %v5670 = vcombine.high %v5669, 0
  %v5671 = vcombine.low %v5584, %v5591
  %v5673 = vunpack.c.l.s4 1983009808
  %v5674 = vunpack.c.0.s8 %v5673
  %v5675 = vlaneseq
  %v5676 = vshrl.u32 %v5675, 7
  %v5677 = vsub.s32 %v5674, %v5676
  %v5678 = vrot.slane %v5671, %v5677
  %v5679 = vcombine.low %v5594, %v5595
  %v5681 = vunpack.c.l.s4 1983009808
  %v5682 = vunpack.c.0.s8 %v5681
  %v5683 = vlaneseq
  %v5684 = vshrl.u32 %v5683, 7
  %v5685 = vsub.s32 %v5682, %v5684
  %v5686 = vrot.slane %v5679, %v5685
  %v5687 = vcombine.low %v5678, %v5686
  %v5689 = vunpack.c.l.s4 1934713408
  %v5690 = vunpack.c.0.s8 %v5689
  %v5691 = vlaneseq
  %v5692 = vshrl.u32 %v5691, 7
  %v5693 = vsub.s32 %v5690, %v5692
  %v5694 = vrot.slane %v5687, %v5693
  %v5695 = vcombine.high %v5694, 0
  %v5698 = vpack.i.b16 %v5644, %v5619
  %v5699 = vshrl.u32 %v5619, 16
  %v5700 = vshrl.u32 %v5644, 16
  %v5701 = vpack.i.b16 %v5700, %v5699
  %v5704 = vpack.i.b16 %v5645, %v5620
  %v5705 = vshrl.u32 %v5620, 16
  %v5706 = vshrl.u32 %v5645, 16
  %v5707 = vpack.i.b16 %v5706, %v5705
  %v5710 = vpack.i.b16 %v5694, %v5669
  %v5711 = vshrl.u32 %v5669, 16
  %v5712 = vshrl.u32 %v5694, 16
  %v5713 = vpack.i.b16 %v5712, %v5711
  %v5716 = vpack.i.b16 %v5695, %v5670
  %v5717 = vshrl.u32 %v5670, 16
  %v5718 = vshrl.u32 %v5695, 16
  %v5719 = vpack.i.b16 %v5718, %v5717
  %5720 = vrot.lane.b32.xlu0 %v5440, 96
  %v5721 = vpop.permute.xlu0 %5720
  %5722 = vrot.lane.b32.xlu0 %v5443, 96
  %v5723 = vpop.permute.xlu0 %5722
  %5724 = vrot.lane.b32.xlu0 %v5445, 96
  %v5725 = vpop.permute.xlu0 %5724
  %5726 = vrot.lane.b32.xlu0 %v5447, 96
  %v5727 = vpop.permute.xlu0 %5726
  %v5730 = vpack.i.b16 %v5723, %v5721
  %v5732 = vshrl.u32 %v5721, 16
  %v5733 = vshrl.u32 %v5723, 16
  %v5734 = vpack.i.b16 %v5733, %v5732
  %v5738 = vpack.i.b16 %v5727, %v5725
  %v5740 = vshrl.u32 %v5725, 16
  %v5741 = vshrl.u32 %v5727, 16
  %v5742 = vpack.i.b16 %v5741, %v5740
  %v5744 = vcombine.high %v5730, %v251
  %v5746 = vunpack.c.l.s4 1983009808
  %v5747 = vunpack.c.0.s8 %v5746
  %v5748 = vlaneseq
  %v5749 = vshrl.u32 %v5748, 7
  %v5750 = vsub.s32 %v5747, %v5749
  %v5751 = vrot.slane %v5730, %v5750
  %v5753 = vunpack.c.l.s4 1983009808
  %v5754 = vunpack.c.0.s8 %v5753
  %v5755 = vlaneseq
  %v5756 = vshrl.u32 %v5755, 7
  %v5757 = vsub.s32 %v5754, %v5756
  %v5758 = vrot.slane %v5744, %v5757
  %v5759 = vcombine.high %v5738, %v251
  %v5761 = vunpack.c.l.s4 1983009808
  %v5762 = vunpack.c.0.s8 %v5761
  %v5763 = vlaneseq
  %v5764 = vshrl.u32 %v5763, 7
  %v5765 = vsub.s32 %v5762, %v5764
  %v5766 = vrot.slane %v5738, %v5765
  %v5768 = vunpack.c.l.s4 1983009808
  %v5769 = vunpack.c.0.s8 %v5768
  %v5770 = vlaneseq
  %v5771 = vshrl.u32 %v5770, 7
  %v5772 = vsub.s32 %v5769, %v5771
  %v5773 = vrot.slane %v5759, %v5772
  %v5774 = vcombine.low %v5751, %v5766
  %v5775 = vcombine.high %v5751, %v5766
  %v5777 = vunpack.c.l.s4 1934713408
  %v5778 = vunpack.c.0.s8 %v5777
  %v5779 = vlaneseq
  %v5780 = vshrl.u32 %v5779, 7
  %v5781 = vsub.s32 %v5778, %v5780
  %v5782 = vrot.slane %v5774, %v5781
  %v5784 = vunpack.c.l.s4 1934713408
  %v5785 = vunpack.c.0.s8 %v5784
  %v5786 = vlaneseq
  %v5787 = vshrl.u32 %v5786, 7
  %v5788 = vsub.s32 %v5785, %v5787
  %v5789 = vrot.slane %v5775, %v5788
  %v5790 = vcombine.low %v5758, %v5773
  %v5791 = vcombine.high %v5758, %v5773
  %v5793 = vunpack.c.l.s4 1934713408
  %v5794 = vunpack.c.0.s8 %v5793
  %v5795 = vlaneseq
  %v5796 = vshrl.u32 %v5795, 7
  %v5797 = vsub.s32 %v5794, %v5796
  %v5798 = vrot.slane %v5790, %v5797
  %v5800 = vunpack.c.l.s4 1934713408
  %v5801 = vunpack.c.0.s8 %v5800
  %v5802 = vlaneseq
  %v5803 = vshrl.u32 %v5802, 7
  %v5804 = vsub.s32 %v5801, %v5803
  %v5805 = vrot.slane %v5791, %v5804
  %v5806 = vcombine.high %v5782, 0
  %v5807 = vcombine.high %v5789, 0
  %v5808 = vcombine.high %v5798, 0
  %v5809 = vcombine.high %v5805, 0
  %v5810 = vcombine.high %v5734, %v254
  %v5812 = vunpack.c.l.s4 1983009808
  %v5813 = vunpack.c.0.s8 %v5812
  %v5814 = vlaneseq
  %v5815 = vshrl.u32 %v5814, 7
  %v5816 = vsub.s32 %v5813, %v5815
  %v5817 = vrot.slane %v5734, %v5816
  %v5819 = vunpack.c.l.s4 1983009808
  %v5820 = vunpack.c.0.s8 %v5819
  %v5821 = vlaneseq
  %v5822 = vshrl.u32 %v5821, 7
  %v5823 = vsub.s32 %v5820, %v5822
  %v5824 = vrot.slane %v5810, %v5823
  %v5825 = vcombine.high %v5742, %v254
  %v5827 = vunpack.c.l.s4 1983009808
  %v5828 = vunpack.c.0.s8 %v5827
  %v5829 = vlaneseq
  %v5830 = vshrl.u32 %v5829, 7
  %v5831 = vsub.s32 %v5828, %v5830
  %v5832 = vrot.slane %v5742, %v5831
  %v5834 = vunpack.c.l.s4 1983009808
  %v5835 = vunpack.c.0.s8 %v5834
  %v5836 = vlaneseq
  %v5837 = vshrl.u32 %v5836, 7
  %v5838 = vsub.s32 %v5835, %v5837
  %v5839 = vrot.slane %v5825, %v5838
  %v5840 = vcombine.low %v5817, %v5832
  %v5841 = vcombine.high %v5817, %v5832
  %v5843 = vunpack.c.l.s4 1934713408
  %v5844 = vunpack.c.0.s8 %v5843
  %v5845 = vlaneseq
  %v5846 = vshrl.u32 %v5845, 7
  %v5847 = vsub.s32 %v5844, %v5846
  %v5848 = vrot.slane %v5840, %v5847
  %v5850 = vunpack.c.l.s4 1934713408
  %v5851 = vunpack.c.0.s8 %v5850
  %v5852 = vlaneseq
  %v5853 = vshrl.u32 %v5852, 7
  %v5854 = vsub.s32 %v5851, %v5853
  %v5855 = vrot.slane %v5841, %v5854
  %v5856 = vcombine.low %v5824, %v5839
  %v5857 = vcombine.high %v5824, %v5839
  %v5859 = vunpack.c.l.s4 1934713408
  %v5860 = vunpack.c.0.s8 %v5859
  %v5861 = vlaneseq
  %v5862 = vshrl.u32 %v5861, 7
  %v5863 = vsub.s32 %v5860, %v5862
  %v5864 = vrot.slane %v5856, %v5863
  %v5866 = vunpack.c.l.s4 1934713408
  %v5867 = vunpack.c.0.s8 %v5866
  %v5868 = vlaneseq
  %v5869 = vshrl.u32 %v5868, 7
  %v5870 = vsub.s32 %v5867, %v5869
  %v5871 = vrot.slane %v5857, %v5870
  %v5872 = vcombine.high %v5848, 0
  %v5873 = vcombine.high %v5855, 0
  %v5874 = vcombine.high %v5864, 0
  %v5875 = vcombine.high %v5871, 0
  %v5876 = vcombine.low %v5782, %v5789
  %v5878 = vunpack.c.l.s4 1983009808
  %v5879 = vunpack.c.0.s8 %v5878
  %v5880 = vlaneseq
  %v5881 = vshrl.u32 %v5880, 7
  %v5882 = vsub.s32 %v5879, %v5881
  %v5883 = vrot.slane %v5876, %v5882
  %v5884 = vcombine.low %v5806, %v5807
  %v5886 = vunpack.c.l.s4 1983009808
  %v5887 = vunpack.c.0.s8 %v5886
  %v5888 = vlaneseq
  %v5889 = vshrl.u32 %v5888, 7
  %v5890 = vsub.s32 %v5887, %v5889
  %v5891 = vrot.slane %v5884, %v5890
  %v5892 = vcombine.low %v5883, %v5891
  %v5894 = vunpack.c.l.s4 1934713408
  %v5895 = vunpack.c.0.s8 %v5894
  %v5896 = vlaneseq
  %v5897 = vshrl.u32 %v5896, 7
  %v5898 = vsub.s32 %v5895, %v5897
  %v5899 = vrot.slane %v5892, %v5898
  %v5900 = vcombine.high %v5899, 0
  %v5901 = vcombine.low %v5848, %v5855
  %v5903 = vunpack.c.l.s4 1983009808
  %v5904 = vunpack.c.0.s8 %v5903
  %v5905 = vlaneseq
  %v5906 = vshrl.u32 %v5905, 7
  %v5907 = vsub.s32 %v5904, %v5906
  %v5908 = vrot.slane %v5901, %v5907
  %v5909 = vcombine.low %v5872, %v5873
  %v5911 = vunpack.c.l.s4 1983009808
  %v5912 = vunpack.c.0.s8 %v5911
  %v5913 = vlaneseq
  %v5914 = vshrl.u32 %v5913, 7
  %v5915 = vsub.s32 %v5912, %v5914
  %v5916 = vrot.slane %v5909, %v5915
  %v5917 = vcombine.low %v5908, %v5916
  %v5919 = vunpack.c.l.s4 1934713408
  %v5920 = vunpack.c.0.s8 %v5919
  %v5921 = vlaneseq
  %v5922 = vshrl.u32 %v5921, 7
  %v5923 = vsub.s32 %v5920, %v5922
  %v5924 = vrot.slane %v5917, %v5923
  %v5925 = vcombine.high %v5924, 0
  %v5926 = vcombine.low %v5798, %v5805
  %v5928 = vunpack.c.l.s4 1983009808
  %v5929 = vunpack.c.0.s8 %v5928
  %v5930 = vlaneseq
  %v5931 = vshrl.u32 %v5930, 7
  %v5932 = vsub.s32 %v5929, %v5931
  %v5933 = vrot.slane %v5926, %v5932
  %v5934 = vcombine.low %v5808, %v5809
  %v5936 = vunpack.c.l.s4 1983009808
  %v5937 = vunpack.c.0.s8 %v5936
  %v5938 = vlaneseq
  %v5939 = vshrl.u32 %v5938, 7
  %v5940 = vsub.s32 %v5937, %v5939
  %v5941 = vrot.slane %v5934, %v5940
  %v5942 = vcombine.low %v5933, %v5941
  %v5944 = vunpack.c.l.s4 1934713408
  %v5945 = vunpack.c.0.s8 %v5944
  %v5946 = vlaneseq
  %v5947 = vshrl.u32 %v5946, 7
  %v5948 = vsub.s32 %v5945, %v5947
  %v5949 = vrot.slane %v5942, %v5948
  %v5950 = vcombine.high %v5949, 0
  %v5951 = vcombine.low %v5864, %v5871
  %v5953 = vunpack.c.l.s4 1983009808
  %v5954 = vunpack.c.0.s8 %v5953
  %v5955 = vlaneseq
  %v5956 = vshrl.u32 %v5955, 7
  %v5957 = vsub.s32 %v5954, %v5956
  %v5958 = vrot.slane %v5951, %v5957
  %v5959 = vcombine.low %v5874, %v5875
  %v5961 = vunpack.c.l.s4 1983009808
  %v5962 = vunpack.c.0.s8 %v5961
  %v5963 = vlaneseq
  %v5964 = vshrl.u32 %v5963, 7
  %v5965 = vsub.s32 %v5962, %v5964
  %v5966 = vrot.slane %v5959, %v5965
  %v5967 = vcombine.low %v5958, %v5966
  %v5969 = vunpack.c.l.s4 1934713408
  %v5970 = vunpack.c.0.s8 %v5969
  %v5971 = vlaneseq
  %v5972 = vshrl.u32 %v5971, 7
  %v5973 = vsub.s32 %v5970, %v5972
  %v5974 = vrot.slane %v5967, %v5973
  %v5975 = vcombine.high %v5974, 0
  %v5978 = vpack.i.b16 %v5924, %v5899
  %v5979 = vshrl.u32 %v5899, 16
  %v5980 = vshrl.u32 %v5924, 16
  %v5981 = vpack.i.b16 %v5980, %v5979
  %v5984 = vpack.i.b16 %v5925, %v5900
  %v5985 = vshrl.u32 %v5900, 16
  %v5986 = vshrl.u32 %v5925, 16
  %v5987 = vpack.i.b16 %v5986, %v5985
  %v5990 = vpack.i.b16 %v5974, %v5949
  %v5991 = vshrl.u32 %v5949, 16
  %v5992 = vshrl.u32 %v5974, 16
  %v5993 = vpack.i.b16 %v5992, %v5991
  %v5996 = vpack.i.b16 %v5975, %v5950
  %v5997 = vshrl.u32 %v5950, 16
  %v5998 = vshrl.u32 %v5975, 16
  %v5999 = vpack.i.b16 %v5998, %v5997
  %v6000 = vpack.c.bf16 %v5437, %v5434
  %6002 = vrot.lane.b32.xlu0 %v6000, 120
  %v6003 = vpop.permute.xlu0 %6002
  %6004 = vrot.lane.b32.xlu0 %v6000, 112
  %v6005 = vpop.permute.xlu0 %6004
  %6006 = vrot.lane.b32.xlu0 %v6000, 104
  %v6007 = vpop.permute.xlu0 %6006
  %v6010 = vpack.i.b16 %v6003, %v6000
  %v6012 = vshrl.u32 %v6000, 16
  %v6013 = vshrl.u32 %v6003, 16
  %v6014 = vpack.i.b16 %v6013, %v6012
  %v6018 = vpack.i.b16 %v6007, %v6005
  %v6020 = vshrl.u32 %v6005, 16
  %v6021 = vshrl.u32 %v6007, 16
  %v6022 = vpack.i.b16 %v6021, %v6020
  %v6024 = vcombine.high %v6010, %v251
  %v6026 = vunpack.c.l.s4 1983009808
  %v6027 = vunpack.c.0.s8 %v6026
  %v6028 = vlaneseq
  %v6029 = vshrl.u32 %v6028, 7
  %v6030 = vsub.s32 %v6027, %v6029
  %v6031 = vrot.slane %v6010, %v6030
  %v6033 = vunpack.c.l.s4 1983009808
  %v6034 = vunpack.c.0.s8 %v6033
  %v6035 = vlaneseq
  %v6036 = vshrl.u32 %v6035, 7
  %v6037 = vsub.s32 %v6034, %v6036
  %v6038 = vrot.slane %v6024, %v6037
  %v6039 = vcombine.high %v6018, %v251
  %v6041 = vunpack.c.l.s4 1983009808
  %v6042 = vunpack.c.0.s8 %v6041
  %v6043 = vlaneseq
  %v6044 = vshrl.u32 %v6043, 7
  %v6045 = vsub.s32 %v6042, %v6044
  %v6046 = vrot.slane %v6018, %v6045
  %v6048 = vunpack.c.l.s4 1983009808
  %v6049 = vunpack.c.0.s8 %v6048
  %v6050 = vlaneseq
  %v6051 = vshrl.u32 %v6050, 7
  %v6052 = vsub.s32 %v6049, %v6051
  %v6053 = vrot.slane %v6039, %v6052
  %v6054 = vcombine.low %v6031, %v6046
  %v6055 = vcombine.high %v6031, %v6046
  %v6057 = vunpack.c.l.s4 1934713408
  %v6058 = vunpack.c.0.s8 %v6057
  %v6059 = vlaneseq
  %v6060 = vshrl.u32 %v6059, 7
  %v6061 = vsub.s32 %v6058, %v6060
  %v6062 = vrot.slane %v6054, %v6061
  %v6064 = vunpack.c.l.s4 1934713408
  %v6065 = vunpack.c.0.s8 %v6064
  %v6066 = vlaneseq
  %v6067 = vshrl.u32 %v6066, 7
  %v6068 = vsub.s32 %v6065, %v6067
  %v6069 = vrot.slane %v6055, %v6068
  %v6070 = vcombine.low %v6038, %v6053
  %v6071 = vcombine.high %v6038, %v6053
  %v6073 = vunpack.c.l.s4 1934713408
  %v6074 = vunpack.c.0.s8 %v6073
  %v6075 = vlaneseq
  %v6076 = vshrl.u32 %v6075, 7
  %v6077 = vsub.s32 %v6074, %v6076
  %v6078 = vrot.slane %v6070, %v6077
  %v6080 = vunpack.c.l.s4 1934713408
  %v6081 = vunpack.c.0.s8 %v6080
  %v6082 = vlaneseq
  %v6083 = vshrl.u32 %v6082, 7
  %v6084 = vsub.s32 %v6081, %v6083
  %v6085 = vrot.slane %v6071, %v6084
  %v6086 = vcombine.high %v6062, 0
  %v6087 = vcombine.high %v6069, 0
  %v6088 = vcombine.high %v6078, 0
  %v6089 = vcombine.high %v6085, 0
  %v6090 = vcombine.high %v6014, %v254
  %v6092 = vunpack.c.l.s4 1983009808
  %v6093 = vunpack.c.0.s8 %v6092
  %v6094 = vlaneseq
  %v6095 = vshrl.u32 %v6094, 7
  %v6096 = vsub.s32 %v6093, %v6095
  %v6097 = vrot.slane %v6014, %v6096
  %v6099 = vunpack.c.l.s4 1983009808
  %v6100 = vunpack.c.0.s8 %v6099
  %v6101 = vlaneseq
  %v6102 = vshrl.u32 %v6101, 7
  %v6103 = vsub.s32 %v6100, %v6102
  %v6104 = vrot.slane %v6090, %v6103
  %v6105 = vcombine.high %v6022, %v254
  %v6107 = vunpack.c.l.s4 1983009808
  %v6108 = vunpack.c.0.s8 %v6107
  %v6109 = vlaneseq
  %v6110 = vshrl.u32 %v6109, 7
  %v6111 = vsub.s32 %v6108, %v6110
  %v6112 = vrot.slane %v6022, %v6111
  %v6114 = vunpack.c.l.s4 1983009808
  %v6115 = vunpack.c.0.s8 %v6114
  %v6116 = vlaneseq
  %v6117 = vshrl.u32 %v6116, 7
  %v6118 = vsub.s32 %v6115, %v6117
  %v6119 = vrot.slane %v6105, %v6118
  %v6120 = vcombine.low %v6097, %v6112
  %v6121 = vcombine.high %v6097, %v6112
  %v6123 = vunpack.c.l.s4 1934713408
  %v6124 = vunpack.c.0.s8 %v6123
  %v6125 = vlaneseq
  %v6126 = vshrl.u32 %v6125, 7
  %v6127 = vsub.s32 %v6124, %v6126
  %v6128 = vrot.slane %v6120, %v6127
  %v6130 = vunpack.c.l.s4 1934713408
  %v6131 = vunpack.c.0.s8 %v6130
  %v6132 = vlaneseq
  %v6133 = vshrl.u32 %v6132, 7
  %v6134 = vsub.s32 %v6131, %v6133
  %v6135 = vrot.slane %v6121, %v6134
  %v6136 = vcombine.low %v6104, %v6119
  %v6137 = vcombine.high %v6104, %v6119
  %v6139 = vunpack.c.l.s4 1934713408
  %v6140 = vunpack.c.0.s8 %v6139
  %v6141 = vlaneseq
  %v6142 = vshrl.u32 %v6141, 7
  %v6143 = vsub.s32 %v6140, %v6142
  %v6144 = vrot.slane %v6136, %v6143
  %v6146 = vunpack.c.l.s4 1934713408
  %v6147 = vunpack.c.0.s8 %v6146
  %v6148 = vlaneseq
  %v6149 = vshrl.u32 %v6148, 7
  %v6150 = vsub.s32 %v6147, %v6149
  %v6151 = vrot.slane %v6137, %v6150
  %v6152 = vcombine.high %v6128, 0
  %v6153 = vcombine.high %v6135, 0
  %v6154 = vcombine.high %v6144, 0
  %v6155 = vcombine.high %v6151, 0
  %v6156 = vcombine.low %v6062, %v6069
  %v6158 = vunpack.c.l.s4 1983009808
  %v6159 = vunpack.c.0.s8 %v6158
  %v6160 = vlaneseq
  %v6161 = vshrl.u32 %v6160, 7
  %v6162 = vsub.s32 %v6159, %v6161
  %v6163 = vrot.slane %v6156, %v6162
  %v6164 = vcombine.low %v6086, %v6087
  %v6166 = vunpack.c.l.s4 1983009808
  %v6167 = vunpack.c.0.s8 %v6166
  %v6168 = vlaneseq
  %v6169 = vshrl.u32 %v6168, 7
  %v6170 = vsub.s32 %v6167, %v6169
  %v6171 = vrot.slane %v6164, %v6170
  %v6172 = vcombine.low %v6163, %v6171
  %v6174 = vunpack.c.l.s4 1934713408
  %v6175 = vunpack.c.0.s8 %v6174
  %v6176 = vlaneseq
  %v6177 = vshrl.u32 %v6176, 7
  %v6178 = vsub.s32 %v6175, %v6177
  %v6179 = vrot.slane %v6172, %v6178
  %v6180 = vcombine.high %v6179, 0
  %v6181 = vcombine.low %v6128, %v6135
  %v6183 = vunpack.c.l.s4 1983009808
  %v6184 = vunpack.c.0.s8 %v6183
  %v6185 = vlaneseq
  %v6186 = vshrl.u32 %v6185, 7
  %v6187 = vsub.s32 %v6184, %v6186
  %v6188 = vrot.slane %v6181, %v6187
  %v6189 = vcombine.low %v6152, %v6153
  %v6191 = vunpack.c.l.s4 1983009808
  %v6192 = vunpack.c.0.s8 %v6191
  %v6193 = vlaneseq
  %v6194 = vshrl.u32 %v6193, 7
  %v6195 = vsub.s32 %v6192, %v6194
  %v6196 = vrot.slane %v6189, %v6195
  %v6197 = vcombine.low %v6188, %v6196
  %v6199 = vunpack.c.l.s4 1934713408
  %v6200 = vunpack.c.0.s8 %v6199
  %v6201 = vlaneseq
  %v6202 = vshrl.u32 %v6201, 7
  %v6203 = vsub.s32 %v6200, %v6202
  %v6204 = vrot.slane %v6197, %v6203
  %v6205 = vcombine.high %v6204, 0
  %v6206 = vcombine.low %v6078, %v6085
  %v6208 = vunpack.c.l.s4 1983009808
  %v6209 = vunpack.c.0.s8 %v6208
  %v6210 = vlaneseq
  %v6211 = vshrl.u32 %v6210, 7
  %v6212 = vsub.s32 %v6209, %v6211
  %v6213 = vrot.slane %v6206, %v6212
  %v6214 = vcombine.low %v6088, %v6089
  %v6216 = vunpack.c.l.s4 1983009808
  %v6217 = vunpack.c.0.s8 %v6216
  %v6218 = vlaneseq
  %v6219 = vshrl.u32 %v6218, 7
  %v6220 = vsub.s32 %v6217, %v6219
  %v6221 = vrot.slane %v6214, %v6220
  %v6222 = vcombine.low %v6213, %v6221
  %v6224 = vunpack.c.l.s4 1934713408
  %v6225 = vunpack.c.0.s8 %v6224
  %v6226 = vlaneseq
  %v6227 = vshrl.u32 %v6226, 7
  %v6228 = vsub.s32 %v6225, %v6227
  %v6229 = vrot.slane %v6222, %v6228
  %v6230 = vcombine.high %v6229, 0
  %v6231 = vcombine.low %v6144, %v6151
  %v6233 = vunpack.c.l.s4 1983009808
  %v6234 = vunpack.c.0.s8 %v6233
  %v6235 = vlaneseq
  %v6236 = vshrl.u32 %v6235, 7
  %v6237 = vsub.s32 %v6234, %v6236
  %v6238 = vrot.slane %v6231, %v6237
  %v6239 = vcombine.low %v6154, %v6155
  %v6241 = vunpack.c.l.s4 1983009808
  %v6242 = vunpack.c.0.s8 %v6241
  %v6243 = vlaneseq
  %v6244 = vshrl.u32 %v6243, 7
  %v6245 = vsub.s32 %v6242, %v6244
  %v6246 = vrot.slane %v6239, %v6245
  %v6247 = vcombine.low %v6238, %v6246
  %v6249 = vunpack.c.l.s4 1934713408
  %v6250 = vunpack.c.0.s8 %v6249
  %v6251 = vlaneseq
  %v6252 = vshrl.u32 %v6251, 7
  %v6253 = vsub.s32 %v6250, %v6252
  %v6254 = vrot.slane %v6247, %v6253
  %v6255 = vcombine.high %v6254, 0
  %v6258 = vpack.i.b16 %v6204, %v6179
  %v6259 = vshrl.u32 %v6179, 16
  %v6260 = vshrl.u32 %v6204, 16
  %v6261 = vpack.i.b16 %v6260, %v6259
  %v6264 = vpack.i.b16 %v6205, %v6180
  %v6265 = vshrl.u32 %v6180, 16
  %v6266 = vshrl.u32 %v6205, 16
  %v6267 = vpack.i.b16 %v6266, %v6265
  %v6270 = vpack.i.b16 %v6254, %v6229
  %v6271 = vshrl.u32 %v6229, 16
  %v6272 = vshrl.u32 %v6254, 16
  %v6273 = vpack.i.b16 %v6272, %v6271
  %v6276 = vpack.i.b16 %v6255, %v6230
  %v6277 = vshrl.u32 %v6230, 16
  %v6278 = vshrl.u32 %v6255, 16
  %v6279 = vpack.i.b16 %v6278, %v6277
  %v6281 = vsel %vm1072, %v5698, 0
  %v6284 = vsel %vm1072, %v5978, 0
  %6286 = vmatprep.subr.bf16.mxu0 0
  %6287 = vmatpush1.bf16.xpose.msra.mxu0 0
  %6288 = vmatprep.subr.bf16.mxu0 0
  %6289 = vmatpush1.bf16.xpose.msra.mxu0 0
  %6290 = vmatprep.subr.bf16.mxu0 0
  %6291 = vmatpush1.bf16.xpose.msra.mxu0 0
  %6292 = vmatprep.subr.bf16.mxu0 0
  %6293 = vmatpush1.bf16.xpose.msra.mxu0 0
  %6294 = vmatprep.subr.bf16.mxu0 0
  %6295 = vmatpush1.bf16.xpose.msra.mxu0 0
  %6296 = vmatprep.subr.bf16.mxu0 0
  %6297 = vmatpush1.bf16.xpose.msra.mxu0 0
  %6298 = vmatprep.subr.bf16.mxu0 0
  %6299 = vmatpush1.bf16.xpose.msra.mxu0 0
  %6300 = vmatprep.subr.bf16.mxu0 0
  %6301 = vmatpush1.bf16.xpose.msra.mxu0 %v6284
  %6302 = vmatprep.subr.bf16.mxu0 0
  %6303 = vmatpush2.bf16.xpose.msra.mxu0 0
  %6304 = vmatprep.subr.bf16.mxu0 0
  %6305 = vmatpush2.bf16.xpose.msra.mxu0 0
  %6306 = vmatprep.subr.bf16.mxu0 0
  %6307 = vmatpush2.bf16.xpose.msra.mxu0 0
  %6308 = vmatprep.subr.bf16.mxu0 0
  %6309 = vmatpush2.bf16.xpose.msra.mxu0 0
  %6310 = vmatprep.subr.bf16.mxu0 0
  %6311 = vmatpush2.bf16.xpose.msra.mxu0 0
  %6312 = vmatprep.subr.bf16.mxu0 0
  %6313 = vmatpush2.bf16.xpose.msra.mxu0 0
  %6314 = vmatprep.subr.bf16.mxu0 0
  %6315 = vmatpush2.bf16.xpose.msra.mxu0 0
  %6316 = vmatprep.subr.bf16.mxu0 0
  %6317 = vmatpush2.bf16.xpose.msra.mxu0 0
  %6318 = vmatprep.mubr.bf16.mxu0 0
  %6319 = vmatmul.mubr.bf16.gmra.mxu0 %v6281
  %v6320 = vpop.f32.mrf.mxu0
  %v6321 = vadd.f32 0.0, %v6320
  %v6322 = vpop.f32.mrf.mxu0
  %v6323 = vpop.f32.mrf.mxu0
  %v6324 = vpop.f32.mrf.mxu0
  %6325 = vdwg.mxu0
  %v6327 = vsel %vm1072, %v5701, 0
  %v6330 = vsel %vm1072, %v5981, 0
  %6332 = vmatprep.subr.bf16.mxu0 0
  %6333 = vmatpush1.bf16.xpose.msra.mxu0 0
  %6334 = vmatprep.subr.bf16.mxu0 0
  %6335 = vmatpush1.bf16.xpose.msra.mxu0 0
  %6336 = vmatprep.subr.bf16.mxu0 0
  %6337 = vmatpush1.bf16.xpose.msra.mxu0 0
  %6338 = vmatprep.subr.bf16.mxu0 0
  %6339 = vmatpush1.bf16.xpose.msra.mxu0 0
  %6340 = vmatprep.subr.bf16.mxu0 0
  %6341 = vmatpush1.bf16.xpose.msra.mxu0 0
  %6342 = vmatprep.subr.bf16.mxu0 0
  %6343 = vmatpush1.bf16.xpose.msra.mxu0 0
  %6344 = vmatprep.subr.bf16.mxu0 0
  %6345 = vmatpush1.bf16.xpose.msra.mxu0 0
  %6346 = vmatprep.subr.bf16.mxu0 0
  %6347 = vmatpush1.bf16.xpose.msra.mxu0 %v6330
  %6348 = vmatprep.subr.bf16.mxu0 0
  %6349 = vmatpush2.bf16.xpose.msra.mxu0 0
  %6350 = vmatprep.subr.bf16.mxu0 0
  %6351 = vmatpush2.bf16.xpose.msra.mxu0 0
  %6352 = vmatprep.subr.bf16.mxu0 0
  %6353 = vmatpush2.bf16.xpose.msra.mxu0 0
  %6354 = vmatprep.subr.bf16.mxu0 0
  %6355 = vmatpush2.bf16.xpose.msra.mxu0 0
  %6356 = vmatprep.subr.bf16.mxu0 0
  %6357 = vmatpush2.bf16.xpose.msra.mxu0 0
  %6358 = vmatprep.subr.bf16.mxu0 0
  %6359 = vmatpush2.bf16.xpose.msra.mxu0 0
  %6360 = vmatprep.subr.bf16.mxu0 0
  %6361 = vmatpush2.bf16.xpose.msra.mxu0 0
  %6362 = vmatprep.subr.bf16.mxu0 0
  %6363 = vmatpush2.bf16.xpose.msra.mxu0 0
  %6364 = vmatprep.mubr.bf16.mxu0 0
  %6365 = vmatmul.mubr.bf16.gmra.mxu0 %v6327
  %v6366 = vpop.f32.mrf.mxu0
  %v6367 = vadd.f32 0.0, %v6366
  %v6368 = vpop.f32.mrf.mxu0
  %v6369 = vpop.f32.mrf.mxu0
  %v6370 = vpop.f32.mrf.mxu0
  %6371 = vdwg.mxu0
  %v6373 = vsel %vm1072, %v5704, 0
  %v6376 = vsel %vm1072, %v5984, 0
  %6378 = vmatprep.subr.bf16.mxu0 0
  %6379 = vmatpush1.bf16.xpose.msra.mxu0 0
  %6380 = vmatprep.subr.bf16.mxu0 0
  %6381 = vmatpush1.bf16.xpose.msra.mxu0 0
  %6382 = vmatprep.subr.bf16.mxu0 0
  %6383 = vmatpush1.bf16.xpose.msra.mxu0 0
  %6384 = vmatprep.subr.bf16.mxu0 0
  %6385 = vmatpush1.bf16.xpose.msra.mxu0 0
  %6386 = vmatprep.subr.bf16.mxu0 0
  %6387 = vmatpush1.bf16.xpose.msra.mxu0 0
  %6388 = vmatprep.subr.bf16.mxu0 0
  %6389 = vmatpush1.bf16.xpose.msra.mxu0 0
  %6390 = vmatprep.subr.bf16.mxu0 0
  %6391 = vmatpush1.bf16.xpose.msra.mxu0 0
  %6392 = vmatprep.subr.bf16.mxu0 0
  %6393 = vmatpush1.bf16.xpose.msra.mxu0 %v6376
  %6394 = vmatprep.subr.bf16.mxu0 0
  %6395 = vmatpush2.bf16.xpose.msra.mxu0 0
  %6396 = vmatprep.subr.bf16.mxu0 0
  %6397 = vmatpush2.bf16.xpose.msra.mxu0 0
  %6398 = vmatprep.subr.bf16.mxu0 0
  %6399 = vmatpush2.bf16.xpose.msra.mxu0 0
  %6400 = vmatprep.subr.bf16.mxu0 0
  %6401 = vmatpush2.bf16.xpose.msra.mxu0 0
  %6402 = vmatprep.subr.bf16.mxu0 0
  %6403 = vmatpush2.bf16.xpose.msra.mxu0 0
  %6404 = vmatprep.subr.bf16.mxu0 0
  %6405 = vmatpush2.bf16.xpose.msra.mxu0 0
  %6406 = vmatprep.subr.bf16.mxu0 0
  %6407 = vmatpush2.bf16.xpose.msra.mxu0 0
  %6408 = vmatprep.subr.bf16.mxu0 0
  %6409 = vmatpush2.bf16.xpose.msra.mxu0 0
  %6410 = vmatprep.mubr.bf16.mxu0 0
  %6411 = vmatmul.mubr.bf16.gmra.mxu0 %v6373
  %v6412 = vpop.f32.mrf.mxu0
  %v6413 = vadd.f32 0.0, %v6412
  %v6414 = vpop.f32.mrf.mxu0
  %v6415 = vpop.f32.mrf.mxu0
  %v6416 = vpop.f32.mrf.mxu0
  %6417 = vdwg.mxu0
  %v6419 = vsel %vm1072, %v5707, 0
  %v6422 = vsel %vm1072, %v5987, 0
  %6424 = vmatprep.subr.bf16.mxu0 0
  %6425 = vmatpush1.bf16.xpose.msra.mxu0 0
  %6426 = vmatprep.subr.bf16.mxu0 0
  %6427 = vmatpush1.bf16.xpose.msra.mxu0 0
  %6428 = vmatprep.subr.bf16.mxu0 0
  %6429 = vmatpush1.bf16.xpose.msra.mxu0 0
  %6430 = vmatprep.subr.bf16.mxu0 0
  %6431 = vmatpush1.bf16.xpose.msra.mxu0 0
  %6432 = vmatprep.subr.bf16.mxu0 0
  %6433 = vmatpush1.bf16.xpose.msra.mxu0 0
  %6434 = vmatprep.subr.bf16.mxu0 0
  %6435 = vmatpush1.bf16.xpose.msra.mxu0 0
  %6436 = vmatprep.subr.bf16.mxu0 0
  %6437 = vmatpush1.bf16.xpose.msra.mxu0 0
  %6438 = vmatprep.subr.bf16.mxu0 0
  %6439 = vmatpush1.bf16.xpose.msra.mxu0 %v6422
  %6440 = vmatprep.subr.bf16.mxu0 0
  %6441 = vmatpush2.bf16.xpose.msra.mxu0 0
  %6442 = vmatprep.subr.bf16.mxu0 0
  %6443 = vmatpush2.bf16.xpose.msra.mxu0 0
  %6444 = vmatprep.subr.bf16.mxu0 0
  %6445 = vmatpush2.bf16.xpose.msra.mxu0 0
  %6446 = vmatprep.subr.bf16.mxu0 0
  %6447 = vmatpush2.bf16.xpose.msra.mxu0 0
  %6448 = vmatprep.subr.bf16.mxu0 0
  %6449 = vmatpush2.bf16.xpose.msra.mxu0 0
  %6450 = vmatprep.subr.bf16.mxu0 0
  %6451 = vmatpush2.bf16.xpose.msra.mxu0 0
  %6452 = vmatprep.subr.bf16.mxu0 0
  %6453 = vmatpush2.bf16.xpose.msra.mxu0 0
  %6454 = vmatprep.subr.bf16.mxu0 0
  %6455 = vmatpush2.bf16.xpose.msra.mxu0 0
  %6456 = vmatprep.mubr.bf16.mxu0 0
  %6457 = vmatmul.mubr.bf16.gmra.mxu0 %v6419
  %v6458 = vpop.f32.mrf.mxu0
  %v6459 = vadd.f32 0.0, %v6458
  %v6460 = vpop.f32.mrf.mxu0
  %v6461 = vpop.f32.mrf.mxu0
  %v6462 = vpop.f32.mrf.mxu0
  %6463 = vdwg.mxu0
  %v6465 = vsel %vm1072, %v5710, 0
  %v6468 = vsel %vm1072, %v5990, 0
  %6470 = vmatprep.subr.bf16.mxu0 0
  %6471 = vmatpush1.bf16.xpose.msra.mxu0 0
  %6472 = vmatprep.subr.bf16.mxu0 0
  %6473 = vmatpush1.bf16.xpose.msra.mxu0 0
  %6474 = vmatprep.subr.bf16.mxu0 0
  %6475 = vmatpush1.bf16.xpose.msra.mxu0 0
  %6476 = vmatprep.subr.bf16.mxu0 0
  %6477 = vmatpush1.bf16.xpose.msra.mxu0 0
  %6478 = vmatprep.subr.bf16.mxu0 0
  %6479 = vmatpush1.bf16.xpose.msra.mxu0 0
  %6480 = vmatprep.subr.bf16.mxu0 0
  %6481 = vmatpush1.bf16.xpose.msra.mxu0 0
  %6482 = vmatprep.subr.bf16.mxu0 0
  %6483 = vmatpush1.bf16.xpose.msra.mxu0 0
  %6484 = vmatprep.subr.bf16.mxu0 0
  %6485 = vmatpush1.bf16.xpose.msra.mxu0 %v6468
  %6486 = vmatprep.subr.bf16.mxu0 0
  %6487 = vmatpush2.bf16.xpose.msra.mxu0 0
  %6488 = vmatprep.subr.bf16.mxu0 0
  %6489 = vmatpush2.bf16.xpose.msra.mxu0 0
  %6490 = vmatprep.subr.bf16.mxu0 0
  %6491 = vmatpush2.bf16.xpose.msra.mxu0 0
  %6492 = vmatprep.subr.bf16.mxu0 0
  %6493 = vmatpush2.bf16.xpose.msra.mxu0 0
  %6494 = vmatprep.subr.bf16.mxu0 0
  %6495 = vmatpush2.bf16.xpose.msra.mxu0 0
  %6496 = vmatprep.subr.bf16.mxu0 0
  %6497 = vmatpush2.bf16.xpose.msra.mxu0 0
  %6498 = vmatprep.subr.bf16.mxu0 0
  %6499 = vmatpush2.bf16.xpose.msra.mxu0 0
  %6500 = vmatprep.subr.bf16.mxu0 0
  %6501 = vmatpush2.bf16.xpose.msra.mxu0 0
  %6502 = vmatprep.mubr.bf16.mxu0 0
  %6503 = vmatmul.mubr.bf16.gmra.mxu0 %v6465
  %v6504 = vpop.f32.mrf.mxu0
  %v6505 = vadd.f32 0.0, %v6504
  %v6506 = vpop.f32.mrf.mxu0
  %v6507 = vpop.f32.mrf.mxu0
  %v6508 = vpop.f32.mrf.mxu0
  %6509 = vdwg.mxu0
  %v6511 = vsel %vm1072, %v5713, 0
  %v6514 = vsel %vm1072, %v5993, 0
  %6516 = vmatprep.subr.bf16.mxu0 0
  %6517 = vmatpush1.bf16.xpose.msra.mxu0 0
  %6518 = vmatprep.subr.bf16.mxu0 0
  %6519 = vmatpush1.bf16.xpose.msra.mxu0 0
  %6520 = vmatprep.subr.bf16.mxu0 0
  %6521 = vmatpush1.bf16.xpose.msra.mxu0 0
  %6522 = vmatprep.subr.bf16.mxu0 0
  %6523 = vmatpush1.bf16.xpose.msra.mxu0 0
  %6524 = vmatprep.subr.bf16.mxu0 0
  %6525 = vmatpush1.bf16.xpose.msra.mxu0 0
  %6526 = vmatprep.subr.bf16.mxu0 0
  %6527 = vmatpush1.bf16.xpose.msra.mxu0 0
  %6528 = vmatprep.subr.bf16.mxu0 0
  %6529 = vmatpush1.bf16.xpose.msra.mxu0 0
  %6530 = vmatprep.subr.bf16.mxu0 0
  %6531 = vmatpush1.bf16.xpose.msra.mxu0 %v6514
  %6532 = vmatprep.subr.bf16.mxu0 0
  %6533 = vmatpush2.bf16.xpose.msra.mxu0 0
  %6534 = vmatprep.subr.bf16.mxu0 0
  %6535 = vmatpush2.bf16.xpose.msra.mxu0 0
  %6536 = vmatprep.subr.bf16.mxu0 0
  %6537 = vmatpush2.bf16.xpose.msra.mxu0 0
  %6538 = vmatprep.subr.bf16.mxu0 0
  %6539 = vmatpush2.bf16.xpose.msra.mxu0 0
  %6540 = vmatprep.subr.bf16.mxu0 0
  %6541 = vmatpush2.bf16.xpose.msra.mxu0 0
  %6542 = vmatprep.subr.bf16.mxu0 0
  %6543 = vmatpush2.bf16.xpose.msra.mxu0 0
  %6544 = vmatprep.subr.bf16.mxu0 0
  %6545 = vmatpush2.bf16.xpose.msra.mxu0 0
  %6546 = vmatprep.subr.bf16.mxu0 0
  %6547 = vmatpush2.bf16.xpose.msra.mxu0 0
  %6548 = vmatprep.mubr.bf16.mxu0 0
  %6549 = vmatmul.mubr.bf16.gmra.mxu0 %v6511
  %v6550 = vpop.f32.mrf.mxu0
  %v6551 = vadd.f32 0.0, %v6550
  %v6552 = vpop.f32.mrf.mxu0
  %v6553 = vpop.f32.mrf.mxu0
  %v6554 = vpop.f32.mrf.mxu0
  %6555 = vdwg.mxu0
  %v6557 = vsel %vm1072, %v5716, 0
  %v6560 = vsel %vm1072, %v5996, 0
  %6562 = vmatprep.subr.bf16.mxu0 0
  %6563 = vmatpush1.bf16.xpose.msra.mxu0 0
  %6564 = vmatprep.subr.bf16.mxu0 0
  %6565 = vmatpush1.bf16.xpose.msra.mxu0 0
  %6566 = vmatprep.subr.bf16.mxu0 0
  %6567 = vmatpush1.bf16.xpose.msra.mxu0 0
  %6568 = vmatprep.subr.bf16.mxu0 0
  %6569 = vmatpush1.bf16.xpose.msra.mxu0 0
  %6570 = vmatprep.subr.bf16.mxu0 0
  %6571 = vmatpush1.bf16.xpose.msra.mxu0 0
  %6572 = vmatprep.subr.bf16.mxu0 0
  %6573 = vmatpush1.bf16.xpose.msra.mxu0 0
  %6574 = vmatprep.subr.bf16.mxu0 0
  %6575 = vmatpush1.bf16.xpose.msra.mxu0 0
  %6576 = vmatprep.subr.bf16.mxu0 0
  %6577 = vmatpush1.bf16.xpose.msra.mxu0 %v6560
  %6578 = vmatprep.subr.bf16.mxu0 0
  %6579 = vmatpush2.bf16.xpose.msra.mxu0 0
  %6580 = vmatprep.subr.bf16.mxu0 0
  %6581 = vmatpush2.bf16.xpose.msra.mxu0 0
  %6582 = vmatprep.subr.bf16.mxu0 0
  %6583 = vmatpush2.bf16.xpose.msra.mxu0 0
  %6584 = vmatprep.subr.bf16.mxu0 0
  %6585 = vmatpush2.bf16.xpose.msra.mxu0 0
  %6586 = vmatprep.subr.bf16.mxu0 0
  %6587 = vmatpush2.bf16.xpose.msra.mxu0 0
  %6588 = vmatprep.subr.bf16.mxu0 0
  %6589 = vmatpush2.bf16.xpose.msra.mxu0 0
  %6590 = vmatprep.subr.bf16.mxu0 0
  %6591 = vmatpush2.bf16.xpose.msra.mxu0 0
  %6592 = vmatprep.subr.bf16.mxu0 0
  %6593 = vmatpush2.bf16.xpose.msra.mxu0 0
  %6594 = vmatprep.mubr.bf16.mxu0 0
  %6595 = vmatmul.mubr.bf16.gmra.mxu0 %v6557
  %v6596 = vpop.f32.mrf.mxu0
  %v6597 = vadd.f32 0.0, %v6596
  %v6598 = vpop.f32.mrf.mxu0
  %v6599 = vpop.f32.mrf.mxu0
  %v6600 = vpop.f32.mrf.mxu0
  %6601 = vdwg.mxu0
  %v6603 = vsel %vm1072, %v5719, 0
  %v6606 = vsel %vm1072, %v5999, 0
  %6608 = vmatprep.subr.bf16.mxu0 0
  %6609 = vmatpush1.bf16.xpose.msra.mxu0 0
  %6610 = vmatprep.subr.bf16.mxu0 0
  %6611 = vmatpush1.bf16.xpose.msra.mxu0 0
  %6612 = vmatprep.subr.bf16.mxu0 0
  %6613 = vmatpush1.bf16.xpose.msra.mxu0 0
  %6614 = vmatprep.subr.bf16.mxu0 0
  %6615 = vmatpush1.bf16.xpose.msra.mxu0 0
  %6616 = vmatprep.subr.bf16.mxu0 0
  %6617 = vmatpush1.bf16.xpose.msra.mxu0 0
  %6618 = vmatprep.subr.bf16.mxu0 0
  %6619 = vmatpush1.bf16.xpose.msra.mxu0 0
  %6620 = vmatprep.subr.bf16.mxu0 0
  %6621 = vmatpush1.bf16.xpose.msra.mxu0 0
  %6622 = vmatprep.subr.bf16.mxu0 0
  %6623 = vmatpush1.bf16.xpose.msra.mxu0 %v6606
  %6624 = vmatprep.subr.bf16.mxu0 0
  %6625 = vmatpush2.bf16.xpose.msra.mxu0 0
  %6626 = vmatprep.subr.bf16.mxu0 0
  %6627 = vmatpush2.bf16.xpose.msra.mxu0 0
  %6628 = vmatprep.subr.bf16.mxu0 0
  %6629 = vmatpush2.bf16.xpose.msra.mxu0 0
  %6630 = vmatprep.subr.bf16.mxu0 0
  %6631 = vmatpush2.bf16.xpose.msra.mxu0 0
  %6632 = vmatprep.subr.bf16.mxu0 0
  %6633 = vmatpush2.bf16.xpose.msra.mxu0 0
  %6634 = vmatprep.subr.bf16.mxu0 0
  %6635 = vmatpush2.bf16.xpose.msra.mxu0 0
  %6636 = vmatprep.subr.bf16.mxu0 0
  %6637 = vmatpush2.bf16.xpose.msra.mxu0 0
  %6638 = vmatprep.subr.bf16.mxu0 0
  %6639 = vmatpush2.bf16.xpose.msra.mxu0 0
  %6640 = vmatprep.mubr.bf16.mxu0 0
  %6641 = vmatmul.mubr.bf16.gmra.mxu0 %v6603
  %v6642 = vpop.f32.mrf.mxu0
  %v6643 = vadd.f32 0.0, %v6642
  %v6644 = vpop.f32.mrf.mxu0
  %v6645 = vpop.f32.mrf.mxu0
  %v6646 = vpop.f32.mrf.mxu0
  %6647 = vdwg.mxu0
  %v6648 = vsel %vm1072, %v6321, -inf
  %6649 = vmax.xlane.f32.xlu0 %v6648
  %v6650 = vpop.xlane.xlu0 %6649
  %v6651 = vsel %vm1072, %v6367, -inf
  %6652 = vmax.xlane.f32.xlu0 %v6651
  %v6653 = vpop.xlane.xlu0 %6652
  %v6654 = vsel %vm1072, %v6413, -inf
  %6655 = vmax.xlane.f32.xlu0 %v6654
  %v6656 = vpop.xlane.xlu0 %6655
  %v6657 = vsel %vm1072, %v6459, -inf
  %6658 = vmax.xlane.f32.xlu0 %v6657
  %v6659 = vpop.xlane.xlu0 %6658
  %v6660 = vsel %vm1072, %v6505, -inf
  %6661 = vmax.xlane.f32.xlu0 %v6660
  %v6662 = vpop.xlane.xlu0 %6661
  %v6663 = vsel %vm1072, %v6551, -inf
  %6664 = vmax.xlane.f32.xlu0 %v6663
  %v6665 = vpop.xlane.xlu0 %6664
  %v6666 = vsel %vm1072, %v6597, -inf
  %6667 = vmax.xlane.f32.xlu0 %v6666
  %v6668 = vpop.xlane.xlu0 %6667
  %v6669 = vsel %vm1072, %v6643, -inf
  %6670 = vmax.xlane.f32.xlu0 %v6669
  %v6671 = vpop.xlane.xlu0 %6670
  %v6672 = vsub.f32 %v6321, %v6650
  %v6673 = vsub.f32 %v6367, %v6653
  %v6674 = vsub.f32 %v6413, %v6656
  %v6675 = vsub.f32 %v6459, %v6659
  %v6676 = vsub.f32 %v6505, %v6662
  %v6677 = vsub.f32 %v6551, %v6665
  %v6678 = vsub.f32 %v6597, %v6668
  %v6679 = vsub.f32 %v6643, %v6671
  %v6680 = vmul.f32 %v6672, 1.442695
  %v6681 = vpow.pop %v6680
  %v6682 = vmul.f32 %v6673, 1.442695
  %v6683 = vpow.pop %v6682
  %v6684 = vmul.f32 %v6674, 1.442695
  %v6685 = vpow.pop %v6684
  %v6686 = vmul.f32 %v6675, 1.442695
  %v6687 = vpow.pop %v6686
  %v6688 = vmul.f32 %v6676, 1.442695
  %v6689 = vpow.pop %v6688
  %v6690 = vmul.f32 %v6677, 1.442695
  %v6691 = vpow.pop %v6690
  %v6692 = vmul.f32 %v6678, 1.442695
  %v6693 = vpow.pop %v6692
  %v6694 = vmul.f32 %v6679, 1.442695
  %v6695 = vpow.pop %v6694
  %v6696 = vsel %vm1072, %v6681, 0.0
  %6697 = vadd.xlane.f32.xlu0 %v6696
  %v6698 = vpop.xlane.xlu0 %6697
  %v6699 = vsel %vm1072, %v6683, 0.0
  %6700 = vadd.xlane.f32.xlu0 %v6699
  %v6701 = vpop.xlane.xlu0 %6700
  %v6702 = vsel %vm1072, %v6685, 0.0
  %6703 = vadd.xlane.f32.xlu0 %v6702
  %v6704 = vpop.xlane.xlu0 %6703
  %v6705 = vsel %vm1072, %v6687, 0.0
  %6706 = vadd.xlane.f32.xlu0 %v6705
  %v6707 = vpop.xlane.xlu0 %6706
  %v6708 = vsel %vm1072, %v6689, 0.0
  %6709 = vadd.xlane.f32.xlu0 %v6708
  %v6710 = vpop.xlane.xlu0 %6709
  %v6711 = vsel %vm1072, %v6691, 0.0
  %6712 = vadd.xlane.f32.xlu0 %v6711
  %v6713 = vpop.xlane.xlu0 %6712
  %v6714 = vsel %vm1072, %v6693, 0.0
  %6715 = vadd.xlane.f32.xlu0 %v6714
  %v6716 = vpop.xlane.xlu0 %6715
  %v6717 = vsel %vm1072, %v6695, 0.0
  %6718 = vadd.xlane.f32.xlu0 %v6717
  %v6719 = vpop.xlane.xlu0 %6718
  %v6720 = vrcp.pop %v6698
  %v6721 = vrcp.pop %v6701
  %v6722 = vrcp.pop %v6704
  %v6723 = vrcp.pop %v6707
  %v6724 = vrcp.pop %v6710
  %v6725 = vrcp.pop %v6713
  %v6726 = vrcp.pop %v6716
  %v6727 = vrcp.pop %v6719
  %v6728 = vmul.f32 %v6681, %v6720
  %v6729 = vmul.f32 %v6683, %v6721
  %v6730 = vmul.f32 %v6685, %v6722
  %v6731 = vmul.f32 %v6687, %v6723
  %v6732 = vmul.f32 %v6689, %v6724
  %v6733 = vmul.f32 %v6691, %v6725
  %v6734 = vmul.f32 %v6693, %v6726
  %v6735 = vmul.f32 %v6695, %v6727
  %v6736 = vpack.c.bf16 %v6728, %v6728
  %v6737 = vpack.c.bf16 %v6729, %v6729
  %v6738 = vpack.c.bf16 %v6730, %v6730
  %v6739 = vpack.c.bf16 %v6731, %v6731
  %v6740 = vpack.c.bf16 %v6732, %v6732
  %v6741 = vpack.c.bf16 %v6733, %v6733
  %v6742 = vpack.c.bf16 %v6734, %v6734
  %v6743 = vpack.c.bf16 %v6735, %v6735
  %v6745 = vsel %vm1072, %v6736, 0
  %v6748 = vsel %vm1540, %v6258, 0
  %6750 = vmatprep.subr.bf16.mxu0 0
  %6751 = vmatpush1.bf16.msra.mxu0 0
  %6752 = vmatprep.subr.bf16.mxu0 0
  %6753 = vmatpush1.bf16.msra.mxu0 0
  %6754 = vmatprep.subr.bf16.mxu0 0
  %6755 = vmatpush1.bf16.msra.mxu0 0
  %6756 = vmatprep.subr.bf16.mxu0 0
  %6757 = vmatpush1.bf16.msra.mxu0 0
  %6758 = vmatprep.subr.bf16.mxu0 0
  %6759 = vmatpush1.bf16.msra.mxu0 0
  %6760 = vmatprep.subr.bf16.mxu0 0
  %6761 = vmatpush1.bf16.msra.mxu0 0
  %6762 = vmatprep.subr.bf16.mxu0 0
  %6763 = vmatpush1.bf16.msra.mxu0 0
  %6764 = vmatprep.subr.bf16.mxu0 0
  %6765 = vmatpush1.bf16.msra.mxu0 %v6748
  %6766 = vmatprep.subr.bf16.mxu0 0
  %6767 = vmatpush2.bf16.msra.mxu0 0
  %6768 = vmatprep.subr.bf16.mxu0 0
  %6769 = vmatpush2.bf16.msra.mxu0 0
  %6770 = vmatprep.subr.bf16.mxu0 0
  %6771 = vmatpush2.bf16.msra.mxu0 0
  %6772 = vmatprep.subr.bf16.mxu0 0
  %6773 = vmatpush2.bf16.msra.mxu0 0
  %6774 = vmatprep.subr.bf16.mxu0 0
  %6775 = vmatpush2.bf16.msra.mxu0 0
  %6776 = vmatprep.subr.bf16.mxu0 0
  %6777 = vmatpush2.bf16.msra.mxu0 0
  %6778 = vmatprep.subr.bf16.mxu0 0
  %6779 = vmatpush2.bf16.msra.mxu0 0
  %6780 = vmatprep.subr.bf16.mxu0 0
  %6781 = vmatpush2.bf16.msra.mxu0 0
  %6782 = vmatprep.mubr.bf16.mxu0 0
  %6783 = vmatmul.mubr.bf16.gmra.mxu0 %v6745
  %v6784 = vpop.f32.mrf.mxu0
  %v6785 = vadd.f32 0.0, %v6784
  %v6786 = vpop.f32.mrf.mxu0
  %v6787 = vpop.f32.mrf.mxu0
  %v6788 = vpop.f32.mrf.mxu0
  %6789 = vdwg.mxu0
  %v6791 = vsel %vm1072, %v6737, 0
  %v6794 = vsel %vm1540, %v6261, 0
  %6796 = vmatprep.subr.bf16.mxu0 0
  %6797 = vmatpush1.bf16.msra.mxu0 0
  %6798 = vmatprep.subr.bf16.mxu0 0
  %6799 = vmatpush1.bf16.msra.mxu0 0
  %6800 = vmatprep.subr.bf16.mxu0 0
  %6801 = vmatpush1.bf16.msra.mxu0 0
  %6802 = vmatprep.subr.bf16.mxu0 0
  %6803 = vmatpush1.bf16.msra.mxu0 0
  %6804 = vmatprep.subr.bf16.mxu0 0
  %6805 = vmatpush1.bf16.msra.mxu0 0
  %6806 = vmatprep.subr.bf16.mxu0 0
  %6807 = vmatpush1.bf16.msra.mxu0 0
  %6808 = vmatprep.subr.bf16.mxu0 0
  %6809 = vmatpush1.bf16.msra.mxu0 0
  %6810 = vmatprep.subr.bf16.mxu0 0
  %6811 = vmatpush1.bf16.msra.mxu0 %v6794
  %6812 = vmatprep.subr.bf16.mxu0 0
  %6813 = vmatpush2.bf16.msra.mxu0 0
  %6814 = vmatprep.subr.bf16.mxu0 0
  %6815 = vmatpush2.bf16.msra.mxu0 0
  %6816 = vmatprep.subr.bf16.mxu0 0
  %6817 = vmatpush2.bf16.msra.mxu0 0
  %6818 = vmatprep.subr.bf16.mxu0 0
  %6819 = vmatpush2.bf16.msra.mxu0 0
  %6820 = vmatprep.subr.bf16.mxu0 0
  %6821 = vmatpush2.bf16.msra.mxu0 0
  %6822 = vmatprep.subr.bf16.mxu0 0
  %6823 = vmatpush2.bf16.msra.mxu0 0
  %6824 = vmatprep.subr.bf16.mxu0 0
  %6825 = vmatpush2.bf16.msra.mxu0 0
  %6826 = vmatprep.subr.bf16.mxu0 0
  %6827 = vmatpush2.bf16.msra.mxu0 0
  %6828 = vmatprep.mubr.bf16.mxu0 0
  %6829 = vmatmul.mubr.bf16.gmra.mxu0 %v6791
  %v6830 = vpop.f32.mrf.mxu0
  %v6831 = vadd.f32 0.0, %v6830
  %v6832 = vpop.f32.mrf.mxu0
  %v6833 = vpop.f32.mrf.mxu0
  %v6834 = vpop.f32.mrf.mxu0
  %6835 = vdwg.mxu0
  %v6837 = vsel %vm1072, %v6738, 0
  %v6840 = vsel %vm1540, %v6264, 0
  %6842 = vmatprep.subr.bf16.mxu0 0
  %6843 = vmatpush1.bf16.msra.mxu0 0
  %6844 = vmatprep.subr.bf16.mxu0 0
  %6845 = vmatpush1.bf16.msra.mxu0 0
  %6846 = vmatprep.subr.bf16.mxu0 0
  %6847 = vmatpush1.bf16.msra.mxu0 0
  %6848 = vmatprep.subr.bf16.mxu0 0
  %6849 = vmatpush1.bf16.msra.mxu0 0
  %6850 = vmatprep.subr.bf16.mxu0 0
  %6851 = vmatpush1.bf16.msra.mxu0 0
  %6852 = vmatprep.subr.bf16.mxu0 0
  %6853 = vmatpush1.bf16.msra.mxu0 0
  %6854 = vmatprep.subr.bf16.mxu0 0
  %6855 = vmatpush1.bf16.msra.mxu0 0
  %6856 = vmatprep.subr.bf16.mxu0 0
  %6857 = vmatpush1.bf16.msra.mxu0 %v6840
  %6858 = vmatprep.subr.bf16.mxu0 0
  %6859 = vmatpush2.bf16.msra.mxu0 0
  %6860 = vmatprep.subr.bf16.mxu0 0
  %6861 = vmatpush2.bf16.msra.mxu0 0
  %6862 = vmatprep.subr.bf16.mxu0 0
  %6863 = vmatpush2.bf16.msra.mxu0 0
  %6864 = vmatprep.subr.bf16.mxu0 0
  %6865 = vmatpush2.bf16.msra.mxu0 0
  %6866 = vmatprep.subr.bf16.mxu0 0
  %6867 = vmatpush2.bf16.msra.mxu0 0
  %6868 = vmatprep.subr.bf16.mxu0 0
  %6869 = vmatpush2.bf16.msra.mxu0 0
  %6870 = vmatprep.subr.bf16.mxu0 0
  %6871 = vmatpush2.bf16.msra.mxu0 0
  %6872 = vmatprep.subr.bf16.mxu0 0
  %6873 = vmatpush2.bf16.msra.mxu0 0
  %6874 = vmatprep.mubr.bf16.mxu0 0
  %6875 = vmatmul.mubr.bf16.gmra.mxu0 %v6837
  %v6876 = vpop.f32.mrf.mxu0
  %v6877 = vadd.f32 0.0, %v6876
  %v6878 = vpop.f32.mrf.mxu0
  %v6879 = vpop.f32.mrf.mxu0
  %v6880 = vpop.f32.mrf.mxu0
  %6881 = vdwg.mxu0
  %v6883 = vsel %vm1072, %v6739, 0
  %v6886 = vsel %vm1540, %v6267, 0
  %6888 = vmatprep.subr.bf16.mxu0 0
  %6889 = vmatpush1.bf16.msra.mxu0 0
  %6890 = vmatprep.subr.bf16.mxu0 0
  %6891 = vmatpush1.bf16.msra.mxu0 0
  %6892 = vmatprep.subr.bf16.mxu0 0
  %6893 = vmatpush1.bf16.msra.mxu0 0
  %6894 = vmatprep.subr.bf16.mxu0 0
  %6895 = vmatpush1.bf16.msra.mxu0 0
  %6896 = vmatprep.subr.bf16.mxu0 0
  %6897 = vmatpush1.bf16.msra.mxu0 0
  %6898 = vmatprep.subr.bf16.mxu0 0
  %6899 = vmatpush1.bf16.msra.mxu0 0
  %6900 = vmatprep.subr.bf16.mxu0 0
  %6901 = vmatpush1.bf16.msra.mxu0 0
  %6902 = vmatprep.subr.bf16.mxu0 0
  %6903 = vmatpush1.bf16.msra.mxu0 %v6886
  %6904 = vmatprep.subr.bf16.mxu0 0
  %6905 = vmatpush2.bf16.msra.mxu0 0
  %6906 = vmatprep.subr.bf16.mxu0 0
  %6907 = vmatpush2.bf16.msra.mxu0 0
  %6908 = vmatprep.subr.bf16.mxu0 0
  %6909 = vmatpush2.bf16.msra.mxu0 0
  %6910 = vmatprep.subr.bf16.mxu0 0
  %6911 = vmatpush2.bf16.msra.mxu0 0
  %6912 = vmatprep.subr.bf16.mxu0 0
  %6913 = vmatpush2.bf16.msra.mxu0 0
  %6914 = vmatprep.subr.bf16.mxu0 0
  %6915 = vmatpush2.bf16.msra.mxu0 0
  %6916 = vmatprep.subr.bf16.mxu0 0
  %6917 = vmatpush2.bf16.msra.mxu0 0
  %6918 = vmatprep.subr.bf16.mxu0 0
  %6919 = vmatpush2.bf16.msra.mxu0 0
  %6920 = vmatprep.mubr.bf16.mxu0 0
  %6921 = vmatmul.mubr.bf16.gmra.mxu0 %v6883
  %v6922 = vpop.f32.mrf.mxu0
  %v6923 = vadd.f32 0.0, %v6922
  %v6924 = vpop.f32.mrf.mxu0
  %v6925 = vpop.f32.mrf.mxu0
  %v6926 = vpop.f32.mrf.mxu0
  %6927 = vdwg.mxu0
  %v6929 = vsel %vm1072, %v6740, 0
  %v6932 = vsel %vm1540, %v6270, 0
  %6934 = vmatprep.subr.bf16.mxu0 0
  %6935 = vmatpush1.bf16.msra.mxu0 0
  %6936 = vmatprep.subr.bf16.mxu0 0
  %6937 = vmatpush1.bf16.msra.mxu0 0
  %6938 = vmatprep.subr.bf16.mxu0 0
  %6939 = vmatpush1.bf16.msra.mxu0 0
  %6940 = vmatprep.subr.bf16.mxu0 0
  %6941 = vmatpush1.bf16.msra.mxu0 0
  %6942 = vmatprep.subr.bf16.mxu0 0
  %6943 = vmatpush1.bf16.msra.mxu0 0
  %6944 = vmatprep.subr.bf16.mxu0 0
  %6945 = vmatpush1.bf16.msra.mxu0 0
  %6946 = vmatprep.subr.bf16.mxu0 0
  %6947 = vmatpush1.bf16.msra.mxu0 0
  %6948 = vmatprep.subr.bf16.mxu0 0
  %6949 = vmatpush1.bf16.msra.mxu0 %v6932
  %6950 = vmatprep.subr.bf16.mxu0 0
  %6951 = vmatpush2.bf16.msra.mxu0 0
  %6952 = vmatprep.subr.bf16.mxu0 0
  %6953 = vmatpush2.bf16.msra.mxu0 0
  %6954 = vmatprep.subr.bf16.mxu0 0
  %6955 = vmatpush2.bf16.msra.mxu0 0
  %6956 = vmatprep.subr.bf16.mxu0 0
  %6957 = vmatpush2.bf16.msra.mxu0 0
  %6958 = vmatprep.subr.bf16.mxu0 0
  %6959 = vmatpush2.bf16.msra.mxu0 0
  %6960 = vmatprep.subr.bf16.mxu0 0
  %6961 = vmatpush2.bf16.msra.mxu0 0
  %6962 = vmatprep.subr.bf16.mxu0 0
  %6963 = vmatpush2.bf16.msra.mxu0 0
  %6964 = vmatprep.subr.bf16.mxu0 0
  %6965 = vmatpush2.bf16.msra.mxu0 0
  %6966 = vmatprep.mubr.bf16.mxu0 0
  %6967 = vmatmul.mubr.bf16.gmra.mxu0 %v6929
  %v6968 = vpop.f32.mrf.mxu0
  %v6969 = vadd.f32 0.0, %v6968
  %v6970 = vpop.f32.mrf.mxu0
  %v6971 = vpop.f32.mrf.mxu0
  %v6972 = vpop.f32.mrf.mxu0
  %6973 = vdwg.mxu0
  %v6975 = vsel %vm1072, %v6741, 0
  %v6978 = vsel %vm1540, %v6273, 0
  %6980 = vmatprep.subr.bf16.mxu0 0
  %6981 = vmatpush1.bf16.msra.mxu0 0
  %6982 = vmatprep.subr.bf16.mxu0 0
  %6983 = vmatpush1.bf16.msra.mxu0 0
  %6984 = vmatprep.subr.bf16.mxu0 0
  %6985 = vmatpush1.bf16.msra.mxu0 0
  %6986 = vmatprep.subr.bf16.mxu0 0
  %6987 = vmatpush1.bf16.msra.mxu0 0
  %6988 = vmatprep.subr.bf16.mxu0 0
  %6989 = vmatpush1.bf16.msra.mxu0 0
  %6990 = vmatprep.subr.bf16.mxu0 0
  %6991 = vmatpush1.bf16.msra.mxu0 0
  %6992 = vmatprep.subr.bf16.mxu0 0
  %6993 = vmatpush1.bf16.msra.mxu0 0
  %6994 = vmatprep.subr.bf16.mxu0 0
  %6995 = vmatpush1.bf16.msra.mxu0 %v6978
  %6996 = vmatprep.subr.bf16.mxu0 0
  %6997 = vmatpush2.bf16.msra.mxu0 0
  %6998 = vmatprep.subr.bf16.mxu0 0
  %6999 = vmatpush2.bf16.msra.mxu0 0
  %7000 = vmatprep.subr.bf16.mxu0 0
  %7001 = vmatpush2.bf16.msra.mxu0 0
  %7002 = vmatprep.subr.bf16.mxu0 0
  %7003 = vmatpush2.bf16.msra.mxu0 0
  %7004 = vmatprep.subr.bf16.mxu0 0
  %7005 = vmatpush2.bf16.msra.mxu0 0
  %7006 = vmatprep.subr.bf16.mxu0 0
  %7007 = vmatpush2.bf16.msra.mxu0 0
  %7008 = vmatprep.subr.bf16.mxu0 0
  %7009 = vmatpush2.bf16.msra.mxu0 0
  %7010 = vmatprep.subr.bf16.mxu0 0
  %7011 = vmatpush2.bf16.msra.mxu0 0
  %7012 = vmatprep.mubr.bf16.mxu0 0
  %7013 = vmatmul.mubr.bf16.gmra.mxu0 %v6975
  %v7014 = vpop.f32.mrf.mxu0
  %v7015 = vadd.f32 0.0, %v7014
  %v7016 = vpop.f32.mrf.mxu0
  %v7017 = vpop.f32.mrf.mxu0
  %v7018 = vpop.f32.mrf.mxu0
  %7019 = vdwg.mxu0
  %v7021 = vsel %vm1072, %v6742, 0
  %v7024 = vsel %vm1540, %v6276, 0
  %7026 = vmatprep.subr.bf16.mxu0 0
  %7027 = vmatpush1.bf16.msra.mxu0 0
  %7028 = vmatprep.subr.bf16.mxu0 0
  %7029 = vmatpush1.bf16.msra.mxu0 0
  %7030 = vmatprep.subr.bf16.mxu0 0
  %7031 = vmatpush1.bf16.msra.mxu0 0
  %7032 = vmatprep.subr.bf16.mxu0 0
  %7033 = vmatpush1.bf16.msra.mxu0 0
  %7034 = vmatprep.subr.bf16.mxu0 0
  %7035 = vmatpush1.bf16.msra.mxu0 0
  %7036 = vmatprep.subr.bf16.mxu0 0
  %7037 = vmatpush1.bf16.msra.mxu0 0
  %7038 = vmatprep.subr.bf16.mxu0 0
  %7039 = vmatpush1.bf16.msra.mxu0 0
  %7040 = vmatprep.subr.bf16.mxu0 0
  %7041 = vmatpush1.bf16.msra.mxu0 %v7024
  %7042 = vmatprep.subr.bf16.mxu0 0
  %7043 = vmatpush2.bf16.msra.mxu0 0
  %7044 = vmatprep.subr.bf16.mxu0 0
  %7045 = vmatpush2.bf16.msra.mxu0 0
  %7046 = vmatprep.subr.bf16.mxu0 0
  %7047 = vmatpush2.bf16.msra.mxu0 0
  %7048 = vmatprep.subr.bf16.mxu0 0
  %7049 = vmatpush2.bf16.msra.mxu0 0
  %7050 = vmatprep.subr.bf16.mxu0 0
  %7051 = vmatpush2.bf16.msra.mxu0 0
  %7052 = vmatprep.subr.bf16.mxu0 0
  %7053 = vmatpush2.bf16.msra.mxu0 0
  %7054 = vmatprep.subr.bf16.mxu0 0
  %7055 = vmatpush2.bf16.msra.mxu0 0
  %7056 = vmatprep.subr.bf16.mxu0 0
  %7057 = vmatpush2.bf16.msra.mxu0 0
  %7058 = vmatprep.mubr.bf16.mxu0 0
  %7059 = vmatmul.mubr.bf16.gmra.mxu0 %v7021
  %v7060 = vpop.f32.mrf.mxu0
  %v7061 = vadd.f32 0.0, %v7060
  %v7062 = vpop.f32.mrf.mxu0
  %v7063 = vpop.f32.mrf.mxu0
  %v7064 = vpop.f32.mrf.mxu0
  %7065 = vdwg.mxu0
  %v7067 = vsel %vm1072, %v6743, 0
  %v7070 = vsel %vm1540, %v6279, 0
  %7072 = vmatprep.subr.bf16.mxu0 0
  %7073 = vmatpush1.bf16.msra.mxu0 0
  %7074 = vmatprep.subr.bf16.mxu0 0
  %7075 = vmatpush1.bf16.msra.mxu0 0
  %7076 = vmatprep.subr.bf16.mxu0 0
  %7077 = vmatpush1.bf16.msra.mxu0 0
  %7078 = vmatprep.subr.bf16.mxu0 0
  %7079 = vmatpush1.bf16.msra.mxu0 0
  %7080 = vmatprep.subr.bf16.mxu0 0
  %7081 = vmatpush1.bf16.msra.mxu0 0
  %7082 = vmatprep.subr.bf16.mxu0 0
  %7083 = vmatpush1.bf16.msra.mxu0 0
  %7084 = vmatprep.subr.bf16.mxu0 0
  %7085 = vmatpush1.bf16.msra.mxu0 0
  %7086 = vmatprep.subr.bf16.mxu0 0
  %7087 = vmatpush1.bf16.msra.mxu0 %v7070
  %7088 = vmatprep.subr.bf16.mxu0 0
  %7089 = vmatpush2.bf16.msra.mxu0 0
  %7090 = vmatprep.subr.bf16.mxu0 0
  %7091 = vmatpush2.bf16.msra.mxu0 0
  %7092 = vmatprep.subr.bf16.mxu0 0
  %7093 = vmatpush2.bf16.msra.mxu0 0
  %7094 = vmatprep.subr.bf16.mxu0 0
  %7095 = vmatpush2.bf16.msra.mxu0 0
  %7096 = vmatprep.subr.bf16.mxu0 0
  %7097 = vmatpush2.bf16.msra.mxu0 0
  %7098 = vmatprep.subr.bf16.mxu0 0
  %7099 = vmatpush2.bf16.msra.mxu0 0
  %7100 = vmatprep.subr.bf16.mxu0 0
  %7101 = vmatpush2.bf16.msra.mxu0 0
  %7102 = vmatprep.subr.bf16.mxu0 0
  %7103 = vmatpush2.bf16.msra.mxu0 0
  %7104 = vmatprep.mubr.bf16.mxu0 0
  %7105 = vmatmul.mubr.bf16.gmra.mxu0 %v7067
  %v7106 = vpop.f32.mrf.mxu0
  %v7107 = vadd.f32 0.0, %v7106
  %v7108 = vpop.f32.mrf.mxu0
  %v7109 = vpop.f32.mrf.mxu0
  %v7110 = vpop.f32.mrf.mxu0
  %7111 = vdwg.mxu0
  %v7112 = vcombine.low %v6785, %v6877
  %v7113 = vcombine.high %v6785, %v6877
  %v7115 = vunpack.c.l.s4 1983009808
  %v7116 = vunpack.c.0.s8 %v7115
  %v7117 = vlaneseq
  %v7118 = vshrl.u32 %v7117, 7
  %v7119 = vsub.s32 %v7116, %v7118
  %v7120 = vrot.slane %v7112, %v7119
  %v7122 = vunpack.c.l.s4 1983009808
  %v7123 = vunpack.c.0.s8 %v7122
  %v7124 = vlaneseq
  %v7125 = vshrl.u32 %v7124, 7
  %v7126 = vsub.s32 %v7123, %v7125
  %v7127 = vrot.slane %v7113, %v7126
  %v7128 = vcombine.low %v6831, %v6923
  %v7129 = vcombine.high %v6831, %v6923
  %v7131 = vunpack.c.l.s4 1983009808
  %v7132 = vunpack.c.0.s8 %v7131
  %v7133 = vlaneseq
  %v7134 = vshrl.u32 %v7133, 7
  %v7135 = vsub.s32 %v7132, %v7134
  %v7136 = vrot.slane %v7128, %v7135
  %v7138 = vunpack.c.l.s4 1983009808
  %v7139 = vunpack.c.0.s8 %v7138
  %v7140 = vlaneseq
  %v7141 = vshrl.u32 %v7140, 7
  %v7142 = vsub.s32 %v7139, %v7141
  %v7143 = vrot.slane %v7129, %v7142
  %v7144 = vcombine.low %v7120, %v7136
  %v7145 = vcombine.high %v7120, %v7136
  %v7147 = vunpack.c.l.s4 1934713408
  %v7148 = vunpack.c.0.s8 %v7147
  %v7149 = vlaneseq
  %v7150 = vshrl.u32 %v7149, 7
  %v7151 = vsub.s32 %v7148, %v7150
  %v7152 = vrot.slane %v7144, %v7151
  %v7154 = vunpack.c.l.s4 1934713408
  %v7155 = vunpack.c.0.s8 %v7154
  %v7156 = vlaneseq
  %v7157 = vshrl.u32 %v7156, 7
  %v7158 = vsub.s32 %v7155, %v7157
  %v7159 = vrot.slane %v7145, %v7158
  %v7160 = vcombine.low %v7127, %v7143
  %v7161 = vcombine.high %v7127, %v7143
  %v7163 = vunpack.c.l.s4 1934713408
  %v7164 = vunpack.c.0.s8 %v7163
  %v7165 = vlaneseq
  %v7166 = vshrl.u32 %v7165, 7
  %v7167 = vsub.s32 %v7164, %v7166
  %v7168 = vrot.slane %v7160, %v7167
  %v7170 = vunpack.c.l.s4 1934713408
  %v7171 = vunpack.c.0.s8 %v7170
  %v7172 = vlaneseq
  %v7173 = vshrl.u32 %v7172, 7
  %v7174 = vsub.s32 %v7171, %v7173
  %v7175 = vrot.slane %v7161, %v7174
  %v7176 = vcombine.high %v7152, 0.0
  %v7177 = vcombine.high %v7159, 0.0
  %v7178 = vcombine.high %v7168, 0.0
  %v7179 = vcombine.high %v7175, 0.0
  %v7180 = vcombine.low %v6969, %v7061
  %v7181 = vcombine.high %v6969, %v7061
  %v7183 = vunpack.c.l.s4 1983009808
  %v7184 = vunpack.c.0.s8 %v7183
  %v7185 = vlaneseq
  %v7186 = vshrl.u32 %v7185, 7
  %v7187 = vsub.s32 %v7184, %v7186
  %v7188 = vrot.slane %v7180, %v7187
  %v7190 = vunpack.c.l.s4 1983009808
  %v7191 = vunpack.c.0.s8 %v7190
  %v7192 = vlaneseq
  %v7193 = vshrl.u32 %v7192, 7
  %v7194 = vsub.s32 %v7191, %v7193
  %v7195 = vrot.slane %v7181, %v7194
  %v7196 = vcombine.low %v7015, %v7107
  %v7197 = vcombine.high %v7015, %v7107
  %v7199 = vunpack.c.l.s4 1983009808
  %v7200 = vunpack.c.0.s8 %v7199
  %v7201 = vlaneseq
  %v7202 = vshrl.u32 %v7201, 7
  %v7203 = vsub.s32 %v7200, %v7202
  %v7204 = vrot.slane %v7196, %v7203
  %v7206 = vunpack.c.l.s4 1983009808
  %v7207 = vunpack.c.0.s8 %v7206
  %v7208 = vlaneseq
  %v7209 = vshrl.u32 %v7208, 7
  %v7210 = vsub.s32 %v7207, %v7209
  %v7211 = vrot.slane %v7197, %v7210
  %v7212 = vcombine.low %v7188, %v7204
  %v7213 = vcombine.high %v7188, %v7204
  %v7215 = vunpack.c.l.s4 1934713408
  %v7216 = vunpack.c.0.s8 %v7215
  %v7217 = vlaneseq
  %v7218 = vshrl.u32 %v7217, 7
  %v7219 = vsub.s32 %v7216, %v7218
  %v7220 = vrot.slane %v7212, %v7219
  %v7222 = vunpack.c.l.s4 1934713408
  %v7223 = vunpack.c.0.s8 %v7222
  %v7224 = vlaneseq
  %v7225 = vshrl.u32 %v7224, 7
  %v7226 = vsub.s32 %v7223, %v7225
  %v7227 = vrot.slane %v7213, %v7226
  %v7228 = vcombine.low %v7195, %v7211
  %v7229 = vcombine.high %v7195, %v7211
  %v7231 = vunpack.c.l.s4 1934713408
  %v7232 = vunpack.c.0.s8 %v7231
  %v7233 = vlaneseq
  %v7234 = vshrl.u32 %v7233, 7
  %v7235 = vsub.s32 %v7232, %v7234
  %v7236 = vrot.slane %v7228, %v7235
  %v7238 = vunpack.c.l.s4 1934713408
  %v7239 = vunpack.c.0.s8 %v7238
  %v7240 = vlaneseq
  %v7241 = vshrl.u32 %v7240, 7
  %v7242 = vsub.s32 %v7239, %v7241
  %v7243 = vrot.slane %v7229, %v7242
  %v7244 = vcombine.high %v7220, 0.0
  %v7245 = vcombine.high %v7227, 0.0
  %v7246 = vcombine.high %v7236, 0.0
  %v7247 = vcombine.high %v7243, 0.0
  %v7248 = vcombine.low %v7152, %v7159
  %v7250 = vunpack.c.l.s4 1983009808
  %v7251 = vunpack.c.0.s8 %v7250
  %v7252 = vlaneseq
  %v7253 = vshrl.u32 %v7252, 7
  %v7254 = vsub.s32 %v7251, %v7253
  %v7255 = vrot.slane %v7248, %v7254
  %v7256 = vcombine.low %v7176, %v7177
  %v7258 = vunpack.c.l.s4 1983009808
  %v7259 = vunpack.c.0.s8 %v7258
  %v7260 = vlaneseq
  %v7261 = vshrl.u32 %v7260, 7
  %v7262 = vsub.s32 %v7259, %v7261
  %v7263 = vrot.slane %v7256, %v7262
  %v7264 = vcombine.low %v7168, %v7175
  %v7266 = vunpack.c.l.s4 1983009808
  %v7267 = vunpack.c.0.s8 %v7266
  %v7268 = vlaneseq
  %v7269 = vshrl.u32 %v7268, 7
  %v7270 = vsub.s32 %v7267, %v7269
  %v7271 = vrot.slane %v7264, %v7270
  %v7272 = vcombine.low %v7178, %v7179
  %v7274 = vunpack.c.l.s4 1983009808
  %v7275 = vunpack.c.0.s8 %v7274
  %v7276 = vlaneseq
  %v7277 = vshrl.u32 %v7276, 7
  %v7278 = vsub.s32 %v7275, %v7277
  %v7279 = vrot.slane %v7272, %v7278
  %v7280 = vcombine.low %v7255, %v7263
  %v7281 = vcombine.high %v7255, %v7263
  %v7283 = vunpack.c.l.s4 1934713408
  %v7284 = vunpack.c.0.s8 %v7283
  %v7285 = vlaneseq
  %v7286 = vshrl.u32 %v7285, 7
  %v7287 = vsub.s32 %v7284, %v7286
  %v7288 = vrot.slane %v7280, %v7287
  %v7290 = vunpack.c.l.s4 1934713408
  %v7291 = vunpack.c.0.s8 %v7290
  %v7292 = vlaneseq
  %v7293 = vshrl.u32 %v7292, 7
  %v7294 = vsub.s32 %v7291, %v7293
  %v7295 = vrot.slane %v7281, %v7294
  %v7296 = vcombine.low %v7271, %v7279
  %v7297 = vcombine.high %v7271, %v7279
  %v7299 = vunpack.c.l.s4 1934713408
  %v7300 = vunpack.c.0.s8 %v7299
  %v7301 = vlaneseq
  %v7302 = vshrl.u32 %v7301, 7
  %v7303 = vsub.s32 %v7300, %v7302
  %v7304 = vrot.slane %v7296, %v7303
  %v7306 = vunpack.c.l.s4 1934713408
  %v7307 = vunpack.c.0.s8 %v7306
  %v7308 = vlaneseq
  %v7309 = vshrl.u32 %v7308, 7
  %v7310 = vsub.s32 %v7307, %v7309
  %v7311 = vrot.slane %v7297, %v7310
  %v7312 = vcombine.low %v7288, %v7304
  %v7313 = vcombine.high %v7288, %v7304
  %v7314 = vcombine.low %v7295, %v7311
  %v7315 = vcombine.high %v7295, %v7311
  %v7316 = vcombine.low %v7220, %v7227
  %v7318 = vunpack.c.l.s4 1983009808
  %v7319 = vunpack.c.0.s8 %v7318
  %v7320 = vlaneseq
  %v7321 = vshrl.u32 %v7320, 7
  %v7322 = vsub.s32 %v7319, %v7321
  %v7323 = vrot.slane %v7316, %v7322
  %v7324 = vcombine.low %v7244, %v7245
  %v7326 = vunpack.c.l.s4 1983009808
  %v7327 = vunpack.c.0.s8 %v7326
  %v7328 = vlaneseq
  %v7329 = vshrl.u32 %v7328, 7
  %v7330 = vsub.s32 %v7327, %v7329
  %v7331 = vrot.slane %v7324, %v7330
  %v7332 = vcombine.low %v7236, %v7243
  %v7334 = vunpack.c.l.s4 1983009808
  %v7335 = vunpack.c.0.s8 %v7334
  %v7336 = vlaneseq
  %v7337 = vshrl.u32 %v7336, 7
  %v7338 = vsub.s32 %v7335, %v7337
  %v7339 = vrot.slane %v7332, %v7338
  %v7340 = vcombine.low %v7246, %v7247
  %v7342 = vunpack.c.l.s4 1983009808
  %v7343 = vunpack.c.0.s8 %v7342
  %v7344 = vlaneseq
  %v7345 = vshrl.u32 %v7344, 7
  %v7346 = vsub.s32 %v7343, %v7345
  %v7347 = vrot.slane %v7340, %v7346
  %v7348 = vcombine.low %v7323, %v7331
  %v7349 = vcombine.high %v7323, %v7331
  %v7351 = vunpack.c.l.s4 1934713408
  %v7352 = vunpack.c.0.s8 %v7351
  %v7353 = vlaneseq
  %v7354 = vshrl.u32 %v7353, 7
  %v7355 = vsub.s32 %v7352, %v7354
  %v7356 = vrot.slane %v7348, %v7355
  %v7358 = vunpack.c.l.s4 1934713408
  %v7359 = vunpack.c.0.s8 %v7358
  %v7360 = vlaneseq
  %v7361 = vshrl.u32 %v7360, 7
  %v7362 = vsub.s32 %v7359, %v7361
  %v7363 = vrot.slane %v7349, %v7362
  %v7364 = vcombine.low %v7339, %v7347
  %v7365 = vcombine.high %v7339, %v7347
  %v7367 = vunpack.c.l.s4 1934713408
  %v7368 = vunpack.c.0.s8 %v7367
  %v7369 = vlaneseq
  %v7370 = vshrl.u32 %v7369, 7
  %v7371 = vsub.s32 %v7368, %v7370
  %v7372 = vrot.slane %v7364, %v7371
  %v7374 = vunpack.c.l.s4 1934713408
  %v7375 = vunpack.c.0.s8 %v7374
  %v7376 = vlaneseq
  %v7377 = vshrl.u32 %v7376, 7
  %v7378 = vsub.s32 %v7375, %v7377
  %v7379 = vrot.slane %v7365, %v7378
  %v7380 = vcombine.low %v7356, %v7372
  %v7381 = vcombine.high %v7356, %v7372
  %v7382 = vcombine.low %v7363, %v7379
  %v7383 = vcombine.high %v7363, %v7379
  %7386 = vrot.lane.b32.xlu0 %v7313, 8
  %v7387 = vpop.permute.xlu0 %7386
  %7388 = vrot.lane.b32.xlu0 %v7381, 8
  %v7389 = vpop.permute.xlu0 %7388
  %7394 = vrot.lane.b32.xlu0 %v7314, 16
  %v7395 = vpop.permute.xlu0 %7394
  %7396 = vrot.lane.b32.xlu0 %v7382, 16
  %v7397 = vpop.permute.xlu0 %7396
  %7402 = vrot.lane.b32.xlu0 %v7315, 24
  %v7403 = vpop.permute.xlu0 %7402
  %7404 = vrot.lane.b32.xlu0 %v7383, 24
  %v7405 = vpop.permute.xlu0 %7404
  %v7408 = vsel %vm1072, %v7312, %v7387
  %v7409 = vsel %vm1072, %v7380, %v7389
  %v7410 = vsel %vm2204, %v7408, %v7395
  %v7411 = vsel %vm2204, %v7409, %v7397
  %v7412 = vsel %vm2207, %v7410, %v7403
  %v7413 = vsel %vm2207, %v7411, %v7405
  %v7414 = vpack.c.bf16 %v7413, %v7412
  %v7416 = vlaneseq
  %v7417 = vshrl.u32 %v7416, 7
  %v7418 = vsub.s32 0, %v7417
  %v7419 = vrot.slane %v5322, %v7418
  %v7425 = vunpack.c.l.b16 %v5317
  %v7426 = vunpack.c.l.b16 %v5318
  %v7427 = vunpack.c.l.b16 %v5319
  %v7428 = vunpack.c.l.b16 %v5320
  %v7429 = vpack.c.b16 %v7426, %v7425
  %v7430 = vpack.c.b16 %v7428, %v7427
  %v7434 = vsel %vm127, %v7414, 0
  %7436 = vmatprep.subr.bf16.mxu0 0
  %7437 = vmatpush1.bf16.msra.mxu0 0
  %7438 = vmatprep.subr.bf16.mxu0 0
  %7439 = vmatpush1.bf16.msra.mxu0 0
  %7440 = vmatprep.subr.bf16.mxu0 0
  %7441 = vmatpush1.bf16.msra.mxu0 0
  %7442 = vmatprep.subr.bf16.mxu0 0
  %7443 = vmatpush1.bf16.msra.mxu0 0
  %7444 = vmatprep.subr.bf16.mxu0 0
  %7445 = vmatpush1.bf16.msra.mxu0 0
  %7446 = vmatprep.subr.bf16.mxu0 0
  %7447 = vmatpush1.bf16.msra.mxu0 0
  %7448 = vmatprep.subr.bf16.mxu0 0
  %7449 = vmatpush1.bf16.msra.mxu0 %v7430
  %7450 = vmatprep.subr.bf16.mxu0 0
  %7451 = vmatpush1.bf16.msra.mxu0 %v7429
  %7452 = vmatprep.subr.bf16.mxu0 0
  %7453 = vmatpush2.bf16.msra.mxu0 0
  %7454 = vmatprep.subr.bf16.mxu0 0
  %7455 = vmatpush2.bf16.msra.mxu0 0
  %7456 = vmatprep.subr.bf16.mxu0 0
  %7457 = vmatpush2.bf16.msra.mxu0 0
  %7458 = vmatprep.subr.bf16.mxu0 0
  %7459 = vmatpush2.bf16.msra.mxu0 0
  %7460 = vmatprep.subr.bf16.mxu0 0
  %7461 = vmatpush2.bf16.msra.mxu0 0
  %7462 = vmatprep.subr.bf16.mxu0 0
  %7463 = vmatpush2.bf16.msra.mxu0 0
  %7464 = vmatprep.subr.bf16.mxu0 0
  %7465 = vmatpush2.bf16.msra.mxu0 0
  %7466 = vmatprep.subr.bf16.mxu0 0
  %7467 = vmatpush2.bf16.msra.mxu0 0
  %7468 = vmatprep.mubr.bf16.mxu0 0
  %7469 = vmatmul.mubr.bf16.gmra.mxu0 %v7434
  %v7470 = vpop.f32.mrf.mxu0
  %v7471 = vadd.f32 %v7419, %v7470
  %v7472 = vpop.f32.mrf.mxu0
  %v7473 = vpop.f32.mrf.mxu0
  %v7474 = vadd.f32 %v7419, %v7473
  %v7475 = vpop.f32.mrf.mxu0
  %7476 = vdwg.mxu0
  %v7477 = vadd.f32 %v5305, %v7471
  %v7478 = vadd.f32 %v5306, %v7474
  %s7479 = scalar_lea.vmem %s16, 1
  %v7480 = vld [vmem:[%s7479] sm:$0x1]
  %s7481 = scalar_lea.vmem %s17, 1
  %v7482 = vld [vmem:[%s7481] sm:$0x1]
  %v7483 = vsel %vm127, %v7477, 0.0
  %7484 = vadd.xlane.f32.xlu0 %v7483
  %v7485 = vpop.xlane.xlu0 %7484
  %v7486 = vsel %vm127, %v7478, 0.0
  %7487 = vadd.xlane.f32.xlu0 %v7486
  %v7488 = vpop.xlane.xlu0 %7487
  %v7489 = vmul.f32 %v7485, %v2283
  %v7490 = vmul.f32 %v7488, %v2283
  %v7491 = vsub.f32 %v7477, %v7489
  %v7492 = vsub.f32 %v7478, %v7490
  %v7493 = vmul.f32 %v7491, %v7491
  %v7494 = vmul.f32 %v7492, %v7492
  %v7495 = vsel %vm127, %v7493, 0.0
  %7496 = vadd.xlane.f32.xlu0 %v7495
  %v7497 = vpop.xlane.xlu0 %7496
  %v7498 = vsel %vm127, %v7494, 0.0
  %7499 = vadd.xlane.f32.xlu0 %v7498
  %v7500 = vpop.xlane.xlu0 %7499
  %v7501 = vmul.f32 %v7497, %v2283
  %v7502 = vmul.f32 %v7500, %v2283
  %v7503 = vadd.f32 %v7501, 1e-05
  %v7504 = vadd.f32 %v7502, 1e-05
  %v7505 = vrsqrt.pop %v7503
  %v7506 = vrsqrt.pop %v7504
  %v7507 = vmul.f32 %v7491, %v7505
  %v7508 = vmul.f32 %v7492, %v7506
  %v7510 = vlaneseq
  %v7511 = vshrl.u32 %v7510, 7
  %v7512 = vsub.s32 0, %v7511
  %v7513 = vrot.slane %v7480, %v7512
  %v7515 = vmul.f32 %v7507, %v7513
  %v7516 = vmul.f32 %v7508, %v7513
  %v7518 = vlaneseq
  %v7519 = vshrl.u32 %v7518, 7
  %v7520 = vsub.s32 0, %v7519
  %v7521 = vrot.slane %v7482, %v7520
  %v7523 = vadd.f32 %v7515, %v7521
  %v7524 = vadd.f32 %v7516, %v7521
  %v7525 = vadd.f32 %v7523, %v90
  %v7526 = vadd.f32 %v7524, %v91
  %s7527 = scalar_lea.vmem %s8, 16
  %v7528 = vld [vmem:[%s7527] sm:$0xf]
  %v7529 = vld [vmem:[%s7527 + $0x4] sm:$0xf]
  %v7530 = vld [vmem:[%s7527 + $0x8] sm:$0xf]
  %v7531 = vld [vmem:[%s7527 + $0xc] sm:$0xf]
  %s7532 = scalar_lea.vmem %s9, 1
  %v7533 = vld [vmem:[%s7532] sm:$0x1]
  %s7534 = scalar_lea.vmem %s10, 16
  %v7535 = vld [vmem:[%s7534] sm:$0xf]
  %v7536 = vld [vmem:[%s7534 + $0x4] sm:$0xf]
  %v7537 = vld [vmem:[%s7534 + $0x8] sm:$0xf]
  %v7538 = vld [vmem:[%s7534 + $0xc] sm:$0xf]
  %s7539 = scalar_lea.vmem %s11, 1
  %v7540 = vld [vmem:[%s7539] sm:$0x1]
  %v7541 = vpack.c.bf16 %v7526, %v7525
  %v7543 = vlaneseq
  %v7544 = vshrl.u32 %v7543, 7
  %v7545 = vsub.s32 0, %v7544
  %v7546 = vrot.slane %v7533, %v7545
  %v7552 = vunpack.c.l.b16 %v7528
  %v7553 = vunpack.c.l.b16 %v7529
  %v7554 = vunpack.c.l.b16 %v7530
  %v7555 = vunpack.c.l.b16 %v7531
  %v7556 = vpack.c.b16 %v7553, %v7552
  %v7557 = vpack.c.b16 %v7555, %v7554
  %v7561 = vsel %vm127, %v7541, 0
  %7563 = vmatprep.subr.bf16.mxu0 0
  %7564 = vmatpush1.bf16.msra.mxu0 0
  %7565 = vmatprep.subr.bf16.mxu0 0
  %7566 = vmatpush1.bf16.msra.mxu0 0
  %7567 = vmatprep.subr.bf16.mxu0 0
  %7568 = vmatpush1.bf16.msra.mxu0 0
  %7569 = vmatprep.subr.bf16.mxu0 0
  %7570 = vmatpush1.bf16.msra.mxu0 0
  %7571 = vmatprep.subr.bf16.mxu0 0
  %7572 = vmatpush1.bf16.msra.mxu0 0
  %7573 = vmatprep.subr.bf16.mxu0 0
  %7574 = vmatpush1.bf16.msra.mxu0 0
  %7575 = vmatprep.subr.bf16.mxu0 0
  %7576 = vmatpush1.bf16.msra.mxu0 %v7557
  %7577 = vmatprep.subr.bf16.mxu0 0
  %7578 = vmatpush1.bf16.msra.mxu0 %v7556
  %7579 = vmatprep.subr.bf16.mxu0 0
  %7580 = vmatpush2.bf16.msra.mxu0 0
  %7581 = vmatprep.subr.bf16.mxu0 0
  %7582 = vmatpush2.bf16.msra.mxu0 0
  %7583 = vmatprep.subr.bf16.mxu0 0
  %7584 = vmatpush2.bf16.msra.mxu0 0
  %7585 = vmatprep.subr.bf16.mxu0 0
  %7586 = vmatpush2.bf16.msra.mxu0 0
  %7587 = vmatprep.subr.bf16.mxu0 0
  %7588 = vmatpush2.bf16.msra.mxu0 0
  %7589 = vmatprep.subr.bf16.mxu0 0
  %7590 = vmatpush2.bf16.msra.mxu0 0
  %7591 = vmatprep.subr.bf16.mxu0 0
  %7592 = vmatpush2.bf16.msra.mxu0 0
  %7593 = vmatprep.subr.bf16.mxu0 0
  %7594 = vmatpush2.bf16.msra.mxu0 0
  %7595 = vmatprep.mubr.bf16.mxu0 0
  %7596 = vmatmul.mubr.bf16.gmra.mxu0 %v7561
  %v7597 = vpop.f32.mrf.mxu0
  %v7598 = vadd.f32 %v7546, %v7597
  %v7599 = vpop.f32.mrf.mxu0
  %v7600 = vpop.f32.mrf.mxu0
  %v7601 = vadd.f32 %v7546, %v7600
  %v7602 = vpop.f32.mrf.mxu0
  %7603 = vdwg.mxu0
  %7604 = vrot.lane.b32.xlu0 %v7556, 96
  %v7605 = vpop.permute.xlu0 %7604
  %7606 = vrot.lane.b32.xlu0 %v7557, 96
  %v7607 = vpop.permute.xlu0 %7606
  %7610 = vrot.lane.b32.xlu0 %v7546, 96
  %v7611 = vpop.permute.xlu0 %7610
  %7613 = vmatprep.subr.bf16.mxu0 0
  %7614 = vmatpush1.bf16.msra.mxu0 0
  %7615 = vmatprep.subr.bf16.mxu0 0
  %7616 = vmatpush1.bf16.msra.mxu0 0
  %7617 = vmatprep.subr.bf16.mxu0 0
  %7618 = vmatpush1.bf16.msra.mxu0 0
  %7619 = vmatprep.subr.bf16.mxu0 0
  %7620 = vmatpush1.bf16.msra.mxu0 0
  %7621 = vmatprep.subr.bf16.mxu0 0
  %7622 = vmatpush1.bf16.msra.mxu0 0
  %7623 = vmatprep.subr.bf16.mxu0 0
  %7624 = vmatpush1.bf16.msra.mxu0 0
  %7625 = vmatprep.subr.bf16.mxu0 0
  %7626 = vmatpush1.bf16.msra.mxu0 %v7607
  %7627 = vmatprep.subr.bf16.mxu0 0
  %7628 = vmatpush1.bf16.msra.mxu0 %v7605
  %7629 = vmatprep.subr.bf16.mxu0 0
  %7630 = vmatpush2.bf16.msra.mxu0 0
  %7631 = vmatprep.subr.bf16.mxu0 0
  %7632 = vmatpush2.bf16.msra.mxu0 0
  %7633 = vmatprep.subr.bf16.mxu0 0
  %7634 = vmatpush2.bf16.msra.mxu0 0
  %7635 = vmatprep.subr.bf16.mxu0 0
  %7636 = vmatpush2.bf16.msra.mxu0 0
  %7637 = vmatprep.subr.bf16.mxu0 0
  %7638 = vmatpush2.bf16.msra.mxu0 0
  %7639 = vmatprep.subr.bf16.mxu0 0
  %7640 = vmatpush2.bf16.msra.mxu0 0
  %7641 = vmatprep.subr.bf16.mxu0 0
  %7642 = vmatpush2.bf16.msra.mxu0 0
  %7643 = vmatprep.subr.bf16.mxu0 0
  %7644 = vmatpush2.bf16.msra.mxu0 0
  %7645 = vmatprep.mubr.bf16.mxu0 0
  %7646 = vmatmul.mubr.bf16.gmra.mxu0 %v2407
  %v7647 = vpop.f32.mrf.mxu0
  %v7648 = vadd.f32 %v7611, %v7647
  %v7649 = vpop.f32.mrf.mxu0
  %v7650 = vpop.f32.mrf.mxu0
  %v7651 = vadd.f32 %v7611, %v7650
  %v7652 = vpop.f32.mrf.mxu0
  %7653 = vmatprep.mubr.bf16.mxu0 0
  %7654 = vmatmul.mubr.bf16.gmra.mxu0 %v2410
  %v7655 = vpop.f32.mrf.mxu0
  %v7656 = vadd.f32 %v7611, %v7655
  %v7657 = vpop.f32.mrf.mxu0
  %v7658 = vpop.f32.mrf.mxu0
  %v7659 = vadd.f32 %v7611, %v7658
  %v7660 = vpop.f32.mrf.mxu0
  %7661 = vdwg.mxu0
  %7662 = vrot.lane.b32.xlu0 %v7556, 64
  %v7663 = vpop.permute.xlu0 %7662
  %7664 = vrot.lane.b32.xlu0 %v7557, 64
  %v7665 = vpop.permute.xlu0 %7664
  %7668 = vrot.lane.b32.xlu0 %v7546, 64
  %v7669 = vpop.permute.xlu0 %7668
  %7671 = vmatprep.subr.bf16.mxu0 0
  %7672 = vmatpush1.bf16.msra.mxu0 0
  %7673 = vmatprep.subr.bf16.mxu0 0
  %7674 = vmatpush1.bf16.msra.mxu0 0
  %7675 = vmatprep.subr.bf16.mxu0 0
  %7676 = vmatpush1.bf16.msra.mxu0 0
  %7677 = vmatprep.subr.bf16.mxu0 0
  %7678 = vmatpush1.bf16.msra.mxu0 0
  %7679 = vmatprep.subr.bf16.mxu0 0
  %7680 = vmatpush1.bf16.msra.mxu0 0
  %7681 = vmatprep.subr.bf16.mxu0 0
  %7682 = vmatpush1.bf16.msra.mxu0 0
  %7683 = vmatprep.subr.bf16.mxu0 0
  %7684 = vmatpush1.bf16.msra.mxu0 %v7665
  %7685 = vmatprep.subr.bf16.mxu0 0
  %7686 = vmatpush1.bf16.msra.mxu0 %v7663
  %7687 = vmatprep.subr.bf16.mxu0 0
  %7688 = vmatpush2.bf16.msra.mxu0 0
  %7689 = vmatprep.subr.bf16.mxu0 0
  %7690 = vmatpush2.bf16.msra.mxu0 0
  %7691 = vmatprep.subr.bf16.mxu0 0
  %7692 = vmatpush2.bf16.msra.mxu0 0
  %7693 = vmatprep.subr.bf16.mxu0 0
  %7694 = vmatpush2.bf16.msra.mxu0 0
  %7695 = vmatprep.subr.bf16.mxu0 0
  %7696 = vmatpush2.bf16.msra.mxu0 0
  %7697 = vmatprep.subr.bf16.mxu0 0
  %7698 = vmatpush2.bf16.msra.mxu0 0
  %7699 = vmatprep.subr.bf16.mxu0 0
  %7700 = vmatpush2.bf16.msra.mxu0 0
  %7701 = vmatprep.subr.bf16.mxu0 0
  %7702 = vmatpush2.bf16.msra.mxu0 0
  %7703 = vmatprep.mubr.bf16.mxu0 0
  %7704 = vmatmul.mubr.bf16.gmra.mxu0 %v2473
  %v7705 = vpop.f32.mrf.mxu0
  %v7706 = vadd.f32 %v7669, %v7705
  %v7707 = vpop.f32.mrf.mxu0
  %v7708 = vpop.f32.mrf.mxu0
  %v7709 = vadd.f32 %v7669, %v7708
  %v7710 = vpop.f32.mrf.mxu0
  %7711 = vmatprep.mubr.bf16.mxu0 0
  %7712 = vmatmul.mubr.bf16.gmra.mxu0 %v2476
  %v7713 = vpop.f32.mrf.mxu0
  %v7714 = vadd.f32 %v7669, %v7713
  %v7715 = vpop.f32.mrf.mxu0
  %v7716 = vpop.f32.mrf.mxu0
  %v7717 = vadd.f32 %v7669, %v7716
  %v7718 = vpop.f32.mrf.mxu0
  %7719 = vdwg.mxu0
  %v7720 = vpack.c.bf16 %v7601, %v7598
  %7722 = vrot.lane.b32.xlu0 %v7720, 120
  %v7723 = vpop.permute.xlu0 %7722
  %7724 = vrot.lane.b32.xlu0 %v7720, 112
  %v7725 = vpop.permute.xlu0 %7724
  %7726 = vrot.lane.b32.xlu0 %v7720, 104
  %v7727 = vpop.permute.xlu0 %7726
  %v7730 = vpack.i.b16 %v7723, %v7720
  %v7732 = vshrl.u32 %v7720, 16
  %v7733 = vshrl.u32 %v7723, 16
  %v7734 = vpack.i.b16 %v7733, %v7732
  %v7738 = vpack.i.b16 %v7727, %v7725
  %v7740 = vshrl.u32 %v7725, 16
  %v7741 = vshrl.u32 %v7727, 16
  %v7742 = vpack.i.b16 %v7741, %v7740
  %v7744 = vcombine.high %v7730, %v251
  %v7746 = vunpack.c.l.s4 1983009808
  %v7747 = vunpack.c.0.s8 %v7746
  %v7748 = vlaneseq
  %v7749 = vshrl.u32 %v7748, 7
  %v7750 = vsub.s32 %v7747, %v7749
  %v7751 = vrot.slane %v7730, %v7750
  %v7753 = vunpack.c.l.s4 1983009808
  %v7754 = vunpack.c.0.s8 %v7753
  %v7755 = vlaneseq
  %v7756 = vshrl.u32 %v7755, 7
  %v7757 = vsub.s32 %v7754, %v7756
  %v7758 = vrot.slane %v7744, %v7757
  %v7759 = vcombine.high %v7738, %v251
  %v7761 = vunpack.c.l.s4 1983009808
  %v7762 = vunpack.c.0.s8 %v7761
  %v7763 = vlaneseq
  %v7764 = vshrl.u32 %v7763, 7
  %v7765 = vsub.s32 %v7762, %v7764
  %v7766 = vrot.slane %v7738, %v7765
  %v7768 = vunpack.c.l.s4 1983009808
  %v7769 = vunpack.c.0.s8 %v7768
  %v7770 = vlaneseq
  %v7771 = vshrl.u32 %v7770, 7
  %v7772 = vsub.s32 %v7769, %v7771
  %v7773 = vrot.slane %v7759, %v7772
  %v7774 = vcombine.low %v7751, %v7766
  %v7775 = vcombine.high %v7751, %v7766
  %v7777 = vunpack.c.l.s4 1934713408
  %v7778 = vunpack.c.0.s8 %v7777
  %v7779 = vlaneseq
  %v7780 = vshrl.u32 %v7779, 7
  %v7781 = vsub.s32 %v7778, %v7780
  %v7782 = vrot.slane %v7774, %v7781
  %v7784 = vunpack.c.l.s4 1934713408
  %v7785 = vunpack.c.0.s8 %v7784
  %v7786 = vlaneseq
  %v7787 = vshrl.u32 %v7786, 7
  %v7788 = vsub.s32 %v7785, %v7787
  %v7789 = vrot.slane %v7775, %v7788
  %v7790 = vcombine.low %v7758, %v7773
  %v7791 = vcombine.high %v7758, %v7773
  %v7793 = vunpack.c.l.s4 1934713408
  %v7794 = vunpack.c.0.s8 %v7793
  %v7795 = vlaneseq
  %v7796 = vshrl.u32 %v7795, 7
  %v7797 = vsub.s32 %v7794, %v7796
  %v7798 = vrot.slane %v7790, %v7797
  %v7800 = vunpack.c.l.s4 1934713408
  %v7801 = vunpack.c.0.s8 %v7800
  %v7802 = vlaneseq
  %v7803 = vshrl.u32 %v7802, 7
  %v7804 = vsub.s32 %v7801, %v7803
  %v7805 = vrot.slane %v7791, %v7804
  %v7806 = vcombine.high %v7782, 0
  %v7807 = vcombine.high %v7789, 0
  %v7808 = vcombine.high %v7798, 0
  %v7809 = vcombine.high %v7805, 0
  %v7810 = vcombine.high %v7734, %v254
  %v7812 = vunpack.c.l.s4 1983009808
  %v7813 = vunpack.c.0.s8 %v7812
  %v7814 = vlaneseq
  %v7815 = vshrl.u32 %v7814, 7
  %v7816 = vsub.s32 %v7813, %v7815
  %v7817 = vrot.slane %v7734, %v7816
  %v7819 = vunpack.c.l.s4 1983009808
  %v7820 = vunpack.c.0.s8 %v7819
  %v7821 = vlaneseq
  %v7822 = vshrl.u32 %v7821, 7
  %v7823 = vsub.s32 %v7820, %v7822
  %v7824 = vrot.slane %v7810, %v7823
  %v7825 = vcombine.high %v7742, %v254
  %v7827 = vunpack.c.l.s4 1983009808
  %v7828 = vunpack.c.0.s8 %v7827
  %v7829 = vlaneseq
  %v7830 = vshrl.u32 %v7829, 7
  %v7831 = vsub.s32 %v7828, %v7830
  %v7832 = vrot.slane %v7742, %v7831
  %v7834 = vunpack.c.l.s4 1983009808
  %v7835 = vunpack.c.0.s8 %v7834
  %v7836 = vlaneseq
  %v7837 = vshrl.u32 %v7836, 7
  %v7838 = vsub.s32 %v7835, %v7837
  %v7839 = vrot.slane %v7825, %v7838
  %v7840 = vcombine.low %v7817, %v7832
  %v7841 = vcombine.high %v7817, %v7832
  %v7843 = vunpack.c.l.s4 1934713408
  %v7844 = vunpack.c.0.s8 %v7843
  %v7845 = vlaneseq
  %v7846 = vshrl.u32 %v7845, 7
  %v7847 = vsub.s32 %v7844, %v7846
  %v7848 = vrot.slane %v7840, %v7847
  %v7850 = vunpack.c.l.s4 1934713408
  %v7851 = vunpack.c.0.s8 %v7850
  %v7852 = vlaneseq
  %v7853 = vshrl.u32 %v7852, 7
  %v7854 = vsub.s32 %v7851, %v7853
  %v7855 = vrot.slane %v7841, %v7854
  %v7856 = vcombine.low %v7824, %v7839
  %v7857 = vcombine.high %v7824, %v7839
  %v7859 = vunpack.c.l.s4 1934713408
  %v7860 = vunpack.c.0.s8 %v7859
  %v7861 = vlaneseq
  %v7862 = vshrl.u32 %v7861, 7
  %v7863 = vsub.s32 %v7860, %v7862
  %v7864 = vrot.slane %v7856, %v7863
  %v7866 = vunpack.c.l.s4 1934713408
  %v7867 = vunpack.c.0.s8 %v7866
  %v7868 = vlaneseq
  %v7869 = vshrl.u32 %v7868, 7
  %v7870 = vsub.s32 %v7867, %v7869
  %v7871 = vrot.slane %v7857, %v7870
  %v7872 = vcombine.high %v7848, 0
  %v7873 = vcombine.high %v7855, 0
  %v7874 = vcombine.high %v7864, 0
  %v7875 = vcombine.high %v7871, 0
  %v7876 = vcombine.low %v7782, %v7789
  %v7878 = vunpack.c.l.s4 1983009808
  %v7879 = vunpack.c.0.s8 %v7878
  %v7880 = vlaneseq
  %v7881 = vshrl.u32 %v7880, 7
  %v7882 = vsub.s32 %v7879, %v7881
  %v7883 = vrot.slane %v7876, %v7882
  %v7884 = vcombine.low %v7806, %v7807
  %v7886 = vunpack.c.l.s4 1983009808
  %v7887 = vunpack.c.0.s8 %v7886
  %v7888 = vlaneseq
  %v7889 = vshrl.u32 %v7888, 7
  %v7890 = vsub.s32 %v7887, %v7889
  %v7891 = vrot.slane %v7884, %v7890
  %v7892 = vcombine.low %v7883, %v7891
  %v7894 = vunpack.c.l.s4 1934713408
  %v7895 = vunpack.c.0.s8 %v7894
  %v7896 = vlaneseq
  %v7897 = vshrl.u32 %v7896, 7
  %v7898 = vsub.s32 %v7895, %v7897
  %v7899 = vrot.slane %v7892, %v7898
  %v7900 = vcombine.high %v7899, 0
  %v7901 = vcombine.low %v7848, %v7855
  %v7903 = vunpack.c.l.s4 1983009808
  %v7904 = vunpack.c.0.s8 %v7903
  %v7905 = vlaneseq
  %v7906 = vshrl.u32 %v7905, 7
  %v7907 = vsub.s32 %v7904, %v7906
  %v7908 = vrot.slane %v7901, %v7907
  %v7909 = vcombine.low %v7872, %v7873
  %v7911 = vunpack.c.l.s4 1983009808
  %v7912 = vunpack.c.0.s8 %v7911
  %v7913 = vlaneseq
  %v7914 = vshrl.u32 %v7913, 7
  %v7915 = vsub.s32 %v7912, %v7914
  %v7916 = vrot.slane %v7909, %v7915
  %v7917 = vcombine.low %v7908, %v7916
  %v7919 = vunpack.c.l.s4 1934713408
  %v7920 = vunpack.c.0.s8 %v7919
  %v7921 = vlaneseq
  %v7922 = vshrl.u32 %v7921, 7
  %v7923 = vsub.s32 %v7920, %v7922
  %v7924 = vrot.slane %v7917, %v7923
  %v7925 = vcombine.high %v7924, 0
  %v7926 = vcombine.low %v7798, %v7805
  %v7928 = vunpack.c.l.s4 1983009808
  %v7929 = vunpack.c.0.s8 %v7928
  %v7930 = vlaneseq
  %v7931 = vshrl.u32 %v7930, 7
  %v7932 = vsub.s32 %v7929, %v7931
  %v7933 = vrot.slane %v7926, %v7932
  %v7934 = vcombine.low %v7808, %v7809
  %v7936 = vunpack.c.l.s4 1983009808
  %v7937 = vunpack.c.0.s8 %v7936
  %v7938 = vlaneseq
  %v7939 = vshrl.u32 %v7938, 7
  %v7940 = vsub.s32 %v7937, %v7939
  %v7941 = vrot.slane %v7934, %v7940
  %v7942 = vcombine.low %v7933, %v7941
  %v7944 = vunpack.c.l.s4 1934713408
  %v7945 = vunpack.c.0.s8 %v7944
  %v7946 = vlaneseq
  %v7947 = vshrl.u32 %v7946, 7
  %v7948 = vsub.s32 %v7945, %v7947
  %v7949 = vrot.slane %v7942, %v7948
  %v7950 = vcombine.high %v7949, 0
  %v7951 = vcombine.low %v7864, %v7871
  %v7953 = vunpack.c.l.s4 1983009808
  %v7954 = vunpack.c.0.s8 %v7953
  %v7955 = vlaneseq
  %v7956 = vshrl.u32 %v7955, 7
  %v7957 = vsub.s32 %v7954, %v7956
  %v7958 = vrot.slane %v7951, %v7957
  %v7959 = vcombine.low %v7874, %v7875
  %v7961 = vunpack.c.l.s4 1983009808
  %v7962 = vunpack.c.0.s8 %v7961
  %v7963 = vlaneseq
  %v7964 = vshrl.u32 %v7963, 7
  %v7965 = vsub.s32 %v7962, %v7964
  %v7966 = vrot.slane %v7959, %v7965
  %v7967 = vcombine.low %v7958, %v7966
  %v7969 = vunpack.c.l.s4 1934713408
  %v7970 = vunpack.c.0.s8 %v7969
  %v7971 = vlaneseq
  %v7972 = vshrl.u32 %v7971, 7
  %v7973 = vsub.s32 %v7970, %v7972
  %v7974 = vrot.slane %v7967, %v7973
  %v7975 = vcombine.high %v7974, 0
  %v7978 = vpack.i.b16 %v7924, %v7899
  %v7979 = vshrl.u32 %v7899, 16
  %v7980 = vshrl.u32 %v7924, 16
  %v7981 = vpack.i.b16 %v7980, %v7979
  %v7984 = vpack.i.b16 %v7925, %v7900
  %v7985 = vshrl.u32 %v7900, 16
  %v7986 = vshrl.u32 %v7925, 16
  %v7987 = vpack.i.b16 %v7986, %v7985
  %v7990 = vpack.i.b16 %v7974, %v7949
  %v7991 = vshrl.u32 %v7949, 16
  %v7992 = vshrl.u32 %v7974, 16
  %v7993 = vpack.i.b16 %v7992, %v7991
  %v7996 = vpack.i.b16 %v7975, %v7950
  %v7997 = vshrl.u32 %v7950, 16
  %v7998 = vshrl.u32 %v7975, 16
  %v7999 = vpack.i.b16 %v7998, %v7997
  %v8000 = vpack.c.bf16 %v7651, %v7648
  %v8001 = vpack.c.bf16 %v7659, %v7656
  %8004 = vrot.lane.b32.xlu0 %v8000, 120
  %v8005 = vpop.permute.xlu0 %8004
  %8006 = vrot.lane.b32.xlu0 %v8001, 120
  %v8007 = vpop.permute.xlu0 %8006
  %8008 = vrot.lane.b32.xlu0 %v8000, 112
  %v8009 = vpop.permute.xlu0 %8008
  %8010 = vrot.lane.b32.xlu0 %v8001, 112
  %v8011 = vpop.permute.xlu0 %8010
  %8012 = vrot.lane.b32.xlu0 %v8000, 104
  %v8013 = vpop.permute.xlu0 %8012
  %8014 = vrot.lane.b32.xlu0 %v8001, 104
  %v8015 = vpop.permute.xlu0 %8014
  %v8018 = vpack.i.b16 %v8005, %v8000
  %v8020 = vshrl.u32 %v8000, 16
  %v8021 = vshrl.u32 %v8005, 16
  %v8022 = vpack.i.b16 %v8021, %v8020
  %v8026 = vpack.i.b16 %v8013, %v8009
  %v8028 = vshrl.u32 %v8009, 16
  %v8029 = vshrl.u32 %v8013, 16
  %v8030 = vpack.i.b16 %v8029, %v8028
  %v8034 = vpack.i.b16 %v8007, %v8001
  %v8036 = vshrl.u32 %v8001, 16
  %v8037 = vshrl.u32 %v8007, 16
  %v8038 = vpack.i.b16 %v8037, %v8036
  %v8042 = vpack.i.b16 %v8015, %v8011
  %v8044 = vshrl.u32 %v8011, 16
  %v8045 = vshrl.u32 %v8015, 16
  %v8046 = vpack.i.b16 %v8045, %v8044
  %v8048 = vcombine.high %v8018, %v251
  %v8050 = vunpack.c.l.s4 1983009808
  %v8051 = vunpack.c.0.s8 %v8050
  %v8052 = vlaneseq
  %v8053 = vshrl.u32 %v8052, 7
  %v8054 = vsub.s32 %v8051, %v8053
  %v8055 = vrot.slane %v8018, %v8054
  %v8057 = vunpack.c.l.s4 1983009808
  %v8058 = vunpack.c.0.s8 %v8057
  %v8059 = vlaneseq
  %v8060 = vshrl.u32 %v8059, 7
  %v8061 = vsub.s32 %v8058, %v8060
  %v8062 = vrot.slane %v8048, %v8061
  %v8063 = vcombine.high %v8026, %v251
  %v8065 = vunpack.c.l.s4 1983009808
  %v8066 = vunpack.c.0.s8 %v8065
  %v8067 = vlaneseq
  %v8068 = vshrl.u32 %v8067, 7
  %v8069 = vsub.s32 %v8066, %v8068
  %v8070 = vrot.slane %v8026, %v8069
  %v8072 = vunpack.c.l.s4 1983009808
  %v8073 = vunpack.c.0.s8 %v8072
  %v8074 = vlaneseq
  %v8075 = vshrl.u32 %v8074, 7
  %v8076 = vsub.s32 %v8073, %v8075
  %v8077 = vrot.slane %v8063, %v8076
  %v8078 = vcombine.low %v8055, %v8070
  %v8079 = vcombine.high %v8055, %v8070
  %v8081 = vunpack.c.l.s4 1934713408
  %v8082 = vunpack.c.0.s8 %v8081
  %v8083 = vlaneseq
  %v8084 = vshrl.u32 %v8083, 7
  %v8085 = vsub.s32 %v8082, %v8084
  %v8086 = vrot.slane %v8078, %v8085
  %v8088 = vunpack.c.l.s4 1934713408
  %v8089 = vunpack.c.0.s8 %v8088
  %v8090 = vlaneseq
  %v8091 = vshrl.u32 %v8090, 7
  %v8092 = vsub.s32 %v8089, %v8091
  %v8093 = vrot.slane %v8079, %v8092
  %v8094 = vcombine.low %v8062, %v8077
  %v8095 = vcombine.high %v8062, %v8077
  %v8097 = vunpack.c.l.s4 1934713408
  %v8098 = vunpack.c.0.s8 %v8097
  %v8099 = vlaneseq
  %v8100 = vshrl.u32 %v8099, 7
  %v8101 = vsub.s32 %v8098, %v8100
  %v8102 = vrot.slane %v8094, %v8101
  %v8104 = vunpack.c.l.s4 1934713408
  %v8105 = vunpack.c.0.s8 %v8104
  %v8106 = vlaneseq
  %v8107 = vshrl.u32 %v8106, 7
  %v8108 = vsub.s32 %v8105, %v8107
  %v8109 = vrot.slane %v8095, %v8108
  %v8110 = vcombine.high %v8086, 0
  %v8111 = vcombine.high %v8093, 0
  %v8112 = vcombine.high %v8102, 0
  %v8113 = vcombine.high %v8109, 0
  %v8114 = vcombine.high %v8022, %v254
  %v8116 = vunpack.c.l.s4 1983009808
  %v8117 = vunpack.c.0.s8 %v8116
  %v8118 = vlaneseq
  %v8119 = vshrl.u32 %v8118, 7
  %v8120 = vsub.s32 %v8117, %v8119
  %v8121 = vrot.slane %v8022, %v8120
  %v8123 = vunpack.c.l.s4 1983009808
  %v8124 = vunpack.c.0.s8 %v8123
  %v8125 = vlaneseq
  %v8126 = vshrl.u32 %v8125, 7
  %v8127 = vsub.s32 %v8124, %v8126
  %v8128 = vrot.slane %v8114, %v8127
  %v8129 = vcombine.high %v8030, %v254
  %v8131 = vunpack.c.l.s4 1983009808
  %v8132 = vunpack.c.0.s8 %v8131
  %v8133 = vlaneseq
  %v8134 = vshrl.u32 %v8133, 7
  %v8135 = vsub.s32 %v8132, %v8134
  %v8136 = vrot.slane %v8030, %v8135
  %v8138 = vunpack.c.l.s4 1983009808
  %v8139 = vunpack.c.0.s8 %v8138
  %v8140 = vlaneseq
  %v8141 = vshrl.u32 %v8140, 7
  %v8142 = vsub.s32 %v8139, %v8141
  %v8143 = vrot.slane %v8129, %v8142
  %v8144 = vcombine.low %v8121, %v8136
  %v8145 = vcombine.high %v8121, %v8136
  %v8147 = vunpack.c.l.s4 1934713408
  %v8148 = vunpack.c.0.s8 %v8147
  %v8149 = vlaneseq
  %v8150 = vshrl.u32 %v8149, 7
  %v8151 = vsub.s32 %v8148, %v8150
  %v8152 = vrot.slane %v8144, %v8151
  %v8154 = vunpack.c.l.s4 1934713408
  %v8155 = vunpack.c.0.s8 %v8154
  %v8156 = vlaneseq
  %v8157 = vshrl.u32 %v8156, 7
  %v8158 = vsub.s32 %v8155, %v8157
  %v8159 = vrot.slane %v8145, %v8158
  %v8160 = vcombine.low %v8128, %v8143
  %v8161 = vcombine.high %v8128, %v8143
  %v8163 = vunpack.c.l.s4 1934713408
  %v8164 = vunpack.c.0.s8 %v8163
  %v8165 = vlaneseq
  %v8166 = vshrl.u32 %v8165, 7
  %v8167 = vsub.s32 %v8164, %v8166
  %v8168 = vrot.slane %v8160, %v8167
  %v8170 = vunpack.c.l.s4 1934713408
  %v8171 = vunpack.c.0.s8 %v8170
  %v8172 = vlaneseq
  %v8173 = vshrl.u32 %v8172, 7
  %v8174 = vsub.s32 %v8171, %v8173
  %v8175 = vrot.slane %v8161, %v8174
  %v8176 = vcombine.high %v8152, 0
  %v8177 = vcombine.high %v8159, 0
  %v8178 = vcombine.high %v8168, 0
  %v8179 = vcombine.high %v8175, 0
  %v8180 = vcombine.high %v8034, %v251
  %v8182 = vunpack.c.l.s4 1983009808
  %v8183 = vunpack.c.0.s8 %v8182
  %v8184 = vlaneseq
  %v8185 = vshrl.u32 %v8184, 7
  %v8186 = vsub.s32 %v8183, %v8185
  %v8187 = vrot.slane %v8034, %v8186
  %v8189 = vunpack.c.l.s4 1983009808
  %v8190 = vunpack.c.0.s8 %v8189
  %v8191 = vlaneseq
  %v8192 = vshrl.u32 %v8191, 7
  %v8193 = vsub.s32 %v8190, %v8192
  %v8194 = vrot.slane %v8180, %v8193
  %v8195 = vcombine.high %v8042, %v251
  %v8197 = vunpack.c.l.s4 1983009808
  %v8198 = vunpack.c.0.s8 %v8197
  %v8199 = vlaneseq
  %v8200 = vshrl.u32 %v8199, 7
  %v8201 = vsub.s32 %v8198, %v8200
  %v8202 = vrot.slane %v8042, %v8201
  %v8204 = vunpack.c.l.s4 1983009808
  %v8205 = vunpack.c.0.s8 %v8204
  %v8206 = vlaneseq
  %v8207 = vshrl.u32 %v8206, 7
  %v8208 = vsub.s32 %v8205, %v8207
  %v8209 = vrot.slane %v8195, %v8208
  %v8210 = vcombine.low %v8187, %v8202
  %v8211 = vcombine.high %v8187, %v8202
  %v8213 = vunpack.c.l.s4 1934713408
  %v8214 = vunpack.c.0.s8 %v8213
  %v8215 = vlaneseq
  %v8216 = vshrl.u32 %v8215, 7
  %v8217 = vsub.s32 %v8214, %v8216
  %v8218 = vrot.slane %v8210, %v8217
  %v8220 = vunpack.c.l.s4 1934713408
  %v8221 = vunpack.c.0.s8 %v8220
  %v8222 = vlaneseq
  %v8223 = vshrl.u32 %v8222, 7
  %v8224 = vsub.s32 %v8221, %v8223
  %v8225 = vrot.slane %v8211, %v8224
  %v8226 = vcombine.low %v8194, %v8209
  %v8227 = vcombine.high %v8194, %v8209
  %v8229 = vunpack.c.l.s4 1934713408
  %v8230 = vunpack.c.0.s8 %v8229
  %v8231 = vlaneseq
  %v8232 = vshrl.u32 %v8231, 7
  %v8233 = vsub.s32 %v8230, %v8232
  %v8234 = vrot.slane %v8226, %v8233
  %v8236 = vunpack.c.l.s4 1934713408
  %v8237 = vunpack.c.0.s8 %v8236
  %v8238 = vlaneseq
  %v8239 = vshrl.u32 %v8238, 7
  %v8240 = vsub.s32 %v8237, %v8239
  %v8241 = vrot.slane %v8227, %v8240
  %v8242 = vcombine.high %v8218, 0
  %v8243 = vcombine.high %v8225, 0
  %v8244 = vcombine.high %v8234, 0
  %v8245 = vcombine.high %v8241, 0
  %v8246 = vcombine.high %v8038, %v254
  %v8248 = vunpack.c.l.s4 1983009808
  %v8249 = vunpack.c.0.s8 %v8248
  %v8250 = vlaneseq
  %v8251 = vshrl.u32 %v8250, 7
  %v8252 = vsub.s32 %v8249, %v8251
  %v8253 = vrot.slane %v8038, %v8252
  %v8255 = vunpack.c.l.s4 1983009808
  %v8256 = vunpack.c.0.s8 %v8255
  %v8257 = vlaneseq
  %v8258 = vshrl.u32 %v8257, 7
  %v8259 = vsub.s32 %v8256, %v8258
  %v8260 = vrot.slane %v8246, %v8259
  %v8261 = vcombine.high %v8046, %v254
  %v8263 = vunpack.c.l.s4 1983009808
  %v8264 = vunpack.c.0.s8 %v8263
  %v8265 = vlaneseq
  %v8266 = vshrl.u32 %v8265, 7
  %v8267 = vsub.s32 %v8264, %v8266
  %v8268 = vrot.slane %v8046, %v8267
  %v8270 = vunpack.c.l.s4 1983009808
  %v8271 = vunpack.c.0.s8 %v8270
  %v8272 = vlaneseq
  %v8273 = vshrl.u32 %v8272, 7
  %v8274 = vsub.s32 %v8271, %v8273
  %v8275 = vrot.slane %v8261, %v8274
  %v8276 = vcombine.low %v8253, %v8268
  %v8277 = vcombine.high %v8253, %v8268
  %v8279 = vunpack.c.l.s4 1934713408
  %v8280 = vunpack.c.0.s8 %v8279
  %v8281 = vlaneseq
  %v8282 = vshrl.u32 %v8281, 7
  %v8283 = vsub.s32 %v8280, %v8282
  %v8284 = vrot.slane %v8276, %v8283
  %v8286 = vunpack.c.l.s4 1934713408
  %v8287 = vunpack.c.0.s8 %v8286
  %v8288 = vlaneseq
  %v8289 = vshrl.u32 %v8288, 7
  %v8290 = vsub.s32 %v8287, %v8289
  %v8291 = vrot.slane %v8277, %v8290
  %v8292 = vcombine.low %v8260, %v8275
  %v8293 = vcombine.high %v8260, %v8275
  %v8295 = vunpack.c.l.s4 1934713408
  %v8296 = vunpack.c.0.s8 %v8295
  %v8297 = vlaneseq
  %v8298 = vshrl.u32 %v8297, 7
  %v8299 = vsub.s32 %v8296, %v8298
  %v8300 = vrot.slane %v8292, %v8299
  %v8302 = vunpack.c.l.s4 1934713408
  %v8303 = vunpack.c.0.s8 %v8302
  %v8304 = vlaneseq
  %v8305 = vshrl.u32 %v8304, 7
  %v8306 = vsub.s32 %v8303, %v8305
  %v8307 = vrot.slane %v8293, %v8306
  %v8308 = vcombine.high %v8284, 0
  %v8309 = vcombine.high %v8291, 0
  %v8310 = vcombine.high %v8300, 0
  %v8311 = vcombine.high %v8307, 0
  %v8312 = vcombine.low %v8086, %v8093
  %v8314 = vunpack.c.l.s4 1983009808
  %v8315 = vunpack.c.0.s8 %v8314
  %v8316 = vlaneseq
  %v8317 = vshrl.u32 %v8316, 7
  %v8318 = vsub.s32 %v8315, %v8317
  %v8319 = vrot.slane %v8312, %v8318
  %v8320 = vcombine.low %v8110, %v8111
  %v8322 = vunpack.c.l.s4 1983009808
  %v8323 = vunpack.c.0.s8 %v8322
  %v8324 = vlaneseq
  %v8325 = vshrl.u32 %v8324, 7
  %v8326 = vsub.s32 %v8323, %v8325
  %v8327 = vrot.slane %v8320, %v8326
  %v8328 = vcombine.low %v8102, %v8109
  %v8330 = vunpack.c.l.s4 1983009808
  %v8331 = vunpack.c.0.s8 %v8330
  %v8332 = vlaneseq
  %v8333 = vshrl.u32 %v8332, 7
  %v8334 = vsub.s32 %v8331, %v8333
  %v8335 = vrot.slane %v8328, %v8334
  %v8336 = vcombine.low %v8112, %v8113
  %v8338 = vunpack.c.l.s4 1983009808
  %v8339 = vunpack.c.0.s8 %v8338
  %v8340 = vlaneseq
  %v8341 = vshrl.u32 %v8340, 7
  %v8342 = vsub.s32 %v8339, %v8341
  %v8343 = vrot.slane %v8336, %v8342
  %v8344 = vcombine.low %v8319, %v8327
  %v8346 = vunpack.c.l.s4 1934713408
  %v8347 = vunpack.c.0.s8 %v8346
  %v8348 = vlaneseq
  %v8349 = vshrl.u32 %v8348, 7
  %v8350 = vsub.s32 %v8347, %v8349
  %v8351 = vrot.slane %v8344, %v8350
  %v8352 = vcombine.low %v8335, %v8343
  %v8354 = vunpack.c.l.s4 1934713408
  %v8355 = vunpack.c.0.s8 %v8354
  %v8356 = vlaneseq
  %v8357 = vshrl.u32 %v8356, 7
  %v8358 = vsub.s32 %v8355, %v8357
  %v8359 = vrot.slane %v8352, %v8358
  %v8360 = vcombine.low %v8351, %v8359
  %v8361 = vcombine.high %v8351, %v8359
  %v8362 = vcombine.low %v8152, %v8159
  %v8364 = vunpack.c.l.s4 1983009808
  %v8365 = vunpack.c.0.s8 %v8364
  %v8366 = vlaneseq
  %v8367 = vshrl.u32 %v8366, 7
  %v8368 = vsub.s32 %v8365, %v8367
  %v8369 = vrot.slane %v8362, %v8368
  %v8370 = vcombine.low %v8176, %v8177
  %v8372 = vunpack.c.l.s4 1983009808
  %v8373 = vunpack.c.0.s8 %v8372
  %v8374 = vlaneseq
  %v8375 = vshrl.u32 %v8374, 7
  %v8376 = vsub.s32 %v8373, %v8375
  %v8377 = vrot.slane %v8370, %v8376
  %v8378 = vcombine.low %v8168, %v8175
  %v8380 = vunpack.c.l.s4 1983009808
  %v8381 = vunpack.c.0.s8 %v8380
  %v8382 = vlaneseq
  %v8383 = vshrl.u32 %v8382, 7
  %v8384 = vsub.s32 %v8381, %v8383
  %v8385 = vrot.slane %v8378, %v8384
  %v8386 = vcombine.low %v8178, %v8179
  %v8388 = vunpack.c.l.s4 1983009808
  %v8389 = vunpack.c.0.s8 %v8388
  %v8390 = vlaneseq
  %v8391 = vshrl.u32 %v8390, 7
  %v8392 = vsub.s32 %v8389, %v8391
  %v8393 = vrot.slane %v8386, %v8392
  %v8394 = vcombine.low %v8369, %v8377
  %v8396 = vunpack.c.l.s4 1934713408
  %v8397 = vunpack.c.0.s8 %v8396
  %v8398 = vlaneseq
  %v8399 = vshrl.u32 %v8398, 7
  %v8400 = vsub.s32 %v8397, %v8399
  %v8401 = vrot.slane %v8394, %v8400
  %v8402 = vcombine.low %v8385, %v8393
  %v8404 = vunpack.c.l.s4 1934713408
  %v8405 = vunpack.c.0.s8 %v8404
  %v8406 = vlaneseq
  %v8407 = vshrl.u32 %v8406, 7
  %v8408 = vsub.s32 %v8405, %v8407
  %v8409 = vrot.slane %v8402, %v8408
  %v8410 = vcombine.low %v8401, %v8409
  %v8411 = vcombine.high %v8401, %v8409
  %v8412 = vcombine.low %v8218, %v8225
  %v8414 = vunpack.c.l.s4 1983009808
  %v8415 = vunpack.c.0.s8 %v8414
  %v8416 = vlaneseq
  %v8417 = vshrl.u32 %v8416, 7
  %v8418 = vsub.s32 %v8415, %v8417
  %v8419 = vrot.slane %v8412, %v8418
  %v8420 = vcombine.low %v8242, %v8243
  %v8422 = vunpack.c.l.s4 1983009808
  %v8423 = vunpack.c.0.s8 %v8422
  %v8424 = vlaneseq
  %v8425 = vshrl.u32 %v8424, 7
  %v8426 = vsub.s32 %v8423, %v8425
  %v8427 = vrot.slane %v8420, %v8426
  %v8428 = vcombine.low %v8234, %v8241
  %v8430 = vunpack.c.l.s4 1983009808
  %v8431 = vunpack.c.0.s8 %v8430
  %v8432 = vlaneseq
  %v8433 = vshrl.u32 %v8432, 7
  %v8434 = vsub.s32 %v8431, %v8433
  %v8435 = vrot.slane %v8428, %v8434
  %v8436 = vcombine.low %v8244, %v8245
  %v8438 = vunpack.c.l.s4 1983009808
  %v8439 = vunpack.c.0.s8 %v8438
  %v8440 = vlaneseq
  %v8441 = vshrl.u32 %v8440, 7
  %v8442 = vsub.s32 %v8439, %v8441
  %v8443 = vrot.slane %v8436, %v8442
  %v8444 = vcombine.low %v8419, %v8427
  %v8446 = vunpack.c.l.s4 1934713408
  %v8447 = vunpack.c.0.s8 %v8446
  %v8448 = vlaneseq
  %v8449 = vshrl.u32 %v8448, 7
  %v8450 = vsub.s32 %v8447, %v8449
  %v8451 = vrot.slane %v8444, %v8450
  %v8452 = vcombine.low %v8435, %v8443
  %v8454 = vunpack.c.l.s4 1934713408
  %v8455 = vunpack.c.0.s8 %v8454
  %v8456 = vlaneseq
  %v8457 = vshrl.u32 %v8456, 7
  %v8458 = vsub.s32 %v8455, %v8457
  %v8459 = vrot.slane %v8452, %v8458
  %v8460 = vcombine.low %v8451, %v8459
  %v8461 = vcombine.high %v8451, %v8459
  %v8462 = vcombine.low %v8284, %v8291
  %v8464 = vunpack.c.l.s4 1983009808
  %v8465 = vunpack.c.0.s8 %v8464
  %v8466 = vlaneseq
  %v8467 = vshrl.u32 %v8466, 7
  %v8468 = vsub.s32 %v8465, %v8467
  %v8469 = vrot.slane %v8462, %v8468
  %v8470 = vcombine.low %v8308, %v8309
  %v8472 = vunpack.c.l.s4 1983009808
  %v8473 = vunpack.c.0.s8 %v8472
  %v8474 = vlaneseq
  %v8475 = vshrl.u32 %v8474, 7
  %v8476 = vsub.s32 %v8473, %v8475
  %v8477 = vrot.slane %v8470, %v8476
  %v8478 = vcombine.low %v8300, %v8307
  %v8480 = vunpack.c.l.s4 1983009808
  %v8481 = vunpack.c.0.s8 %v8480
  %v8482 = vlaneseq
  %v8483 = vshrl.u32 %v8482, 7
  %v8484 = vsub.s32 %v8481, %v8483
  %v8485 = vrot.slane %v8478, %v8484
  %v8486 = vcombine.low %v8310, %v8311
  %v8488 = vunpack.c.l.s4 1983009808
  %v8489 = vunpack.c.0.s8 %v8488
  %v8490 = vlaneseq
  %v8491 = vshrl.u32 %v8490, 7
  %v8492 = vsub.s32 %v8489, %v8491
  %v8493 = vrot.slane %v8486, %v8492
  %v8494 = vcombine.low %v8469, %v8477
  %v8496 = vunpack.c.l.s4 1934713408
  %v8497 = vunpack.c.0.s8 %v8496
  %v8498 = vlaneseq
  %v8499 = vshrl.u32 %v8498, 7
  %v8500 = vsub.s32 %v8497, %v8499
  %v8501 = vrot.slane %v8494, %v8500
  %v8502 = vcombine.low %v8485, %v8493
  %v8504 = vunpack.c.l.s4 1934713408
  %v8505 = vunpack.c.0.s8 %v8504
  %v8506 = vlaneseq
  %v8507 = vshrl.u32 %v8506, 7
  %v8508 = vsub.s32 %v8505, %v8507
  %v8509 = vrot.slane %v8502, %v8508
  %v8510 = vcombine.low %v8501, %v8509
  %v8511 = vcombine.high %v8501, %v8509
  %v8514 = vpack.i.b16 %v8410, %v8360
  %v8515 = vshrl.u32 %v8360, 16
  %v8516 = vshrl.u32 %v8410, 16
  %v8517 = vpack.i.b16 %v8516, %v8515
  %v8520 = vpack.i.b16 %v8411, %v8361
  %v8521 = vshrl.u32 %v8361, 16
  %v8522 = vshrl.u32 %v8411, 16
  %v8523 = vpack.i.b16 %v8522, %v8521
  %v8526 = vpack.i.b16 %v8510, %v8460
  %v8527 = vshrl.u32 %v8460, 16
  %v8528 = vshrl.u32 %v8510, 16
  %v8529 = vpack.i.b16 %v8528, %v8527
  %v8532 = vpack.i.b16 %v8511, %v8461
  %v8533 = vshrl.u32 %v8461, 16
  %v8534 = vshrl.u32 %v8511, 16
  %v8535 = vpack.i.b16 %v8534, %v8533
  %v8536 = vpack.c.bf16 %v7709, %v7706
  %v8537 = vpack.c.bf16 %v7717, %v7714
  %8540 = vrot.lane.b32.xlu0 %v8536, 120
  %v8541 = vpop.permute.xlu0 %8540
  %8542 = vrot.lane.b32.xlu0 %v8537, 120
  %v8543 = vpop.permute.xlu0 %8542
  %8544 = vrot.lane.b32.xlu0 %v8536, 112
  %v8545 = vpop.permute.xlu0 %8544
  %8546 = vrot.lane.b32.xlu0 %v8537, 112
  %v8547 = vpop.permute.xlu0 %8546
  %8548 = vrot.lane.b32.xlu0 %v8536, 104
  %v8549 = vpop.permute.xlu0 %8548
  %8550 = vrot.lane.b32.xlu0 %v8537, 104
  %v8551 = vpop.permute.xlu0 %8550
  %v8554 = vpack.i.b16 %v8541, %v8536
  %v8556 = vshrl.u32 %v8536, 16
  %v8557 = vshrl.u32 %v8541, 16
  %v8558 = vpack.i.b16 %v8557, %v8556
  %v8562 = vpack.i.b16 %v8549, %v8545
  %v8564 = vshrl.u32 %v8545, 16
  %v8565 = vshrl.u32 %v8549, 16
  %v8566 = vpack.i.b16 %v8565, %v8564
  %v8570 = vpack.i.b16 %v8543, %v8537
  %v8572 = vshrl.u32 %v8537, 16
  %v8573 = vshrl.u32 %v8543, 16
  %v8574 = vpack.i.b16 %v8573, %v8572
  %v8578 = vpack.i.b16 %v8551, %v8547
  %v8580 = vshrl.u32 %v8547, 16
  %v8581 = vshrl.u32 %v8551, 16
  %v8582 = vpack.i.b16 %v8581, %v8580
  %v8584 = vcombine.high %v8554, %v251
  %v8586 = vunpack.c.l.s4 1983009808
  %v8587 = vunpack.c.0.s8 %v8586
  %v8588 = vlaneseq
  %v8589 = vshrl.u32 %v8588, 7
  %v8590 = vsub.s32 %v8587, %v8589
  %v8591 = vrot.slane %v8554, %v8590
  %v8593 = vunpack.c.l.s4 1983009808
  %v8594 = vunpack.c.0.s8 %v8593
  %v8595 = vlaneseq
  %v8596 = vshrl.u32 %v8595, 7
  %v8597 = vsub.s32 %v8594, %v8596
  %v8598 = vrot.slane %v8584, %v8597
  %v8599 = vcombine.high %v8562, %v251
  %v8601 = vunpack.c.l.s4 1983009808
  %v8602 = vunpack.c.0.s8 %v8601
  %v8603 = vlaneseq
  %v8604 = vshrl.u32 %v8603, 7
  %v8605 = vsub.s32 %v8602, %v8604
  %v8606 = vrot.slane %v8562, %v8605
  %v8608 = vunpack.c.l.s4 1983009808
  %v8609 = vunpack.c.0.s8 %v8608
  %v8610 = vlaneseq
  %v8611 = vshrl.u32 %v8610, 7
  %v8612 = vsub.s32 %v8609, %v8611
  %v8613 = vrot.slane %v8599, %v8612
  %v8614 = vcombine.low %v8591, %v8606
  %v8615 = vcombine.high %v8591, %v8606
  %v8617 = vunpack.c.l.s4 1934713408
  %v8618 = vunpack.c.0.s8 %v8617
  %v8619 = vlaneseq
  %v8620 = vshrl.u32 %v8619, 7
  %v8621 = vsub.s32 %v8618, %v8620
  %v8622 = vrot.slane %v8614, %v8621
  %v8624 = vunpack.c.l.s4 1934713408
  %v8625 = vunpack.c.0.s8 %v8624
  %v8626 = vlaneseq
  %v8627 = vshrl.u32 %v8626, 7
  %v8628 = vsub.s32 %v8625, %v8627
  %v8629 = vrot.slane %v8615, %v8628
  %v8630 = vcombine.low %v8598, %v8613
  %v8631 = vcombine.high %v8598, %v8613
  %v8633 = vunpack.c.l.s4 1934713408
  %v8634 = vunpack.c.0.s8 %v8633
  %v8635 = vlaneseq
  %v8636 = vshrl.u32 %v8635, 7
  %v8637 = vsub.s32 %v8634, %v8636
  %v8638 = vrot.slane %v8630, %v8637
  %v8640 = vunpack.c.l.s4 1934713408
  %v8641 = vunpack.c.0.s8 %v8640
  %v8642 = vlaneseq
  %v8643 = vshrl.u32 %v8642, 7
  %v8644 = vsub.s32 %v8641, %v8643
  %v8645 = vrot.slane %v8631, %v8644
  %v8646 = vcombine.high %v8622, 0
  %v8647 = vcombine.high %v8629, 0
  %v8648 = vcombine.high %v8638, 0
  %v8649 = vcombine.high %v8645, 0
  %v8650 = vcombine.high %v8558, %v254
  %v8652 = vunpack.c.l.s4 1983009808
  %v8653 = vunpack.c.0.s8 %v8652
  %v8654 = vlaneseq
  %v8655 = vshrl.u32 %v8654, 7
  %v8656 = vsub.s32 %v8653, %v8655
  %v8657 = vrot.slane %v8558, %v8656
  %v8659 = vunpack.c.l.s4 1983009808
  %v8660 = vunpack.c.0.s8 %v8659
  %v8661 = vlaneseq
  %v8662 = vshrl.u32 %v8661, 7
  %v8663 = vsub.s32 %v8660, %v8662
  %v8664 = vrot.slane %v8650, %v8663
  %v8665 = vcombine.high %v8566, %v254
  %v8667 = vunpack.c.l.s4 1983009808
  %v8668 = vunpack.c.0.s8 %v8667
  %v8669 = vlaneseq
  %v8670 = vshrl.u32 %v8669, 7
  %v8671 = vsub.s32 %v8668, %v8670
  %v8672 = vrot.slane %v8566, %v8671
  %v8674 = vunpack.c.l.s4 1983009808
  %v8675 = vunpack.c.0.s8 %v8674
  %v8676 = vlaneseq
  %v8677 = vshrl.u32 %v8676, 7
  %v8678 = vsub.s32 %v8675, %v8677
  %v8679 = vrot.slane %v8665, %v8678
  %v8680 = vcombine.low %v8657, %v8672
  %v8681 = vcombine.high %v8657, %v8672
  %v8683 = vunpack.c.l.s4 1934713408
  %v8684 = vunpack.c.0.s8 %v8683
  %v8685 = vlaneseq
  %v8686 = vshrl.u32 %v8685, 7
  %v8687 = vsub.s32 %v8684, %v8686
  %v8688 = vrot.slane %v8680, %v8687
  %v8690 = vunpack.c.l.s4 1934713408
  %v8691 = vunpack.c.0.s8 %v8690
  %v8692 = vlaneseq
  %v8693 = vshrl.u32 %v8692, 7
  %v8694 = vsub.s32 %v8691, %v8693
  %v8695 = vrot.slane %v8681, %v8694
  %v8696 = vcombine.low %v8664, %v8679
  %v8697 = vcombine.high %v8664, %v8679
  %v8699 = vunpack.c.l.s4 1934713408
  %v8700 = vunpack.c.0.s8 %v8699
  %v8701 = vlaneseq
  %v8702 = vshrl.u32 %v8701, 7
  %v8703 = vsub.s32 %v8700, %v8702
  %v8704 = vrot.slane %v8696, %v8703
  %v8706 = vunpack.c.l.s4 1934713408
  %v8707 = vunpack.c.0.s8 %v8706
  %v8708 = vlaneseq
  %v8709 = vshrl.u32 %v8708, 7
  %v8710 = vsub.s32 %v8707, %v8709
  %v8711 = vrot.slane %v8697, %v8710
  %v8712 = vcombine.high %v8688, 0
  %v8713 = vcombine.high %v8695, 0
  %v8714 = vcombine.high %v8704, 0
  %v8715 = vcombine.high %v8711, 0
  %v8716 = vcombine.high %v8570, %v251
  %v8718 = vunpack.c.l.s4 1983009808
  %v8719 = vunpack.c.0.s8 %v8718
  %v8720 = vlaneseq
  %v8721 = vshrl.u32 %v8720, 7
  %v8722 = vsub.s32 %v8719, %v8721
  %v8723 = vrot.slane %v8570, %v8722
  %v8725 = vunpack.c.l.s4 1983009808
  %v8726 = vunpack.c.0.s8 %v8725
  %v8727 = vlaneseq
  %v8728 = vshrl.u32 %v8727, 7
  %v8729 = vsub.s32 %v8726, %v8728
  %v8730 = vrot.slane %v8716, %v8729
  %v8731 = vcombine.high %v8578, %v251
  %v8733 = vunpack.c.l.s4 1983009808
  %v8734 = vunpack.c.0.s8 %v8733
  %v8735 = vlaneseq
  %v8736 = vshrl.u32 %v8735, 7
  %v8737 = vsub.s32 %v8734, %v8736
  %v8738 = vrot.slane %v8578, %v8737
  %v8740 = vunpack.c.l.s4 1983009808
  %v8741 = vunpack.c.0.s8 %v8740
  %v8742 = vlaneseq
  %v8743 = vshrl.u32 %v8742, 7
  %v8744 = vsub.s32 %v8741, %v8743
  %v8745 = vrot.slane %v8731, %v8744
  %v8746 = vcombine.low %v8723, %v8738
  %v8747 = vcombine.high %v8723, %v8738
  %v8749 = vunpack.c.l.s4 1934713408
  %v8750 = vunpack.c.0.s8 %v8749
  %v8751 = vlaneseq
  %v8752 = vshrl.u32 %v8751, 7
  %v8753 = vsub.s32 %v8750, %v8752
  %v8754 = vrot.slane %v8746, %v8753
  %v8756 = vunpack.c.l.s4 1934713408
  %v8757 = vunpack.c.0.s8 %v8756
  %v8758 = vlaneseq
  %v8759 = vshrl.u32 %v8758, 7
  %v8760 = vsub.s32 %v8757, %v8759
  %v8761 = vrot.slane %v8747, %v8760
  %v8762 = vcombine.low %v8730, %v8745
  %v8763 = vcombine.high %v8730, %v8745
  %v8765 = vunpack.c.l.s4 1934713408
  %v8766 = vunpack.c.0.s8 %v8765
  %v8767 = vlaneseq
  %v8768 = vshrl.u32 %v8767, 7
  %v8769 = vsub.s32 %v8766, %v8768
  %v8770 = vrot.slane %v8762, %v8769
  %v8772 = vunpack.c.l.s4 1934713408
  %v8773 = vunpack.c.0.s8 %v8772
  %v8774 = vlaneseq
  %v8775 = vshrl.u32 %v8774, 7
  %v8776 = vsub.s32 %v8773, %v8775
  %v8777 = vrot.slane %v8763, %v8776
  %v8778 = vcombine.high %v8754, 0
  %v8779 = vcombine.high %v8761, 0
  %v8780 = vcombine.high %v8770, 0
  %v8781 = vcombine.high %v8777, 0
  %v8782 = vcombine.high %v8574, %v254
  %v8784 = vunpack.c.l.s4 1983009808
  %v8785 = vunpack.c.0.s8 %v8784
  %v8786 = vlaneseq
  %v8787 = vshrl.u32 %v8786, 7
  %v8788 = vsub.s32 %v8785, %v8787
  %v8789 = vrot.slane %v8574, %v8788
  %v8791 = vunpack.c.l.s4 1983009808
  %v8792 = vunpack.c.0.s8 %v8791
  %v8793 = vlaneseq
  %v8794 = vshrl.u32 %v8793, 7
  %v8795 = vsub.s32 %v8792, %v8794
  %v8796 = vrot.slane %v8782, %v8795
  %v8797 = vcombine.high %v8582, %v254
  %v8799 = vunpack.c.l.s4 1983009808
  %v8800 = vunpack.c.0.s8 %v8799
  %v8801 = vlaneseq
  %v8802 = vshrl.u32 %v8801, 7
  %v8803 = vsub.s32 %v8800, %v8802
  %v8804 = vrot.slane %v8582, %v8803
  %v8806 = vunpack.c.l.s4 1983009808
  %v8807 = vunpack.c.0.s8 %v8806
  %v8808 = vlaneseq
  %v8809 = vshrl.u32 %v8808, 7
  %v8810 = vsub.s32 %v8807, %v8809
  %v8811 = vrot.slane %v8797, %v8810
  %v8812 = vcombine.low %v8789, %v8804
  %v8813 = vcombine.high %v8789, %v8804
  %v8815 = vunpack.c.l.s4 1934713408
  %v8816 = vunpack.c.0.s8 %v8815
  %v8817 = vlaneseq
  %v8818 = vshrl.u32 %v8817, 7
  %v8819 = vsub.s32 %v8816, %v8818
  %v8820 = vrot.slane %v8812, %v8819
  %v8822 = vunpack.c.l.s4 1934713408
  %v8823 = vunpack.c.0.s8 %v8822
  %v8824 = vlaneseq
  %v8825 = vshrl.u32 %v8824, 7
  %v8826 = vsub.s32 %v8823, %v8825
  %v8827 = vrot.slane %v8813, %v8826
  %v8828 = vcombine.low %v8796, %v8811
  %v8829 = vcombine.high %v8796, %v8811
  %v8831 = vunpack.c.l.s4 1934713408
  %v8832 = vunpack.c.0.s8 %v8831
  %v8833 = vlaneseq
  %v8834 = vshrl.u32 %v8833, 7
  %v8835 = vsub.s32 %v8832, %v8834
  %v8836 = vrot.slane %v8828, %v8835
  %v8838 = vunpack.c.l.s4 1934713408
  %v8839 = vunpack.c.0.s8 %v8838
  %v8840 = vlaneseq
  %v8841 = vshrl.u32 %v8840, 7
  %v8842 = vsub.s32 %v8839, %v8841
  %v8843 = vrot.slane %v8829, %v8842
  %v8844 = vcombine.high %v8820, 0
  %v8845 = vcombine.high %v8827, 0
  %v8846 = vcombine.high %v8836, 0
  %v8847 = vcombine.high %v8843, 0
  %v8848 = vcombine.low %v8622, %v8629
  %v8850 = vunpack.c.l.s4 1983009808
  %v8851 = vunpack.c.0.s8 %v8850
  %v8852 = vlaneseq
  %v8853 = vshrl.u32 %v8852, 7
  %v8854 = vsub.s32 %v8851, %v8853
  %v8855 = vrot.slane %v8848, %v8854
  %v8856 = vcombine.low %v8646, %v8647
  %v8858 = vunpack.c.l.s4 1983009808
  %v8859 = vunpack.c.0.s8 %v8858
  %v8860 = vlaneseq
  %v8861 = vshrl.u32 %v8860, 7
  %v8862 = vsub.s32 %v8859, %v8861
  %v8863 = vrot.slane %v8856, %v8862
  %v8864 = vcombine.low %v8638, %v8645
  %v8866 = vunpack.c.l.s4 1983009808
  %v8867 = vunpack.c.0.s8 %v8866
  %v8868 = vlaneseq
  %v8869 = vshrl.u32 %v8868, 7
  %v8870 = vsub.s32 %v8867, %v8869
  %v8871 = vrot.slane %v8864, %v8870
  %v8872 = vcombine.low %v8648, %v8649
  %v8874 = vunpack.c.l.s4 1983009808
  %v8875 = vunpack.c.0.s8 %v8874
  %v8876 = vlaneseq
  %v8877 = vshrl.u32 %v8876, 7
  %v8878 = vsub.s32 %v8875, %v8877
  %v8879 = vrot.slane %v8872, %v8878
  %v8880 = vcombine.low %v8855, %v8863
  %v8882 = vunpack.c.l.s4 1934713408
  %v8883 = vunpack.c.0.s8 %v8882
  %v8884 = vlaneseq
  %v8885 = vshrl.u32 %v8884, 7
  %v8886 = vsub.s32 %v8883, %v8885
  %v8887 = vrot.slane %v8880, %v8886
  %v8888 = vcombine.low %v8871, %v8879
  %v8890 = vunpack.c.l.s4 1934713408
  %v8891 = vunpack.c.0.s8 %v8890
  %v8892 = vlaneseq
  %v8893 = vshrl.u32 %v8892, 7
  %v8894 = vsub.s32 %v8891, %v8893
  %v8895 = vrot.slane %v8888, %v8894
  %v8896 = vcombine.low %v8887, %v8895
  %v8897 = vcombine.high %v8887, %v8895
  %v8898 = vcombine.low %v8688, %v8695
  %v8900 = vunpack.c.l.s4 1983009808
  %v8901 = vunpack.c.0.s8 %v8900
  %v8902 = vlaneseq
  %v8903 = vshrl.u32 %v8902, 7
  %v8904 = vsub.s32 %v8901, %v8903
  %v8905 = vrot.slane %v8898, %v8904
  %v8906 = vcombine.low %v8712, %v8713
  %v8908 = vunpack.c.l.s4 1983009808
  %v8909 = vunpack.c.0.s8 %v8908
  %v8910 = vlaneseq
  %v8911 = vshrl.u32 %v8910, 7
  %v8912 = vsub.s32 %v8909, %v8911
  %v8913 = vrot.slane %v8906, %v8912
  %v8914 = vcombine.low %v8704, %v8711
  %v8916 = vunpack.c.l.s4 1983009808
  %v8917 = vunpack.c.0.s8 %v8916
  %v8918 = vlaneseq
  %v8919 = vshrl.u32 %v8918, 7
  %v8920 = vsub.s32 %v8917, %v8919
  %v8921 = vrot.slane %v8914, %v8920
  %v8922 = vcombine.low %v8714, %v8715
  %v8924 = vunpack.c.l.s4 1983009808
  %v8925 = vunpack.c.0.s8 %v8924
  %v8926 = vlaneseq
  %v8927 = vshrl.u32 %v8926, 7
  %v8928 = vsub.s32 %v8925, %v8927
  %v8929 = vrot.slane %v8922, %v8928
  %v8930 = vcombine.low %v8905, %v8913
  %v8932 = vunpack.c.l.s4 1934713408
  %v8933 = vunpack.c.0.s8 %v8932
  %v8934 = vlaneseq
  %v8935 = vshrl.u32 %v8934, 7
  %v8936 = vsub.s32 %v8933, %v8935
  %v8937 = vrot.slane %v8930, %v8936
  %v8938 = vcombine.low %v8921, %v8929
  %v8940 = vunpack.c.l.s4 1934713408
  %v8941 = vunpack.c.0.s8 %v8940
  %v8942 = vlaneseq
  %v8943 = vshrl.u32 %v8942, 7
  %v8944 = vsub.s32 %v8941, %v8943
  %v8945 = vrot.slane %v8938, %v8944
  %v8946 = vcombine.low %v8937, %v8945
  %v8947 = vcombine.high %v8937, %v8945
  %v8948 = vcombine.low %v8754, %v8761
  %v8950 = vunpack.c.l.s4 1983009808
  %v8951 = vunpack.c.0.s8 %v8950
  %v8952 = vlaneseq
  %v8953 = vshrl.u32 %v8952, 7
  %v8954 = vsub.s32 %v8951, %v8953
  %v8955 = vrot.slane %v8948, %v8954
  %v8956 = vcombine.low %v8778, %v8779
  %v8958 = vunpack.c.l.s4 1983009808
  %v8959 = vunpack.c.0.s8 %v8958
  %v8960 = vlaneseq
  %v8961 = vshrl.u32 %v8960, 7
  %v8962 = vsub.s32 %v8959, %v8961
  %v8963 = vrot.slane %v8956, %v8962
  %v8964 = vcombine.low %v8770, %v8777
  %v8966 = vunpack.c.l.s4 1983009808
  %v8967 = vunpack.c.0.s8 %v8966
  %v8968 = vlaneseq
  %v8969 = vshrl.u32 %v8968, 7
  %v8970 = vsub.s32 %v8967, %v8969
  %v8971 = vrot.slane %v8964, %v8970
  %v8972 = vcombine.low %v8780, %v8781
  %v8974 = vunpack.c.l.s4 1983009808
  %v8975 = vunpack.c.0.s8 %v8974
  %v8976 = vlaneseq
  %v8977 = vshrl.u32 %v8976, 7
  %v8978 = vsub.s32 %v8975, %v8977
  %v8979 = vrot.slane %v8972, %v8978
  %v8980 = vcombine.low %v8955, %v8963
  %v8982 = vunpack.c.l.s4 1934713408
  %v8983 = vunpack.c.0.s8 %v8982
  %v8984 = vlaneseq
  %v8985 = vshrl.u32 %v8984, 7
  %v8986 = vsub.s32 %v8983, %v8985
  %v8987 = vrot.slane %v8980, %v8986
  %v8988 = vcombine.low %v8971, %v8979
  %v8990 = vunpack.c.l.s4 1934713408
  %v8991 = vunpack.c.0.s8 %v8990
  %v8992 = vlaneseq
  %v8993 = vshrl.u32 %v8992, 7
  %v8994 = vsub.s32 %v8991, %v8993
  %v8995 = vrot.slane %v8988, %v8994
  %v8996 = vcombine.low %v8987, %v8995
  %v8997 = vcombine.high %v8987, %v8995
  %v8998 = vcombine.low %v8820, %v8827
  %v9000 = vunpack.c.l.s4 1983009808
  %v9001 = vunpack.c.0.s8 %v9000
  %v9002 = vlaneseq
  %v9003 = vshrl.u32 %v9002, 7
  %v9004 = vsub.s32 %v9001, %v9003
  %v9005 = vrot.slane %v8998, %v9004
  %v9006 = vcombine.low %v8844, %v8845
  %v9008 = vunpack.c.l.s4 1983009808
  %v9009 = vunpack.c.0.s8 %v9008
  %v9010 = vlaneseq
  %v9011 = vshrl.u32 %v9010, 7
  %v9012 = vsub.s32 %v9009, %v9011
  %v9013 = vrot.slane %v9006, %v9012
  %v9014 = vcombine.low %v8836, %v8843
  %v9016 = vunpack.c.l.s4 1983009808
  %v9017 = vunpack.c.0.s8 %v9016
  %v9018 = vlaneseq
  %v9019 = vshrl.u32 %v9018, 7
  %v9020 = vsub.s32 %v9017, %v9019
  %v9021 = vrot.slane %v9014, %v9020
  %v9022 = vcombine.low %v8846, %v8847
  %v9024 = vunpack.c.l.s4 1983009808
  %v9025 = vunpack.c.0.s8 %v9024
  %v9026 = vlaneseq
  %v9027 = vshrl.u32 %v9026, 7
  %v9028 = vsub.s32 %v9025, %v9027
  %v9029 = vrot.slane %v9022, %v9028
  %v9030 = vcombine.low %v9005, %v9013
  %v9032 = vunpack.c.l.s4 1934713408
  %v9033 = vunpack.c.0.s8 %v9032
  %v9034 = vlaneseq
  %v9035 = vshrl.u32 %v9034, 7
  %v9036 = vsub.s32 %v9033, %v9035
  %v9037 = vrot.slane %v9030, %v9036
  %v9038 = vcombine.low %v9021, %v9029
  %v9040 = vunpack.c.l.s4 1934713408
  %v9041 = vunpack.c.0.s8 %v9040
  %v9042 = vlaneseq
  %v9043 = vshrl.u32 %v9042, 7
  %v9044 = vsub.s32 %v9041, %v9043
  %v9045 = vrot.slane %v9038, %v9044
  %v9046 = vcombine.low %v9037, %v9045
  %v9047 = vcombine.high %v9037, %v9045
  %v9050 = vpack.i.b16 %v8946, %v8896
  %v9052 = vshrl.u32 %v8896, 16
  %v9053 = vshrl.u32 %v8946, 16
  %v9054 = vpack.i.b16 %v9053, %v9052
  %v9058 = vpack.i.b16 %v8947, %v8897
  %v9060 = vshrl.u32 %v8897, 16
  %v9061 = vshrl.u32 %v8947, 16
  %v9062 = vpack.i.b16 %v9061, %v9060
  %v9066 = vpack.i.b16 %v9046, %v8996
  %v9068 = vshrl.u32 %v8996, 16
  %v9069 = vshrl.u32 %v9046, 16
  %v9070 = vpack.i.b16 %v9069, %v9068
  %v9074 = vpack.i.b16 %v9047, %v8997
  %v9076 = vshrl.u32 %v8997, 16
  %v9077 = vshrl.u32 %v9047, 16
  %v9078 = vpack.i.b16 %v9077, %v9076
  %v9081 = vsel %vm1072, %v7978, 0
  %v9084 = vsel %vm1072, %v8514, 0
  %9086 = vmatprep.subr.bf16.mxu0 0
  %9087 = vmatpush1.bf16.xpose.msra.mxu0 0
  %9088 = vmatprep.subr.bf16.mxu0 0
  %9089 = vmatpush1.bf16.xpose.msra.mxu0 0
  %9090 = vmatprep.subr.bf16.mxu0 0
  %9091 = vmatpush1.bf16.xpose.msra.mxu0 0
  %9092 = vmatprep.subr.bf16.mxu0 0
  %9093 = vmatpush1.bf16.xpose.msra.mxu0 0
  %9094 = vmatprep.subr.bf16.mxu0 0
  %9095 = vmatpush1.bf16.xpose.msra.mxu0 0
  %9096 = vmatprep.subr.bf16.mxu0 0
  %9097 = vmatpush1.bf16.xpose.msra.mxu0 0
  %9098 = vmatprep.subr.bf16.mxu0 0
  %9099 = vmatpush1.bf16.xpose.msra.mxu0 0
  %9100 = vmatprep.subr.bf16.mxu0 0
  %9101 = vmatpush1.bf16.xpose.msra.mxu0 %v9084
  %9102 = vmatprep.subr.bf16.mxu0 0
  %9103 = vmatpush2.bf16.xpose.msra.mxu0 0
  %9104 = vmatprep.subr.bf16.mxu0 0
  %9105 = vmatpush2.bf16.xpose.msra.mxu0 0
  %9106 = vmatprep.subr.bf16.mxu0 0
  %9107 = vmatpush2.bf16.xpose.msra.mxu0 0
  %9108 = vmatprep.subr.bf16.mxu0 0
  %9109 = vmatpush2.bf16.xpose.msra.mxu0 0
  %9110 = vmatprep.subr.bf16.mxu0 0
  %9111 = vmatpush2.bf16.xpose.msra.mxu0 0
  %9112 = vmatprep.subr.bf16.mxu0 0
  %9113 = vmatpush2.bf16.xpose.msra.mxu0 0
  %9114 = vmatprep.subr.bf16.mxu0 0
  %9115 = vmatpush2.bf16.xpose.msra.mxu0 0
  %9116 = vmatprep.subr.bf16.mxu0 0
  %9117 = vmatpush2.bf16.xpose.msra.mxu0 0
  %9118 = vmatprep.mubr.bf16.mxu0 0
  %9119 = vmatmul.mubr.bf16.gmra.mxu0 %v9081
  %v9120 = vpop.f32.mrf.mxu0
  %v9121 = vadd.f32 0.0, %v9120
  %v9122 = vpop.f32.mrf.mxu0
  %v9123 = vpop.f32.mrf.mxu0
  %v9124 = vpop.f32.mrf.mxu0
  %9125 = vdwg.mxu0
  %v9127 = vsel %vm1072, %v7981, 0
  %v9130 = vsel %vm1072, %v8517, 0
  %9132 = vmatprep.subr.bf16.mxu0 0
  %9133 = vmatpush1.bf16.xpose.msra.mxu0 0
  %9134 = vmatprep.subr.bf16.mxu0 0
  %9135 = vmatpush1.bf16.xpose.msra.mxu0 0
  %9136 = vmatprep.subr.bf16.mxu0 0
  %9137 = vmatpush1.bf16.xpose.msra.mxu0 0
  %9138 = vmatprep.subr.bf16.mxu0 0
  %9139 = vmatpush1.bf16.xpose.msra.mxu0 0
  %9140 = vmatprep.subr.bf16.mxu0 0
  %9141 = vmatpush1.bf16.xpose.msra.mxu0 0
  %9142 = vmatprep.subr.bf16.mxu0 0
  %9143 = vmatpush1.bf16.xpose.msra.mxu0 0
  %9144 = vmatprep.subr.bf16.mxu0 0
  %9145 = vmatpush1.bf16.xpose.msra.mxu0 0
  %9146 = vmatprep.subr.bf16.mxu0 0
  %9147 = vmatpush1.bf16.xpose.msra.mxu0 %v9130
  %9148 = vmatprep.subr.bf16.mxu0 0
  %9149 = vmatpush2.bf16.xpose.msra.mxu0 0
  %9150 = vmatprep.subr.bf16.mxu0 0
  %9151 = vmatpush2.bf16.xpose.msra.mxu0 0
  %9152 = vmatprep.subr.bf16.mxu0 0
  %9153 = vmatpush2.bf16.xpose.msra.mxu0 0
  %9154 = vmatprep.subr.bf16.mxu0 0
  %9155 = vmatpush2.bf16.xpose.msra.mxu0 0
  %9156 = vmatprep.subr.bf16.mxu0 0
  %9157 = vmatpush2.bf16.xpose.msra.mxu0 0
  %9158 = vmatprep.subr.bf16.mxu0 0
  %9159 = vmatpush2.bf16.xpose.msra.mxu0 0
  %9160 = vmatprep.subr.bf16.mxu0 0
  %9161 = vmatpush2.bf16.xpose.msra.mxu0 0
  %9162 = vmatprep.subr.bf16.mxu0 0
  %9163 = vmatpush2.bf16.xpose.msra.mxu0 0
  %9164 = vmatprep.mubr.bf16.mxu0 0
  %9165 = vmatmul.mubr.bf16.gmra.mxu0 %v9127
  %v9166 = vpop.f32.mrf.mxu0
  %v9167 = vadd.f32 0.0, %v9166
  %v9168 = vpop.f32.mrf.mxu0
  %v9169 = vpop.f32.mrf.mxu0
  %v9170 = vpop.f32.mrf.mxu0
  %9171 = vdwg.mxu0
  %v9173 = vsel %vm1072, %v7984, 0
  %v9176 = vsel %vm1072, %v8520, 0
  %9178 = vmatprep.subr.bf16.mxu0 0
  %9179 = vmatpush1.bf16.xpose.msra.mxu0 0
  %9180 = vmatprep.subr.bf16.mxu0 0
  %9181 = vmatpush1.bf16.xpose.msra.mxu0 0
  %9182 = vmatprep.subr.bf16.mxu0 0
  %9183 = vmatpush1.bf16.xpose.msra.mxu0 0
  %9184 = vmatprep.subr.bf16.mxu0 0
  %9185 = vmatpush1.bf16.xpose.msra.mxu0 0
  %9186 = vmatprep.subr.bf16.mxu0 0
  %9187 = vmatpush1.bf16.xpose.msra.mxu0 0
  %9188 = vmatprep.subr.bf16.mxu0 0
  %9189 = vmatpush1.bf16.xpose.msra.mxu0 0
  %9190 = vmatprep.subr.bf16.mxu0 0
  %9191 = vmatpush1.bf16.xpose.msra.mxu0 0
  %9192 = vmatprep.subr.bf16.mxu0 0
  %9193 = vmatpush1.bf16.xpose.msra.mxu0 %v9176
  %9194 = vmatprep.subr.bf16.mxu0 0
  %9195 = vmatpush2.bf16.xpose.msra.mxu0 0
  %9196 = vmatprep.subr.bf16.mxu0 0
  %9197 = vmatpush2.bf16.xpose.msra.mxu0 0
  %9198 = vmatprep.subr.bf16.mxu0 0
  %9199 = vmatpush2.bf16.xpose.msra.mxu0 0
  %9200 = vmatprep.subr.bf16.mxu0 0
  %9201 = vmatpush2.bf16.xpose.msra.mxu0 0
  %9202 = vmatprep.subr.bf16.mxu0 0
  %9203 = vmatpush2.bf16.xpose.msra.mxu0 0
  %9204 = vmatprep.subr.bf16.mxu0 0
  %9205 = vmatpush2.bf16.xpose.msra.mxu0 0
  %9206 = vmatprep.subr.bf16.mxu0 0
  %9207 = vmatpush2.bf16.xpose.msra.mxu0 0
  %9208 = vmatprep.subr.bf16.mxu0 0
  %9209 = vmatpush2.bf16.xpose.msra.mxu0 0
  %9210 = vmatprep.mubr.bf16.mxu0 0
  %9211 = vmatmul.mubr.bf16.gmra.mxu0 %v9173
  %v9212 = vpop.f32.mrf.mxu0
  %v9213 = vadd.f32 0.0, %v9212
  %v9214 = vpop.f32.mrf.mxu0
  %v9215 = vpop.f32.mrf.mxu0
  %v9216 = vpop.f32.mrf.mxu0
  %9217 = vdwg.mxu0
  %v9219 = vsel %vm1072, %v7987, 0
  %v9222 = vsel %vm1072, %v8523, 0
  %9224 = vmatprep.subr.bf16.mxu0 0
  %9225 = vmatpush1.bf16.xpose.msra.mxu0 0
  %9226 = vmatprep.subr.bf16.mxu0 0
  %9227 = vmatpush1.bf16.xpose.msra.mxu0 0
  %9228 = vmatprep.subr.bf16.mxu0 0
  %9229 = vmatpush1.bf16.xpose.msra.mxu0 0
  %9230 = vmatprep.subr.bf16.mxu0 0
  %9231 = vmatpush1.bf16.xpose.msra.mxu0 0
  %9232 = vmatprep.subr.bf16.mxu0 0
  %9233 = vmatpush1.bf16.xpose.msra.mxu0 0
  %9234 = vmatprep.subr.bf16.mxu0 0
  %9235 = vmatpush1.bf16.xpose.msra.mxu0 0
  %9236 = vmatprep.subr.bf16.mxu0 0
  %9237 = vmatpush1.bf16.xpose.msra.mxu0 0
  %9238 = vmatprep.subr.bf16.mxu0 0
  %9239 = vmatpush1.bf16.xpose.msra.mxu0 %v9222
  %9240 = vmatprep.subr.bf16.mxu0 0
  %9241 = vmatpush2.bf16.xpose.msra.mxu0 0
  %9242 = vmatprep.subr.bf16.mxu0 0
  %9243 = vmatpush2.bf16.xpose.msra.mxu0 0
  %9244 = vmatprep.subr.bf16.mxu0 0
  %9245 = vmatpush2.bf16.xpose.msra.mxu0 0
  %9246 = vmatprep.subr.bf16.mxu0 0
  %9247 = vmatpush2.bf16.xpose.msra.mxu0 0
  %9248 = vmatprep.subr.bf16.mxu0 0
  %9249 = vmatpush2.bf16.xpose.msra.mxu0 0
  %9250 = vmatprep.subr.bf16.mxu0 0
  %9251 = vmatpush2.bf16.xpose.msra.mxu0 0
  %9252 = vmatprep.subr.bf16.mxu0 0
  %9253 = vmatpush2.bf16.xpose.msra.mxu0 0
  %9254 = vmatprep.subr.bf16.mxu0 0
  %9255 = vmatpush2.bf16.xpose.msra.mxu0 0
  %9256 = vmatprep.mubr.bf16.mxu0 0
  %9257 = vmatmul.mubr.bf16.gmra.mxu0 %v9219
  %v9258 = vpop.f32.mrf.mxu0
  %v9259 = vadd.f32 0.0, %v9258
  %v9260 = vpop.f32.mrf.mxu0
  %v9261 = vpop.f32.mrf.mxu0
  %v9262 = vpop.f32.mrf.mxu0
  %9263 = vdwg.mxu0
  %v9265 = vsel %vm1072, %v7990, 0
  %v9268 = vsel %vm1072, %v8526, 0
  %9270 = vmatprep.subr.bf16.mxu0 0
  %9271 = vmatpush1.bf16.xpose.msra.mxu0 0
  %9272 = vmatprep.subr.bf16.mxu0 0
  %9273 = vmatpush1.bf16.xpose.msra.mxu0 0
  %9274 = vmatprep.subr.bf16.mxu0 0
  %9275 = vmatpush1.bf16.xpose.msra.mxu0 0
  %9276 = vmatprep.subr.bf16.mxu0 0
  %9277 = vmatpush1.bf16.xpose.msra.mxu0 0
  %9278 = vmatprep.subr.bf16.mxu0 0
  %9279 = vmatpush1.bf16.xpose.msra.mxu0 0
  %9280 = vmatprep.subr.bf16.mxu0 0
  %9281 = vmatpush1.bf16.xpose.msra.mxu0 0
  %9282 = vmatprep.subr.bf16.mxu0 0
  %9283 = vmatpush1.bf16.xpose.msra.mxu0 0
  %9284 = vmatprep.subr.bf16.mxu0 0
  %9285 = vmatpush1.bf16.xpose.msra.mxu0 %v9268
  %9286 = vmatprep.subr.bf16.mxu0 0
  %9287 = vmatpush2.bf16.xpose.msra.mxu0 0
  %9288 = vmatprep.subr.bf16.mxu0 0
  %9289 = vmatpush2.bf16.xpose.msra.mxu0 0
  %9290 = vmatprep.subr.bf16.mxu0 0
  %9291 = vmatpush2.bf16.xpose.msra.mxu0 0
  %9292 = vmatprep.subr.bf16.mxu0 0
  %9293 = vmatpush2.bf16.xpose.msra.mxu0 0
  %9294 = vmatprep.subr.bf16.mxu0 0
  %9295 = vmatpush2.bf16.xpose.msra.mxu0 0
  %9296 = vmatprep.subr.bf16.mxu0 0
  %9297 = vmatpush2.bf16.xpose.msra.mxu0 0
  %9298 = vmatprep.subr.bf16.mxu0 0
  %9299 = vmatpush2.bf16.xpose.msra.mxu0 0
  %9300 = vmatprep.subr.bf16.mxu0 0
  %9301 = vmatpush2.bf16.xpose.msra.mxu0 0
  %9302 = vmatprep.mubr.bf16.mxu0 0
  %9303 = vmatmul.mubr.bf16.gmra.mxu0 %v9265
  %v9304 = vpop.f32.mrf.mxu0
  %v9305 = vadd.f32 0.0, %v9304
  %v9306 = vpop.f32.mrf.mxu0
  %v9307 = vpop.f32.mrf.mxu0
  %v9308 = vpop.f32.mrf.mxu0
  %9309 = vdwg.mxu0
  %v9311 = vsel %vm1072, %v7993, 0
  %v9314 = vsel %vm1072, %v8529, 0
  %9316 = vmatprep.subr.bf16.mxu0 0
  %9317 = vmatpush1.bf16.xpose.msra.mxu0 0
  %9318 = vmatprep.subr.bf16.mxu0 0
  %9319 = vmatpush1.bf16.xpose.msra.mxu0 0
  %9320 = vmatprep.subr.bf16.mxu0 0
  %9321 = vmatpush1.bf16.xpose.msra.mxu0 0
  %9322 = vmatprep.subr.bf16.mxu0 0
  %9323 = vmatpush1.bf16.xpose.msra.mxu0 0
  %9324 = vmatprep.subr.bf16.mxu0 0
  %9325 = vmatpush1.bf16.xpose.msra.mxu0 0
  %9326 = vmatprep.subr.bf16.mxu0 0
  %9327 = vmatpush1.bf16.xpose.msra.mxu0 0
  %9328 = vmatprep.subr.bf16.mxu0 0
  %9329 = vmatpush1.bf16.xpose.msra.mxu0 0
  %9330 = vmatprep.subr.bf16.mxu0 0
  %9331 = vmatpush1.bf16.xpose.msra.mxu0 %v9314
  %9332 = vmatprep.subr.bf16.mxu0 0
  %9333 = vmatpush2.bf16.xpose.msra.mxu0 0
  %9334 = vmatprep.subr.bf16.mxu0 0
  %9335 = vmatpush2.bf16.xpose.msra.mxu0 0
  %9336 = vmatprep.subr.bf16.mxu0 0
  %9337 = vmatpush2.bf16.xpose.msra.mxu0 0
  %9338 = vmatprep.subr.bf16.mxu0 0
  %9339 = vmatpush2.bf16.xpose.msra.mxu0 0
  %9340 = vmatprep.subr.bf16.mxu0 0
  %9341 = vmatpush2.bf16.xpose.msra.mxu0 0
  %9342 = vmatprep.subr.bf16.mxu0 0
  %9343 = vmatpush2.bf16.xpose.msra.mxu0 0
  %9344 = vmatprep.subr.bf16.mxu0 0
  %9345 = vmatpush2.bf16.xpose.msra.mxu0 0
  %9346 = vmatprep.subr.bf16.mxu0 0
  %9347 = vmatpush2.bf16.xpose.msra.mxu0 0
  %9348 = vmatprep.mubr.bf16.mxu0 0
  %9349 = vmatmul.mubr.bf16.gmra.mxu0 %v9311
  %v9350 = vpop.f32.mrf.mxu0
  %v9351 = vadd.f32 0.0, %v9350
  %v9352 = vpop.f32.mrf.mxu0
  %v9353 = vpop.f32.mrf.mxu0
  %v9354 = vpop.f32.mrf.mxu0
  %9355 = vdwg.mxu0
  %v9357 = vsel %vm1072, %v7996, 0
  %v9360 = vsel %vm1072, %v8532, 0
  %9362 = vmatprep.subr.bf16.mxu0 0
  %9363 = vmatpush1.bf16.xpose.msra.mxu0 0
  %9364 = vmatprep.subr.bf16.mxu0 0
  %9365 = vmatpush1.bf16.xpose.msra.mxu0 0
  %9366 = vmatprep.subr.bf16.mxu0 0
  %9367 = vmatpush1.bf16.xpose.msra.mxu0 0
  %9368 = vmatprep.subr.bf16.mxu0 0
  %9369 = vmatpush1.bf16.xpose.msra.mxu0 0
  %9370 = vmatprep.subr.bf16.mxu0 0
  %9371 = vmatpush1.bf16.xpose.msra.mxu0 0
  %9372 = vmatprep.subr.bf16.mxu0 0
  %9373 = vmatpush1.bf16.xpose.msra.mxu0 0
  %9374 = vmatprep.subr.bf16.mxu0 0
  %9375 = vmatpush1.bf16.xpose.msra.mxu0 0
  %9376 = vmatprep.subr.bf16.mxu0 0
  %9377 = vmatpush1.bf16.xpose.msra.mxu0 %v9360
  %9378 = vmatprep.subr.bf16.mxu0 0
  %9379 = vmatpush2.bf16.xpose.msra.mxu0 0
  %9380 = vmatprep.subr.bf16.mxu0 0
  %9381 = vmatpush2.bf16.xpose.msra.mxu0 0
  %9382 = vmatprep.subr.bf16.mxu0 0
  %9383 = vmatpush2.bf16.xpose.msra.mxu0 0
  %9384 = vmatprep.subr.bf16.mxu0 0
  %9385 = vmatpush2.bf16.xpose.msra.mxu0 0
  %9386 = vmatprep.subr.bf16.mxu0 0
  %9387 = vmatpush2.bf16.xpose.msra.mxu0 0
  %9388 = vmatprep.subr.bf16.mxu0 0
  %9389 = vmatpush2.bf16.xpose.msra.mxu0 0
  %9390 = vmatprep.subr.bf16.mxu0 0
  %9391 = vmatpush2.bf16.xpose.msra.mxu0 0
  %9392 = vmatprep.subr.bf16.mxu0 0
  %9393 = vmatpush2.bf16.xpose.msra.mxu0 0
  %9394 = vmatprep.mubr.bf16.mxu0 0
  %9395 = vmatmul.mubr.bf16.gmra.mxu0 %v9357
  %v9396 = vpop.f32.mrf.mxu0
  %v9397 = vadd.f32 0.0, %v9396
  %v9398 = vpop.f32.mrf.mxu0
  %v9399 = vpop.f32.mrf.mxu0
  %v9400 = vpop.f32.mrf.mxu0
  %9401 = vdwg.mxu0
  %v9403 = vsel %vm1072, %v7999, 0
  %v9406 = vsel %vm1072, %v8535, 0
  %9408 = vmatprep.subr.bf16.mxu0 0
  %9409 = vmatpush1.bf16.xpose.msra.mxu0 0
  %9410 = vmatprep.subr.bf16.mxu0 0
  %9411 = vmatpush1.bf16.xpose.msra.mxu0 0
  %9412 = vmatprep.subr.bf16.mxu0 0
  %9413 = vmatpush1.bf16.xpose.msra.mxu0 0
  %9414 = vmatprep.subr.bf16.mxu0 0
  %9415 = vmatpush1.bf16.xpose.msra.mxu0 0
  %9416 = vmatprep.subr.bf16.mxu0 0
  %9417 = vmatpush1.bf16.xpose.msra.mxu0 0
  %9418 = vmatprep.subr.bf16.mxu0 0
  %9419 = vmatpush1.bf16.xpose.msra.mxu0 0
  %9420 = vmatprep.subr.bf16.mxu0 0
  %9421 = vmatpush1.bf16.xpose.msra.mxu0 0
  %9422 = vmatprep.subr.bf16.mxu0 0
  %9423 = vmatpush1.bf16.xpose.msra.mxu0 %v9406
  %9424 = vmatprep.subr.bf16.mxu0 0
  %9425 = vmatpush2.bf16.xpose.msra.mxu0 0
  %9426 = vmatprep.subr.bf16.mxu0 0
  %9427 = vmatpush2.bf16.xpose.msra.mxu0 0
  %9428 = vmatprep.subr.bf16.mxu0 0
  %9429 = vmatpush2.bf16.xpose.msra.mxu0 0
  %9430 = vmatprep.subr.bf16.mxu0 0
  %9431 = vmatpush2.bf16.xpose.msra.mxu0 0
  %9432 = vmatprep.subr.bf16.mxu0 0
  %9433 = vmatpush2.bf16.xpose.msra.mxu0 0
  %9434 = vmatprep.subr.bf16.mxu0 0
  %9435 = vmatpush2.bf16.xpose.msra.mxu0 0
  %9436 = vmatprep.subr.bf16.mxu0 0
  %9437 = vmatpush2.bf16.xpose.msra.mxu0 0
  %9438 = vmatprep.subr.bf16.mxu0 0
  %9439 = vmatpush2.bf16.xpose.msra.mxu0 0
  %9440 = vmatprep.mubr.bf16.mxu0 0
  %9441 = vmatmul.mubr.bf16.gmra.mxu0 %v9403
  %v9442 = vpop.f32.mrf.mxu0
  %v9443 = vadd.f32 0.0, %v9442
  %v9444 = vpop.f32.mrf.mxu0
  %v9445 = vpop.f32.mrf.mxu0
  %v9446 = vpop.f32.mrf.mxu0
  %9447 = vdwg.mxu0
  %v9448 = vsel %vm2204, %v9121, -inf
  %9449 = vmax.xlane.f32.xlu0 %v9448
  %v9450 = vpop.xlane.xlu0 %9449
  %v9451 = vsel %vm2204, %v9167, -inf
  %9452 = vmax.xlane.f32.xlu0 %v9451
  %v9453 = vpop.xlane.xlu0 %9452
  %v9454 = vsel %vm2204, %v9213, -inf
  %9455 = vmax.xlane.f32.xlu0 %v9454
  %v9456 = vpop.xlane.xlu0 %9455
  %v9457 = vsel %vm2204, %v9259, -inf
  %9458 = vmax.xlane.f32.xlu0 %v9457
  %v9459 = vpop.xlane.xlu0 %9458
  %v9460 = vsel %vm2204, %v9305, -inf
  %9461 = vmax.xlane.f32.xlu0 %v9460
  %v9462 = vpop.xlane.xlu0 %9461
  %v9463 = vsel %vm2204, %v9351, -inf
  %9464 = vmax.xlane.f32.xlu0 %v9463
  %v9465 = vpop.xlane.xlu0 %9464
  %v9466 = vsel %vm2204, %v9397, -inf
  %9467 = vmax.xlane.f32.xlu0 %v9466
  %v9468 = vpop.xlane.xlu0 %9467
  %v9469 = vsel %vm2204, %v9443, -inf
  %9470 = vmax.xlane.f32.xlu0 %v9469
  %v9471 = vpop.xlane.xlu0 %9470
  %v9472 = vsub.f32 %v9121, %v9450
  %v9473 = vsub.f32 %v9167, %v9453
  %v9474 = vsub.f32 %v9213, %v9456
  %v9475 = vsub.f32 %v9259, %v9459
  %v9476 = vsub.f32 %v9305, %v9462
  %v9477 = vsub.f32 %v9351, %v9465
  %v9478 = vsub.f32 %v9397, %v9468
  %v9479 = vsub.f32 %v9443, %v9471
  %v9480 = vmul.f32 %v9472, 1.442695
  %v9481 = vpow.pop %v9480
  %v9482 = vmul.f32 %v9473, 1.442695
  %v9483 = vpow.pop %v9482
  %v9484 = vmul.f32 %v9474, 1.442695
  %v9485 = vpow.pop %v9484
  %v9486 = vmul.f32 %v9475, 1.442695
  %v9487 = vpow.pop %v9486
  %v9488 = vmul.f32 %v9476, 1.442695
  %v9489 = vpow.pop %v9488
  %v9490 = vmul.f32 %v9477, 1.442695
  %v9491 = vpow.pop %v9490
  %v9492 = vmul.f32 %v9478, 1.442695
  %v9493 = vpow.pop %v9492
  %v9494 = vmul.f32 %v9479, 1.442695
  %v9495 = vpow.pop %v9494
  %v9496 = vsel %vm2204, %v9481, 0.0
  %9497 = vadd.xlane.f32.xlu0 %v9496
  %v9498 = vpop.xlane.xlu0 %9497
  %v9499 = vsel %vm2204, %v9483, 0.0
  %9500 = vadd.xlane.f32.xlu0 %v9499
  %v9501 = vpop.xlane.xlu0 %9500
  %v9502 = vsel %vm2204, %v9485, 0.0
  %9503 = vadd.xlane.f32.xlu0 %v9502
  %v9504 = vpop.xlane.xlu0 %9503
  %v9505 = vsel %vm2204, %v9487, 0.0
  %9506 = vadd.xlane.f32.xlu0 %v9505
  %v9507 = vpop.xlane.xlu0 %9506
  %v9508 = vsel %vm2204, %v9489, 0.0
  %9509 = vadd.xlane.f32.xlu0 %v9508
  %v9510 = vpop.xlane.xlu0 %9509
  %v9511 = vsel %vm2204, %v9491, 0.0
  %9512 = vadd.xlane.f32.xlu0 %v9511
  %v9513 = vpop.xlane.xlu0 %9512
  %v9514 = vsel %vm2204, %v9493, 0.0
  %9515 = vadd.xlane.f32.xlu0 %v9514
  %v9516 = vpop.xlane.xlu0 %9515
  %v9517 = vsel %vm2204, %v9495, 0.0
  %9518 = vadd.xlane.f32.xlu0 %v9517
  %v9519 = vpop.xlane.xlu0 %9518
  %v9520 = vrcp.pop %v9498
  %v9521 = vrcp.pop %v9501
  %v9522 = vrcp.pop %v9504
  %v9523 = vrcp.pop %v9507
  %v9524 = vrcp.pop %v9510
  %v9525 = vrcp.pop %v9513
  %v9526 = vrcp.pop %v9516
  %v9527 = vrcp.pop %v9519
  %v9528 = vmul.f32 %v9481, %v9520
  %v9529 = vmul.f32 %v9483, %v9521
  %v9530 = vmul.f32 %v9485, %v9522
  %v9531 = vmul.f32 %v9487, %v9523
  %v9532 = vmul.f32 %v9489, %v9524
  %v9533 = vmul.f32 %v9491, %v9525
  %v9534 = vmul.f32 %v9493, %v9526
  %v9535 = vmul.f32 %v9495, %v9527
  %v9536 = vpack.c.bf16 %v9528, %v9528
  %v9537 = vpack.c.bf16 %v9529, %v9529
  %v9538 = vpack.c.bf16 %v9530, %v9530
  %v9539 = vpack.c.bf16 %v9531, %v9531
  %v9540 = vpack.c.bf16 %v9532, %v9532
  %v9541 = vpack.c.bf16 %v9533, %v9533
  %v9542 = vpack.c.bf16 %v9534, %v9534
  %v9543 = vpack.c.bf16 %v9535, %v9535
  %v9545 = vsel %vm2204, %v9536, 0
  %9547 = vmatprep.subr.bf16.mxu0 0
  %9548 = vmatpush1.bf16.msra.mxu0 0
  %9549 = vmatprep.subr.bf16.mxu0 0
  %9550 = vmatpush1.bf16.msra.mxu0 0
  %9551 = vmatprep.subr.bf16.mxu0 0
  %9552 = vmatpush1.bf16.msra.mxu0 0
  %9553 = vmatprep.subr.bf16.mxu0 0
  %9554 = vmatpush1.bf16.msra.mxu0 0
  %9555 = vmatprep.subr.bf16.mxu0 0
  %9556 = vmatpush1.bf16.msra.mxu0 0
  %9557 = vmatprep.subr.bf16.mxu0 0
  %9558 = vmatpush1.bf16.msra.mxu0 0
  %9559 = vmatprep.subr.bf16.mxu0 0
  %9560 = vmatpush1.bf16.msra.mxu0 0
  %9561 = vmatprep.subr.bf16.mxu0 0
  %9562 = vmatpush1.bf16.msra.mxu0 %v9050
  %9563 = vmatprep.subr.bf16.mxu0 0
  %9564 = vmatpush2.bf16.msra.mxu0 0
  %9565 = vmatprep.subr.bf16.mxu0 0
  %9566 = vmatpush2.bf16.msra.mxu0 0
  %9567 = vmatprep.subr.bf16.mxu0 0
  %9568 = vmatpush2.bf16.msra.mxu0 0
  %9569 = vmatprep.subr.bf16.mxu0 0
  %9570 = vmatpush2.bf16.msra.mxu0 0
  %9571 = vmatprep.subr.bf16.mxu0 0
  %9572 = vmatpush2.bf16.msra.mxu0 0
  %9573 = vmatprep.subr.bf16.mxu0 0
  %9574 = vmatpush2.bf16.msra.mxu0 0
  %9575 = vmatprep.subr.bf16.mxu0 0
  %9576 = vmatpush2.bf16.msra.mxu0 0
  %9577 = vmatprep.subr.bf16.mxu0 0
  %9578 = vmatpush2.bf16.msra.mxu0 0
  %9579 = vmatprep.mubr.bf16.mxu0 0
  %9580 = vmatmul.mubr.bf16.gmra.mxu0 %v9545
  %v9581 = vpop.f32.mrf.mxu0
  %v9582 = vadd.f32 0.0, %v9581
  %v9583 = vpop.f32.mrf.mxu0
  %v9584 = vpop.f32.mrf.mxu0
  %v9585 = vpop.f32.mrf.mxu0
  %9586 = vdwg.mxu0
  %v9588 = vsel %vm2204, %v9537, 0
  %9590 = vmatprep.subr.bf16.mxu0 0
  %9591 = vmatpush1.bf16.msra.mxu0 0
  %9592 = vmatprep.subr.bf16.mxu0 0
  %9593 = vmatpush1.bf16.msra.mxu0 0
  %9594 = vmatprep.subr.bf16.mxu0 0
  %9595 = vmatpush1.bf16.msra.mxu0 0
  %9596 = vmatprep.subr.bf16.mxu0 0
  %9597 = vmatpush1.bf16.msra.mxu0 0
  %9598 = vmatprep.subr.bf16.mxu0 0
  %9599 = vmatpush1.bf16.msra.mxu0 0
  %9600 = vmatprep.subr.bf16.mxu0 0
  %9601 = vmatpush1.bf16.msra.mxu0 0
  %9602 = vmatprep.subr.bf16.mxu0 0
  %9603 = vmatpush1.bf16.msra.mxu0 0
  %9604 = vmatprep.subr.bf16.mxu0 0
  %9605 = vmatpush1.bf16.msra.mxu0 %v9054
  %9606 = vmatprep.subr.bf16.mxu0 0
  %9607 = vmatpush2.bf16.msra.mxu0 0
  %9608 = vmatprep.subr.bf16.mxu0 0
  %9609 = vmatpush2.bf16.msra.mxu0 0
  %9610 = vmatprep.subr.bf16.mxu0 0
  %9611 = vmatpush2.bf16.msra.mxu0 0
  %9612 = vmatprep.subr.bf16.mxu0 0
  %9613 = vmatpush2.bf16.msra.mxu0 0
  %9614 = vmatprep.subr.bf16.mxu0 0
  %9615 = vmatpush2.bf16.msra.mxu0 0
  %9616 = vmatprep.subr.bf16.mxu0 0
  %9617 = vmatpush2.bf16.msra.mxu0 0
  %9618 = vmatprep.subr.bf16.mxu0 0
  %9619 = vmatpush2.bf16.msra.mxu0 0
  %9620 = vmatprep.subr.bf16.mxu0 0
  %9621 = vmatpush2.bf16.msra.mxu0 0
  %9622 = vmatprep.mubr.bf16.mxu0 0
  %9623 = vmatmul.mubr.bf16.gmra.mxu0 %v9588
  %v9624 = vpop.f32.mrf.mxu0
  %v9625 = vadd.f32 0.0, %v9624
  %v9626 = vpop.f32.mrf.mxu0
  %v9627 = vpop.f32.mrf.mxu0
  %v9628 = vpop.f32.mrf.mxu0
  %9629 = vdwg.mxu0
  %v9631 = vsel %vm2204, %v9538, 0
  %9633 = vmatprep.subr.bf16.mxu0 0
  %9634 = vmatpush1.bf16.msra.mxu0 0
  %9635 = vmatprep.subr.bf16.mxu0 0
  %9636 = vmatpush1.bf16.msra.mxu0 0
  %9637 = vmatprep.subr.bf16.mxu0 0
  %9638 = vmatpush1.bf16.msra.mxu0 0
  %9639 = vmatprep.subr.bf16.mxu0 0
  %9640 = vmatpush1.bf16.msra.mxu0 0
  %9641 = vmatprep.subr.bf16.mxu0 0
  %9642 = vmatpush1.bf16.msra.mxu0 0
  %9643 = vmatprep.subr.bf16.mxu0 0
  %9644 = vmatpush1.bf16.msra.mxu0 0
  %9645 = vmatprep.subr.bf16.mxu0 0
  %9646 = vmatpush1.bf16.msra.mxu0 0
  %9647 = vmatprep.subr.bf16.mxu0 0
  %9648 = vmatpush1.bf16.msra.mxu0 %v9058
  %9649 = vmatprep.subr.bf16.mxu0 0
  %9650 = vmatpush2.bf16.msra.mxu0 0
  %9651 = vmatprep.subr.bf16.mxu0 0
  %9652 = vmatpush2.bf16.msra.mxu0 0
  %9653 = vmatprep.subr.bf16.mxu0 0
  %9654 = vmatpush2.bf16.msra.mxu0 0
  %9655 = vmatprep.subr.bf16.mxu0 0
  %9656 = vmatpush2.bf16.msra.mxu0 0
  %9657 = vmatprep.subr.bf16.mxu0 0
  %9658 = vmatpush2.bf16.msra.mxu0 0
  %9659 = vmatprep.subr.bf16.mxu0 0
  %9660 = vmatpush2.bf16.msra.mxu0 0
  %9661 = vmatprep.subr.bf16.mxu0 0
  %9662 = vmatpush2.bf16.msra.mxu0 0
  %9663 = vmatprep.subr.bf16.mxu0 0
  %9664 = vmatpush2.bf16.msra.mxu0 0
  %9665 = vmatprep.mubr.bf16.mxu0 0
  %9666 = vmatmul.mubr.bf16.gmra.mxu0 %v9631
  %v9667 = vpop.f32.mrf.mxu0
  %v9668 = vadd.f32 0.0, %v9667
  %v9669 = vpop.f32.mrf.mxu0
  %v9670 = vpop.f32.mrf.mxu0
  %v9671 = vpop.f32.mrf.mxu0
  %9672 = vdwg.mxu0
  %v9674 = vsel %vm2204, %v9539, 0
  %9676 = vmatprep.subr.bf16.mxu0 0
  %9677 = vmatpush1.bf16.msra.mxu0 0
  %9678 = vmatprep.subr.bf16.mxu0 0
  %9679 = vmatpush1.bf16.msra.mxu0 0
  %9680 = vmatprep.subr.bf16.mxu0 0
  %9681 = vmatpush1.bf16.msra.mxu0 0
  %9682 = vmatprep.subr.bf16.mxu0 0
  %9683 = vmatpush1.bf16.msra.mxu0 0
  %9684 = vmatprep.subr.bf16.mxu0 0
  %9685 = vmatpush1.bf16.msra.mxu0 0
  %9686 = vmatprep.subr.bf16.mxu0 0
  %9687 = vmatpush1.bf16.msra.mxu0 0
  %9688 = vmatprep.subr.bf16.mxu0 0
  %9689 = vmatpush1.bf16.msra.mxu0 0
  %9690 = vmatprep.subr.bf16.mxu0 0
  %9691 = vmatpush1.bf16.msra.mxu0 %v9062
  %9692 = vmatprep.subr.bf16.mxu0 0
  %9693 = vmatpush2.bf16.msra.mxu0 0
  %9694 = vmatprep.subr.bf16.mxu0 0
  %9695 = vmatpush2.bf16.msra.mxu0 0
  %9696 = vmatprep.subr.bf16.mxu0 0
  %9697 = vmatpush2.bf16.msra.mxu0 0
  %9698 = vmatprep.subr.bf16.mxu0 0
  %9699 = vmatpush2.bf16.msra.mxu0 0
  %9700 = vmatprep.subr.bf16.mxu0 0
  %9701 = vmatpush2.bf16.msra.mxu0 0
  %9702 = vmatprep.subr.bf16.mxu0 0
  %9703 = vmatpush2.bf16.msra.mxu0 0
  %9704 = vmatprep.subr.bf16.mxu0 0
  %9705 = vmatpush2.bf16.msra.mxu0 0
  %9706 = vmatprep.subr.bf16.mxu0 0
  %9707 = vmatpush2.bf16.msra.mxu0 0
  %9708 = vmatprep.mubr.bf16.mxu0 0
  %9709 = vmatmul.mubr.bf16.gmra.mxu0 %v9674
  %v9710 = vpop.f32.mrf.mxu0
  %v9711 = vadd.f32 0.0, %v9710
  %v9712 = vpop.f32.mrf.mxu0
  %v9713 = vpop.f32.mrf.mxu0
  %v9714 = vpop.f32.mrf.mxu0
  %9715 = vdwg.mxu0
  %v9717 = vsel %vm2204, %v9540, 0
  %9719 = vmatprep.subr.bf16.mxu0 0
  %9720 = vmatpush1.bf16.msra.mxu0 0
  %9721 = vmatprep.subr.bf16.mxu0 0
  %9722 = vmatpush1.bf16.msra.mxu0 0
  %9723 = vmatprep.subr.bf16.mxu0 0
  %9724 = vmatpush1.bf16.msra.mxu0 0
  %9725 = vmatprep.subr.bf16.mxu0 0
  %9726 = vmatpush1.bf16.msra.mxu0 0
  %9727 = vmatprep.subr.bf16.mxu0 0
  %9728 = vmatpush1.bf16.msra.mxu0 0
  %9729 = vmatprep.subr.bf16.mxu0 0
  %9730 = vmatpush1.bf16.msra.mxu0 0
  %9731 = vmatprep.subr.bf16.mxu0 0
  %9732 = vmatpush1.bf16.msra.mxu0 0
  %9733 = vmatprep.subr.bf16.mxu0 0
  %9734 = vmatpush1.bf16.msra.mxu0 %v9066
  %9735 = vmatprep.subr.bf16.mxu0 0
  %9736 = vmatpush2.bf16.msra.mxu0 0
  %9737 = vmatprep.subr.bf16.mxu0 0
  %9738 = vmatpush2.bf16.msra.mxu0 0
  %9739 = vmatprep.subr.bf16.mxu0 0
  %9740 = vmatpush2.bf16.msra.mxu0 0
  %9741 = vmatprep.subr.bf16.mxu0 0
  %9742 = vmatpush2.bf16.msra.mxu0 0
  %9743 = vmatprep.subr.bf16.mxu0 0
  %9744 = vmatpush2.bf16.msra.mxu0 0
  %9745 = vmatprep.subr.bf16.mxu0 0
  %9746 = vmatpush2.bf16.msra.mxu0 0
  %9747 = vmatprep.subr.bf16.mxu0 0
  %9748 = vmatpush2.bf16.msra.mxu0 0
  %9749 = vmatprep.subr.bf16.mxu0 0
  %9750 = vmatpush2.bf16.msra.mxu0 0
  %9751 = vmatprep.mubr.bf16.mxu0 0
  %9752 = vmatmul.mubr.bf16.gmra.mxu0 %v9717
  %v9753 = vpop.f32.mrf.mxu0
  %v9754 = vadd.f32 0.0, %v9753
  %v9755 = vpop.f32.mrf.mxu0
  %v9756 = vpop.f32.mrf.mxu0
  %v9757 = vpop.f32.mrf.mxu0
  %9758 = vdwg.mxu0
  %v9760 = vsel %vm2204, %v9541, 0
  %9762 = vmatprep.subr.bf16.mxu0 0
  %9763 = vmatpush1.bf16.msra.mxu0 0
  %9764 = vmatprep.subr.bf16.mxu0 0
  %9765 = vmatpush1.bf16.msra.mxu0 0
  %9766 = vmatprep.subr.bf16.mxu0 0
  %9767 = vmatpush1.bf16.msra.mxu0 0
  %9768 = vmatprep.subr.bf16.mxu0 0
  %9769 = vmatpush1.bf16.msra.mxu0 0
  %9770 = vmatprep.subr.bf16.mxu0 0
  %9771 = vmatpush1.bf16.msra.mxu0 0
  %9772 = vmatprep.subr.bf16.mxu0 0
  %9773 = vmatpush1.bf16.msra.mxu0 0
  %9774 = vmatprep.subr.bf16.mxu0 0
  %9775 = vmatpush1.bf16.msra.mxu0 0
  %9776 = vmatprep.subr.bf16.mxu0 0
  %9777 = vmatpush1.bf16.msra.mxu0 %v9070
  %9778 = vmatprep.subr.bf16.mxu0 0
  %9779 = vmatpush2.bf16.msra.mxu0 0
  %9780 = vmatprep.subr.bf16.mxu0 0
  %9781 = vmatpush2.bf16.msra.mxu0 0
  %9782 = vmatprep.subr.bf16.mxu0 0
  %9783 = vmatpush2.bf16.msra.mxu0 0
  %9784 = vmatprep.subr.bf16.mxu0 0
  %9785 = vmatpush2.bf16.msra.mxu0 0
  %9786 = vmatprep.subr.bf16.mxu0 0
  %9787 = vmatpush2.bf16.msra.mxu0 0
  %9788 = vmatprep.subr.bf16.mxu0 0
  %9789 = vmatpush2.bf16.msra.mxu0 0
  %9790 = vmatprep.subr.bf16.mxu0 0
  %9791 = vmatpush2.bf16.msra.mxu0 0
  %9792 = vmatprep.subr.bf16.mxu0 0
  %9793 = vmatpush2.bf16.msra.mxu0 0
  %9794 = vmatprep.mubr.bf16.mxu0 0
  %9795 = vmatmul.mubr.bf16.gmra.mxu0 %v9760
  %v9796 = vpop.f32.mrf.mxu0
  %v9797 = vadd.f32 0.0, %v9796
  %v9798 = vpop.f32.mrf.mxu0
  %v9799 = vpop.f32.mrf.mxu0
  %v9800 = vpop.f32.mrf.mxu0
  %9801 = vdwg.mxu0
  %v9803 = vsel %vm2204, %v9542, 0
  %9805 = vmatprep.subr.bf16.mxu0 0
  %9806 = vmatpush1.bf16.msra.mxu0 0
  %9807 = vmatprep.subr.bf16.mxu0 0
  %9808 = vmatpush1.bf16.msra.mxu0 0
  %9809 = vmatprep.subr.bf16.mxu0 0
  %9810 = vmatpush1.bf16.msra.mxu0 0
  %9811 = vmatprep.subr.bf16.mxu0 0
  %9812 = vmatpush1.bf16.msra.mxu0 0
  %9813 = vmatprep.subr.bf16.mxu0 0
  %9814 = vmatpush1.bf16.msra.mxu0 0
  %9815 = vmatprep.subr.bf16.mxu0 0
  %9816 = vmatpush1.bf16.msra.mxu0 0
  %9817 = vmatprep.subr.bf16.mxu0 0
  %9818 = vmatpush1.bf16.msra.mxu0 0
  %9819 = vmatprep.subr.bf16.mxu0 0
  %9820 = vmatpush1.bf16.msra.mxu0 %v9074
  %9821 = vmatprep.subr.bf16.mxu0 0
  %9822 = vmatpush2.bf16.msra.mxu0 0
  %9823 = vmatprep.subr.bf16.mxu0 0
  %9824 = vmatpush2.bf16.msra.mxu0 0
  %9825 = vmatprep.subr.bf16.mxu0 0
  %9826 = vmatpush2.bf16.msra.mxu0 0
  %9827 = vmatprep.subr.bf16.mxu0 0
  %9828 = vmatpush2.bf16.msra.mxu0 0
  %9829 = vmatprep.subr.bf16.mxu0 0
  %9830 = vmatpush2.bf16.msra.mxu0 0
  %9831 = vmatprep.subr.bf16.mxu0 0
  %9832 = vmatpush2.bf16.msra.mxu0 0
  %9833 = vmatprep.subr.bf16.mxu0 0
  %9834 = vmatpush2.bf16.msra.mxu0 0
  %9835 = vmatprep.subr.bf16.mxu0 0
  %9836 = vmatpush2.bf16.msra.mxu0 0
  %9837 = vmatprep.mubr.bf16.mxu0 0
  %9838 = vmatmul.mubr.bf16.gmra.mxu0 %v9803
  %v9839 = vpop.f32.mrf.mxu0
  %v9840 = vadd.f32 0.0, %v9839
  %v9841 = vpop.f32.mrf.mxu0
  %v9842 = vpop.f32.mrf.mxu0
  %v9843 = vpop.f32.mrf.mxu0
  %9844 = vdwg.mxu0
  %v9846 = vsel %vm2204, %v9543, 0
  %9848 = vmatprep.subr.bf16.mxu0 0
  %9849 = vmatpush1.bf16.msra.mxu0 0
  %9850 = vmatprep.subr.bf16.mxu0 0
  %9851 = vmatpush1.bf16.msra.mxu0 0
  %9852 = vmatprep.subr.bf16.mxu0 0
  %9853 = vmatpush1.bf16.msra.mxu0 0
  %9854 = vmatprep.subr.bf16.mxu0 0
  %9855 = vmatpush1.bf16.msra.mxu0 0
  %9856 = vmatprep.subr.bf16.mxu0 0
  %9857 = vmatpush1.bf16.msra.mxu0 0
  %9858 = vmatprep.subr.bf16.mxu0 0
  %9859 = vmatpush1.bf16.msra.mxu0 0
  %9860 = vmatprep.subr.bf16.mxu0 0
  %9861 = vmatpush1.bf16.msra.mxu0 0
  %9862 = vmatprep.subr.bf16.mxu0 0
  %9863 = vmatpush1.bf16.msra.mxu0 %v9078
  %9864 = vmatprep.subr.bf16.mxu0 0
  %9865 = vmatpush2.bf16.msra.mxu0 0
  %9866 = vmatprep.subr.bf16.mxu0 0
  %9867 = vmatpush2.bf16.msra.mxu0 0
  %9868 = vmatprep.subr.bf16.mxu0 0
  %9869 = vmatpush2.bf16.msra.mxu0 0
  %9870 = vmatprep.subr.bf16.mxu0 0
  %9871 = vmatpush2.bf16.msra.mxu0 0
  %9872 = vmatprep.subr.bf16.mxu0 0
  %9873 = vmatpush2.bf16.msra.mxu0 0
  %9874 = vmatprep.subr.bf16.mxu0 0
  %9875 = vmatpush2.bf16.msra.mxu0 0
  %9876 = vmatprep.subr.bf16.mxu0 0
  %9877 = vmatpush2.bf16.msra.mxu0 0
  %9878 = vmatprep.subr.bf16.mxu0 0
  %9879 = vmatpush2.bf16.msra.mxu0 0
  %9880 = vmatprep.mubr.bf16.mxu0 0
  %9881 = vmatmul.mubr.bf16.gmra.mxu0 %v9846
  %v9882 = vpop.f32.mrf.mxu0
  %v9883 = vadd.f32 0.0, %v9882
  %v9884 = vpop.f32.mrf.mxu0
  %v9885 = vpop.f32.mrf.mxu0
  %v9886 = vpop.f32.mrf.mxu0
  %9887 = vdwg.mxu0
  %v9888 = vcombine.low %v9582, %v9668
  %v9889 = vcombine.high %v9582, %v9668
  %v9891 = vunpack.c.l.s4 1983009808
  %v9892 = vunpack.c.0.s8 %v9891
  %v9893 = vlaneseq
  %v9894 = vshrl.u32 %v9893, 7
  %v9895 = vsub.s32 %v9892, %v9894
  %v9896 = vrot.slane %v9888, %v9895
  %v9898 = vunpack.c.l.s4 1983009808
  %v9899 = vunpack.c.0.s8 %v9898
  %v9900 = vlaneseq
  %v9901 = vshrl.u32 %v9900, 7
  %v9902 = vsub.s32 %v9899, %v9901
  %v9903 = vrot.slane %v9889, %v9902
  %v9904 = vcombine.low %v9625, %v9711
  %v9905 = vcombine.high %v9625, %v9711
  %v9907 = vunpack.c.l.s4 1983009808
  %v9908 = vunpack.c.0.s8 %v9907
  %v9909 = vlaneseq
  %v9910 = vshrl.u32 %v9909, 7
  %v9911 = vsub.s32 %v9908, %v9910
  %v9912 = vrot.slane %v9904, %v9911
  %v9914 = vunpack.c.l.s4 1983009808
  %v9915 = vunpack.c.0.s8 %v9914
  %v9916 = vlaneseq
  %v9917 = vshrl.u32 %v9916, 7
  %v9918 = vsub.s32 %v9915, %v9917
  %v9919 = vrot.slane %v9905, %v9918
  %v9920 = vcombine.low %v9896, %v9912
  %v9921 = vcombine.high %v9896, %v9912
  %v9923 = vunpack.c.l.s4 1934713408
  %v9924 = vunpack.c.0.s8 %v9923
  %v9925 = vlaneseq
  %v9926 = vshrl.u32 %v9925, 7
  %v9927 = vsub.s32 %v9924, %v9926
  %v9928 = vrot.slane %v9920, %v9927
  %v9930 = vunpack.c.l.s4 1934713408
  %v9931 = vunpack.c.0.s8 %v9930
  %v9932 = vlaneseq
  %v9933 = vshrl.u32 %v9932, 7
  %v9934 = vsub.s32 %v9931, %v9933
  %v9935 = vrot.slane %v9921, %v9934
  %v9936 = vcombine.low %v9903, %v9919
  %v9937 = vcombine.high %v9903, %v9919
  %v9939 = vunpack.c.l.s4 1934713408
  %v9940 = vunpack.c.0.s8 %v9939
  %v9941 = vlaneseq
  %v9942 = vshrl.u32 %v9941, 7
  %v9943 = vsub.s32 %v9940, %v9942
  %v9944 = vrot.slane %v9936, %v9943
  %v9946 = vunpack.c.l.s4 1934713408
  %v9947 = vunpack.c.0.s8 %v9946
  %v9948 = vlaneseq
  %v9949 = vshrl.u32 %v9948, 7
  %v9950 = vsub.s32 %v9947, %v9949
  %v9951 = vrot.slane %v9937, %v9950
  %v9952 = vcombine.high %v9928, 0.0
  %v9953 = vcombine.high %v9935, 0.0
  %v9954 = vcombine.high %v9944, 0.0
  %v9955 = vcombine.high %v9951, 0.0
  %v9956 = vcombine.low %v9754, %v9840
  %v9957 = vcombine.high %v9754, %v9840
  %v9959 = vunpack.c.l.s4 1983009808
  %v9960 = vunpack.c.0.s8 %v9959
  %v9961 = vlaneseq
  %v9962 = vshrl.u32 %v9961, 7
  %v9963 = vsub.s32 %v9960, %v9962
  %v9964 = vrot.slane %v9956, %v9963
  %v9966 = vunpack.c.l.s4 1983009808
  %v9967 = vunpack.c.0.s8 %v9966
  %v9968 = vlaneseq
  %v9969 = vshrl.u32 %v9968, 7
  %v9970 = vsub.s32 %v9967, %v9969
  %v9971 = vrot.slane %v9957, %v9970
  %v9972 = vcombine.low %v9797, %v9883
  %v9973 = vcombine.high %v9797, %v9883
  %v9975 = vunpack.c.l.s4 1983009808
  %v9976 = vunpack.c.0.s8 %v9975
  %v9977 = vlaneseq
  %v9978 = vshrl.u32 %v9977, 7
  %v9979 = vsub.s32 %v9976, %v9978
  %v9980 = vrot.slane %v9972, %v9979
  %v9982 = vunpack.c.l.s4 1983009808
  %v9983 = vunpack.c.0.s8 %v9982
  %v9984 = vlaneseq
  %v9985 = vshrl.u32 %v9984, 7
  %v9986 = vsub.s32 %v9983, %v9985
  %v9987 = vrot.slane %v9973, %v9986
  %v9988 = vcombine.low %v9964, %v9980
  %v9989 = vcombine.high %v9964, %v9980
  %v9991 = vunpack.c.l.s4 1934713408
  %v9992 = vunpack.c.0.s8 %v9991
  %v9993 = vlaneseq
  %v9994 = vshrl.u32 %v9993, 7
  %v9995 = vsub.s32 %v9992, %v9994
  %v9996 = vrot.slane %v9988, %v9995
  %v9998 = vunpack.c.l.s4 1934713408
  %v9999 = vunpack.c.0.s8 %v9998
  %v10000 = vlaneseq
  %v10001 = vshrl.u32 %v10000, 7
  %v10002 = vsub.s32 %v9999, %v10001
  %v10003 = vrot.slane %v9989, %v10002
  %v10004 = vcombine.low %v9971, %v9987
  %v10005 = vcombine.high %v9971, %v9987
  %v10007 = vunpack.c.l.s4 1934713408
  %v10008 = vunpack.c.0.s8 %v10007
  %v10009 = vlaneseq
  %v10010 = vshrl.u32 %v10009, 7
  %v10011 = vsub.s32 %v10008, %v10010
  %v10012 = vrot.slane %v10004, %v10011
  %v10014 = vunpack.c.l.s4 1934713408
  %v10015 = vunpack.c.0.s8 %v10014
  %v10016 = vlaneseq
  %v10017 = vshrl.u32 %v10016, 7
  %v10018 = vsub.s32 %v10015, %v10017
  %v10019 = vrot.slane %v10005, %v10018
  %v10020 = vcombine.high %v9996, 0.0
  %v10021 = vcombine.high %v10003, 0.0
  %v10022 = vcombine.high %v10012, 0.0
  %v10023 = vcombine.high %v10019, 0.0
  %v10024 = vcombine.low %v9928, %v9935
  %v10026 = vunpack.c.l.s4 1983009808
  %v10027 = vunpack.c.0.s8 %v10026
  %v10028 = vlaneseq
  %v10029 = vshrl.u32 %v10028, 7
  %v10030 = vsub.s32 %v10027, %v10029
  %v10031 = vrot.slane %v10024, %v10030
  %v10032 = vcombine.low %v9952, %v9953
  %v10034 = vunpack.c.l.s4 1983009808
  %v10035 = vunpack.c.0.s8 %v10034
  %v10036 = vlaneseq
  %v10037 = vshrl.u32 %v10036, 7
  %v10038 = vsub.s32 %v10035, %v10037
  %v10039 = vrot.slane %v10032, %v10038
  %v10040 = vcombine.low %v9944, %v9951
  %v10042 = vunpack.c.l.s4 1983009808
  %v10043 = vunpack.c.0.s8 %v10042
  %v10044 = vlaneseq
  %v10045 = vshrl.u32 %v10044, 7
  %v10046 = vsub.s32 %v10043, %v10045
  %v10047 = vrot.slane %v10040, %v10046
  %v10048 = vcombine.low %v9954, %v9955
  %v10050 = vunpack.c.l.s4 1983009808
  %v10051 = vunpack.c.0.s8 %v10050
  %v10052 = vlaneseq
  %v10053 = vshrl.u32 %v10052, 7
  %v10054 = vsub.s32 %v10051, %v10053
  %v10055 = vrot.slane %v10048, %v10054
  %v10056 = vcombine.low %v10031, %v10039
  %v10057 = vcombine.high %v10031, %v10039
  %v10059 = vunpack.c.l.s4 1934713408
  %v10060 = vunpack.c.0.s8 %v10059
  %v10061 = vlaneseq
  %v10062 = vshrl.u32 %v10061, 7
  %v10063 = vsub.s32 %v10060, %v10062
  %v10064 = vrot.slane %v10056, %v10063
  %v10066 = vunpack.c.l.s4 1934713408
  %v10067 = vunpack.c.0.s8 %v10066
  %v10068 = vlaneseq
  %v10069 = vshrl.u32 %v10068, 7
  %v10070 = vsub.s32 %v10067, %v10069
  %v10071 = vrot.slane %v10057, %v10070
  %v10072 = vcombine.low %v10047, %v10055
  %v10073 = vcombine.high %v10047, %v10055
  %v10075 = vunpack.c.l.s4 1934713408
  %v10076 = vunpack.c.0.s8 %v10075
  %v10077 = vlaneseq
  %v10078 = vshrl.u32 %v10077, 7
  %v10079 = vsub.s32 %v10076, %v10078
  %v10080 = vrot.slane %v10072, %v10079
  %v10082 = vunpack.c.l.s4 1934713408
  %v10083 = vunpack.c.0.s8 %v10082
  %v10084 = vlaneseq
  %v10085 = vshrl.u32 %v10084, 7
  %v10086 = vsub.s32 %v10083, %v10085
  %v10087 = vrot.slane %v10073, %v10086
  %v10088 = vcombine.low %v10064, %v10080
  %v10089 = vcombine.high %v10064, %v10080
  %v10090 = vcombine.low %v10071, %v10087
  %v10091 = vcombine.high %v10071, %v10087
  %v10092 = vcombine.low %v9996, %v10003
  %v10094 = vunpack.c.l.s4 1983009808
  %v10095 = vunpack.c.0.s8 %v10094
  %v10096 = vlaneseq
  %v10097 = vshrl.u32 %v10096, 7
  %v10098 = vsub.s32 %v10095, %v10097
  %v10099 = vrot.slane %v10092, %v10098
  %v10100 = vcombine.low %v10020, %v10021
  %v10102 = vunpack.c.l.s4 1983009808
  %v10103 = vunpack.c.0.s8 %v10102
  %v10104 = vlaneseq
  %v10105 = vshrl.u32 %v10104, 7
  %v10106 = vsub.s32 %v10103, %v10105
  %v10107 = vrot.slane %v10100, %v10106
  %v10108 = vcombine.low %v10012, %v10019
  %v10110 = vunpack.c.l.s4 1983009808
  %v10111 = vunpack.c.0.s8 %v10110
  %v10112 = vlaneseq
  %v10113 = vshrl.u32 %v10112, 7
  %v10114 = vsub.s32 %v10111, %v10113
  %v10115 = vrot.slane %v10108, %v10114
  %v10116 = vcombine.low %v10022, %v10023
  %v10118 = vunpack.c.l.s4 1983009808
  %v10119 = vunpack.c.0.s8 %v10118
  %v10120 = vlaneseq
  %v10121 = vshrl.u32 %v10120, 7
  %v10122 = vsub.s32 %v10119, %v10121
  %v10123 = vrot.slane %v10116, %v10122
  %v10124 = vcombine.low %v10099, %v10107
  %v10125 = vcombine.high %v10099, %v10107
  %v10127 = vunpack.c.l.s4 1934713408
  %v10128 = vunpack.c.0.s8 %v10127
  %v10129 = vlaneseq
  %v10130 = vshrl.u32 %v10129, 7
  %v10131 = vsub.s32 %v10128, %v10130
  %v10132 = vrot.slane %v10124, %v10131
  %v10134 = vunpack.c.l.s4 1934713408
  %v10135 = vunpack.c.0.s8 %v10134
  %v10136 = vlaneseq
  %v10137 = vshrl.u32 %v10136, 7
  %v10138 = vsub.s32 %v10135, %v10137
  %v10139 = vrot.slane %v10125, %v10138
  %v10140 = vcombine.low %v10115, %v10123
  %v10141 = vcombine.high %v10115, %v10123
  %v10143 = vunpack.c.l.s4 1934713408
  %v10144 = vunpack.c.0.s8 %v10143
  %v10145 = vlaneseq
  %v10146 = vshrl.u32 %v10145, 7
  %v10147 = vsub.s32 %v10144, %v10146
  %v10148 = vrot.slane %v10140, %v10147
  %v10150 = vunpack.c.l.s4 1934713408
  %v10151 = vunpack.c.0.s8 %v10150
  %v10152 = vlaneseq
  %v10153 = vshrl.u32 %v10152, 7
  %v10154 = vsub.s32 %v10151, %v10153
  %v10155 = vrot.slane %v10141, %v10154
  %v10156 = vcombine.low %v10132, %v10148
  %v10157 = vcombine.high %v10132, %v10148
  %v10158 = vcombine.low %v10139, %v10155
  %v10159 = vcombine.high %v10139, %v10155
  %10162 = vrot.lane.b32.xlu0 %v10089, 8
  %v10163 = vpop.permute.xlu0 %10162
  %10164 = vrot.lane.b32.xlu0 %v10157, 8
  %v10165 = vpop.permute.xlu0 %10164
  %10170 = vrot.lane.b32.xlu0 %v10090, 16
  %v10171 = vpop.permute.xlu0 %10170
  %10172 = vrot.lane.b32.xlu0 %v10158, 16
  %v10173 = vpop.permute.xlu0 %10172
  %10178 = vrot.lane.b32.xlu0 %v10091, 24
  %v10179 = vpop.permute.xlu0 %10178
  %10180 = vrot.lane.b32.xlu0 %v10159, 24
  %v10181 = vpop.permute.xlu0 %10180
  %v10184 = vsel %vm1072, %v10088, %v10163
  %v10185 = vsel %vm1072, %v10156, %v10165
  %v10186 = vsel %vm2204, %v10184, %v10171
  %v10187 = vsel %vm2204, %v10185, %v10173
  %v10188 = vsel %vm2207, %v10186, %v10179
  %v10189 = vsel %vm2207, %v10187, %v10181
  %v10190 = vpack.c.bf16 %v10189, %v10188
  %v10192 = vlaneseq
  %v10193 = vshrl.u32 %v10192, 7
  %v10194 = vsub.s32 0, %v10193
  %v10195 = vrot.slane %v7540, %v10194
  %v10201 = vunpack.c.l.b16 %v7535
  %v10202 = vunpack.c.l.b16 %v7536
  %v10203 = vunpack.c.l.b16 %v7537
  %v10204 = vunpack.c.l.b16 %v7538
  %v10205 = vpack.c.b16 %v10202, %v10201
  %v10206 = vpack.c.b16 %v10204, %v10203
  %v10210 = vsel %vm127, %v10190, 0
  %10212 = vmatprep.subr.bf16.mxu0 0
  %10213 = vmatpush1.bf16.msra.mxu0 0
  %10214 = vmatprep.subr.bf16.mxu0 0
  %10215 = vmatpush1.bf16.msra.mxu0 0
  %10216 = vmatprep.subr.bf16.mxu0 0
  %10217 = vmatpush1.bf16.msra.mxu0 0
  %10218 = vmatprep.subr.bf16.mxu0 0
  %10219 = vmatpush1.bf16.msra.mxu0 0
  %10220 = vmatprep.subr.bf16.mxu0 0
  %10221 = vmatpush1.bf16.msra.mxu0 0
  %10222 = vmatprep.subr.bf16.mxu0 0
  %10223 = vmatpush1.bf16.msra.mxu0 0
  %10224 = vmatprep.subr.bf16.mxu0 0
  %10225 = vmatpush1.bf16.msra.mxu0 %v10206
  %10226 = vmatprep.subr.bf16.mxu0 0
  %10227 = vmatpush1.bf16.msra.mxu0 %v10205
  %10228 = vmatprep.subr.bf16.mxu0 0
  %10229 = vmatpush2.bf16.msra.mxu0 0
  %10230 = vmatprep.subr.bf16.mxu0 0
  %10231 = vmatpush2.bf16.msra.mxu0 0
  %10232 = vmatprep.subr.bf16.mxu0 0
  %10233 = vmatpush2.bf16.msra.mxu0 0
  %10234 = vmatprep.subr.bf16.mxu0 0
  %10235 = vmatpush2.bf16.msra.mxu0 0
  %10236 = vmatprep.subr.bf16.mxu0 0
  %10237 = vmatpush2.bf16.msra.mxu0 0
  %10238 = vmatprep.subr.bf16.mxu0 0
  %10239 = vmatpush2.bf16.msra.mxu0 0
  %10240 = vmatprep.subr.bf16.mxu0 0
  %10241 = vmatpush2.bf16.msra.mxu0 0
  %10242 = vmatprep.subr.bf16.mxu0 0
  %10243 = vmatpush2.bf16.msra.mxu0 0
  %10244 = vmatprep.mubr.bf16.mxu0 0
  %10245 = vmatmul.mubr.bf16.gmra.mxu0 %v10210
  %v10246 = vpop.f32.mrf.mxu0
  %v10247 = vadd.f32 %v10195, %v10246
  %v10248 = vpop.f32.mrf.mxu0
  %v10249 = vpop.f32.mrf.mxu0
  %v10250 = vadd.f32 %v10195, %v10249
  %v10251 = vpop.f32.mrf.mxu0
  %10252 = vdwg.mxu0
  %v10253 = vadd.f32 %v7523, %v10247
  %v10254 = vadd.f32 %v7524, %v10250
  %s10255 = scalar_lea.vmem %s18, 1
  %v10256 = vld [vmem:[%s10255] sm:$0x1]
  %s10257 = scalar_lea.vmem %s19, 1
  %v10258 = vld [vmem:[%s10257] sm:$0x1]
  %v10259 = vsel %vm127, %v10253, 0.0
  %10260 = vadd.xlane.f32.xlu0 %v10259
  %v10261 = vpop.xlane.xlu0 %10260
  %v10262 = vsel %vm127, %v10254, 0.0
  %10263 = vadd.xlane.f32.xlu0 %v10262
  %v10264 = vpop.xlane.xlu0 %10263
  %v10265 = vmul.f32 %v10261, %v2283
  %v10266 = vmul.f32 %v10264, %v2283
  %v10267 = vsub.f32 %v10253, %v10265
  %v10268 = vsub.f32 %v10254, %v10266
  %v10269 = vmul.f32 %v10267, %v10267
  %v10270 = vmul.f32 %v10268, %v10268
  %v10271 = vsel %vm127, %v10269, 0.0
  %10272 = vadd.xlane.f32.xlu0 %v10271
  %v10273 = vpop.xlane.xlu0 %10272
  %v10274 = vsel %vm127, %v10270, 0.0
  %10275 = vadd.xlane.f32.xlu0 %v10274
  %v10276 = vpop.xlane.xlu0 %10275
  %v10277 = vmul.f32 %v10273, %v2283
  %v10278 = vmul.f32 %v10276, %v2283
  %v10279 = vadd.f32 %v10277, 1e-05
  %v10280 = vadd.f32 %v10278, 1e-05
  %v10281 = vrsqrt.pop %v10279
  %v10282 = vrsqrt.pop %v10280
  %v10283 = vmul.f32 %v10267, %v10281
  %v10284 = vmul.f32 %v10268, %v10282
  %v10286 = vlaneseq
  %v10287 = vshrl.u32 %v10286, 7
  %v10288 = vsub.s32 0, %v10287
  %v10289 = vrot.slane %v10256, %v10288
  %v10291 = vmul.f32 %v10283, %v10289
  %v10292 = vmul.f32 %v10284, %v10289
  %v10294 = vlaneseq
  %v10295 = vshrl.u32 %v10294, 7
  %v10296 = vsub.s32 0, %v10295
  %v10297 = vrot.slane %v10258, %v10296
  %v10299 = vadd.f32 %v10291, %v10297
  %v10300 = vadd.f32 %v10292, %v10297
  %v10301 = vpack.c.bf16 %v10300, %v10299
  %s10302 = scalar_lea.vmem %s12, 16
  %v10303 = vld [vmem:[%s10302] sm:$0xf]
  %v10304 = vld [vmem:[%s10302 + $0x4] sm:$0xf]
  %v10305 = vld [vmem:[%s10302 + $0x8] sm:$0xf]
  %v10306 = vld [vmem:[%s10302 + $0xc] sm:$0xf]
  %s10307 = scalar_lea.vmem %s13, 1
  %v10308 = vld [vmem:[%s10307] sm:$0x1]
  %v10310 = vlaneseq
  %v10311 = vshrl.u32 %v10310, 7
  %v10312 = vsub.s32 0, %v10311
  %v10313 = vrot.slane %v10308, %v10312
  %v10319 = vunpack.c.l.b16 %v10303
  %v10320 = vunpack.c.l.b16 %v10304
  %v10321 = vunpack.c.l.b16 %v10305
  %v10322 = vunpack.c.l.b16 %v10306
  %v10323 = vpack.c.b16 %v10320, %v10319
  %v10324 = vpack.c.b16 %v10322, %v10321
  %v10328 = vsel %vm127, %v10301, 0
  %10330 = vmatprep.subr.bf16.mxu0 0
  %10331 = vmatpush1.bf16.msra.mxu0 0
  %10332 = vmatprep.subr.bf16.mxu0 0
  %10333 = vmatpush1.bf16.msra.mxu0 0
  %10334 = vmatprep.subr.bf16.mxu0 0
  %10335 = vmatpush1.bf16.msra.mxu0 0
  %10336 = vmatprep.subr.bf16.mxu0 0
  %10337 = vmatpush1.bf16.msra.mxu0 0
  %10338 = vmatprep.subr.bf16.mxu0 0
  %10339 = vmatpush1.bf16.msra.mxu0 0
  %10340 = vmatprep.subr.bf16.mxu0 0
  %10341 = vmatpush1.bf16.msra.mxu0 0
  %10342 = vmatprep.subr.bf16.mxu0 0
  %10343 = vmatpush1.bf16.msra.mxu0 %v10324
  %10344 = vmatprep.subr.bf16.mxu0 0
  %10345 = vmatpush1.bf16.msra.mxu0 %v10323
  %10346 = vmatprep.subr.bf16.mxu0 0
  %10347 = vmatpush2.bf16.msra.mxu0 0
  %10348 = vmatprep.subr.bf16.mxu0 0
  %10349 = vmatpush2.bf16.msra.mxu0 0
  %10350 = vmatprep.subr.bf16.mxu0 0
  %10351 = vmatpush2.bf16.msra.mxu0 0
  %10352 = vmatprep.subr.bf16.mxu0 0
  %10353 = vmatpush2.bf16.msra.mxu0 0
  %10354 = vmatprep.subr.bf16.mxu0 0
  %10355 = vmatpush2.bf16.msra.mxu0 0
  %10356 = vmatprep.subr.bf16.mxu0 0
  %10357 = vmatpush2.bf16.msra.mxu0 0
  %10358 = vmatprep.subr.bf16.mxu0 0
  %10359 = vmatpush2.bf16.msra.mxu0 0
  %10360 = vmatprep.subr.bf16.mxu0 0
  %10361 = vmatpush2.bf16.msra.mxu0 0
  %10362 = vmatprep.mubr.bf16.mxu0 0
  %10363 = vmatmul.mubr.bf16.gmra.mxu0 %v10328
  %v10364 = vpop.f32.mrf.mxu0
  %v10365 = vadd.f32 %v10313, %v10364
  %v10366 = vpop.f32.mrf.mxu0
  %v10367 = vpop.f32.mrf.mxu0
  %v10368 = vadd.f32 %v10313, %v10367
  %v10369 = vpop.f32.mrf.mxu0
  %10370 = vdwg.mxu0
  %v10371 = vmax.f32 %v10365, 0.0
  %v10372 = vmax.f32 %v10368, 0.0
  %v10373 = vpack.c.bf16 %v10372, %v10371
  %s10374 = scalar_lea.vmem %s14, 32
  %v10375 = vld [vmem:[%s10374] sm:$0xf]
  %v10376 = vld [vmem:[%s10374 + $0x4] sm:$0xf]
  %v10377 = vld [vmem:[%s10374 + $0x8] sm:$0xf]
  %v10378 = vld [vmem:[%s10374 + $0xc] sm:$0xf]
  %v10379 = vld [vmem:[%s10374 + $0x10] sm:$0xf]
  %v10380 = vld [vmem:[%s10374 + $0x14] sm:$0xf]
  %v10381 = vld [vmem:[%s10374 + $0x18] sm:$0xf]
  %v10382 = vld [vmem:[%s10374 + $0x1c] sm:$0xf]
  %s10383 = scalar_lea.vmem %s15, 1
  %v10384 = vld [vmem:[%s10383] sm:$0x1]
  %v10386 = vlaneseq
  %v10387 = vshrl.u32 %v10386, 7
  %v10388 = vsub.s32 0, %v10387
  %v10389 = vrot.slane %v10384, %v10388
  %v10399 = vunpack.c.l.b16 %v10375
  %v10400 = vunpack.c.l.b16 %v10376
  %v10401 = vunpack.c.l.b16 %v10377
  %v10402 = vunpack.c.l.b16 %v10378
  %v10403 = vunpack.c.l.b16 %v10379
  %v10404 = vunpack.c.l.b16 %v10380
  %v10405 = vunpack.c.l.b16 %v10381
  %v10406 = vunpack.c.l.b16 %v10382
  %v10407 = vpack.c.b16 %v10400, %v10399
  %v10408 = vpack.c.b16 %v10402, %v10401
  %v10409 = vpack.c.b16 %v10404, %v10403
  %v10410 = vpack.c.b16 %v10406, %v10405
  %v10416 = vsel %vm5216, %v10373, 0
  %10418 = vmatprep.subr.bf16.mxu0 0
  %10419 = vmatpush1.bf16.msra.mxu0 0
  %10420 = vmatprep.subr.bf16.mxu0 0
  %10421 = vmatpush1.bf16.msra.mxu0 0
  %10422 = vmatprep.subr.bf16.mxu0 0
  %10423 = vmatpush1.bf16.msra.mxu0 0
  %10424 = vmatprep.subr.bf16.mxu0 0
  %10425 = vmatpush1.bf16.msra.mxu0 0
  %10426 = vmatprep.subr.bf16.mxu0 0
  %10427 = vmatpush1.bf16.msra.mxu0 %v10410
  %10428 = vmatprep.subr.bf16.mxu0 0
  %10429 = vmatpush1.bf16.msra.mxu0 %v10409
  %10430 = vmatprep.subr.bf16.mxu0 0
  %10431 = vmatpush1.bf16.msra.mxu0 %v10408
  %10432 = vmatprep.subr.bf16.mxu0 0
  %10433 = vmatpush1.bf16.msra.mxu0 %v10407
  %10434 = vmatprep.subr.bf16.mxu0 0
  %10435 = vmatpush2.bf16.msra.mxu0 0
  %10436 = vmatprep.subr.bf16.mxu0 0
  %10437 = vmatpush2.bf16.msra.mxu0 0
  %10438 = vmatprep.subr.bf16.mxu0 0
  %10439 = vmatpush2.bf16.msra.mxu0 0
  %10440 = vmatprep.subr.bf16.mxu0 0
  %10441 = vmatpush2.bf16.msra.mxu0 0
  %10442 = vmatprep.subr.bf16.mxu0 0
  %10443 = vmatpush2.bf16.msra.mxu0 0
  %10444 = vmatprep.subr.bf16.mxu0 0
  %10445 = vmatpush2.bf16.msra.mxu0 0
  %10446 = vmatprep.subr.bf16.mxu0 0
  %10447 = vmatpush2.bf16.msra.mxu0 0
  %10448 = vmatprep.subr.bf16.mxu0 0
  %10449 = vmatpush2.bf16.msra.mxu0 0
  %10450 = vmatprep.mubr.bf16.mxu0 0
  %10451 = vmatmul.mubr.bf16.gmra.mxu0 %v10416
  %v10452 = vpop.f32.mrf.mxu0
  %v10453 = vadd.f32 %v10389, %v10452
  %v10454 = vpop.f32.mrf.mxu0
  %v10455 = vpop.f32.mrf.mxu0
  %v10456 = vadd.f32 %v10389, %v10455
  %v10457 = vpop.f32.mrf.mxu0
  %10458 = vdwg.mxu0
  %v10459 = vadd.f32 %v10299, %v10453
  %v10460 = vadd.f32 %v10300, %v10456
  %s10461 = scalar_lea.vmem %s20, 1
  %v10462 = vld [vmem:[%s10461] sm:$0x1]
  %s10463 = scalar_lea.vmem %s21, 1
  %v10464 = vld [vmem:[%s10463] sm:$0x1]
  %v10465 = vsel %vm127, %v10459, 0.0
  %10466 = vadd.xlane.f32.xlu0 %v10465
  %v10467 = vpop.xlane.xlu0 %10466
  %v10468 = vsel %vm127, %v10460, 0.0
  %10469 = vadd.xlane.f32.xlu0 %v10468
  %v10470 = vpop.xlane.xlu0 %10469
  %v10471 = vmul.f32 %v10467, %v2283
  %v10472 = vmul.f32 %v10470, %v2283
  %v10473 = vsub.f32 %v10459, %v10471
  %v10474 = vsub.f32 %v10460, %v10472
  %v10475 = vmul.f32 %v10473, %v10473
  %v10476 = vmul.f32 %v10474, %v10474
  %v10477 = vsel %vm127, %v10475, 0.0
  %10478 = vadd.xlane.f32.xlu0 %v10477
  %v10479 = vpop.xlane.xlu0 %10478
  %v10480 = vsel %vm127, %v10476, 0.0
  %10481 = vadd.xlane.f32.xlu0 %v10480
  %v10482 = vpop.xlane.xlu0 %10481
  %v10483 = vmul.f32 %v10479, %v2283
  %v10484 = vmul.f32 %v10482, %v2283
  %v10485 = vadd.f32 %v10483, 1e-05
  %v10486 = vadd.f32 %v10484, 1e-05
  %v10487 = vrsqrt.pop %v10485
  %v10488 = vrsqrt.pop %v10486
  %v10489 = vmul.f32 %v10473, %v10487
  %v10490 = vmul.f32 %v10474, %v10488
  %v10492 = vlaneseq
  %v10493 = vshrl.u32 %v10492, 7
  %v10494 = vsub.s32 0, %v10493
  %v10495 = vrot.slane %v10462, %v10494
  %v10497 = vmul.f32 %v10489, %v10495
  %v10498 = vmul.f32 %v10490, %v10495
  %v10500 = vlaneseq
  %v10501 = vshrl.u32 %v10500, 7
  %v10502 = vsub.s32 0, %v10501
  %v10503 = vrot.slane %v10464, %v10502
  %v10505 = vadd.f32 %v10497, %v10503
  %v10506 = vadd.f32 %v10498, %v10503
  %10507 = vst.msk [vmem:[%s24] sm:$0xff] %vm127, %v10505
  %10508 = vst.msk [vmem:[%s24 + $0x8] sm:$0xff] %vm127, %v10506
  %v10509 = vld [vmem:[%s22] sm:$0x1]
  %v10510 = vld [vmem:[%s23] sm:$0x1]
  %v10511 = vsel %vm127, %v10505, 0.0
  %10512 = vadd.xlane.f32.xlu0 %v10511
  %v10513 = vpop.xlane.xlu0 %10512
  %v10514 = vsel %vm127, %v10506, 0.0
  %10515 = vadd.xlane.f32.xlu0 %v10514
  %v10516 = vpop.xlane.xlu0 %10515
  %v10517 = vmul.f32 %v10513, %v2283
  %v10518 = vmul.f32 %v10516, %v2283
  %v10519 = vsub.f32 %v10505, %v10517
  %v10520 = vsub.f32 %v10506, %v10518
  %v10521 = vmul.f32 %v10519, %v10519
  %v10522 = vmul.f32 %v10520, %v10520
  %v10523 = vsel %vm127, %v10521, 0.0
  %10524 = vadd.xlane.f32.xlu0 %v10523
  %v10525 = vpop.xlane.xlu0 %10524
  %v10526 = vsel %vm127, %v10522, 0.0
  %10527 = vadd.xlane.f32.xlu0 %v10526
  %v10528 = vpop.xlane.xlu0 %10527
  %v10529 = vmul.f32 %v10525, %v2283
  %v10530 = vmul.f32 %v10528, %v2283
  %v10531 = vadd.f32 %v10529, 1e-05
  %v10532 = vadd.f32 %v10530, 1e-05
  %v10533 = vrsqrt.pop %v10531
  %v10534 = vrsqrt.pop %v10532
  %v10535 = vmul.f32 %v10519, %v10533
  %v10536 = vmul.f32 %v10520, %v10534
  %v10538 = vlaneseq
  %v10539 = vshrl.u32 %v10538, 7
  %v10540 = vsub.s32 0, %v10539
  %v10541 = vrot.slane %v10509, %v10540
  %v10543 = vmul.f32 %v10535, %v10541
  %v10544 = vmul.f32 %v10536, %v10541
  %v10546 = vlaneseq
  %v10547 = vshrl.u32 %v10546, 7
  %v10548 = vsub.s32 0, %v10547
  %v10549 = vrot.slane %v10510, %v10548
  %v10551 = vadd.f32 %v10543, %v10549
  %v10552 = vadd.f32 %v10544, %v10549
  %10553 = vst.msk [vmem:[%s25] sm:$0xff] %vm127, %v10551
  %10554 = vst.msk [vmem:[%s25 + $0x8] sm:$0xff] %vm127, %v10552
  // Predicated region
  $region98: #{transformer_decoder_forward.1} parent=0 // pred_check
    _
  $region99: #{transformer_decoder_forward.1} parent=0 // pred_check_branch
    %10556 = sbr.rel (0) target = $region101
  $region100: #{transformer_decoder_forward.1} parent=0 // pred_region
    _
  $region101: #{transformer_decoder_forward.1} parent=0 // pred_fallthru
    _
  // Predicated region
  $region102: #{transformer_decoder_forward.1} parent=0 // pred_check
    _
  $region103: #{transformer_decoder_forward.1} parent=0 // pred_check_branch
    %10558 = sbr.rel (0) target = $region105
  $region104: #{transformer_decoder_forward.1} parent=0 // pred_region
    _
  $region105: #{transformer_decoder_forward.1} parent=0 // pred_fallthru
    _
  // Predicated region
  $region106: #{transformer_decoder_forward.1} parent=0 // pred_check
    _
  $region107: #{transformer_decoder_forward.1} parent=0 // pred_check_branch
    %10560 = sbr.rel (0) target = $region109
  $region108: #{transformer_decoder_forward.1} parent=0 // pred_region
    _
  $region109: #{transformer_decoder_forward.1} parent=0 // pred_fallthru
    _
  // Predicated region
  $region110: #{transformer_decoder_forward.1} parent=0 // pred_check
    _
  $region111: #{transformer_decoder_forward.1} parent=0 // pred_check_branch
    %10562 = sbr.rel (0) target = $region113
  $region112: #{transformer_decoder_forward.1} parent=0 // pred_region
    _
  $region113: #{transformer_decoder_forward.1} parent=0 // pred_fallthru
    _

</llo_original>
